<compile_context>
chip_gen: v5e
topology: v5e:2x2
jax: 0.10.0
libtpu: 0.0.40
codegen_flags: <defaults>
</compile_context>

<pallas_src>
import functools
import math

import jax
import jax.numpy as jnp
from jax.experimental import pallas as pl
from jax.experimental.pallas import tpu as pltpu

_INV_SQRT2 = 1.0 / math.sqrt(2.0)


def _round_up(x, m):
    return ((x + m - 1) // m) * m


def _round_down(x, m):
    return (x // m) * m


def _residual_mlp_kernel(*refs, n_layers, has_res_input):
    """Fused: y = residual + last(GELU(hidden_chain(first(x)))).

    refs layout: x_ref, [res_ref], (w_0, b_0), ..., (w_{L-1}, b_{L-1}), o_ref
    """
    idx = 0
    x_ref = refs[idx]; idx += 1
    if has_res_input:
        res_ref = refs[idx]; idx += 1
    else:
        res_ref = x_ref                       # reshape is None -> residual is x
    wb_refs = refs[idx: idx + 2 * n_layers]; idx += 2 * n_layers
    o_ref = refs[idx]

    h = x_ref[...]
    # Statically unrolled layer chain; activations live in vregs/VMEM only.
    for li in range(n_layers):
        w = wb_refs[2 * li][...]                                   # bf16 weights
        b = wb_refs[2 * li + 1][...].astype(jnp.float32)           # (1, out_li)
        # bf16 operands into the MXU, f32 accumulation.
        h = jnp.dot(h.astype(w.dtype), w, preferred_element_type=jnp.float32)
        h = h + b                                                  # f32 bias add
        if li == n_layers - 2:
            # exact erf-GELU (torch.nn.GELU default), kept in f32
            h = 0.5 * h * (1.0 + jax.lax.erf(h * _INV_SQRT2))

    y = h + res_ref[...].astype(jnp.float32)                       # residual add
    o_ref[...] = y.astype(o_ref.dtype)


def _choose_tm(n, io_cols, act_bytes, weight_bytes,
               tm_cap=1024, vmem_budget=24 << 20):
    """Largest 8-aligned row tile whose double-buffered I/O + resident weights
    fit the VMEM budget; prefers >=4 grid steps when that keeps tm >= 256."""
    per_row = 2 * io_cols * act_bytes                # double-buffered in+out rows
    avail = max(vmem_budget - 2 * weight_bytes, per_row * 8)
    tm_max = max(8, min(tm_cap, _round_down(avail // per_row, 8)))

    if n <= tm_max:
        tm = n if (n % 8 == 0 or n < 8) else _round_down(n, 8)
    else:
        tm = tm_max

    # >= 4 grid steps -> >= 2 per v7x TensorCore so DMA overlaps compute.
    tm_steps = _round_up(pl.cdiv(n, 4), 8)
    if 256 <= tm_steps < tm:
        tm = tm_steps
    return max(tm, 1)


def _fused_residual_mlp(x2d, res2d, weights, biases, out_dtype):
    """One pallas_call for the whole residual MLP block.

    x2d:   (N, in_dim) tokens
    res2d: (N, out_dim) residual branch, or None (-> residual is x2d itself)
    """
    n, in_dim = x2d.shape
    n_layers = len(weights)
    out_dim = weights[-1].shape[1]
    has_res = res2d is not None
    if not has_res:
        assert in_dim == out_dim, "reshape=None requires in_dim == out_dim"

    act_bytes = jnp.dtype(x2d.dtype).itemsize
    io_cols = in_dim + out_dim + (out_dim if has_res else 0)
    weight_bytes = sum(int(w.size) * w.dtype.itemsize for w in weights)
    weight_bytes += sum(int(b.size) * b.dtype.itemsize for b in biases)

    tm = _choose_tm(n, io_cols, act_bytes, weight_bytes)
    grid = (pl.cdiv(n, tm),)                  # no jnp.pad; edge block is masked

    in_specs = [pl.BlockSpec((tm, in_dim), lambda i: (i, 0))]
    inputs = [x2d]
    if has_res:
        in_specs.append(pl.BlockSpec((tm, out_dim), lambda i: (i, 0)))
        inputs.append(res2d)
    for w, b in zip(weights, biases):
        kw, mw = w.shape
        # Constant index_map -> weights/biases are VMEM-resident across the
        # whole row grid (DMA'd once, not per tile).
        in_specs.append(pl.BlockSpec((kw, mw), lambda i: (0, 0)))
        in_specs.append(pl.BlockSpec((1, mw), lambda i: (0, 0)))
        inputs.append(w)
        inputs.append(b.reshape(1, mw))

    flops = 2 * n * sum(w.shape[0] * w.shape[1] for w in weights)
    transcendentals = n * weights[-1].shape[0]     # one erf per last-hidden elem
    bytes_accessed = (int(x2d.size) * act_bytes
                      + (int(res2d.size) * res2d.dtype.itemsize if has_res else 0)
                      + n * out_dim * jnp.dtype(out_dtype).itemsize
                      + weight_bytes)

    # Double-buffered I/O tiles + (conservatively double-buffered) weights.
    vmem_need = 2 * tm * io_cols * act_bytes + 2 * weight_bytes
    vmem_limit = int(min(64 << 20, max(32 << 20, 2 * vmem_need)))

    kernel = functools.partial(
        _residual_mlp_kernel, n_layers=n_layers, has_res_input=has_res)

    return pl.pallas_call(
        kernel,
        out_shape=jax.ShapeDtypeStruct((n, out_dim), out_dtype),
        grid=grid,
        in_specs=in_specs,
        out_specs=pl.BlockSpec((tm, out_dim), lambda i: (i, 0)),
        compiler_params=pltpu.CompilerParams(
            dimension_semantics=("parallel",),    # rows shard across v7x's 2 TCs
            vmem_limit_bytes=vmem_limit),
        cost_estimate=pl.CostEstimate(
            flops=flops,
            transcendentals=transcendentals,
            bytes_accessed=bytes_accessed),
    )(*inputs)


class ResidualMLPPallas:
    """Residual(anonymousfunction=Swin-MLP, reshape=optional JAX callable).

    forward(x) == (reshape(x) if reshape is not None else x) + MLP(x)
    where MLP is first -> hidden chain -> GELU -> last (GELU applied once,
    after the hidden chain), exactly as in the original PyTorch code.
    The entire block runs as one fused Pallas kernel.
    """

    def __init__(self, in_dim, hidden_dims, out_dim, key, reshape=None,
                 param_dtype=jnp.bfloat16):
        if isinstance(hidden_dims, int):
            hidden_dims = [hidden_dims]
        assert hidden_dims is not None and len(hidden_dims) >= 1
        self.in_dim = in_dim
        self.hidden_dims = list(hidden_dims)
        self.out_dim = out_dim
        self.reshape = reshape          # pure-JAX callable or None
        # TODO(synk): arbitrary torch nn.Module `function`/`reshape` callables
        # cannot be translated generically; this class fixes `function` to the
        # Swin MLP and accepts only JAX callables for `reshape` (applied
        # outside the kernel -- a known reshape such as a lane reverse could be
        # fused in-kernel via an XLU permute).

        dims = [in_dim] + self.hidden_dims + [out_dim]
        self.weights = []
        self.biases = []
        for i in range(len(dims) - 1):
            key, kw, kb = jax.random.split(key, 3)
            fan_in, fan_out = dims[i], dims[i + 1]
            bound = 1.0 / math.sqrt(fan_in)     # torch.nn.Linear init scheme
            w = jax.random.uniform(kw, (fan_in, fan_out), jnp.float32, -bound, bound)
            b = jax.random.uniform(kb, (fan_out,), jnp.float32, -bound, bound)
            self.weights.append(w.astype(param_dtype))   # bf16 weights for MXU
            self.biases.append(b)                        # f32 biases (added in f32)

    def __call__(self, x):
        orig_shape = x.shape
        assert orig_shape[-1] == self.in_dim
        x2d = x.reshape(-1, self.in_dim)

        if self.reshape is not None:
            res = self.reshape(x)
            res2d = res.reshape(-1, self.out_dim)
            assert res2d.shape[0] == x2d.shape[0]
        else:
            res2d = None

        out2d = _fused_residual_mlp(
            x2d, res2d, self.weights, self.biases, x.dtype)
        return out2d.reshape(*orig_shape[:-1], self.out_dim)


def _reference_forward(mod, x):
    """Pure-JAX reference with the same precision recipe as the kernel
    (bf16 matmul operands, f32 accumulation / bias / GELU / residual add)."""
    x2d = x.reshape(-1, mod.in_dim)
    h = x2d.astype(jnp.float32)
    n_layers = len(mod.weights)
    for li in range(n_layers):
        w = mod.weights[li]
        h = jnp.dot(h.astype(w.dtype), w, preferred_element_type=jnp.float32)
        h = h + mod.biases[li].astype(jnp.float32)
        if li == n_layers - 2:
            h = 0.5 * h * (1.0 + jax.lax.erf(h * _INV_SQRT2))
    if mod.reshape is not None:
        res = mod.reshape(x).reshape(-1, mod.out_dim).astype(jnp.float32)
    else:
        res = x2d.astype(jnp.float32)
    out = (res + h).astype(x.dtype)
    return out.reshape(*x.shape[:-1], mod.out_dim)


if __name__ == "__main__":
    key = jax.random.PRNGKey(0)
    k_param, k_param2, k_x = jax.random.split(key, 3)

    # Swin-MLP-like shapes, lane-dense feature dims (multiples of 128).
    dim, hidden, batch, seq = 128, [512], 2, 200   # N = 400 token rows

    x = jax.random.normal(k_x, (batch, seq, dim), jnp.float32)

    # Path 1: reshape=None  ->  out = x + MLP(x)
    mod = ResidualMLPPallas(dim, hidden, dim, k_param)
    out = jax.block_until_ready(mod(x))
    ref = _reference_forward(mod, x)
    assert out.shape == (batch, seq, dim)
    assert jnp.allclose(out, ref, atol=1e-2, rtol=1e-2), \
        float(jnp.max(jnp.abs(out - ref)))

    # Path 2: explicit reshape callable on the residual branch.
    mod2 = ResidualMLPPallas(dim, hidden, dim, k_param2,
                             reshape=lambda t: t[..., ::-1])
    out2 = jax.block_until_ready(mod2(x))
    ref2 = _reference_forward(mod2, x)
    assert jnp.allclose(out2, ref2, atol=1e-2, rtol=1e-2), \
        float(jnp.max(jnp.abs(out2 - ref2)))

    print("KERNEL_OK")
</pallas_src>

<mosaic_0001>
module attributes {stable_mosaic.version = 11 : i64} {
  func.func @_residual_mlp_kernel(%arg0: i32, %arg1: memref<400x128xf32, #tpu.memory_space<vmem>>, %arg2: memref<128x512xbf16, #tpu.memory_space<vmem>>, %arg3: memref<1x512xf32, #tpu.memory_space<vmem>>, %arg4: memref<512x128xbf16, #tpu.memory_space<vmem>>, %arg5: memref<1x128xf32, #tpu.memory_space<vmem>>, %arg6: memref<400x128xf32, #tpu.memory_space<vmem>>) attributes {dimension_semantics = [#tpu.dimension_semantics<parallel>], iteration_bounds = array<i64: 1>, scalar_prefetch = 0 : i64, scratch_operands = 0 : i64, tpu.core_type = #tpu.core_type<tc>, window_params = [{transform_indices = @transform_0, window_bounds = array<i64: 400, 128>}, {pipeline_mode = #tpu.pipeline_mode<synchronous>, transform_indices = @transform_1, window_bounds = array<i64: 128, 512>}, {pipeline_mode = #tpu.pipeline_mode<synchronous>, transform_indices = @transform_2, window_bounds = array<i64: 1, 512>}, {pipeline_mode = #tpu.pipeline_mode<synchronous>, transform_indices = @transform_3, window_bounds = array<i64: 512, 128>}, {pipeline_mode = #tpu.pipeline_mode<synchronous>, transform_indices = @transform_4, window_bounds = array<i64: 1, 128>}, {transform_indices = @transform_5, window_bounds = array<i64: 400, 128>}]} {
    %c0 = arith.constant 0 : index
    %c0_0 = arith.constant 0 : index
    %0 = vector.load %arg1[%c0, %c0_0] : memref<400x128xf32, #tpu.memory_space<vmem>>, vector<400x128xf32>
    %c0_1 = arith.constant 0 : index
    %c0_2 = arith.constant 0 : index
    %1 = vector.load %arg2[%c0_1, %c0_2] : memref<128x512xbf16, #tpu.memory_space<vmem>>, vector<128x512xbf16>
    %c0_3 = arith.constant 0 : index
    %c0_4 = arith.constant 0 : index
    %2 = vector.load %arg3[%c0_3, %c0_4] : memref<1x512xf32, #tpu.memory_space<vmem>>, vector<1x512xf32>
    %3 = arith.truncf %0 : vector<400x128xf32> to vector<400x128xbf16>
    %cst = arith.constant dense<0.000000e+00> : vector<400x512xf32>
    %4 = tpu.matmul %3, %1, %cst {dimension_numbers = #tpu.dot_dimension_numbers<[1], [0], [0], [1], [0, 0, 1, 1], [], []>} : vector<400x128xbf16>, vector<128x512xbf16>, vector<400x512xf32> -> vector<400x512xf32>
    %5 = vector.broadcast %2 : vector<1x512xf32> to vector<400x512xf32>
    %6 = arith.addf %4, %5 : vector<400x512xf32>
    %cst_5 = arith.constant 5.000000e-01 : f32
    %7 = vector.broadcast %cst_5 : f32 to vector<400x512xf32>
    %8 = arith.mulf %7, %6 : vector<400x512xf32>
    %cst_6 = arith.constant 0.707106769 : f32
    %9 = vector.broadcast %cst_6 : f32 to vector<400x512xf32>
    %10 = arith.mulf %6, %9 : vector<400x512xf32>
    %11 = math.erf %10 : vector<400x512xf32>
    %cst_7 = arith.constant 1.000000e+00 : f32
    %12 = vector.broadcast %cst_7 : f32 to vector<400x512xf32>
    %13 = arith.addf %12, %11 : vector<400x512xf32>
    %14 = arith.mulf %8, %13 : vector<400x512xf32>
    %c0_8 = arith.constant 0 : index
    %c0_9 = arith.constant 0 : index
    %15 = vector.load %arg4[%c0_8, %c0_9] : memref<512x128xbf16, #tpu.memory_space<vmem>>, vector<512x128xbf16>
    %c0_10 = arith.constant 0 : index
    %c0_11 = arith.constant 0 : index
    %16 = vector.load %arg5[%c0_10, %c0_11] : memref<1x128xf32, #tpu.memory_space<vmem>>, vector<1x128xf32>
    %17 = arith.truncf %14 : vector<400x512xf32> to vector<400x512xbf16>
    %cst_12 = arith.constant dense<0.000000e+00> : vector<400x128xf32>
    %18 = tpu.matmul %17, %15, %cst_12 {dimension_numbers = #tpu.dot_dimension_numbers<[1], [0], [0], [1], [0, 0, 1, 1], [], []>} : vector<400x512xbf16>, vector<512x128xbf16>, vector<400x128xf32> -> vector<400x128xf32>
    %19 = vector.broadcast %16 : vector<1x128xf32> to vector<400x128xf32>
    %20 = arith.addf %18, %19 : vector<400x128xf32>
    %c0_13 = arith.constant 0 : index
    %c0_14 = arith.constant 0 : index
    %21 = vector.load %arg1[%c0_13, %c0_14] : memref<400x128xf32, #tpu.memory_space<vmem>>, vector<400x128xf32>
    %22 = arith.addf %20, %21 : vector<400x128xf32>
    %c0_15 = arith.constant 0 : index
    %c0_16 = arith.constant 0 : index
    %23 = vector.load %arg6[%c0_15, %c0_16] : memref<400x128xf32, #tpu.memory_space<vmem>>, vector<400x128xf32>
    tpu.vector_store %arg6[%c0_15, %c0_16], %22 {strides = array<i32>} : memref<400x128xf32, #tpu.memory_space<vmem>>, vector<400x128xf32>,
    return
  }
  func.func @transform_0(%arg0: i32) -> (i32, i32) {
    %c0_i32 = arith.constant 0 : i32
    %c0_i32_0 = arith.constant 0 : i32
    return %arg0, %c0_i32 : i32, i32
  }
  func.func @transform_1(%arg0: i32) -> (i32, i32) {
    %c0_i32 = arith.constant 0 : i32
    %c0_i32_0 = arith.constant 0 : i32
    %c0_i32_1 = arith.constant 0 : i32
    return %c0_i32, %c0_i32_0 : i32, i32
  }
  func.func @transform_2(%arg0: i32) -> (i32, i32) {
    %c0_i32 = arith.constant 0 : i32
    %c0_i32_0 = arith.constant 0 : i32
    %c0_i32_1 = arith.constant 0 : i32
    return %c0_i32, %c0_i32_0 : i32, i32
  }
  func.func @transform_3(%arg0: i32) -> (i32, i32) {
    %c0_i32 = arith.constant 0 : i32
    %c0_i32_0 = arith.constant 0 : i32
    %c0_i32_1 = arith.constant 0 : i32
    return %c0_i32, %c0_i32_0 : i32, i32
  }
  func.func @transform_4(%arg0: i32) -> (i32, i32) {
    %c0_i32 = arith.constant 0 : i32
    %c0_i32_0 = arith.constant 0 : i32
    %c0_i32_1 = arith.constant 0 : i32
    return %c0_i32, %c0_i32_0 : i32, i32
  }
  func.func @transform_5(%arg0: i32) -> (i32, i32) {
    %c0_i32 = arith.constant 0 : i32
    %c0_i32_0 = arith.constant 0 : i32
    return %arg0, %c0_i32 : i32, i32
  }
}

</mosaic_0001>

<llo_original>
// kernel: tpu_custom_call.1
$region0: #{tpu_custom_call.1}
  #allocation0 [shape = 'u32[]', space=smem, size = 0x4, offset = 0x4, fixed_abs, tag = 'smem constant byte address 0x4 - core index']
  #allocation1 [shape = 'u32[72,128]{1,0:T(1,128)}', space=vmem, size = 0x9000, scoped, tag = 'internal scratch']
  %s0 = inlined_call_operand.hbm [shape: f32[400,128], index: 0, kind: input, shape index: {}]
  %s1 = inlined_call_operand.hbm [shape: bf16[128,512], index: 1, kind: input, shape index: {}]
  %s2 = inlined_call_operand.hbm [shape: f32[1,512], index: 2, kind: input, shape index: {}]
  %s3 = inlined_call_operand.hbm [shape: bf16[512,128], index: 3, kind: input, shape index: {}]
  %s4 = inlined_call_operand.vmem [shape: f32[1,128], index: 4, kind: input, shape index: {}]
  %s5 = inlined_call_operand.hbm [shape: f32[400,128], index: 5, kind: output, shape index: {}]
  %s6 = sld [smem:[#allocation0]]
  $region46: #{tpu_custom_call.1} parent=0
    _
  %s8 = ssub.s32 1, %s6
  %s9 = scalar_select 0, %s8, %s6
  $region1: #{tpu_custom_call.1} parent=0
    #allocation2 [shape = 'u8[204800]{0}', space=vmem, size = 0x32000, scoped, tag = 'input window, operand 0, single buffered']
    #allocation3 [shape = 's32[1]{0}', space=sflag, size = 0x4, scoped, tag = 'scoped memory for tpu_custom_call.1']
    #allocation4 [shape = 's32[1]{0}', space=sflag, size = 0x4, scoped, tag = 'scoped memory for tpu_custom_call.1']
    #allocation5 [shape = 'u8[131072]{0}', space=vmem, size = 0x20000, scoped, tag = 'input window, operand 1, single buffered']
    #allocation6 [shape = 's32[1]{0}', space=sflag, size = 0x4, scoped, tag = 'scoped memory for tpu_custom_call.1']
    #allocation7 [shape = 'u8[2048]{0}', space=vmem, size = 0x800, scoped, tag = 'input window, operand 2, single buffered']
    #allocation8 [shape = 'u8[131072]{0}', space=vmem, size = 0x20000, scoped, tag = 'input window, operand 3, single buffered']
    #allocation9 [shape = 's32[1]{0}', space=sflag, size = 0x4, scoped, tag = 'scoped memory for tpu_custom_call.1']
    #allocation10 [shape = 'u8[204800]{0}', space=vmem, size = 0x32000, scoped, tag = 'output window, operand 0, single buffered']
    %10 = vsyncpa [#allocation3], 0
    %11 = vsyncpa [#allocation6], 0
    %12 = vsyncpa [#allocation9], 0
    %13 = vsyncpa [#allocation4], 0
    // Predicated region
    $region2: #{tpu_custom_call.1} parent=1 // pred_check
      _
    $region3: #{tpu_custom_call.1} parent=1 // pred_check_branch
      %15 = sbr.rel (0) target = $region5
    $region4: #{tpu_custom_call.1} parent=1 // pred_region
      %17 = vsyncadd [#allocation3], 0
      %s18 = sshll.u32 %s0, 4
      %s19 = int_to_ptr.hbm [resolvable:$true] %s18
      %s20 = sshll.u32 [#allocation2], 4
      %s21 = int_to_ptr.vmem [resolvable:$true] %s20
      %26 = dma.hbm_to_vmem [thread:$0]  %s19, 6400, %s21, [#allocation3], 128, 128, 8
    $region5: #{tpu_custom_call.1} parent=1 // pred_fallthru
      _
    // Predicated region
    $region6: #{tpu_custom_call.1} parent=1 // pred_check
      _
    $region7: #{tpu_custom_call.1} parent=1 // pred_check_branch
      %28 = sbr.rel (0) target = $region9
    $region8: #{tpu_custom_call.1} parent=1 // pred_region
      %30 = vsyncadd [#allocation6], 0
      %s31 = sshll.u32 %s1, 4
      %s32 = int_to_ptr.hbm [resolvable:$true] %s31
      %s33 = sshll.u32 [#allocation5], 4
      %s34 = int_to_ptr.vmem [resolvable:$true] %s33
      %39 = dma.hbm_to_vmem [thread:$0]  %s32, 4096, %s34, [#allocation6], 256, 256, 16
    $region9: #{tpu_custom_call.1} parent=1 // pred_fallthru
      _
    // Predicated region
    $region10: #{tpu_custom_call.1} parent=1 // pred_check
      _
    $region11: #{tpu_custom_call.1} parent=1 // pred_check_branch
      %41 = sbr.rel (0) target = $region13
    $region12: #{tpu_custom_call.1} parent=1 // pred_region
      %43 = vsyncadd [#allocation6], 0
      %s45 = sshll.u32 %s2, 4
      %s46 = int_to_ptr.hbm [resolvable:$true] %s45
      %s47 = sshll.u32 [#allocation7], 4
      %s48 = int_to_ptr.vmem [resolvable:$true] %s47
      %50 = dma.hbm_to_vmem [thread:$0]  %s46, 64, %s48, [#allocation6]
    $region13: #{tpu_custom_call.1} parent=1 // pred_fallthru
      _
    // Predicated region
    $region14: #{tpu_custom_call.1} parent=1 // pred_check
      _
    $region15: #{tpu_custom_call.1} parent=1 // pred_check_branch
      %52 = sbr.rel (0) target = $region17
    $region16: #{tpu_custom_call.1} parent=1 // pred_region
      %54 = vsyncadd [#allocation9], 0
      %s55 = sshll.u32 %s3, 4
      %s56 = int_to_ptr.hbm [resolvable:$true] %s55
      %s57 = sshll.u32 [#allocation8], 4
      %s58 = int_to_ptr.vmem [resolvable:$true] %s57
      %63 = dma.hbm_to_vmem [thread:$0]  %s56, 4096, %s58, [#allocation9], 64, 64, 4
    $region17: #{tpu_custom_call.1} parent=1 // pred_fallthru
      _
    // Predicated region
    $region18: #{tpu_custom_call.1} parent=1 // pred_check
      _
    $region19: #{tpu_custom_call.1} parent=1 // pred_check_branch
      %65 = sbr.rel (0) target = $region21
    $region20: #{tpu_custom_call.1} parent=1 // pred_region
      _
    $region21: #{tpu_custom_call.1} parent=1 // pred_fallthru
      _
    // Predicated region
    $region22: #{tpu_custom_call.1} parent=1 // pred_check
      _
    $region23: #{tpu_custom_call.1} parent=1 // pred_check_branch
      %67 = sbr.rel (0) target = $region25
    $region24: #{tpu_custom_call.1} parent=1 // pred_region
      %69 = dma.done [#allocation3], 6400
    $region25: #{tpu_custom_call.1} parent=1 // pred_fallthru
      _
    // Predicated region
    $region26: #{tpu_custom_call.1} parent=1 // pred_check
      _
    $region27: #{tpu_custom_call.1} parent=1 // pred_check_branch
      %71 = sbr.rel (0) target = $region29
    $region28: #{tpu_custom_call.1} parent=1 // pred_region
      %73 = dma.done [#allocation6], 4096
    $region29: #{tpu_custom_call.1} parent=1 // pred_fallthru
      _
    // Predicated region
    $region30: #{tpu_custom_call.1} parent=1 // pred_check
      _
    $region31: #{tpu_custom_call.1} parent=1 // pred_check_branch
      %75 = sbr.rel (0) target = $region33
    $region32: #{tpu_custom_call.1} parent=1 // pred_region
      %77 = dma.done [#allocation6], 64
    $region33: #{tpu_custom_call.1} parent=1 // pred_fallthru
      _
    // Predicated region
    $region34: #{tpu_custom_call.1} parent=1 // pred_check
      _
    $region35: #{tpu_custom_call.1} parent=1 // pred_check_branch
      %79 = sbr.rel (0) target = $region37
    $region36: #{tpu_custom_call.1} parent=1 // pred_region
      %81 = dma.done [#allocation9], 4096
    $region37: #{tpu_custom_call.1} parent=1 // pred_fallthru
      _
    %v82 = vld [vmem:[#allocation2] sm:$0xff]
    %v83 = vld [vmem:[#allocation2 + $0x8] sm:$0xff]
    %v84 = vld [vmem:[#allocation2 + $0x10] sm:$0xff]
    %v85 = vld [vmem:[#allocation2 + $0x18] sm:$0xff]
    %v86 = vld [vmem:[#allocation2 + $0x20] sm:$0xff]
    %v87 = vld [vmem:[#allocation2 + $0x28] sm:$0xff]
    %v88 = vld [vmem:[#allocation2 + $0x30] sm:$0xff]
    %v89 = vld [vmem:[#allocation2 + $0x38] sm:$0xff]
    %v90 = vld [vmem:[#allocation2 + $0x40] sm:$0xff]
    %v91 = vld [vmem:[#allocation2 + $0x48] sm:$0xff]
    %v92 = vld [vmem:[#allocation2 + $0x50] sm:$0xff]
    %v93 = vld [vmem:[#allocation2 + $0x58] sm:$0xff]
    %v94 = vld [vmem:[#allocation2 + $0x60] sm:$0xff]
    %v95 = vld [vmem:[#allocation2 + $0x68] sm:$0xff]
    %v96 = vld [vmem:[#allocation2 + $0x70] sm:$0xff]
    %v97 = vld [vmem:[#allocation2 + $0x78] sm:$0xff]
    %v98 = vld [vmem:[#allocation2 + $0x80] sm:$0xff]
    %v99 = vld [vmem:[#allocation2 + $0x88] sm:$0xff]
    %v100 = vld [vmem:[#allocation2 + $0x90] sm:$0xff]
    %v101 = vld [vmem:[#allocation2 + $0x98] sm:$0xff]
    %v102 = vld [vmem:[#allocation2 + $0xa0] sm:$0xff]
    %v103 = vld [vmem:[#allocation2 + $0xa8] sm:$0xff]
    %v104 = vld [vmem:[#allocation2 + $0xb0] sm:$0xff]
    %v105 = vld [vmem:[#allocation2 + $0xb8] sm:$0xff]
    %v106 = vld [vmem:[#allocation2 + $0xc0] sm:$0xff]
    %v107 = vld [vmem:[#allocation2 + $0xc8] sm:$0xff]
    %v108 = vld [vmem:[#allocation2 + $0xd0] sm:$0xff]
    %v109 = vld [vmem:[#allocation2 + $0xd8] sm:$0xff]
    %v110 = vld [vmem:[#allocation2 + $0xe0] sm:$0xff]
    %v111 = vld [vmem:[#allocation2 + $0xe8] sm:$0xff]
    %v112 = vld [vmem:[#allocation2 + $0xf0] sm:$0xff]
    %v113 = vld [vmem:[#allocation2 + $0xf8] sm:$0xff]
    %v114 = vld [vmem:[#allocation2 + $0x100] sm:$0xff]
    %v115 = vld [vmem:[#allocation2 + $0x108] sm:$0xff]
    %v116 = vld [vmem:[#allocation2 + $0x110] sm:$0xff]
    %v117 = vld [vmem:[#allocation2 + $0x118] sm:$0xff]
    %v118 = vld [vmem:[#allocation2 + $0x120] sm:$0xff]
    %v119 = vld [vmem:[#allocation2 + $0x128] sm:$0xff]
    %v120 = vld [vmem:[#allocation2 + $0x130] sm:$0xff]
    %v121 = vld [vmem:[#allocation2 + $0x138] sm:$0xff]
    %v122 = vld [vmem:[#allocation2 + $0x140] sm:$0xff]
    %v123 = vld [vmem:[#allocation2 + $0x148] sm:$0xff]
    %v124 = vld [vmem:[#allocation2 + $0x150] sm:$0xff]
    %v125 = vld [vmem:[#allocation2 + $0x158] sm:$0xff]
    %v126 = vld [vmem:[#allocation2 + $0x160] sm:$0xff]
    %v127 = vld [vmem:[#allocation2 + $0x168] sm:$0xff]
    %v128 = vld [vmem:[#allocation2 + $0x170] sm:$0xff]
    %v129 = vld [vmem:[#allocation2 + $0x178] sm:$0xff]
    %v130 = vld [vmem:[#allocation2 + $0x180] sm:$0xff]
    %v131 = vld [vmem:[#allocation2 + $0x188] sm:$0xff]
    %v132 = vld [vmem:[#allocation5] sm:$0xff]
    %v133 = vld [vmem:[#allocation5 + $0x8] sm:$0xff]
    %v134 = vld [vmem:[#allocation5 + $0x10] sm:$0xff]
    %v135 = vld [vmem:[#allocation5 + $0x18] sm:$0xff]
    %v136 = vld [vmem:[#allocation5 + $0x20] sm:$0xff]
    %v137 = vld [vmem:[#allocation5 + $0x28] sm:$0xff]
    %v138 = vld [vmem:[#allocation5 + $0x30] sm:$0xff]
    %v139 = vld [vmem:[#allocation5 + $0x38] sm:$0xff]
    %v140 = vld [vmem:[#allocation5 + $0x40] sm:$0xff]
    %v141 = vld [vmem:[#allocation5 + $0x48] sm:$0xff]
    %v142 = vld [vmem:[#allocation5 + $0x50] sm:$0xff]
    %v143 = vld [vmem:[#allocation5 + $0x58] sm:$0xff]
    %v144 = vld [vmem:[#allocation5 + $0x60] sm:$0xff]
    %v145 = vld [vmem:[#allocation5 + $0x68] sm:$0xff]
    %v146 = vld [vmem:[#allocation5 + $0x70] sm:$0xff]
    %v147 = vld [vmem:[#allocation5 + $0x78] sm:$0xff]
    %v148 = vld [vmem:[#allocation5 + $0x80] sm:$0xff]
    %v149 = vld [vmem:[#allocation5 + $0x88] sm:$0xff]
    %v150 = vld [vmem:[#allocation5 + $0x90] sm:$0xff]
    %v151 = vld [vmem:[#allocation5 + $0x98] sm:$0xff]
    %v152 = vld [vmem:[#allocation5 + $0xa0] sm:$0xff]
    %v153 = vld [vmem:[#allocation5 + $0xa8] sm:$0xff]
    %v154 = vld [vmem:[#allocation5 + $0xb0] sm:$0xff]
    %v155 = vld [vmem:[#allocation5 + $0xb8] sm:$0xff]
    %v156 = vld [vmem:[#allocation5 + $0xc0] sm:$0xff]
    %v157 = vld [vmem:[#allocation5 + $0xc8] sm:$0xff]
    %v158 = vld [vmem:[#allocation5 + $0xd0] sm:$0xff]
    %v159 = vld [vmem:[#allocation5 + $0xd8] sm:$0xff]
    %v160 = vld [vmem:[#allocation5 + $0xe0] sm:$0xff]
    %v161 = vld [vmem:[#allocation5 + $0xe8] sm:$0xff]
    %v162 = vld [vmem:[#allocation5 + $0xf0] sm:$0xff]
    %v163 = vld [vmem:[#allocation5 + $0xf8] sm:$0xff]
    %v164 = vld [vmem:[#allocation7] sm:$0xf]
    %v165 = vpack.c.bf16 %v83, %v82
    %v166 = vpack.c.bf16 %v85, %v84
    %v167 = vpack.c.bf16 %v87, %v86
    %v168 = vpack.c.bf16 %v89, %v88
    %v169 = vpack.c.bf16 %v91, %v90
    %v170 = vpack.c.bf16 %v93, %v92
    %v171 = vpack.c.bf16 %v95, %v94
    %v172 = vpack.c.bf16 %v97, %v96
    %v173 = vpack.c.bf16 %v99, %v98
    %v174 = vpack.c.bf16 %v101, %v100
    %v175 = vpack.c.bf16 %v103, %v102
    %v176 = vpack.c.bf16 %v105, %v104
    %v177 = vpack.c.bf16 %v107, %v106
    %v178 = vpack.c.bf16 %v109, %v108
    %v179 = vpack.c.bf16 %v111, %v110
    %v180 = vpack.c.bf16 %v113, %v112
    %v181 = vpack.c.bf16 %v115, %v114
    %v182 = vpack.c.bf16 %v117, %v116
    %v183 = vpack.c.bf16 %v119, %v118
    %v184 = vpack.c.bf16 %v121, %v120
    %v185 = vpack.c.bf16 %v123, %v122
    %v186 = vpack.c.bf16 %v125, %v124
    %v187 = vpack.c.bf16 %v127, %v126
    %v188 = vpack.c.bf16 %v129, %v128
    %v189 = vpack.c.bf16 %v131, %v130
    %v191 = vperm.slane %v164, 0
    %v192 = vperm.slane %v164, 1
    %v193 = vperm.slane %v164, 2
    %v194 = vperm.slane %v164, 3
    %v231 = vunpack.c.l.b16 %v132
    %v232 = vunpack.c.h.b16 %v132
    %v233 = vunpack.c.l.b16 %v133
    %v234 = vunpack.c.h.b16 %v133
    %v235 = vunpack.c.l.b16 %v134
    %v236 = vunpack.c.h.b16 %v134
    %v237 = vunpack.c.l.b16 %v135
    %v238 = vunpack.c.h.b16 %v135
    %v239 = vunpack.c.l.b16 %v136
    %v240 = vunpack.c.h.b16 %v136
    %v241 = vunpack.c.l.b16 %v137
    %v242 = vunpack.c.h.b16 %v137
    %v243 = vunpack.c.l.b16 %v138
    %v244 = vunpack.c.h.b16 %v138
    %v245 = vunpack.c.l.b16 %v139
    %v246 = vunpack.c.h.b16 %v139
    %v247 = vunpack.c.l.b16 %v140
    %v248 = vunpack.c.h.b16 %v140
    %v249 = vunpack.c.l.b16 %v141
    %v250 = vunpack.c.h.b16 %v141
    %v251 = vunpack.c.l.b16 %v142
    %v252 = vunpack.c.h.b16 %v142
    %v253 = vunpack.c.l.b16 %v143
    %v254 = vunpack.c.h.b16 %v143
    %v255 = vunpack.c.l.b16 %v144
    %v256 = vunpack.c.h.b16 %v144
    %v257 = vunpack.c.l.b16 %v145
    %v258 = vunpack.c.h.b16 %v145
    %v259 = vunpack.c.l.b16 %v146
    %v260 = vunpack.c.h.b16 %v146
    %v261 = vunpack.c.l.b16 %v147
    %v262 = vunpack.c.h.b16 %v147
    %v263 = vunpack.c.l.b16 %v148
    %v264 = vunpack.c.h.b16 %v148
    %v265 = vunpack.c.l.b16 %v149
    %v266 = vunpack.c.h.b16 %v149
    %v267 = vunpack.c.l.b16 %v150
    %v268 = vunpack.c.h.b16 %v150
    %v269 = vunpack.c.l.b16 %v151
    %v270 = vunpack.c.h.b16 %v151
    %v271 = vunpack.c.l.b16 %v152
    %v272 = vunpack.c.h.b16 %v152
    %v273 = vunpack.c.l.b16 %v153
    %v274 = vunpack.c.h.b16 %v153
    %v275 = vunpack.c.l.b16 %v154
    %v276 = vunpack.c.h.b16 %v154
    %v277 = vunpack.c.l.b16 %v155
    %v278 = vunpack.c.h.b16 %v155
    %v279 = vunpack.c.l.b16 %v156
    %v280 = vunpack.c.h.b16 %v156
    %v281 = vunpack.c.l.b16 %v157
    %v282 = vunpack.c.h.b16 %v157
    %v283 = vunpack.c.l.b16 %v158
    %v284 = vunpack.c.h.b16 %v158
    %v285 = vunpack.c.l.b16 %v159
    %v286 = vunpack.c.h.b16 %v159
    %v287 = vunpack.c.l.b16 %v160
    %v288 = vunpack.c.h.b16 %v160
    %v289 = vunpack.c.l.b16 %v161
    %v290 = vunpack.c.h.b16 %v161
    %v291 = vunpack.c.l.b16 %v162
    %v292 = vunpack.c.h.b16 %v162
    %v293 = vunpack.c.l.b16 %v163
    %v294 = vunpack.c.h.b16 %v163
    %v295 = vpack.c.b16 %v235, %v231
    %v296 = vpack.c.b16 %v236, %v232
    %v297 = vpack.c.b16 %v237, %v233
    %v298 = vpack.c.b16 %v238, %v234
    %v299 = vpack.c.b16 %v243, %v239
    %v300 = vpack.c.b16 %v244, %v240
    %v301 = vpack.c.b16 %v245, %v241
    %v302 = vpack.c.b16 %v246, %v242
    %v303 = vpack.c.b16 %v251, %v247
    %v304 = vpack.c.b16 %v252, %v248
    %v305 = vpack.c.b16 %v253, %v249
    %v306 = vpack.c.b16 %v254, %v250
    %v307 = vpack.c.b16 %v259, %v255
    %v308 = vpack.c.b16 %v260, %v256
    %v309 = vpack.c.b16 %v261, %v257
    %v310 = vpack.c.b16 %v262, %v258
    %v311 = vpack.c.b16 %v267, %v263
    %v312 = vpack.c.b16 %v268, %v264
    %v313 = vpack.c.b16 %v269, %v265
    %v314 = vpack.c.b16 %v270, %v266
    %v315 = vpack.c.b16 %v275, %v271
    %v316 = vpack.c.b16 %v276, %v272
    %v317 = vpack.c.b16 %v277, %v273
    %v318 = vpack.c.b16 %v278, %v274
    %v319 = vpack.c.b16 %v283, %v279
    %v320 = vpack.c.b16 %v284, %v280
    %v321 = vpack.c.b16 %v285, %v281
    %v322 = vpack.c.b16 %v286, %v282
    %v323 = vpack.c.b16 %v291, %v287
    %v324 = vpack.c.b16 %v292, %v288
    %v325 = vpack.c.b16 %v293, %v289
    %v326 = vpack.c.b16 %v294, %v290
    %359 = vmatpush.bf16.msra.mxu0 %v323
    %360 = vmatpush.bf16.msra.mxu0 %v319
    %361 = vmatpush.bf16.msra.mxu0 %v315
    %362 = vmatpush.bf16.msra.mxu0 %v311
    %363 = vmatpush.bf16.msra.mxu0 %v307
    %364 = vmatpush.bf16.msra.mxu0 %v303
    %365 = vmatpush.bf16.msra.mxu0 %v299
    %366 = vmatpush.bf16.msra.mxu0 %v295
    %367 = vmatmul.bf16.gmra.mxu0 %v165
    %v368 = vpop.f32.mrf.mxu0
    %v369 = vadd.f32 %v191, %v368
    %v370 = vpop.f32.mrf.mxu0
    %v371 = vadd.f32 %v191, %v370
    %372 = vmatmul.bf16.gmra.mxu0 %v166
    %v373 = vpop.f32.mrf.mxu0
    %v374 = vadd.f32 %v191, %v373
    %v375 = vpop.f32.mrf.mxu0
    %v376 = vadd.f32 %v191, %v375
    %377 = vmatmul.bf16.gmra.mxu0 %v167
    %v378 = vpop.f32.mrf.mxu0
    %v379 = vadd.f32 %v191, %v378
    %v380 = vpop.f32.mrf.mxu0
    %v381 = vadd.f32 %v191, %v380
    %382 = vmatmul.bf16.gmra.mxu0 %v168
    %v383 = vpop.f32.mrf.mxu0
    %v384 = vadd.f32 %v191, %v383
    %v385 = vpop.f32.mrf.mxu0
    %v386 = vadd.f32 %v191, %v385
    %387 = vmatmul.bf16.gmra.mxu0 %v169
    %v388 = vpop.f32.mrf.mxu0
    %v389 = vadd.f32 %v191, %v388
    %v390 = vpop.f32.mrf.mxu0
    %v391 = vadd.f32 %v191, %v390
    %392 = vmatmul.bf16.gmra.mxu0 %v170
    %v393 = vpop.f32.mrf.mxu0
    %v394 = vadd.f32 %v191, %v393
    %v395 = vpop.f32.mrf.mxu0
    %v396 = vadd.f32 %v191, %v395
    %397 = vmatmul.bf16.gmra.mxu0 %v171
    %v398 = vpop.f32.mrf.mxu0
    %v399 = vadd.f32 %v191, %v398
    %v400 = vpop.f32.mrf.mxu0
    %v401 = vadd.f32 %v191, %v400
    %402 = vmatmul.bf16.gmra.mxu0 %v172
    %v403 = vpop.f32.mrf.mxu0
    %v404 = vadd.f32 %v191, %v403
    %v405 = vpop.f32.mrf.mxu0
    %v406 = vadd.f32 %v191, %v405
    %407 = vmatmul.bf16.gmra.mxu0 %v173
    %v408 = vpop.f32.mrf.mxu0
    %v409 = vadd.f32 %v191, %v408
    %v410 = vpop.f32.mrf.mxu0
    %v411 = vadd.f32 %v191, %v410
    %412 = vmatmul.bf16.gmra.mxu0 %v174
    %v413 = vpop.f32.mrf.mxu0
    %v414 = vadd.f32 %v191, %v413
    %v415 = vpop.f32.mrf.mxu0
    %v416 = vadd.f32 %v191, %v415
    %417 = vmatmul.bf16.gmra.mxu0 %v175
    %v418 = vpop.f32.mrf.mxu0
    %v419 = vadd.f32 %v191, %v418
    %v420 = vpop.f32.mrf.mxu0
    %v421 = vadd.f32 %v191, %v420
    %422 = vmatmul.bf16.gmra.mxu0 %v176
    %v423 = vpop.f32.mrf.mxu0
    %v424 = vadd.f32 %v191, %v423
    %v425 = vpop.f32.mrf.mxu0
    %v426 = vadd.f32 %v191, %v425
    %427 = vmatmul.bf16.gmra.mxu0 %v177
    %v428 = vpop.f32.mrf.mxu0
    %v429 = vadd.f32 %v191, %v428
    %v430 = vpop.f32.mrf.mxu0
    %v431 = vadd.f32 %v191, %v430
    %432 = vmatmul.bf16.gmra.mxu0 %v178
    %v433 = vpop.f32.mrf.mxu0
    %v434 = vadd.f32 %v191, %v433
    %v435 = vpop.f32.mrf.mxu0
    %v436 = vadd.f32 %v191, %v435
    %437 = vmatmul.bf16.gmra.mxu0 %v179
    %v438 = vpop.f32.mrf.mxu0
    %v439 = vadd.f32 %v191, %v438
    %v440 = vpop.f32.mrf.mxu0
    %v441 = vadd.f32 %v191, %v440
    %442 = vmatmul.bf16.gmra.mxu0 %v180
    %v443 = vpop.f32.mrf.mxu0
    %v444 = vadd.f32 %v191, %v443
    %v445 = vpop.f32.mrf.mxu0
    %v446 = vadd.f32 %v191, %v445
    %447 = vmatmul.bf16.gmra.mxu0 %v181
    %v448 = vpop.f32.mrf.mxu0
    %v449 = vadd.f32 %v191, %v448
    %v450 = vpop.f32.mrf.mxu0
    %v451 = vadd.f32 %v191, %v450
    %452 = vmatmul.bf16.gmra.mxu0 %v182
    %v453 = vpop.f32.mrf.mxu0
    %v454 = vadd.f32 %v191, %v453
    %v455 = vpop.f32.mrf.mxu0
    %v456 = vadd.f32 %v191, %v455
    %457 = vmatmul.bf16.gmra.mxu0 %v183
    %v458 = vpop.f32.mrf.mxu0
    %v459 = vadd.f32 %v191, %v458
    %v460 = vpop.f32.mrf.mxu0
    %v461 = vadd.f32 %v191, %v460
    %462 = vmatmul.bf16.gmra.mxu0 %v184
    %v463 = vpop.f32.mrf.mxu0
    %v464 = vadd.f32 %v191, %v463
    %v465 = vpop.f32.mrf.mxu0
    %v466 = vadd.f32 %v191, %v465
    %467 = vmatmul.bf16.gmra.mxu0 %v185
    %v468 = vpop.f32.mrf.mxu0
    %v469 = vadd.f32 %v191, %v468
    %v470 = vpop.f32.mrf.mxu0
    %v471 = vadd.f32 %v191, %v470
    %472 = vmatmul.bf16.gmra.mxu0 %v186
    %v473 = vpop.f32.mrf.mxu0
    %v474 = vadd.f32 %v191, %v473
    %v475 = vpop.f32.mrf.mxu0
    %v476 = vadd.f32 %v191, %v475
    %477 = vmatmul.bf16.gmra.mxu0 %v187
    %v478 = vpop.f32.mrf.mxu0
    %v479 = vadd.f32 %v191, %v478
    %v480 = vpop.f32.mrf.mxu0
    %v481 = vadd.f32 %v191, %v480
    %482 = vmatmul.bf16.gmra.mxu0 %v188
    %v483 = vpop.f32.mrf.mxu0
    %v484 = vadd.f32 %v191, %v483
    %v485 = vpop.f32.mrf.mxu0
    %v486 = vadd.f32 %v191, %v485
    %487 = vmatmul.bf16.gmra.mxu0 %v189
    %v488 = vpop.f32.mrf.mxu0
    %v489 = vadd.f32 %v191, %v488
    %v490 = vpop.f32.mrf.mxu0
    %v491 = vadd.f32 %v191, %v490
    %492 = vdwg.mxu0
    %493 = vmatpush.bf16.msra.mxu0 %v324
    %494 = vmatpush.bf16.msra.mxu0 %v320
    %495 = vmatpush.bf16.msra.mxu0 %v316
    %496 = vmatpush.bf16.msra.mxu0 %v312
    %497 = vmatpush.bf16.msra.mxu0 %v308
    %498 = vmatpush.bf16.msra.mxu0 %v304
    %499 = vmatpush.bf16.msra.mxu0 %v300
    %500 = vmatpush.bf16.msra.mxu0 %v296
    %501 = vmatmul.bf16.gmra.mxu0 %v165
    %v502 = vpop.f32.mrf.mxu0
    %v503 = vadd.f32 %v192, %v502
    %v504 = vpop.f32.mrf.mxu0
    %v505 = vadd.f32 %v192, %v504
    %506 = vmatmul.bf16.gmra.mxu0 %v166
    %v507 = vpop.f32.mrf.mxu0
    %v508 = vadd.f32 %v192, %v507
    %v509 = vpop.f32.mrf.mxu0
    %v510 = vadd.f32 %v192, %v509
    %511 = vmatmul.bf16.gmra.mxu0 %v167
    %v512 = vpop.f32.mrf.mxu0
    %v513 = vadd.f32 %v192, %v512
    %v514 = vpop.f32.mrf.mxu0
    %v515 = vadd.f32 %v192, %v514
    %516 = vmatmul.bf16.gmra.mxu0 %v168
    %v517 = vpop.f32.mrf.mxu0
    %v518 = vadd.f32 %v192, %v517
    %v519 = vpop.f32.mrf.mxu0
    %v520 = vadd.f32 %v192, %v519
    %521 = vmatmul.bf16.gmra.mxu0 %v169
    %v522 = vpop.f32.mrf.mxu0
    %v523 = vadd.f32 %v192, %v522
    %v524 = vpop.f32.mrf.mxu0
    %v525 = vadd.f32 %v192, %v524
    %526 = vmatmul.bf16.gmra.mxu0 %v170
    %v527 = vpop.f32.mrf.mxu0
    %v528 = vadd.f32 %v192, %v527
    %v529 = vpop.f32.mrf.mxu0
    %v530 = vadd.f32 %v192, %v529
    %531 = vmatmul.bf16.gmra.mxu0 %v171
    %v532 = vpop.f32.mrf.mxu0
    %v533 = vadd.f32 %v192, %v532
    %v534 = vpop.f32.mrf.mxu0
    %v535 = vadd.f32 %v192, %v534
    %536 = vmatmul.bf16.gmra.mxu0 %v172
    %v537 = vpop.f32.mrf.mxu0
    %v538 = vadd.f32 %v192, %v537
    %v539 = vpop.f32.mrf.mxu0
    %v540 = vadd.f32 %v192, %v539
    %541 = vmatmul.bf16.gmra.mxu0 %v173
    %v542 = vpop.f32.mrf.mxu0
    %v543 = vadd.f32 %v192, %v542
    %v544 = vpop.f32.mrf.mxu0
    %v545 = vadd.f32 %v192, %v544
    %546 = vmatmul.bf16.gmra.mxu0 %v174
    %v547 = vpop.f32.mrf.mxu0
    %v548 = vadd.f32 %v192, %v547
    %v549 = vpop.f32.mrf.mxu0
    %v550 = vadd.f32 %v192, %v549
    %551 = vmatmul.bf16.gmra.mxu0 %v175
    %v552 = vpop.f32.mrf.mxu0
    %v553 = vadd.f32 %v192, %v552
    %v554 = vpop.f32.mrf.mxu0
    %v555 = vadd.f32 %v192, %v554
    %556 = vmatmul.bf16.gmra.mxu0 %v176
    %v557 = vpop.f32.mrf.mxu0
    %v558 = vadd.f32 %v192, %v557
    %v559 = vpop.f32.mrf.mxu0
    %v560 = vadd.f32 %v192, %v559
    %561 = vmatmul.bf16.gmra.mxu0 %v177
    %v562 = vpop.f32.mrf.mxu0
    %v563 = vadd.f32 %v192, %v562
    %v564 = vpop.f32.mrf.mxu0
    %v565 = vadd.f32 %v192, %v564
    %566 = vmatmul.bf16.gmra.mxu0 %v178
    %v567 = vpop.f32.mrf.mxu0
    %v568 = vadd.f32 %v192, %v567
    %v569 = vpop.f32.mrf.mxu0
    %v570 = vadd.f32 %v192, %v569
    %571 = vmatmul.bf16.gmra.mxu0 %v179
    %v572 = vpop.f32.mrf.mxu0
    %v573 = vadd.f32 %v192, %v572
    %v574 = vpop.f32.mrf.mxu0
    %v575 = vadd.f32 %v192, %v574
    %576 = vmatmul.bf16.gmra.mxu0 %v180
    %v577 = vpop.f32.mrf.mxu0
    %v578 = vadd.f32 %v192, %v577
    %v579 = vpop.f32.mrf.mxu0
    %v580 = vadd.f32 %v192, %v579
    %581 = vmatmul.bf16.gmra.mxu0 %v181
    %v582 = vpop.f32.mrf.mxu0
    %v583 = vadd.f32 %v192, %v582
    %v584 = vpop.f32.mrf.mxu0
    %v585 = vadd.f32 %v192, %v584
    %586 = vmatmul.bf16.gmra.mxu0 %v182
    %v587 = vpop.f32.mrf.mxu0
    %v588 = vadd.f32 %v192, %v587
    %v589 = vpop.f32.mrf.mxu0
    %v590 = vadd.f32 %v192, %v589
    %591 = vmatmul.bf16.gmra.mxu0 %v183
    %v592 = vpop.f32.mrf.mxu0
    %v593 = vadd.f32 %v192, %v592
    %v594 = vpop.f32.mrf.mxu0
    %v595 = vadd.f32 %v192, %v594
    %596 = vmatmul.bf16.gmra.mxu0 %v184
    %v597 = vpop.f32.mrf.mxu0
    %v598 = vadd.f32 %v192, %v597
    %v599 = vpop.f32.mrf.mxu0
    %v600 = vadd.f32 %v192, %v599
    %601 = vmatmul.bf16.gmra.mxu0 %v185
    %v602 = vpop.f32.mrf.mxu0
    %v603 = vadd.f32 %v192, %v602
    %v604 = vpop.f32.mrf.mxu0
    %v605 = vadd.f32 %v192, %v604
    %606 = vmatmul.bf16.gmra.mxu0 %v186
    %v607 = vpop.f32.mrf.mxu0
    %v608 = vadd.f32 %v192, %v607
    %v609 = vpop.f32.mrf.mxu0
    %v610 = vadd.f32 %v192, %v609
    %611 = vmatmul.bf16.gmra.mxu0 %v187
    %v612 = vpop.f32.mrf.mxu0
    %v613 = vadd.f32 %v192, %v612
    %v614 = vpop.f32.mrf.mxu0
    %v615 = vadd.f32 %v192, %v614
    %616 = vmatmul.bf16.gmra.mxu0 %v188
    %v617 = vpop.f32.mrf.mxu0
    %v618 = vadd.f32 %v192, %v617
    %v619 = vpop.f32.mrf.mxu0
    %v620 = vadd.f32 %v192, %v619
    %621 = vmatmul.bf16.gmra.mxu0 %v189
    %v622 = vpop.f32.mrf.mxu0
    %v623 = vadd.f32 %v192, %v622
    %v624 = vpop.f32.mrf.mxu0
    %v625 = vadd.f32 %v192, %v624
    %626 = vdwg.mxu0
    %627 = vmatpush.bf16.msra.mxu0 %v325
    %628 = vmatpush.bf16.msra.mxu0 %v321
    %629 = vmatpush.bf16.msra.mxu0 %v317
    %630 = vmatpush.bf16.msra.mxu0 %v313
    %631 = vmatpush.bf16.msra.mxu0 %v309
    %632 = vmatpush.bf16.msra.mxu0 %v305
    %633 = vmatpush.bf16.msra.mxu0 %v301
    %634 = vmatpush.bf16.msra.mxu0 %v297
    %635 = vmatmul.bf16.gmra.mxu0 %v165
    %v636 = vpop.f32.mrf.mxu0
    %v637 = vadd.f32 %v193, %v636
    %v638 = vpop.f32.mrf.mxu0
    %v639 = vadd.f32 %v193, %v638
    %640 = vmatmul.bf16.gmra.mxu0 %v166
    %v641 = vpop.f32.mrf.mxu0
    %v642 = vadd.f32 %v193, %v641
    %v643 = vpop.f32.mrf.mxu0
    %v644 = vadd.f32 %v193, %v643
    %645 = vmatmul.bf16.gmra.mxu0 %v167
    %v646 = vpop.f32.mrf.mxu0
    %v647 = vadd.f32 %v193, %v646
    %v648 = vpop.f32.mrf.mxu0
    %v649 = vadd.f32 %v193, %v648
    %650 = vmatmul.bf16.gmra.mxu0 %v168
    %v651 = vpop.f32.mrf.mxu0
    %v652 = vadd.f32 %v193, %v651
    %v653 = vpop.f32.mrf.mxu0
    %v654 = vadd.f32 %v193, %v653
    %655 = vmatmul.bf16.gmra.mxu0 %v169
    %v656 = vpop.f32.mrf.mxu0
    %v657 = vadd.f32 %v193, %v656
    %v658 = vpop.f32.mrf.mxu0
    %v659 = vadd.f32 %v193, %v658
    %660 = vmatmul.bf16.gmra.mxu0 %v170
    %v661 = vpop.f32.mrf.mxu0
    %v662 = vadd.f32 %v193, %v661
    %v663 = vpop.f32.mrf.mxu0
    %v664 = vadd.f32 %v193, %v663
    %665 = vmatmul.bf16.gmra.mxu0 %v171
    %v666 = vpop.f32.mrf.mxu0
    %v667 = vadd.f32 %v193, %v666
    %v668 = vpop.f32.mrf.mxu0
    %v669 = vadd.f32 %v193, %v668
    %670 = vmatmul.bf16.gmra.mxu0 %v172
    %v671 = vpop.f32.mrf.mxu0
    %v672 = vadd.f32 %v193, %v671
    %v673 = vpop.f32.mrf.mxu0
    %v674 = vadd.f32 %v193, %v673
    %675 = vmatmul.bf16.gmra.mxu0 %v173
    %v676 = vpop.f32.mrf.mxu0
    %v677 = vadd.f32 %v193, %v676
    %v678 = vpop.f32.mrf.mxu0
    %v679 = vadd.f32 %v193, %v678
    %680 = vmatmul.bf16.gmra.mxu0 %v174
    %v681 = vpop.f32.mrf.mxu0
    %v682 = vadd.f32 %v193, %v681
    %v683 = vpop.f32.mrf.mxu0
    %v684 = vadd.f32 %v193, %v683
    %685 = vmatmul.bf16.gmra.mxu0 %v175
    %v686 = vpop.f32.mrf.mxu0
    %v687 = vadd.f32 %v193, %v686
    %v688 = vpop.f32.mrf.mxu0
    %v689 = vadd.f32 %v193, %v688
    %690 = vmatmul.bf16.gmra.mxu0 %v176
    %v691 = vpop.f32.mrf.mxu0
    %v692 = vadd.f32 %v193, %v691
    %v693 = vpop.f32.mrf.mxu0
    %v694 = vadd.f32 %v193, %v693
    %695 = vmatmul.bf16.gmra.mxu0 %v177
    %v696 = vpop.f32.mrf.mxu0
    %v697 = vadd.f32 %v193, %v696
    %v698 = vpop.f32.mrf.mxu0
    %v699 = vadd.f32 %v193, %v698
    %700 = vmatmul.bf16.gmra.mxu0 %v178
    %v701 = vpop.f32.mrf.mxu0
    %v702 = vadd.f32 %v193, %v701
    %v703 = vpop.f32.mrf.mxu0
    %v704 = vadd.f32 %v193, %v703
    %705 = vmatmul.bf16.gmra.mxu0 %v179
    %v706 = vpop.f32.mrf.mxu0
    %v707 = vadd.f32 %v193, %v706
    %v708 = vpop.f32.mrf.mxu0
    %v709 = vadd.f32 %v193, %v708
    %710 = vmatmul.bf16.gmra.mxu0 %v180
    %v711 = vpop.f32.mrf.mxu0
    %v712 = vadd.f32 %v193, %v711
    %v713 = vpop.f32.mrf.mxu0
    %v714 = vadd.f32 %v193, %v713
    %715 = vmatmul.bf16.gmra.mxu0 %v181
    %v716 = vpop.f32.mrf.mxu0
    %v717 = vadd.f32 %v193, %v716
    %v718 = vpop.f32.mrf.mxu0
    %v719 = vadd.f32 %v193, %v718
    %720 = vmatmul.bf16.gmra.mxu0 %v182
    %v721 = vpop.f32.mrf.mxu0
    %v722 = vadd.f32 %v193, %v721
    %v723 = vpop.f32.mrf.mxu0
    %v724 = vadd.f32 %v193, %v723
    %725 = vmatmul.bf16.gmra.mxu0 %v183
    %v726 = vpop.f32.mrf.mxu0
    %v727 = vadd.f32 %v193, %v726
    %v728 = vpop.f32.mrf.mxu0
    %v729 = vadd.f32 %v193, %v728
    %730 = vmatmul.bf16.gmra.mxu0 %v184
    %v731 = vpop.f32.mrf.mxu0
    %v732 = vadd.f32 %v193, %v731
    %v733 = vpop.f32.mrf.mxu0
    %v734 = vadd.f32 %v193, %v733
    %735 = vmatmul.bf16.gmra.mxu0 %v185
    %v736 = vpop.f32.mrf.mxu0
    %v737 = vadd.f32 %v193, %v736
    %v738 = vpop.f32.mrf.mxu0
    %v739 = vadd.f32 %v193, %v738
    %740 = vmatmul.bf16.gmra.mxu0 %v186
    %v741 = vpop.f32.mrf.mxu0
    %v742 = vadd.f32 %v193, %v741
    %v743 = vpop.f32.mrf.mxu0
    %v744 = vadd.f32 %v193, %v743
    %745 = vmatmul.bf16.gmra.mxu0 %v187
    %v746 = vpop.f32.mrf.mxu0
    %v747 = vadd.f32 %v193, %v746
    %v748 = vpop.f32.mrf.mxu0
    %v749 = vadd.f32 %v193, %v748
    %750 = vmatmul.bf16.gmra.mxu0 %v188
    %v751 = vpop.f32.mrf.mxu0
    %v752 = vadd.f32 %v193, %v751
    %v753 = vpop.f32.mrf.mxu0
    %v754 = vadd.f32 %v193, %v753
    %755 = vmatmul.bf16.gmra.mxu0 %v189
    %v756 = vpop.f32.mrf.mxu0
    %v757 = vadd.f32 %v193, %v756
    %v758 = vpop.f32.mrf.mxu0
    %v759 = vadd.f32 %v193, %v758
    %760 = vdwg.mxu0
    %761 = vmatpush.bf16.msra.mxu0 %v326
    %762 = vmatpush.bf16.msra.mxu0 %v322
    %763 = vmatpush.bf16.msra.mxu0 %v318
    %764 = vmatpush.bf16.msra.mxu0 %v314
    %765 = vmatpush.bf16.msra.mxu0 %v310
    %766 = vmatpush.bf16.msra.mxu0 %v306
    %767 = vmatpush.bf16.msra.mxu0 %v302
    %768 = vmatpush.bf16.msra.mxu0 %v298
    %769 = vmatmul.bf16.gmra.mxu0 %v165
    %v770 = vpop.f32.mrf.mxu0
    %v771 = vadd.f32 %v194, %v770
    %v772 = vpop.f32.mrf.mxu0
    %v773 = vadd.f32 %v194, %v772
    %774 = vmatmul.bf16.gmra.mxu0 %v166
    %v775 = vpop.f32.mrf.mxu0
    %v776 = vadd.f32 %v194, %v775
    %v777 = vpop.f32.mrf.mxu0
    %v778 = vadd.f32 %v194, %v777
    %779 = vmatmul.bf16.gmra.mxu0 %v167
    %v780 = vpop.f32.mrf.mxu0
    %v781 = vadd.f32 %v194, %v780
    %v782 = vpop.f32.mrf.mxu0
    %v783 = vadd.f32 %v194, %v782
    %784 = vmatmul.bf16.gmra.mxu0 %v168
    %v785 = vpop.f32.mrf.mxu0
    %v786 = vadd.f32 %v194, %v785
    %v787 = vpop.f32.mrf.mxu0
    %v788 = vadd.f32 %v194, %v787
    %789 = vmatmul.bf16.gmra.mxu0 %v169
    %v790 = vpop.f32.mrf.mxu0
    %v791 = vadd.f32 %v194, %v790
    %v792 = vpop.f32.mrf.mxu0
    %v793 = vadd.f32 %v194, %v792
    %794 = vmatmul.bf16.gmra.mxu0 %v170
    %v795 = vpop.f32.mrf.mxu0
    %v796 = vadd.f32 %v194, %v795
    %v797 = vpop.f32.mrf.mxu0
    %v798 = vadd.f32 %v194, %v797
    %799 = vmatmul.bf16.gmra.mxu0 %v171
    %v800 = vpop.f32.mrf.mxu0
    %v801 = vadd.f32 %v194, %v800
    %v802 = vpop.f32.mrf.mxu0
    %v803 = vadd.f32 %v194, %v802
    %804 = vmatmul.bf16.gmra.mxu0 %v172
    %v805 = vpop.f32.mrf.mxu0
    %v806 = vadd.f32 %v194, %v805
    %v807 = vpop.f32.mrf.mxu0
    %v808 = vadd.f32 %v194, %v807
    %809 = vmatmul.bf16.gmra.mxu0 %v173
    %v810 = vpop.f32.mrf.mxu0
    %v811 = vadd.f32 %v194, %v810
    %v812 = vpop.f32.mrf.mxu0
    %v813 = vadd.f32 %v194, %v812
    %814 = vmatmul.bf16.gmra.mxu0 %v174
    %v815 = vpop.f32.mrf.mxu0
    %v816 = vadd.f32 %v194, %v815
    %v817 = vpop.f32.mrf.mxu0
    %v818 = vadd.f32 %v194, %v817
    %819 = vmatmul.bf16.gmra.mxu0 %v175
    %v820 = vpop.f32.mrf.mxu0
    %v821 = vadd.f32 %v194, %v820
    %v822 = vpop.f32.mrf.mxu0
    %v823 = vadd.f32 %v194, %v822
    %824 = vmatmul.bf16.gmra.mxu0 %v176
    %v825 = vpop.f32.mrf.mxu0
    %v826 = vadd.f32 %v194, %v825
    %v827 = vpop.f32.mrf.mxu0
    %v828 = vadd.f32 %v194, %v827
    %829 = vmatmul.bf16.gmra.mxu0 %v177
    %v830 = vpop.f32.mrf.mxu0
    %v831 = vadd.f32 %v194, %v830
    %v832 = vpop.f32.mrf.mxu0
    %v833 = vadd.f32 %v194, %v832
    %834 = vmatmul.bf16.gmra.mxu0 %v178
    %v835 = vpop.f32.mrf.mxu0
    %v836 = vadd.f32 %v194, %v835
    %v837 = vpop.f32.mrf.mxu0
    %v838 = vadd.f32 %v194, %v837
    %839 = vmatmul.bf16.gmra.mxu0 %v179
    %v840 = vpop.f32.mrf.mxu0
    %v841 = vadd.f32 %v194, %v840
    %v842 = vpop.f32.mrf.mxu0
    %v843 = vadd.f32 %v194, %v842
    %844 = vmatmul.bf16.gmra.mxu0 %v180
    %v845 = vpop.f32.mrf.mxu0
    %v846 = vadd.f32 %v194, %v845
    %v847 = vpop.f32.mrf.mxu0
    %v848 = vadd.f32 %v194, %v847
    %849 = vmatmul.bf16.gmra.mxu0 %v181
    %v850 = vpop.f32.mrf.mxu0
    %v851 = vadd.f32 %v194, %v850
    %v852 = vpop.f32.mrf.mxu0
    %v853 = vadd.f32 %v194, %v852
    %854 = vmatmul.bf16.gmra.mxu0 %v182
    %v855 = vpop.f32.mrf.mxu0
    %v856 = vadd.f32 %v194, %v855
    %v857 = vpop.f32.mrf.mxu0
    %v858 = vadd.f32 %v194, %v857
    %859 = vmatmul.bf16.gmra.mxu0 %v183
    %v860 = vpop.f32.mrf.mxu0
    %v861 = vadd.f32 %v194, %v860
    %v862 = vpop.f32.mrf.mxu0
    %v863 = vadd.f32 %v194, %v862
    %864 = vmatmul.bf16.gmra.mxu0 %v184
    %v865 = vpop.f32.mrf.mxu0
    %v866 = vadd.f32 %v194, %v865
    %v867 = vpop.f32.mrf.mxu0
    %v868 = vadd.f32 %v194, %v867
    %869 = vmatmul.bf16.gmra.mxu0 %v185
    %v870 = vpop.f32.mrf.mxu0
    %v871 = vadd.f32 %v194, %v870
    %v872 = vpop.f32.mrf.mxu0
    %v873 = vadd.f32 %v194, %v872
    %874 = vmatmul.bf16.gmra.mxu0 %v186
    %v875 = vpop.f32.mrf.mxu0
    %v876 = vadd.f32 %v194, %v875
    %v877 = vpop.f32.mrf.mxu0
    %v878 = vadd.f32 %v194, %v877
    %879 = vmatmul.bf16.gmra.mxu0 %v187
    %v880 = vpop.f32.mrf.mxu0
    %v881 = vadd.f32 %v194, %v880
    %v882 = vpop.f32.mrf.mxu0
    %v883 = vadd.f32 %v194, %v882
    %884 = vmatmul.bf16.gmra.mxu0 %v188
    %v885 = vpop.f32.mrf.mxu0
    %v886 = vadd.f32 %v194, %v885
    %v887 = vpop.f32.mrf.mxu0
    %v888 = vadd.f32 %v194, %v887
    %889 = vmatmul.bf16.gmra.mxu0 %v189
    %v890 = vpop.f32.mrf.mxu0
    %v891 = vadd.f32 %v194, %v890
    %v892 = vpop.f32.mrf.mxu0
    %v893 = vadd.f32 %v194, %v892
    %894 = vdwg.mxu0
    %v895 = vmul.f32 %v369, 0.5
    %v896 = vmul.f32 %v503, 0.5
    %v897 = vmul.f32 %v637, 0.5
    %v898 = vmul.f32 %v771, 0.5
    %v899 = vmul.f32 %v371, 0.5
    %v900 = vmul.f32 %v505, 0.5
    %v901 = vmul.f32 %v639, 0.5
    %v902 = vmul.f32 %v773, 0.5
    %v903 = vmul.f32 %v374, 0.5
    %v904 = vmul.f32 %v508, 0.5
    %v905 = vmul.f32 %v642, 0.5
    %v906 = vmul.f32 %v776, 0.5
    %v907 = vmul.f32 %v376, 0.5
    %v908 = vmul.f32 %v510, 0.5
    %v909 = vmul.f32 %v644, 0.5
    %v910 = vmul.f32 %v778, 0.5
    %v911 = vmul.f32 %v379, 0.5
    %v912 = vmul.f32 %v513, 0.5
    %v913 = vmul.f32 %v647, 0.5
    %v914 = vmul.f32 %v781, 0.5
    %v915 = vmul.f32 %v381, 0.5
    %v916 = vmul.f32 %v515, 0.5
    %v917 = vmul.f32 %v649, 0.5
    %v918 = vmul.f32 %v783, 0.5
    %v919 = vmul.f32 %v384, 0.5
    %v920 = vmul.f32 %v518, 0.5
    %v921 = vmul.f32 %v652, 0.5
    %v922 = vmul.f32 %v786, 0.5
    %v923 = vmul.f32 %v386, 0.5
    %v924 = vmul.f32 %v520, 0.5
    %v925 = vmul.f32 %v654, 0.5
    %v926 = vmul.f32 %v788, 0.5
    %v927 = vmul.f32 %v389, 0.5
    %v928 = vmul.f32 %v523, 0.5
    %v929 = vmul.f32 %v657, 0.5
    %v930 = vmul.f32 %v791, 0.5
    %v931 = vmul.f32 %v391, 0.5
    %v932 = vmul.f32 %v525, 0.5
    %v933 = vmul.f32 %v659, 0.5
    %v934 = vmul.f32 %v793, 0.5
    %v935 = vmul.f32 %v394, 0.5
    %v936 = vmul.f32 %v528, 0.5
    %v937 = vmul.f32 %v662, 0.5
    %v938 = vmul.f32 %v796, 0.5
    %v939 = vmul.f32 %v396, 0.5
    %v940 = vmul.f32 %v530, 0.5
    %v941 = vmul.f32 %v664, 0.5
    %v942 = vmul.f32 %v798, 0.5
    %v943 = vmul.f32 %v399, 0.5
    %v944 = vmul.f32 %v533, 0.5
    %v945 = vmul.f32 %v667, 0.5
    %v946 = vmul.f32 %v801, 0.5
    %v947 = vmul.f32 %v401, 0.5
    %v948 = vmul.f32 %v535, 0.5
    %v949 = vmul.f32 %v669, 0.5
    %v950 = vmul.f32 %v803, 0.5
    %v951 = vmul.f32 %v404, 0.5
    %v952 = vmul.f32 %v538, 0.5
    %v953 = vmul.f32 %v672, 0.5
    %v954 = vmul.f32 %v806, 0.5
    %v955 = vmul.f32 %v406, 0.5
    %v956 = vmul.f32 %v540, 0.5
    %v957 = vmul.f32 %v674, 0.5
    %v958 = vmul.f32 %v808, 0.5
    %v959 = vmul.f32 %v409, 0.5
    %v960 = vmul.f32 %v543, 0.5
    %v961 = vmul.f32 %v677, 0.5
    %v962 = vmul.f32 %v811, 0.5
    %v963 = vmul.f32 %v411, 0.5
    %v964 = vmul.f32 %v545, 0.5
    %v965 = vmul.f32 %v679, 0.5
    %v966 = vmul.f32 %v813, 0.5
    %v967 = vmul.f32 %v414, 0.5
    %v968 = vmul.f32 %v548, 0.5
    %v969 = vmul.f32 %v682, 0.5
    %v970 = vmul.f32 %v816, 0.5
    %v971 = vmul.f32 %v416, 0.5
    %v972 = vmul.f32 %v550, 0.5
    %v973 = vmul.f32 %v684, 0.5
    %v974 = vmul.f32 %v818, 0.5
    %v975 = vmul.f32 %v419, 0.5
    %v976 = vmul.f32 %v553, 0.5
    %v977 = vmul.f32 %v687, 0.5
    %v978 = vmul.f32 %v821, 0.5
    %v979 = vmul.f32 %v421, 0.5
    %v980 = vmul.f32 %v555, 0.5
    %v981 = vmul.f32 %v689, 0.5
    %v982 = vmul.f32 %v823, 0.5
    %v983 = vmul.f32 %v424, 0.5
    %v984 = vmul.f32 %v558, 0.5
    %v985 = vmul.f32 %v692, 0.5
    %v986 = vmul.f32 %v826, 0.5
    %v987 = vmul.f32 %v426, 0.5
    %v988 = vmul.f32 %v560, 0.5
    %v989 = vmul.f32 %v694, 0.5
    %v990 = vmul.f32 %v828, 0.5
    %v991 = vmul.f32 %v429, 0.5
    %v992 = vmul.f32 %v563, 0.5
    %v993 = vmul.f32 %v697, 0.5
    %v994 = vmul.f32 %v831, 0.5
    %v995 = vmul.f32 %v431, 0.5
    %v996 = vmul.f32 %v565, 0.5
    %v997 = vmul.f32 %v699, 0.5
    %v998 = vmul.f32 %v833, 0.5
    %v999 = vmul.f32 %v434, 0.5
    %v1000 = vmul.f32 %v568, 0.5
    %v1001 = vmul.f32 %v702, 0.5
    %v1002 = vmul.f32 %v836, 0.5
    %v1003 = vmul.f32 %v436, 0.5
    %v1004 = vmul.f32 %v570, 0.5
    %v1005 = vmul.f32 %v704, 0.5
    %v1006 = vmul.f32 %v838, 0.5
    %v1007 = vmul.f32 %v439, 0.5
    %v1008 = vmul.f32 %v573, 0.5
    %v1009 = vmul.f32 %v707, 0.5
    %v1010 = vmul.f32 %v841, 0.5
    %v1011 = vmul.f32 %v441, 0.5
    %v1012 = vmul.f32 %v575, 0.5
    %v1013 = vmul.f32 %v709, 0.5
    %v1014 = vmul.f32 %v843, 0.5
    %v1015 = vmul.f32 %v444, 0.5
    %v1016 = vmul.f32 %v578, 0.5
    %v1017 = vmul.f32 %v712, 0.5
    %v1018 = vmul.f32 %v846, 0.5
    %v1019 = vmul.f32 %v446, 0.5
    %v1020 = vmul.f32 %v580, 0.5
    %v1021 = vmul.f32 %v714, 0.5
    %v1022 = vmul.f32 %v848, 0.5
    %v1023 = vmul.f32 %v449, 0.5
    %v1024 = vmul.f32 %v583, 0.5
    %v1025 = vmul.f32 %v717, 0.5
    %v1026 = vmul.f32 %v851, 0.5
    %v1027 = vmul.f32 %v451, 0.5
    %v1028 = vmul.f32 %v585, 0.5
    %v1029 = vmul.f32 %v719, 0.5
    %v1030 = vmul.f32 %v853, 0.5
    %v1031 = vmul.f32 %v454, 0.5
    %v1032 = vmul.f32 %v588, 0.5
    %v1033 = vmul.f32 %v722, 0.5
    %v1034 = vmul.f32 %v856, 0.5
    %v1035 = vmul.f32 %v456, 0.5
    %v1036 = vmul.f32 %v590, 0.5
    %v1037 = vmul.f32 %v724, 0.5
    %v1038 = vmul.f32 %v858, 0.5
    %v1039 = vmul.f32 %v459, 0.5
    %v1040 = vmul.f32 %v593, 0.5
    %v1041 = vmul.f32 %v727, 0.5
    %v1042 = vmul.f32 %v861, 0.5
    %v1043 = vmul.f32 %v461, 0.5
    %v1044 = vmul.f32 %v595, 0.5
    %v1045 = vmul.f32 %v729, 0.5
    %v1046 = vmul.f32 %v863, 0.5
    %v1047 = vmul.f32 %v464, 0.5
    %v1048 = vmul.f32 %v598, 0.5
    %v1049 = vmul.f32 %v732, 0.5
    %v1050 = vmul.f32 %v866, 0.5
    %v1051 = vmul.f32 %v466, 0.5
    %v1052 = vmul.f32 %v600, 0.5
    %v1053 = vmul.f32 %v734, 0.5
    %v1054 = vmul.f32 %v868, 0.5
    %v1055 = vmul.f32 %v469, 0.5
    %v1056 = vmul.f32 %v603, 0.5
    %v1057 = vmul.f32 %v737, 0.5
    %v1058 = vmul.f32 %v871, 0.5
    %v1059 = vmul.f32 %v471, 0.5
    %v1060 = vmul.f32 %v605, 0.5
    %v1061 = vmul.f32 %v739, 0.5
    %v1062 = vmul.f32 %v873, 0.5
    %v1063 = vmul.f32 %v474, 0.5
    %v1064 = vmul.f32 %v608, 0.5
    %v1065 = vmul.f32 %v742, 0.5
    %v1066 = vmul.f32 %v876, 0.5
    %v1067 = vmul.f32 %v476, 0.5
    %v1068 = vmul.f32 %v610, 0.5
    %v1069 = vmul.f32 %v744, 0.5
    %v1070 = vmul.f32 %v878, 0.5
    %v1071 = vmul.f32 %v479, 0.5
    %v1072 = vmul.f32 %v613, 0.5
    %v1073 = vmul.f32 %v747, 0.5
    %v1074 = vmul.f32 %v881, 0.5
    %v1075 = vmul.f32 %v481, 0.5
    %v1076 = vmul.f32 %v615, 0.5
    %v1077 = vmul.f32 %v749, 0.5
    %v1078 = vmul.f32 %v883, 0.5
    %v1079 = vmul.f32 %v484, 0.5
    %v1080 = vmul.f32 %v618, 0.5
    %v1081 = vmul.f32 %v752, 0.5
    %v1082 = vmul.f32 %v886, 0.5
    %v1083 = vmul.f32 %v486, 0.5
    %v1084 = vmul.f32 %v620, 0.5
    %v1085 = vmul.f32 %v754, 0.5
    %v1086 = vmul.f32 %v888, 0.5
    %v1087 = vmul.f32 %v489, 0.5
    %v1088 = vmul.f32 %v623, 0.5
    %v1089 = vmul.f32 %v757, 0.5
    %v1090 = vmul.f32 %v891, 0.5
    %v1091 = vmul.f32 %v491, 0.5
    %v1092 = vmul.f32 %v625, 0.5
    %v1093 = vmul.f32 %v759, 0.5
    %v1094 = vmul.f32 %v893, 0.5
    %v1095 = vmul.f32 %v369, 0.70710677
    %v1096 = vmul.f32 %v503, 0.70710677
    %v1097 = vmul.f32 %v637, 0.70710677
    %v1098 = vmul.f32 %v771, 0.70710677
    %v1099 = vmul.f32 %v371, 0.70710677
    %v1100 = vmul.f32 %v505, 0.70710677
    %v1101 = vmul.f32 %v639, 0.70710677
    %v1102 = vmul.f32 %v773, 0.70710677
    %v1103 = vmul.f32 %v374, 0.70710677
    %v1104 = vmul.f32 %v508, 0.70710677
    %v1105 = vmul.f32 %v642, 0.70710677
    %v1106 = vmul.f32 %v776, 0.70710677
    %v1107 = vmul.f32 %v376, 0.70710677
    %v1108 = vmul.f32 %v510, 0.70710677
    %v1109 = vmul.f32 %v644, 0.70710677
    %v1110 = vmul.f32 %v778, 0.70710677
    %v1111 = vmul.f32 %v379, 0.70710677
    %v1112 = vmul.f32 %v513, 0.70710677
    %v1113 = vmul.f32 %v647, 0.70710677
    %v1114 = vmul.f32 %v781, 0.70710677
    %v1115 = vmul.f32 %v381, 0.70710677
    %v1116 = vmul.f32 %v515, 0.70710677
    %v1117 = vmul.f32 %v649, 0.70710677
    %v1118 = vmul.f32 %v783, 0.70710677
    %v1119 = vmul.f32 %v384, 0.70710677
    %v1120 = vmul.f32 %v518, 0.70710677
    %v1121 = vmul.f32 %v652, 0.70710677
    %v1122 = vmul.f32 %v786, 0.70710677
    %v1123 = vmul.f32 %v386, 0.70710677
    %v1124 = vmul.f32 %v520, 0.70710677
    %v1125 = vmul.f32 %v654, 0.70710677
    %v1126 = vmul.f32 %v788, 0.70710677
    %v1127 = vmul.f32 %v389, 0.70710677
    %v1128 = vmul.f32 %v523, 0.70710677
    %v1129 = vmul.f32 %v657, 0.70710677
    %v1130 = vmul.f32 %v791, 0.70710677
    %v1131 = vmul.f32 %v391, 0.70710677
    %v1132 = vmul.f32 %v525, 0.70710677
    %v1133 = vmul.f32 %v659, 0.70710677
    %v1134 = vmul.f32 %v793, 0.70710677
    %v1135 = vmul.f32 %v394, 0.70710677
    %v1136 = vmul.f32 %v528, 0.70710677
    %v1137 = vmul.f32 %v662, 0.70710677
    %v1138 = vmul.f32 %v796, 0.70710677
    %v1139 = vmul.f32 %v396, 0.70710677
    %v1140 = vmul.f32 %v530, 0.70710677
    %v1141 = vmul.f32 %v664, 0.70710677
    %v1142 = vmul.f32 %v798, 0.70710677
    %v1143 = vmul.f32 %v399, 0.70710677
    %v1144 = vmul.f32 %v533, 0.70710677
    %v1145 = vmul.f32 %v667, 0.70710677
    %v1146 = vmul.f32 %v801, 0.70710677
    %v1147 = vmul.f32 %v401, 0.70710677
    %v1148 = vmul.f32 %v535, 0.70710677
    %v1149 = vmul.f32 %v669, 0.70710677
    %v1150 = vmul.f32 %v803, 0.70710677
    %v1151 = vmul.f32 %v404, 0.70710677
    %v1152 = vmul.f32 %v538, 0.70710677
    %v1153 = vmul.f32 %v672, 0.70710677
    %v1154 = vmul.f32 %v806, 0.70710677
    %v1155 = vmul.f32 %v406, 0.70710677
    %v1156 = vmul.f32 %v540, 0.70710677
    %v1157 = vmul.f32 %v674, 0.70710677
    %v1158 = vmul.f32 %v808, 0.70710677
    %v1159 = vmul.f32 %v409, 0.70710677
    %v1160 = vmul.f32 %v543, 0.70710677
    %v1161 = vmul.f32 %v677, 0.70710677
    %v1162 = vmul.f32 %v811, 0.70710677
    %v1163 = vmul.f32 %v411, 0.70710677
    %v1164 = vmul.f32 %v545, 0.70710677
    %v1165 = vmul.f32 %v679, 0.70710677
    %v1166 = vmul.f32 %v813, 0.70710677
    %v1167 = vmul.f32 %v414, 0.70710677
    %v1168 = vmul.f32 %v548, 0.70710677
    %v1169 = vmul.f32 %v682, 0.70710677
    %v1170 = vmul.f32 %v816, 0.70710677
    %v1171 = vmul.f32 %v416, 0.70710677
    %v1172 = vmul.f32 %v550, 0.70710677
    %v1173 = vmul.f32 %v684, 0.70710677
    %v1174 = vmul.f32 %v818, 0.70710677
    %v1175 = vmul.f32 %v419, 0.70710677
    %v1176 = vmul.f32 %v553, 0.70710677
    %v1177 = vmul.f32 %v687, 0.70710677
    %v1178 = vmul.f32 %v821, 0.70710677
    %v1179 = vmul.f32 %v421, 0.70710677
    %v1180 = vmul.f32 %v555, 0.70710677
    %v1181 = vmul.f32 %v689, 0.70710677
    %v1182 = vmul.f32 %v823, 0.70710677
    %v1183 = vmul.f32 %v424, 0.70710677
    %v1184 = vmul.f32 %v558, 0.70710677
    %v1185 = vmul.f32 %v692, 0.70710677
    %v1186 = vmul.f32 %v826, 0.70710677
    %v1187 = vmul.f32 %v426, 0.70710677
    %v1188 = vmul.f32 %v560, 0.70710677
    %v1189 = vmul.f32 %v694, 0.70710677
    %v1190 = vmul.f32 %v828, 0.70710677
    %v1191 = vmul.f32 %v429, 0.70710677
    %v1192 = vmul.f32 %v563, 0.70710677
    %v1193 = vmul.f32 %v697, 0.70710677
    %v1194 = vmul.f32 %v831, 0.70710677
    %v1195 = vmul.f32 %v431, 0.70710677
    %v1196 = vmul.f32 %v565, 0.70710677
    %v1197 = vmul.f32 %v699, 0.70710677
    %v1198 = vmul.f32 %v833, 0.70710677
    %v1199 = vmul.f32 %v434, 0.70710677
    %v1200 = vmul.f32 %v568, 0.70710677
    %v1201 = vmul.f32 %v702, 0.70710677
    %v1202 = vmul.f32 %v836, 0.70710677
    %v1203 = vmul.f32 %v436, 0.70710677
    %v1204 = vmul.f32 %v570, 0.70710677
    %v1205 = vmul.f32 %v704, 0.70710677
    %v1206 = vmul.f32 %v838, 0.70710677
    %v1207 = vmul.f32 %v439, 0.70710677
    %v1208 = vmul.f32 %v573, 0.70710677
    %v1209 = vmul.f32 %v707, 0.70710677
    %v1210 = vmul.f32 %v841, 0.70710677
    %v1211 = vmul.f32 %v441, 0.70710677
    %v1212 = vmul.f32 %v575, 0.70710677
    %v1213 = vmul.f32 %v709, 0.70710677
    %v1214 = vmul.f32 %v843, 0.70710677
    %v1215 = vmul.f32 %v444, 0.70710677
    %v1216 = vmul.f32 %v578, 0.70710677
    %v1217 = vmul.f32 %v712, 0.70710677
    %v1218 = vmul.f32 %v846, 0.70710677
    %v1219 = vmul.f32 %v446, 0.70710677
    %v1220 = vmul.f32 %v580, 0.70710677
    %v1221 = vmul.f32 %v714, 0.70710677
    %v1222 = vmul.f32 %v848, 0.70710677
    %v1223 = vmul.f32 %v449, 0.70710677
    %v1224 = vmul.f32 %v583, 0.70710677
    %v1225 = vmul.f32 %v717, 0.70710677
    %v1226 = vmul.f32 %v851, 0.70710677
    %v1227 = vmul.f32 %v451, 0.70710677
    %v1228 = vmul.f32 %v585, 0.70710677
    %v1229 = vmul.f32 %v719, 0.70710677
    %v1230 = vmul.f32 %v853, 0.70710677
    %v1231 = vmul.f32 %v454, 0.70710677
    %v1232 = vmul.f32 %v588, 0.70710677
    %v1233 = vmul.f32 %v722, 0.70710677
    %v1234 = vmul.f32 %v856, 0.70710677
    %v1235 = vmul.f32 %v456, 0.70710677
    %v1236 = vmul.f32 %v590, 0.70710677
    %v1237 = vmul.f32 %v724, 0.70710677
    %v1238 = vmul.f32 %v858, 0.70710677
    %v1239 = vmul.f32 %v459, 0.70710677
    %v1240 = vmul.f32 %v593, 0.70710677
    %v1241 = vmul.f32 %v727, 0.70710677
    %v1242 = vmul.f32 %v861, 0.70710677
    %v1243 = vmul.f32 %v461, 0.70710677
    %v1244 = vmul.f32 %v595, 0.70710677
    %v1245 = vmul.f32 %v729, 0.70710677
    %v1246 = vmul.f32 %v863, 0.70710677
    %v1247 = vmul.f32 %v464, 0.70710677
    %v1248 = vmul.f32 %v598, 0.70710677
    %v1249 = vmul.f32 %v732, 0.70710677
    %v1250 = vmul.f32 %v866, 0.70710677
    %v1251 = vmul.f32 %v466, 0.70710677
    %v1252 = vmul.f32 %v600, 0.70710677
    %v1253 = vmul.f32 %v734, 0.70710677
    %v1254 = vmul.f32 %v868, 0.70710677
    %v1255 = vmul.f32 %v469, 0.70710677
    %v1256 = vmul.f32 %v603, 0.70710677
    %v1257 = vmul.f32 %v737, 0.70710677
    %v1258 = vmul.f32 %v871, 0.70710677
    %v1259 = vmul.f32 %v471, 0.70710677
    %v1260 = vmul.f32 %v605, 0.70710677
    %v1261 = vmul.f32 %v739, 0.70710677
    %v1262 = vmul.f32 %v873, 0.70710677
    %v1263 = vmul.f32 %v474, 0.70710677
    %v1264 = vmul.f32 %v608, 0.70710677
    %v1265 = vmul.f32 %v742, 0.70710677
    %v1266 = vmul.f32 %v876, 0.70710677
    %v1267 = vmul.f32 %v476, 0.70710677
    %v1268 = vmul.f32 %v610, 0.70710677
    %v1269 = vmul.f32 %v744, 0.70710677
    %v1270 = vmul.f32 %v878, 0.70710677
    %v1271 = vmul.f32 %v479, 0.70710677
    %v1272 = vmul.f32 %v613, 0.70710677
    %v1273 = vmul.f32 %v747, 0.70710677
    %v1274 = vmul.f32 %v881, 0.70710677
    %v1275 = vmul.f32 %v481, 0.70710677
    %v1276 = vmul.f32 %v615, 0.70710677
    %v1277 = vmul.f32 %v749, 0.70710677
    %v1278 = vmul.f32 %v883, 0.70710677
    %v1279 = vmul.f32 %v484, 0.70710677
    %v1280 = vmul.f32 %v618, 0.70710677
    %v1281 = vmul.f32 %v752, 0.70710677
    %v1282 = vmul.f32 %v886, 0.70710677
    %v1283 = vmul.f32 %v486, 0.70710677
    %v1284 = vmul.f32 %v620, 0.70710677
    %v1285 = vmul.f32 %v754, 0.70710677
    %v1286 = vmul.f32 %v888, 0.70710677
    %v1287 = vmul.f32 %v489, 0.70710677
    %v1288 = vmul.f32 %v623, 0.70710677
    %v1289 = vmul.f32 %v757, 0.70710677
    %v1290 = vmul.f32 %v891, 0.70710677
    %v1291 = vmul.f32 %v491, 0.70710677
    %v1292 = vmul.f32 %v625, 0.70710677
    %v1293 = vmul.f32 %v759, 0.70710677
    %v1294 = vmul.f32 %v893, 0.70710677
    %v1295 = vmul.f32 %v1095, %v1095
    %v1296 = vmin.f32 16.0, %v1295
    %v1297 = vmul.f32 %v1296, 2.1237322e-06
    %v1298 = vadd.f32 %v1297, 0.00028619796
    %v1299 = vmul.f32 %v1296, %v1298
    %v1300 = vadd.f32 %v1299, 0.0036580483
    %v1301 = vmul.f32 %v1296, %v1300
    %v1302 = vadd.f32 %v1301, 0.05243302
    %v1303 = vmul.f32 %v1296, %v1302
    %v1304 = vadd.f32 %v1303, 0.18741608
    %v1305 = vmul.f32 %v1296, %v1304
    %v1306 = vadd.f32 %v1305, 1.1283791
    %v1307 = vmul.f32 %v1095, %v1306
    %v1308 = vmul.f32 %v1296, 3.8918573e-05
    %v1309 = vadd.f32 %v1308, 0.001143296
    %v1310 = vmul.f32 %v1296, %v1309
    %v1311 = vadd.f32 %v1310, 0.014752088
    %v1312 = vmul.f32 %v1296, %v1311
    %v1313 = vadd.f32 %v1312, 0.112945676
    %v1314 = vmul.f32 %v1296, %v1313
    %v1315 = vadd.f32 %v1314, 0.4994258
    %v1316 = vmul.f32 %v1296, %v1315
    %v1317 = vadd.f32 %v1316, 1.0
    %v1318 = vrcp.pop %v1317
    %v1319 = vmul.f32 %v1317, %v1318
    %v1320 = vsub.f32 1.0, %v1319
    %v1321 = vmul.f32 %v1318, %v1320
    %v1322 = vadd.f32 %v1318, %v1321
    %vm1323 = vweird.f32 %v1317
    %vm1324 = vweird.f32 %v1318
    %vm1325 = vmor %vm1323, %vm1324
    %v1326 = vsel %vm1325, %v1318, %v1322
    %v1327 = vand.u32 2147483647, %v1317
    %vm1328 = vcmp.eq.f32.partialorder %v1327, 8.507059e+37
    %v1329 = vand.u32 %v1317, 2147483648
    %v1330 = vor.u32 1.1754944e-38, %v1329
    %v1331 = vsel %vm1328, %v1330, %v1326
    %v1332 = vmul.f32 %v1307, %v1331
    %v1333 = vmin.f32 %v1332, 1.0
    %v1334 = vmax.f32 %v1333, -1.0
    %v1335 = vmul.f32 %v1096, %v1096
    %v1336 = vmin.f32 16.0, %v1335
    %v1337 = vmul.f32 %v1336, 2.1237322e-06
    %v1338 = vadd.f32 %v1337, 0.00028619796
    %v1339 = vmul.f32 %v1336, %v1338
    %v1340 = vadd.f32 %v1339, 0.0036580483
    %v1341 = vmul.f32 %v1336, %v1340
    %v1342 = vadd.f32 %v1341, 0.05243302
    %v1343 = vmul.f32 %v1336, %v1342
    %v1344 = vadd.f32 %v1343, 0.18741608
    %v1345 = vmul.f32 %v1336, %v1344
    %v1346 = vadd.f32 %v1345, 1.1283791
    %v1347 = vmul.f32 %v1096, %v1346
    %v1348 = vmul.f32 %v1336, 3.8918573e-05
    %v1349 = vadd.f32 %v1348, 0.001143296
    %v1350 = vmul.f32 %v1336, %v1349
    %v1351 = vadd.f32 %v1350, 0.014752088
    %v1352 = vmul.f32 %v1336, %v1351
    %v1353 = vadd.f32 %v1352, 0.112945676
    %v1354 = vmul.f32 %v1336, %v1353
    %v1355 = vadd.f32 %v1354, 0.4994258
    %v1356 = vmul.f32 %v1336, %v1355
    %v1357 = vadd.f32 %v1356, 1.0
    %v1358 = vrcp.pop %v1357
    %v1359 = vmul.f32 %v1357, %v1358
    %v1360 = vsub.f32 1.0, %v1359
    %v1361 = vmul.f32 %v1358, %v1360
    %v1362 = vadd.f32 %v1358, %v1361
    %vm1363 = vweird.f32 %v1357
    %vm1364 = vweird.f32 %v1358
    %vm1365 = vmor %vm1363, %vm1364
    %v1366 = vsel %vm1365, %v1358, %v1362
    %v1367 = vand.u32 2147483647, %v1357
    %vm1368 = vcmp.eq.f32.partialorder %v1367, 8.507059e+37
    %v1369 = vand.u32 %v1357, 2147483648
    %v1370 = vor.u32 1.1754944e-38, %v1369
    %v1371 = vsel %vm1368, %v1370, %v1366
    %v1372 = vmul.f32 %v1347, %v1371
    %v1373 = vmin.f32 %v1372, 1.0
    %v1374 = vmax.f32 %v1373, -1.0
    %v1375 = vmul.f32 %v1097, %v1097
    %v1376 = vmin.f32 16.0, %v1375
    %v1377 = vmul.f32 %v1376, 2.1237322e-06
    %v1378 = vadd.f32 %v1377, 0.00028619796
    %v1379 = vmul.f32 %v1376, %v1378
    %v1380 = vadd.f32 %v1379, 0.0036580483
    %v1381 = vmul.f32 %v1376, %v1380
    %v1382 = vadd.f32 %v1381, 0.05243302
    %v1383 = vmul.f32 %v1376, %v1382
    %v1384 = vadd.f32 %v1383, 0.18741608
    %v1385 = vmul.f32 %v1376, %v1384
    %v1386 = vadd.f32 %v1385, 1.1283791
    %v1387 = vmul.f32 %v1097, %v1386
    %v1388 = vmul.f32 %v1376, 3.8918573e-05
    %v1389 = vadd.f32 %v1388, 0.001143296
    %v1390 = vmul.f32 %v1376, %v1389
    %v1391 = vadd.f32 %v1390, 0.014752088
    %v1392 = vmul.f32 %v1376, %v1391
    %v1393 = vadd.f32 %v1392, 0.112945676
    %v1394 = vmul.f32 %v1376, %v1393
    %v1395 = vadd.f32 %v1394, 0.4994258
    %v1396 = vmul.f32 %v1376, %v1395
    %v1397 = vadd.f32 %v1396, 1.0
    %v1398 = vrcp.pop %v1397
    %v1399 = vmul.f32 %v1397, %v1398
    %v1400 = vsub.f32 1.0, %v1399
    %v1401 = vmul.f32 %v1398, %v1400
    %v1402 = vadd.f32 %v1398, %v1401
    %vm1403 = vweird.f32 %v1397
    %vm1404 = vweird.f32 %v1398
    %vm1405 = vmor %vm1403, %vm1404
    %v1406 = vsel %vm1405, %v1398, %v1402
    %v1407 = vand.u32 2147483647, %v1397
    %vm1408 = vcmp.eq.f32.partialorder %v1407, 8.507059e+37
    %v1409 = vand.u32 %v1397, 2147483648
    %v1410 = vor.u32 1.1754944e-38, %v1409
    %v1411 = vsel %vm1408, %v1410, %v1406
    %v1412 = vmul.f32 %v1387, %v1411
    %v1413 = vmin.f32 %v1412, 1.0
    %v1414 = vmax.f32 %v1413, -1.0
    %v1415 = vmul.f32 %v1098, %v1098
    %v1416 = vmin.f32 16.0, %v1415
    %v1417 = vmul.f32 %v1416, 2.1237322e-06
    %v1418 = vadd.f32 %v1417, 0.00028619796
    %v1419 = vmul.f32 %v1416, %v1418
    %v1420 = vadd.f32 %v1419, 0.0036580483
    %v1421 = vmul.f32 %v1416, %v1420
    %v1422 = vadd.f32 %v1421, 0.05243302
    %v1423 = vmul.f32 %v1416, %v1422
    %v1424 = vadd.f32 %v1423, 0.18741608
    %v1425 = vmul.f32 %v1416, %v1424
    %v1426 = vadd.f32 %v1425, 1.1283791
    %v1427 = vmul.f32 %v1098, %v1426
    %v1428 = vmul.f32 %v1416, 3.8918573e-05
    %v1429 = vadd.f32 %v1428, 0.001143296
    %v1430 = vmul.f32 %v1416, %v1429
    %v1431 = vadd.f32 %v1430, 0.014752088
    %v1432 = vmul.f32 %v1416, %v1431
    %v1433 = vadd.f32 %v1432, 0.112945676
    %v1434 = vmul.f32 %v1416, %v1433
    %v1435 = vadd.f32 %v1434, 0.4994258
    %v1436 = vmul.f32 %v1416, %v1435
    %v1437 = vadd.f32 %v1436, 1.0
    %v1438 = vrcp.pop %v1437
    %v1439 = vmul.f32 %v1437, %v1438
    %v1440 = vsub.f32 1.0, %v1439
    %v1441 = vmul.f32 %v1438, %v1440
    %v1442 = vadd.f32 %v1438, %v1441
    %vm1443 = vweird.f32 %v1437
    %vm1444 = vweird.f32 %v1438
    %vm1445 = vmor %vm1443, %vm1444
    %v1446 = vsel %vm1445, %v1438, %v1442
    %v1447 = vand.u32 2147483647, %v1437
    %vm1448 = vcmp.eq.f32.partialorder %v1447, 8.507059e+37
    %v1449 = vand.u32 %v1437, 2147483648
    %v1450 = vor.u32 1.1754944e-38, %v1449
    %v1451 = vsel %vm1448, %v1450, %v1446
    %v1452 = vmul.f32 %v1427, %v1451
    %v1453 = vmin.f32 %v1452, 1.0
    %v1454 = vmax.f32 %v1453, -1.0
    %v1455 = vmul.f32 %v1099, %v1099
    %v1456 = vmin.f32 16.0, %v1455
    %v1457 = vmul.f32 %v1456, 2.1237322e-06
    %v1458 = vadd.f32 %v1457, 0.00028619796
    %v1459 = vmul.f32 %v1456, %v1458
    %v1460 = vadd.f32 %v1459, 0.0036580483
    %v1461 = vmul.f32 %v1456, %v1460
    %v1462 = vadd.f32 %v1461, 0.05243302
    %v1463 = vmul.f32 %v1456, %v1462
    %v1464 = vadd.f32 %v1463, 0.18741608
    %v1465 = vmul.f32 %v1456, %v1464
    %v1466 = vadd.f32 %v1465, 1.1283791
    %v1467 = vmul.f32 %v1099, %v1466
    %v1468 = vmul.f32 %v1456, 3.8918573e-05
    %v1469 = vadd.f32 %v1468, 0.001143296
    %v1470 = vmul.f32 %v1456, %v1469
    %v1471 = vadd.f32 %v1470, 0.014752088
    %v1472 = vmul.f32 %v1456, %v1471
    %v1473 = vadd.f32 %v1472, 0.112945676
    %v1474 = vmul.f32 %v1456, %v1473
    %v1475 = vadd.f32 %v1474, 0.4994258
    %v1476 = vmul.f32 %v1456, %v1475
    %v1477 = vadd.f32 %v1476, 1.0
    %v1478 = vrcp.pop %v1477
    %v1479 = vmul.f32 %v1477, %v1478
    %v1480 = vsub.f32 1.0, %v1479
    %v1481 = vmul.f32 %v1478, %v1480
    %v1482 = vadd.f32 %v1478, %v1481
    %vm1483 = vweird.f32 %v1477
    %vm1484 = vweird.f32 %v1478
    %vm1485 = vmor %vm1483, %vm1484
    %v1486 = vsel %vm1485, %v1478, %v1482
    %v1487 = vand.u32 2147483647, %v1477
    %vm1488 = vcmp.eq.f32.partialorder %v1487, 8.507059e+37
    %v1489 = vand.u32 %v1477, 2147483648
    %v1490 = vor.u32 1.1754944e-38, %v1489
    %v1491 = vsel %vm1488, %v1490, %v1486
    %v1492 = vmul.f32 %v1467, %v1491
    %v1493 = vmin.f32 %v1492, 1.0
    %v1494 = vmax.f32 %v1493, -1.0
    %v1495 = vmul.f32 %v1100, %v1100
    %v1496 = vmin.f32 16.0, %v1495
    %v1497 = vmul.f32 %v1496, 2.1237322e-06
    %v1498 = vadd.f32 %v1497, 0.00028619796
    %v1499 = vmul.f32 %v1496, %v1498
    %v1500 = vadd.f32 %v1499, 0.0036580483
    %v1501 = vmul.f32 %v1496, %v1500
    %v1502 = vadd.f32 %v1501, 0.05243302
    %v1503 = vmul.f32 %v1496, %v1502
    %v1504 = vadd.f32 %v1503, 0.18741608
    %v1505 = vmul.f32 %v1496, %v1504
    %v1506 = vadd.f32 %v1505, 1.1283791
    %v1507 = vmul.f32 %v1100, %v1506
    %v1508 = vmul.f32 %v1496, 3.8918573e-05
    %v1509 = vadd.f32 %v1508, 0.001143296
    %v1510 = vmul.f32 %v1496, %v1509
    %v1511 = vadd.f32 %v1510, 0.014752088
    %v1512 = vmul.f32 %v1496, %v1511
    %v1513 = vadd.f32 %v1512, 0.112945676
    %v1514 = vmul.f32 %v1496, %v1513
    %v1515 = vadd.f32 %v1514, 0.4994258
    %v1516 = vmul.f32 %v1496, %v1515
    %v1517 = vadd.f32 %v1516, 1.0
    %v1518 = vrcp.pop %v1517
    %v1519 = vmul.f32 %v1517, %v1518
    %v1520 = vsub.f32 1.0, %v1519
    %v1521 = vmul.f32 %v1518, %v1520
    %v1522 = vadd.f32 %v1518, %v1521
    %vm1523 = vweird.f32 %v1517
    %vm1524 = vweird.f32 %v1518
    %vm1525 = vmor %vm1523, %vm1524
    %v1526 = vsel %vm1525, %v1518, %v1522
    %v1527 = vand.u32 2147483647, %v1517
    %vm1528 = vcmp.eq.f32.partialorder %v1527, 8.507059e+37
    %v1529 = vand.u32 %v1517, 2147483648
    %v1530 = vor.u32 1.1754944e-38, %v1529
    %v1531 = vsel %vm1528, %v1530, %v1526
    %v1532 = vmul.f32 %v1507, %v1531
    %v1533 = vmin.f32 %v1532, 1.0
    %v1534 = vmax.f32 %v1533, -1.0
    %v1535 = vmul.f32 %v1101, %v1101
    %v1536 = vmin.f32 16.0, %v1535
    %v1537 = vmul.f32 %v1536, 2.1237322e-06
    %v1538 = vadd.f32 %v1537, 0.00028619796
    %v1539 = vmul.f32 %v1536, %v1538
    %v1540 = vadd.f32 %v1539, 0.0036580483
    %v1541 = vmul.f32 %v1536, %v1540
    %v1542 = vadd.f32 %v1541, 0.05243302
    %v1543 = vmul.f32 %v1536, %v1542
    %v1544 = vadd.f32 %v1543, 0.18741608
    %v1545 = vmul.f32 %v1536, %v1544
    %v1546 = vadd.f32 %v1545, 1.1283791
    %v1547 = vmul.f32 %v1101, %v1546
    %v1548 = vmul.f32 %v1536, 3.8918573e-05
    %v1549 = vadd.f32 %v1548, 0.001143296
    %v1550 = vmul.f32 %v1536, %v1549
    %v1551 = vadd.f32 %v1550, 0.014752088
    %v1552 = vmul.f32 %v1536, %v1551
    %v1553 = vadd.f32 %v1552, 0.112945676
    %v1554 = vmul.f32 %v1536, %v1553
    %v1555 = vadd.f32 %v1554, 0.4994258
    %v1556 = vmul.f32 %v1536, %v1555
    %v1557 = vadd.f32 %v1556, 1.0
    %v1558 = vrcp.pop %v1557
    %v1559 = vmul.f32 %v1557, %v1558
    %v1560 = vsub.f32 1.0, %v1559
    %v1561 = vmul.f32 %v1558, %v1560
    %v1562 = vadd.f32 %v1558, %v1561
    %vm1563 = vweird.f32 %v1557
    %vm1564 = vweird.f32 %v1558
    %vm1565 = vmor %vm1563, %vm1564
    %v1566 = vsel %vm1565, %v1558, %v1562
    %v1567 = vand.u32 2147483647, %v1557
    %vm1568 = vcmp.eq.f32.partialorder %v1567, 8.507059e+37
    %v1569 = vand.u32 %v1557, 2147483648
    %v1570 = vor.u32 1.1754944e-38, %v1569
    %v1571 = vsel %vm1568, %v1570, %v1566
    %v1572 = vmul.f32 %v1547, %v1571
    %v1573 = vmin.f32 %v1572, 1.0
    %v1574 = vmax.f32 %v1573, -1.0
    %v1575 = vmul.f32 %v1102, %v1102
    %v1576 = vmin.f32 16.0, %v1575
    %v1577 = vmul.f32 %v1576, 2.1237322e-06
    %v1578 = vadd.f32 %v1577, 0.00028619796
    %v1579 = vmul.f32 %v1576, %v1578
    %v1580 = vadd.f32 %v1579, 0.0036580483
    %v1581 = vmul.f32 %v1576, %v1580
    %v1582 = vadd.f32 %v1581, 0.05243302
    %v1583 = vmul.f32 %v1576, %v1582
    %v1584 = vadd.f32 %v1583, 0.18741608
    %v1585 = vmul.f32 %v1576, %v1584
    %v1586 = vadd.f32 %v1585, 1.1283791
    %v1587 = vmul.f32 %v1102, %v1586
    %v1588 = vmul.f32 %v1576, 3.8918573e-05
    %v1589 = vadd.f32 %v1588, 0.001143296
    %v1590 = vmul.f32 %v1576, %v1589
    %v1591 = vadd.f32 %v1590, 0.014752088
    %v1592 = vmul.f32 %v1576, %v1591
    %v1593 = vadd.f32 %v1592, 0.112945676
    %v1594 = vmul.f32 %v1576, %v1593
    %v1595 = vadd.f32 %v1594, 0.4994258
    %v1596 = vmul.f32 %v1576, %v1595
    %v1597 = vadd.f32 %v1596, 1.0
    %v1598 = vrcp.pop %v1597
    %v1599 = vmul.f32 %v1597, %v1598
    %v1600 = vsub.f32 1.0, %v1599
    %v1601 = vmul.f32 %v1598, %v1600
    %v1602 = vadd.f32 %v1598, %v1601
    %vm1603 = vweird.f32 %v1597
    %vm1604 = vweird.f32 %v1598
    %vm1605 = vmor %vm1603, %vm1604
    %v1606 = vsel %vm1605, %v1598, %v1602
    %v1607 = vand.u32 2147483647, %v1597
    %vm1608 = vcmp.eq.f32.partialorder %v1607, 8.507059e+37
    %v1609 = vand.u32 %v1597, 2147483648
    %v1610 = vor.u32 1.1754944e-38, %v1609
    %v1611 = vsel %vm1608, %v1610, %v1606
    %v1612 = vmul.f32 %v1587, %v1611
    %v1613 = vmin.f32 %v1612, 1.0
    %v1614 = vmax.f32 %v1613, -1.0
    %v1615 = vmul.f32 %v1103, %v1103
    %v1616 = vmin.f32 16.0, %v1615
    %v1617 = vmul.f32 %v1616, 2.1237322e-06
    %v1618 = vadd.f32 %v1617, 0.00028619796
    %v1619 = vmul.f32 %v1616, %v1618
    %v1620 = vadd.f32 %v1619, 0.0036580483
    %v1621 = vmul.f32 %v1616, %v1620
    %v1622 = vadd.f32 %v1621, 0.05243302
    %v1623 = vmul.f32 %v1616, %v1622
    %v1624 = vadd.f32 %v1623, 0.18741608
    %v1625 = vmul.f32 %v1616, %v1624
    %v1626 = vadd.f32 %v1625, 1.1283791
    %v1627 = vmul.f32 %v1103, %v1626
    %v1628 = vmul.f32 %v1616, 3.8918573e-05
    %v1629 = vadd.f32 %v1628, 0.001143296
    %v1630 = vmul.f32 %v1616, %v1629
    %v1631 = vadd.f32 %v1630, 0.014752088
    %v1632 = vmul.f32 %v1616, %v1631
    %v1633 = vadd.f32 %v1632, 0.112945676
    %v1634 = vmul.f32 %v1616, %v1633
    %v1635 = vadd.f32 %v1634, 0.4994258
    %v1636 = vmul.f32 %v1616, %v1635
    %v1637 = vadd.f32 %v1636, 1.0
    %v1638 = vrcp.pop %v1637
    %v1639 = vmul.f32 %v1637, %v1638
    %v1640 = vsub.f32 1.0, %v1639
    %v1641 = vmul.f32 %v1638, %v1640
    %v1642 = vadd.f32 %v1638, %v1641
    %vm1643 = vweird.f32 %v1637
    %vm1644 = vweird.f32 %v1638
    %vm1645 = vmor %vm1643, %vm1644
    %v1646 = vsel %vm1645, %v1638, %v1642
    %v1647 = vand.u32 2147483647, %v1637
    %vm1648 = vcmp.eq.f32.partialorder %v1647, 8.507059e+37
    %v1649 = vand.u32 %v1637, 2147483648
    %v1650 = vor.u32 1.1754944e-38, %v1649
    %v1651 = vsel %vm1648, %v1650, %v1646
    %v1652 = vmul.f32 %v1627, %v1651
    %v1653 = vmin.f32 %v1652, 1.0
    %v1654 = vmax.f32 %v1653, -1.0
    %v1655 = vmul.f32 %v1104, %v1104
    %v1656 = vmin.f32 16.0, %v1655
    %v1657 = vmul.f32 %v1656, 2.1237322e-06
    %v1658 = vadd.f32 %v1657, 0.00028619796
    %v1659 = vmul.f32 %v1656, %v1658
    %v1660 = vadd.f32 %v1659, 0.0036580483
    %v1661 = vmul.f32 %v1656, %v1660
    %v1662 = vadd.f32 %v1661, 0.05243302
    %v1663 = vmul.f32 %v1656, %v1662
    %v1664 = vadd.f32 %v1663, 0.18741608
    %v1665 = vmul.f32 %v1656, %v1664
    %v1666 = vadd.f32 %v1665, 1.1283791
    %v1667 = vmul.f32 %v1104, %v1666
    %v1668 = vmul.f32 %v1656, 3.8918573e-05
    %v1669 = vadd.f32 %v1668, 0.001143296
    %v1670 = vmul.f32 %v1656, %v1669
    %v1671 = vadd.f32 %v1670, 0.014752088
    %v1672 = vmul.f32 %v1656, %v1671
    %v1673 = vadd.f32 %v1672, 0.112945676
    %v1674 = vmul.f32 %v1656, %v1673
    %v1675 = vadd.f32 %v1674, 0.4994258
    %v1676 = vmul.f32 %v1656, %v1675
    %v1677 = vadd.f32 %v1676, 1.0
    %v1678 = vrcp.pop %v1677
    %v1679 = vmul.f32 %v1677, %v1678
    %v1680 = vsub.f32 1.0, %v1679
    %v1681 = vmul.f32 %v1678, %v1680
    %v1682 = vadd.f32 %v1678, %v1681
    %vm1683 = vweird.f32 %v1677
    %vm1684 = vweird.f32 %v1678
    %vm1685 = vmor %vm1683, %vm1684
    %v1686 = vsel %vm1685, %v1678, %v1682
    %v1687 = vand.u32 2147483647, %v1677
    %vm1688 = vcmp.eq.f32.partialorder %v1687, 8.507059e+37
    %v1689 = vand.u32 %v1677, 2147483648
    %v1690 = vor.u32 1.1754944e-38, %v1689
    %v1691 = vsel %vm1688, %v1690, %v1686
    %v1692 = vmul.f32 %v1667, %v1691
    %v1693 = vmin.f32 %v1692, 1.0
    %v1694 = vmax.f32 %v1693, -1.0
    %v1695 = vmul.f32 %v1105, %v1105
    %v1696 = vmin.f32 16.0, %v1695
    %v1697 = vmul.f32 %v1696, 2.1237322e-06
    %v1698 = vadd.f32 %v1697, 0.00028619796
    %v1699 = vmul.f32 %v1696, %v1698
    %v1700 = vadd.f32 %v1699, 0.0036580483
    %v1701 = vmul.f32 %v1696, %v1700
    %v1702 = vadd.f32 %v1701, 0.05243302
    %v1703 = vmul.f32 %v1696, %v1702
    %v1704 = vadd.f32 %v1703, 0.18741608
    %v1705 = vmul.f32 %v1696, %v1704
    %v1706 = vadd.f32 %v1705, 1.1283791
    %v1707 = vmul.f32 %v1105, %v1706
    %v1708 = vmul.f32 %v1696, 3.8918573e-05
    %v1709 = vadd.f32 %v1708, 0.001143296
    %v1710 = vmul.f32 %v1696, %v1709
    %v1711 = vadd.f32 %v1710, 0.014752088
    %v1712 = vmul.f32 %v1696, %v1711
    %v1713 = vadd.f32 %v1712, 0.112945676
    %v1714 = vmul.f32 %v1696, %v1713
    %v1715 = vadd.f32 %v1714, 0.4994258
    %v1716 = vmul.f32 %v1696, %v1715
    %v1717 = vadd.f32 %v1716, 1.0
    %v1718 = vrcp.pop %v1717
    %v1719 = vmul.f32 %v1717, %v1718
    %v1720 = vsub.f32 1.0, %v1719
    %v1721 = vmul.f32 %v1718, %v1720
    %v1722 = vadd.f32 %v1718, %v1721
    %vm1723 = vweird.f32 %v1717
    %vm1724 = vweird.f32 %v1718
    %vm1725 = vmor %vm1723, %vm1724
    %v1726 = vsel %vm1725, %v1718, %v1722
    %v1727 = vand.u32 2147483647, %v1717
    %vm1728 = vcmp.eq.f32.partialorder %v1727, 8.507059e+37
    %v1729 = vand.u32 %v1717, 2147483648
    %v1730 = vor.u32 1.1754944e-38, %v1729
    %v1731 = vsel %vm1728, %v1730, %v1726
    %v1732 = vmul.f32 %v1707, %v1731
    %v1733 = vmin.f32 %v1732, 1.0
    %v1734 = vmax.f32 %v1733, -1.0
    %v1735 = vmul.f32 %v1106, %v1106
    %v1736 = vmin.f32 16.0, %v1735
    %v1737 = vmul.f32 %v1736, 2.1237322e-06
    %v1738 = vadd.f32 %v1737, 0.00028619796
    %v1739 = vmul.f32 %v1736, %v1738
    %v1740 = vadd.f32 %v1739, 0.0036580483
    %v1741 = vmul.f32 %v1736, %v1740
    %v1742 = vadd.f32 %v1741, 0.05243302
    %v1743 = vmul.f32 %v1736, %v1742
    %v1744 = vadd.f32 %v1743, 0.18741608
    %v1745 = vmul.f32 %v1736, %v1744
    %v1746 = vadd.f32 %v1745, 1.1283791
    %v1747 = vmul.f32 %v1106, %v1746
    %v1748 = vmul.f32 %v1736, 3.8918573e-05
    %v1749 = vadd.f32 %v1748, 0.001143296
    %v1750 = vmul.f32 %v1736, %v1749
    %v1751 = vadd.f32 %v1750, 0.014752088
    %v1752 = vmul.f32 %v1736, %v1751
    %v1753 = vadd.f32 %v1752, 0.112945676
    %v1754 = vmul.f32 %v1736, %v1753
    %v1755 = vadd.f32 %v1754, 0.4994258
    %v1756 = vmul.f32 %v1736, %v1755
    %v1757 = vadd.f32 %v1756, 1.0
    %v1758 = vrcp.pop %v1757
    %v1759 = vmul.f32 %v1757, %v1758
    %v1760 = vsub.f32 1.0, %v1759
    %v1761 = vmul.f32 %v1758, %v1760
    %v1762 = vadd.f32 %v1758, %v1761
    %vm1763 = vweird.f32 %v1757
    %vm1764 = vweird.f32 %v1758
    %vm1765 = vmor %vm1763, %vm1764
    %v1766 = vsel %vm1765, %v1758, %v1762
    %v1767 = vand.u32 2147483647, %v1757
    %vm1768 = vcmp.eq.f32.partialorder %v1767, 8.507059e+37
    %v1769 = vand.u32 %v1757, 2147483648
    %v1770 = vor.u32 1.1754944e-38, %v1769
    %v1771 = vsel %vm1768, %v1770, %v1766
    %v1772 = vmul.f32 %v1747, %v1771
    %v1773 = vmin.f32 %v1772, 1.0
    %v1774 = vmax.f32 %v1773, -1.0
    %v1775 = vmul.f32 %v1107, %v1107
    %v1776 = vmin.f32 16.0, %v1775
    %v1777 = vmul.f32 %v1776, 2.1237322e-06
    %v1778 = vadd.f32 %v1777, 0.00028619796
    %v1779 = vmul.f32 %v1776, %v1778
    %v1780 = vadd.f32 %v1779, 0.0036580483
    %v1781 = vmul.f32 %v1776, %v1780
    %v1782 = vadd.f32 %v1781, 0.05243302
    %v1783 = vmul.f32 %v1776, %v1782
    %v1784 = vadd.f32 %v1783, 0.18741608
    %v1785 = vmul.f32 %v1776, %v1784
    %v1786 = vadd.f32 %v1785, 1.1283791
    %v1787 = vmul.f32 %v1107, %v1786
    %v1788 = vmul.f32 %v1776, 3.8918573e-05
    %v1789 = vadd.f32 %v1788, 0.001143296
    %v1790 = vmul.f32 %v1776, %v1789
    %v1791 = vadd.f32 %v1790, 0.014752088
    %v1792 = vmul.f32 %v1776, %v1791
    %v1793 = vadd.f32 %v1792, 0.112945676
    %v1794 = vmul.f32 %v1776, %v1793
    %v1795 = vadd.f32 %v1794, 0.4994258
    %v1796 = vmul.f32 %v1776, %v1795
    %v1797 = vadd.f32 %v1796, 1.0
    %v1798 = vrcp.pop %v1797
    %v1799 = vmul.f32 %v1797, %v1798
    %v1800 = vsub.f32 1.0, %v1799
    %v1801 = vmul.f32 %v1798, %v1800
    %v1802 = vadd.f32 %v1798, %v1801
    %vm1803 = vweird.f32 %v1797
    %vm1804 = vweird.f32 %v1798
    %vm1805 = vmor %vm1803, %vm1804
    %v1806 = vsel %vm1805, %v1798, %v1802
    %v1807 = vand.u32 2147483647, %v1797
    %vm1808 = vcmp.eq.f32.partialorder %v1807, 8.507059e+37
    %v1809 = vand.u32 %v1797, 2147483648
    %v1810 = vor.u32 1.1754944e-38, %v1809
    %v1811 = vsel %vm1808, %v1810, %v1806
    %v1812 = vmul.f32 %v1787, %v1811
    %v1813 = vmin.f32 %v1812, 1.0
    %v1814 = vmax.f32 %v1813, -1.0
    %v1815 = vmul.f32 %v1108, %v1108
    %v1816 = vmin.f32 16.0, %v1815
    %v1817 = vmul.f32 %v1816, 2.1237322e-06
    %v1818 = vadd.f32 %v1817, 0.00028619796
    %v1819 = vmul.f32 %v1816, %v1818
    %v1820 = vadd.f32 %v1819, 0.0036580483
    %v1821 = vmul.f32 %v1816, %v1820
    %v1822 = vadd.f32 %v1821, 0.05243302
    %v1823 = vmul.f32 %v1816, %v1822
    %v1824 = vadd.f32 %v1823, 0.18741608
    %v1825 = vmul.f32 %v1816, %v1824
    %v1826 = vadd.f32 %v1825, 1.1283791
    %v1827 = vmul.f32 %v1108, %v1826
    %v1828 = vmul.f32 %v1816, 3.8918573e-05
    %v1829 = vadd.f32 %v1828, 0.001143296
    %v1830 = vmul.f32 %v1816, %v1829
    %v1831 = vadd.f32 %v1830, 0.014752088
    %v1832 = vmul.f32 %v1816, %v1831
    %v1833 = vadd.f32 %v1832, 0.112945676
    %v1834 = vmul.f32 %v1816, %v1833
    %v1835 = vadd.f32 %v1834, 0.4994258
    %v1836 = vmul.f32 %v1816, %v1835
    %v1837 = vadd.f32 %v1836, 1.0
    %v1838 = vrcp.pop %v1837
    %v1839 = vmul.f32 %v1837, %v1838
    %v1840 = vsub.f32 1.0, %v1839
    %v1841 = vmul.f32 %v1838, %v1840
    %v1842 = vadd.f32 %v1838, %v1841
    %vm1843 = vweird.f32 %v1837
    %vm1844 = vweird.f32 %v1838
    %vm1845 = vmor %vm1843, %vm1844
    %v1846 = vsel %vm1845, %v1838, %v1842
    %v1847 = vand.u32 2147483647, %v1837
    %vm1848 = vcmp.eq.f32.partialorder %v1847, 8.507059e+37
    %v1849 = vand.u32 %v1837, 2147483648
    %v1850 = vor.u32 1.1754944e-38, %v1849
    %v1851 = vsel %vm1848, %v1850, %v1846
    %v1852 = vmul.f32 %v1827, %v1851
    %v1853 = vmin.f32 %v1852, 1.0
    %v1854 = vmax.f32 %v1853, -1.0
    %v1855 = vmul.f32 %v1109, %v1109
    %v1856 = vmin.f32 16.0, %v1855
    %v1857 = vmul.f32 %v1856, 2.1237322e-06
    %v1858 = vadd.f32 %v1857, 0.00028619796
    %v1859 = vmul.f32 %v1856, %v1858
    %v1860 = vadd.f32 %v1859, 0.0036580483
    %v1861 = vmul.f32 %v1856, %v1860
    %v1862 = vadd.f32 %v1861, 0.05243302
    %v1863 = vmul.f32 %v1856, %v1862
    %v1864 = vadd.f32 %v1863, 0.18741608
    %v1865 = vmul.f32 %v1856, %v1864
    %v1866 = vadd.f32 %v1865, 1.1283791
    %v1867 = vmul.f32 %v1109, %v1866
    %v1868 = vmul.f32 %v1856, 3.8918573e-05
    %v1869 = vadd.f32 %v1868, 0.001143296
    %v1870 = vmul.f32 %v1856, %v1869
    %v1871 = vadd.f32 %v1870, 0.014752088
    %v1872 = vmul.f32 %v1856, %v1871
    %v1873 = vadd.f32 %v1872, 0.112945676
    %v1874 = vmul.f32 %v1856, %v1873
    %v1875 = vadd.f32 %v1874, 0.4994258
    %v1876 = vmul.f32 %v1856, %v1875
    %v1877 = vadd.f32 %v1876, 1.0
    %v1878 = vrcp.pop %v1877
    %v1879 = vmul.f32 %v1877, %v1878
    %v1880 = vsub.f32 1.0, %v1879
    %v1881 = vmul.f32 %v1878, %v1880
    %v1882 = vadd.f32 %v1878, %v1881
    %vm1883 = vweird.f32 %v1877
    %vm1884 = vweird.f32 %v1878
    %vm1885 = vmor %vm1883, %vm1884
    %v1886 = vsel %vm1885, %v1878, %v1882
    %v1887 = vand.u32 2147483647, %v1877
    %vm1888 = vcmp.eq.f32.partialorder %v1887, 8.507059e+37
    %v1889 = vand.u32 %v1877, 2147483648
    %v1890 = vor.u32 1.1754944e-38, %v1889
    %v1891 = vsel %vm1888, %v1890, %v1886
    %v1892 = vmul.f32 %v1867, %v1891
    %v1893 = vmin.f32 %v1892, 1.0
    %v1894 = vmax.f32 %v1893, -1.0
    %v1895 = vmul.f32 %v1110, %v1110
    %v1896 = vmin.f32 16.0, %v1895
    %v1897 = vmul.f32 %v1896, 2.1237322e-06
    %v1898 = vadd.f32 %v1897, 0.00028619796
    %v1899 = vmul.f32 %v1896, %v1898
    %v1900 = vadd.f32 %v1899, 0.0036580483
    %v1901 = vmul.f32 %v1896, %v1900
    %v1902 = vadd.f32 %v1901, 0.05243302
    %v1903 = vmul.f32 %v1896, %v1902
    %v1904 = vadd.f32 %v1903, 0.18741608
    %v1905 = vmul.f32 %v1896, %v1904
    %v1906 = vadd.f32 %v1905, 1.1283791
    %v1907 = vmul.f32 %v1110, %v1906
    %v1908 = vmul.f32 %v1896, 3.8918573e-05
    %v1909 = vadd.f32 %v1908, 0.001143296
    %v1910 = vmul.f32 %v1896, %v1909
    %v1911 = vadd.f32 %v1910, 0.014752088
    %v1912 = vmul.f32 %v1896, %v1911
    %v1913 = vadd.f32 %v1912, 0.112945676
    %v1914 = vmul.f32 %v1896, %v1913
    %v1915 = vadd.f32 %v1914, 0.4994258
    %v1916 = vmul.f32 %v1896, %v1915
    %v1917 = vadd.f32 %v1916, 1.0
    %v1918 = vrcp.pop %v1917
    %v1919 = vmul.f32 %v1917, %v1918
    %v1920 = vsub.f32 1.0, %v1919
    %v1921 = vmul.f32 %v1918, %v1920
    %v1922 = vadd.f32 %v1918, %v1921
    %vm1923 = vweird.f32 %v1917
    %vm1924 = vweird.f32 %v1918
    %vm1925 = vmor %vm1923, %vm1924
    %v1926 = vsel %vm1925, %v1918, %v1922
    %v1927 = vand.u32 2147483647, %v1917
    %vm1928 = vcmp.eq.f32.partialorder %v1927, 8.507059e+37
    %v1929 = vand.u32 %v1917, 2147483648
    %v1930 = vor.u32 1.1754944e-38, %v1929
    %v1931 = vsel %vm1928, %v1930, %v1926
    %v1932 = vmul.f32 %v1907, %v1931
    %v1933 = vmin.f32 %v1932, 1.0
    %v1934 = vmax.f32 %v1933, -1.0
    %v1935 = vmul.f32 %v1111, %v1111
    %v1936 = vmin.f32 16.0, %v1935
    %v1937 = vmul.f32 %v1936, 2.1237322e-06
    %v1938 = vadd.f32 %v1937, 0.00028619796
    %v1939 = vmul.f32 %v1936, %v1938
    %v1940 = vadd.f32 %v1939, 0.0036580483
    %v1941 = vmul.f32 %v1936, %v1940
    %v1942 = vadd.f32 %v1941, 0.05243302
    %v1943 = vmul.f32 %v1936, %v1942
    %v1944 = vadd.f32 %v1943, 0.18741608
    %v1945 = vmul.f32 %v1936, %v1944
    %v1946 = vadd.f32 %v1945, 1.1283791
    %v1947 = vmul.f32 %v1111, %v1946
    %v1948 = vmul.f32 %v1936, 3.8918573e-05
    %v1949 = vadd.f32 %v1948, 0.001143296
    %v1950 = vmul.f32 %v1936, %v1949
    %v1951 = vadd.f32 %v1950, 0.014752088
    %v1952 = vmul.f32 %v1936, %v1951
    %v1953 = vadd.f32 %v1952, 0.112945676
    %v1954 = vmul.f32 %v1936, %v1953
    %v1955 = vadd.f32 %v1954, 0.4994258
    %v1956 = vmul.f32 %v1936, %v1955
    %v1957 = vadd.f32 %v1956, 1.0
    %v1958 = vrcp.pop %v1957
    %v1959 = vmul.f32 %v1957, %v1958
    %v1960 = vsub.f32 1.0, %v1959
    %v1961 = vmul.f32 %v1958, %v1960
    %v1962 = vadd.f32 %v1958, %v1961
    %vm1963 = vweird.f32 %v1957
    %vm1964 = vweird.f32 %v1958
    %vm1965 = vmor %vm1963, %vm1964
    %v1966 = vsel %vm1965, %v1958, %v1962
    %v1967 = vand.u32 2147483647, %v1957
    %vm1968 = vcmp.eq.f32.partialorder %v1967, 8.507059e+37
    %v1969 = vand.u32 %v1957, 2147483648
    %v1970 = vor.u32 1.1754944e-38, %v1969
    %v1971 = vsel %vm1968, %v1970, %v1966
    %v1972 = vmul.f32 %v1947, %v1971
    %v1973 = vmin.f32 %v1972, 1.0
    %v1974 = vmax.f32 %v1973, -1.0
    %v1975 = vmul.f32 %v1112, %v1112
    %v1976 = vmin.f32 16.0, %v1975
    %v1977 = vmul.f32 %v1976, 2.1237322e-06
    %v1978 = vadd.f32 %v1977, 0.00028619796
    %v1979 = vmul.f32 %v1976, %v1978
    %v1980 = vadd.f32 %v1979, 0.0036580483
    %v1981 = vmul.f32 %v1976, %v1980
    %v1982 = vadd.f32 %v1981, 0.05243302
    %v1983 = vmul.f32 %v1976, %v1982
    %v1984 = vadd.f32 %v1983, 0.18741608
    %v1985 = vmul.f32 %v1976, %v1984
    %v1986 = vadd.f32 %v1985, 1.1283791
    %v1987 = vmul.f32 %v1112, %v1986
    %v1988 = vmul.f32 %v1976, 3.8918573e-05
    %v1989 = vadd.f32 %v1988, 0.001143296
    %v1990 = vmul.f32 %v1976, %v1989
    %v1991 = vadd.f32 %v1990, 0.014752088
    %v1992 = vmul.f32 %v1976, %v1991
    %v1993 = vadd.f32 %v1992, 0.112945676
    %v1994 = vmul.f32 %v1976, %v1993
    %v1995 = vadd.f32 %v1994, 0.4994258
    %v1996 = vmul.f32 %v1976, %v1995
    %v1997 = vadd.f32 %v1996, 1.0
    %v1998 = vrcp.pop %v1997
    %v1999 = vmul.f32 %v1997, %v1998
    %v2000 = vsub.f32 1.0, %v1999
    %v2001 = vmul.f32 %v1998, %v2000
    %v2002 = vadd.f32 %v1998, %v2001
    %vm2003 = vweird.f32 %v1997
    %vm2004 = vweird.f32 %v1998
    %vm2005 = vmor %vm2003, %vm2004
    %v2006 = vsel %vm2005, %v1998, %v2002
    %v2007 = vand.u32 2147483647, %v1997
    %vm2008 = vcmp.eq.f32.partialorder %v2007, 8.507059e+37
    %v2009 = vand.u32 %v1997, 2147483648
    %v2010 = vor.u32 1.1754944e-38, %v2009
    %v2011 = vsel %vm2008, %v2010, %v2006
    %v2012 = vmul.f32 %v1987, %v2011
    %v2013 = vmin.f32 %v2012, 1.0
    %v2014 = vmax.f32 %v2013, -1.0
    %v2015 = vmul.f32 %v1113, %v1113
    %v2016 = vmin.f32 16.0, %v2015
    %v2017 = vmul.f32 %v2016, 2.1237322e-06
    %v2018 = vadd.f32 %v2017, 0.00028619796
    %v2019 = vmul.f32 %v2016, %v2018
    %v2020 = vadd.f32 %v2019, 0.0036580483
    %v2021 = vmul.f32 %v2016, %v2020
    %v2022 = vadd.f32 %v2021, 0.05243302
    %v2023 = vmul.f32 %v2016, %v2022
    %v2024 = vadd.f32 %v2023, 0.18741608
    %v2025 = vmul.f32 %v2016, %v2024
    %v2026 = vadd.f32 %v2025, 1.1283791
    %v2027 = vmul.f32 %v1113, %v2026
    %v2028 = vmul.f32 %v2016, 3.8918573e-05
    %v2029 = vadd.f32 %v2028, 0.001143296
    %v2030 = vmul.f32 %v2016, %v2029
    %v2031 = vadd.f32 %v2030, 0.014752088
    %v2032 = vmul.f32 %v2016, %v2031
    %v2033 = vadd.f32 %v2032, 0.112945676
    %v2034 = vmul.f32 %v2016, %v2033
    %v2035 = vadd.f32 %v2034, 0.4994258
    %v2036 = vmul.f32 %v2016, %v2035
    %v2037 = vadd.f32 %v2036, 1.0
    %v2038 = vrcp.pop %v2037
    %v2039 = vmul.f32 %v2037, %v2038
    %v2040 = vsub.f32 1.0, %v2039
    %v2041 = vmul.f32 %v2038, %v2040
    %v2042 = vadd.f32 %v2038, %v2041
    %vm2043 = vweird.f32 %v2037
    %vm2044 = vweird.f32 %v2038
    %vm2045 = vmor %vm2043, %vm2044
    %v2046 = vsel %vm2045, %v2038, %v2042
    %v2047 = vand.u32 2147483647, %v2037
    %vm2048 = vcmp.eq.f32.partialorder %v2047, 8.507059e+37
    %v2049 = vand.u32 %v2037, 2147483648
    %v2050 = vor.u32 1.1754944e-38, %v2049
    %v2051 = vsel %vm2048, %v2050, %v2046
    %v2052 = vmul.f32 %v2027, %v2051
    %v2053 = vmin.f32 %v2052, 1.0
    %v2054 = vmax.f32 %v2053, -1.0
    %v2055 = vmul.f32 %v1114, %v1114
    %v2056 = vmin.f32 16.0, %v2055
    %v2057 = vmul.f32 %v2056, 2.1237322e-06
    %v2058 = vadd.f32 %v2057, 0.00028619796
    %v2059 = vmul.f32 %v2056, %v2058
    %v2060 = vadd.f32 %v2059, 0.0036580483
    %v2061 = vmul.f32 %v2056, %v2060
    %v2062 = vadd.f32 %v2061, 0.05243302
    %v2063 = vmul.f32 %v2056, %v2062
    %v2064 = vadd.f32 %v2063, 0.18741608
    %v2065 = vmul.f32 %v2056, %v2064
    %v2066 = vadd.f32 %v2065, 1.1283791
    %v2067 = vmul.f32 %v1114, %v2066
    %v2068 = vmul.f32 %v2056, 3.8918573e-05
    %v2069 = vadd.f32 %v2068, 0.001143296
    %v2070 = vmul.f32 %v2056, %v2069
    %v2071 = vadd.f32 %v2070, 0.014752088
    %v2072 = vmul.f32 %v2056, %v2071
    %v2073 = vadd.f32 %v2072, 0.112945676
    %v2074 = vmul.f32 %v2056, %v2073
    %v2075 = vadd.f32 %v2074, 0.4994258
    %v2076 = vmul.f32 %v2056, %v2075
    %v2077 = vadd.f32 %v2076, 1.0
    %v2078 = vrcp.pop %v2077
    %v2079 = vmul.f32 %v2077, %v2078
    %v2080 = vsub.f32 1.0, %v2079
    %v2081 = vmul.f32 %v2078, %v2080
    %v2082 = vadd.f32 %v2078, %v2081
    %vm2083 = vweird.f32 %v2077
    %vm2084 = vweird.f32 %v2078
    %vm2085 = vmor %vm2083, %vm2084
    %v2086 = vsel %vm2085, %v2078, %v2082
    %v2087 = vand.u32 2147483647, %v2077
    %vm2088 = vcmp.eq.f32.partialorder %v2087, 8.507059e+37
    %v2089 = vand.u32 %v2077, 2147483648
    %v2090 = vor.u32 1.1754944e-38, %v2089
    %v2091 = vsel %vm2088, %v2090, %v2086
    %v2092 = vmul.f32 %v2067, %v2091
    %v2093 = vmin.f32 %v2092, 1.0
    %v2094 = vmax.f32 %v2093, -1.0
    %v2095 = vmul.f32 %v1115, %v1115
    %v2096 = vmin.f32 16.0, %v2095
    %v2097 = vmul.f32 %v2096, 2.1237322e-06
    %v2098 = vadd.f32 %v2097, 0.00028619796
    %v2099 = vmul.f32 %v2096, %v2098
    %v2100 = vadd.f32 %v2099, 0.0036580483
    %v2101 = vmul.f32 %v2096, %v2100
    %v2102 = vadd.f32 %v2101, 0.05243302
    %v2103 = vmul.f32 %v2096, %v2102
    %v2104 = vadd.f32 %v2103, 0.18741608
    %v2105 = vmul.f32 %v2096, %v2104
    %v2106 = vadd.f32 %v2105, 1.1283791
    %v2107 = vmul.f32 %v1115, %v2106
    %v2108 = vmul.f32 %v2096, 3.8918573e-05
    %v2109 = vadd.f32 %v2108, 0.001143296
    %v2110 = vmul.f32 %v2096, %v2109
    %v2111 = vadd.f32 %v2110, 0.014752088
    %v2112 = vmul.f32 %v2096, %v2111
    %v2113 = vadd.f32 %v2112, 0.112945676
    %v2114 = vmul.f32 %v2096, %v2113
    %v2115 = vadd.f32 %v2114, 0.4994258
    %v2116 = vmul.f32 %v2096, %v2115
    %v2117 = vadd.f32 %v2116, 1.0
    %v2118 = vrcp.pop %v2117
    %v2119 = vmul.f32 %v2117, %v2118
    %v2120 = vsub.f32 1.0, %v2119
    %v2121 = vmul.f32 %v2118, %v2120
    %v2122 = vadd.f32 %v2118, %v2121
    %vm2123 = vweird.f32 %v2117
    %vm2124 = vweird.f32 %v2118
    %vm2125 = vmor %vm2123, %vm2124
    %v2126 = vsel %vm2125, %v2118, %v2122
    %v2127 = vand.u32 2147483647, %v2117
    %vm2128 = vcmp.eq.f32.partialorder %v2127, 8.507059e+37
    %v2129 = vand.u32 %v2117, 2147483648
    %v2130 = vor.u32 1.1754944e-38, %v2129
    %v2131 = vsel %vm2128, %v2130, %v2126
    %v2132 = vmul.f32 %v2107, %v2131
    %v2133 = vmin.f32 %v2132, 1.0
    %v2134 = vmax.f32 %v2133, -1.0
    %v2135 = vmul.f32 %v1116, %v1116
    %v2136 = vmin.f32 16.0, %v2135
    %v2137 = vmul.f32 %v2136, 2.1237322e-06
    %v2138 = vadd.f32 %v2137, 0.00028619796
    %v2139 = vmul.f32 %v2136, %v2138
    %v2140 = vadd.f32 %v2139, 0.0036580483
    %v2141 = vmul.f32 %v2136, %v2140
    %v2142 = vadd.f32 %v2141, 0.05243302
    %v2143 = vmul.f32 %v2136, %v2142
    %v2144 = vadd.f32 %v2143, 0.18741608
    %v2145 = vmul.f32 %v2136, %v2144
    %v2146 = vadd.f32 %v2145, 1.1283791
    %v2147 = vmul.f32 %v1116, %v2146
    %v2148 = vmul.f32 %v2136, 3.8918573e-05
    %v2149 = vadd.f32 %v2148, 0.001143296
    %v2150 = vmul.f32 %v2136, %v2149
    %v2151 = vadd.f32 %v2150, 0.014752088
    %v2152 = vmul.f32 %v2136, %v2151
    %v2153 = vadd.f32 %v2152, 0.112945676
    %v2154 = vmul.f32 %v2136, %v2153
    %v2155 = vadd.f32 %v2154, 0.4994258
    %v2156 = vmul.f32 %v2136, %v2155
    %v2157 = vadd.f32 %v2156, 1.0
    %v2158 = vrcp.pop %v2157
    %v2159 = vmul.f32 %v2157, %v2158
    %v2160 = vsub.f32 1.0, %v2159
    %v2161 = vmul.f32 %v2158, %v2160
    %v2162 = vadd.f32 %v2158, %v2161
    %vm2163 = vweird.f32 %v2157
    %vm2164 = vweird.f32 %v2158
    %vm2165 = vmor %vm2163, %vm2164
    %v2166 = vsel %vm2165, %v2158, %v2162
    %v2167 = vand.u32 2147483647, %v2157
    %vm2168 = vcmp.eq.f32.partialorder %v2167, 8.507059e+37
    %v2169 = vand.u32 %v2157, 2147483648
    %v2170 = vor.u32 1.1754944e-38, %v2169
    %v2171 = vsel %vm2168, %v2170, %v2166
    %v2172 = vmul.f32 %v2147, %v2171
    %v2173 = vmin.f32 %v2172, 1.0
    %v2174 = vmax.f32 %v2173, -1.0
    %v2175 = vmul.f32 %v1117, %v1117
    %v2176 = vmin.f32 16.0, %v2175
    %v2177 = vmul.f32 %v2176, 2.1237322e-06
    %v2178 = vadd.f32 %v2177, 0.00028619796
    %v2179 = vmul.f32 %v2176, %v2178
    %v2180 = vadd.f32 %v2179, 0.0036580483
    %v2181 = vmul.f32 %v2176, %v2180
    %v2182 = vadd.f32 %v2181, 0.05243302
    %v2183 = vmul.f32 %v2176, %v2182
    %v2184 = vadd.f32 %v2183, 0.18741608
    %v2185 = vmul.f32 %v2176, %v2184
    %v2186 = vadd.f32 %v2185, 1.1283791
    %v2187 = vmul.f32 %v1117, %v2186
    %v2188 = vmul.f32 %v2176, 3.8918573e-05
    %v2189 = vadd.f32 %v2188, 0.001143296
    %v2190 = vmul.f32 %v2176, %v2189
    %v2191 = vadd.f32 %v2190, 0.014752088
    %v2192 = vmul.f32 %v2176, %v2191
    %v2193 = vadd.f32 %v2192, 0.112945676
    %v2194 = vmul.f32 %v2176, %v2193
    %v2195 = vadd.f32 %v2194, 0.4994258
    %v2196 = vmul.f32 %v2176, %v2195
    %v2197 = vadd.f32 %v2196, 1.0
    %v2198 = vrcp.pop %v2197
    %v2199 = vmul.f32 %v2197, %v2198
    %v2200 = vsub.f32 1.0, %v2199
    %v2201 = vmul.f32 %v2198, %v2200
    %v2202 = vadd.f32 %v2198, %v2201
    %vm2203 = vweird.f32 %v2197
    %vm2204 = vweird.f32 %v2198
    %vm2205 = vmor %vm2203, %vm2204
    %v2206 = vsel %vm2205, %v2198, %v2202
    %v2207 = vand.u32 2147483647, %v2197
    %vm2208 = vcmp.eq.f32.partialorder %v2207, 8.507059e+37
    %v2209 = vand.u32 %v2197, 2147483648
    %v2210 = vor.u32 1.1754944e-38, %v2209
    %v2211 = vsel %vm2208, %v2210, %v2206
    %v2212 = vmul.f32 %v2187, %v2211
    %v2213 = vmin.f32 %v2212, 1.0
    %v2214 = vmax.f32 %v2213, -1.0
    %v2215 = vmul.f32 %v1118, %v1118
    %v2216 = vmin.f32 16.0, %v2215
    %v2217 = vmul.f32 %v2216, 2.1237322e-06
    %v2218 = vadd.f32 %v2217, 0.00028619796
    %v2219 = vmul.f32 %v2216, %v2218
    %v2220 = vadd.f32 %v2219, 0.0036580483
    %v2221 = vmul.f32 %v2216, %v2220
    %v2222 = vadd.f32 %v2221, 0.05243302
    %v2223 = vmul.f32 %v2216, %v2222
    %v2224 = vadd.f32 %v2223, 0.18741608
    %v2225 = vmul.f32 %v2216, %v2224
    %v2226 = vadd.f32 %v2225, 1.1283791
    %v2227 = vmul.f32 %v1118, %v2226
    %v2228 = vmul.f32 %v2216, 3.8918573e-05
    %v2229 = vadd.f32 %v2228, 0.001143296
    %v2230 = vmul.f32 %v2216, %v2229
    %v2231 = vadd.f32 %v2230, 0.014752088
    %v2232 = vmul.f32 %v2216, %v2231
    %v2233 = vadd.f32 %v2232, 0.112945676
    %v2234 = vmul.f32 %v2216, %v2233
    %v2235 = vadd.f32 %v2234, 0.4994258
    %v2236 = vmul.f32 %v2216, %v2235
    %v2237 = vadd.f32 %v2236, 1.0
    %v2238 = vrcp.pop %v2237
    %v2239 = vmul.f32 %v2237, %v2238
    %v2240 = vsub.f32 1.0, %v2239
    %v2241 = vmul.f32 %v2238, %v2240
    %v2242 = vadd.f32 %v2238, %v2241
    %vm2243 = vweird.f32 %v2237
    %vm2244 = vweird.f32 %v2238
    %vm2245 = vmor %vm2243, %vm2244
    %v2246 = vsel %vm2245, %v2238, %v2242
    %v2247 = vand.u32 2147483647, %v2237
    %vm2248 = vcmp.eq.f32.partialorder %v2247, 8.507059e+37
    %v2249 = vand.u32 %v2237, 2147483648
    %v2250 = vor.u32 1.1754944e-38, %v2249
    %v2251 = vsel %vm2248, %v2250, %v2246
    %v2252 = vmul.f32 %v2227, %v2251
    %v2253 = vmin.f32 %v2252, 1.0
    %v2254 = vmax.f32 %v2253, -1.0
    %v2255 = vmul.f32 %v1119, %v1119
    %v2256 = vmin.f32 16.0, %v2255
    %v2257 = vmul.f32 %v2256, 2.1237322e-06
    %v2258 = vadd.f32 %v2257, 0.00028619796
    %v2259 = vmul.f32 %v2256, %v2258
    %v2260 = vadd.f32 %v2259, 0.0036580483
    %v2261 = vmul.f32 %v2256, %v2260
    %v2262 = vadd.f32 %v2261, 0.05243302
    %v2263 = vmul.f32 %v2256, %v2262
    %v2264 = vadd.f32 %v2263, 0.18741608
    %v2265 = vmul.f32 %v2256, %v2264
    %v2266 = vadd.f32 %v2265, 1.1283791
    %v2267 = vmul.f32 %v1119, %v2266
    %v2268 = vmul.f32 %v2256, 3.8918573e-05
    %v2269 = vadd.f32 %v2268, 0.001143296
    %v2270 = vmul.f32 %v2256, %v2269
    %v2271 = vadd.f32 %v2270, 0.014752088
    %v2272 = vmul.f32 %v2256, %v2271
    %v2273 = vadd.f32 %v2272, 0.112945676
    %v2274 = vmul.f32 %v2256, %v2273
    %v2275 = vadd.f32 %v2274, 0.4994258
    %v2276 = vmul.f32 %v2256, %v2275
    %v2277 = vadd.f32 %v2276, 1.0
    %v2278 = vrcp.pop %v2277
    %v2279 = vmul.f32 %v2277, %v2278
    %v2280 = vsub.f32 1.0, %v2279
    %v2281 = vmul.f32 %v2278, %v2280
    %v2282 = vadd.f32 %v2278, %v2281
    %vm2283 = vweird.f32 %v2277
    %vm2284 = vweird.f32 %v2278
    %vm2285 = vmor %vm2283, %vm2284
    %v2286 = vsel %vm2285, %v2278, %v2282
    %v2287 = vand.u32 2147483647, %v2277
    %vm2288 = vcmp.eq.f32.partialorder %v2287, 8.507059e+37
    %v2289 = vand.u32 %v2277, 2147483648
    %v2290 = vor.u32 1.1754944e-38, %v2289
    %v2291 = vsel %vm2288, %v2290, %v2286
    %v2292 = vmul.f32 %v2267, %v2291
    %v2293 = vmin.f32 %v2292, 1.0
    %v2294 = vmax.f32 %v2293, -1.0
    %v2295 = vmul.f32 %v1120, %v1120
    %v2296 = vmin.f32 16.0, %v2295
    %v2297 = vmul.f32 %v2296, 2.1237322e-06
    %v2298 = vadd.f32 %v2297, 0.00028619796
    %v2299 = vmul.f32 %v2296, %v2298
    %v2300 = vadd.f32 %v2299, 0.0036580483
    %v2301 = vmul.f32 %v2296, %v2300
    %v2302 = vadd.f32 %v2301, 0.05243302
    %v2303 = vmul.f32 %v2296, %v2302
    %v2304 = vadd.f32 %v2303, 0.18741608
    %v2305 = vmul.f32 %v2296, %v2304
    %v2306 = vadd.f32 %v2305, 1.1283791
    %v2307 = vmul.f32 %v1120, %v2306
    %v2308 = vmul.f32 %v2296, 3.8918573e-05
    %v2309 = vadd.f32 %v2308, 0.001143296
    %v2310 = vmul.f32 %v2296, %v2309
    %v2311 = vadd.f32 %v2310, 0.014752088
    %v2312 = vmul.f32 %v2296, %v2311
    %v2313 = vadd.f32 %v2312, 0.112945676
    %v2314 = vmul.f32 %v2296, %v2313
    %v2315 = vadd.f32 %v2314, 0.4994258
    %v2316 = vmul.f32 %v2296, %v2315
    %v2317 = vadd.f32 %v2316, 1.0
    %v2318 = vrcp.pop %v2317
    %v2319 = vmul.f32 %v2317, %v2318
    %v2320 = vsub.f32 1.0, %v2319
    %v2321 = vmul.f32 %v2318, %v2320
    %v2322 = vadd.f32 %v2318, %v2321
    %vm2323 = vweird.f32 %v2317
    %vm2324 = vweird.f32 %v2318
    %vm2325 = vmor %vm2323, %vm2324
    %v2326 = vsel %vm2325, %v2318, %v2322
    %v2327 = vand.u32 2147483647, %v2317
    %vm2328 = vcmp.eq.f32.partialorder %v2327, 8.507059e+37
    %v2329 = vand.u32 %v2317, 2147483648
    %v2330 = vor.u32 1.1754944e-38, %v2329
    %v2331 = vsel %vm2328, %v2330, %v2326
    %v2332 = vmul.f32 %v2307, %v2331
    %v2333 = vmin.f32 %v2332, 1.0
    %v2334 = vmax.f32 %v2333, -1.0
    %v2335 = vmul.f32 %v1121, %v1121
    %v2336 = vmin.f32 16.0, %v2335
    %v2337 = vmul.f32 %v2336, 2.1237322e-06
    %v2338 = vadd.f32 %v2337, 0.00028619796
    %v2339 = vmul.f32 %v2336, %v2338
    %v2340 = vadd.f32 %v2339, 0.0036580483
    %v2341 = vmul.f32 %v2336, %v2340
    %v2342 = vadd.f32 %v2341, 0.05243302
    %v2343 = vmul.f32 %v2336, %v2342
    %v2344 = vadd.f32 %v2343, 0.18741608
    %v2345 = vmul.f32 %v2336, %v2344
    %v2346 = vadd.f32 %v2345, 1.1283791
    %v2347 = vmul.f32 %v1121, %v2346
    %v2348 = vmul.f32 %v2336, 3.8918573e-05
    %v2349 = vadd.f32 %v2348, 0.001143296
    %v2350 = vmul.f32 %v2336, %v2349
    %v2351 = vadd.f32 %v2350, 0.014752088
    %v2352 = vmul.f32 %v2336, %v2351
    %v2353 = vadd.f32 %v2352, 0.112945676
    %v2354 = vmul.f32 %v2336, %v2353
    %v2355 = vadd.f32 %v2354, 0.4994258
    %v2356 = vmul.f32 %v2336, %v2355
    %v2357 = vadd.f32 %v2356, 1.0
    %v2358 = vrcp.pop %v2357
    %v2359 = vmul.f32 %v2357, %v2358
    %v2360 = vsub.f32 1.0, %v2359
    %v2361 = vmul.f32 %v2358, %v2360
    %v2362 = vadd.f32 %v2358, %v2361
    %vm2363 = vweird.f32 %v2357
    %vm2364 = vweird.f32 %v2358
    %vm2365 = vmor %vm2363, %vm2364
    %v2366 = vsel %vm2365, %v2358, %v2362
    %v2367 = vand.u32 2147483647, %v2357
    %vm2368 = vcmp.eq.f32.partialorder %v2367, 8.507059e+37
    %v2369 = vand.u32 %v2357, 2147483648
    %v2370 = vor.u32 1.1754944e-38, %v2369
    %v2371 = vsel %vm2368, %v2370, %v2366
    %v2372 = vmul.f32 %v2347, %v2371
    %v2373 = vmin.f32 %v2372, 1.0
    %v2374 = vmax.f32 %v2373, -1.0
    %v2375 = vmul.f32 %v1122, %v1122
    %v2376 = vmin.f32 16.0, %v2375
    %v2377 = vmul.f32 %v2376, 2.1237322e-06
    %v2378 = vadd.f32 %v2377, 0.00028619796
    %v2379 = vmul.f32 %v2376, %v2378
    %v2380 = vadd.f32 %v2379, 0.0036580483
    %v2381 = vmul.f32 %v2376, %v2380
    %v2382 = vadd.f32 %v2381, 0.05243302
    %v2383 = vmul.f32 %v2376, %v2382
    %v2384 = vadd.f32 %v2383, 0.18741608
    %v2385 = vmul.f32 %v2376, %v2384
    %v2386 = vadd.f32 %v2385, 1.1283791
    %v2387 = vmul.f32 %v1122, %v2386
    %v2388 = vmul.f32 %v2376, 3.8918573e-05
    %v2389 = vadd.f32 %v2388, 0.001143296
    %v2390 = vmul.f32 %v2376, %v2389
    %v2391 = vadd.f32 %v2390, 0.014752088
    %v2392 = vmul.f32 %v2376, %v2391
    %v2393 = vadd.f32 %v2392, 0.112945676
    %v2394 = vmul.f32 %v2376, %v2393
    %v2395 = vadd.f32 %v2394, 0.4994258
    %v2396 = vmul.f32 %v2376, %v2395
    %v2397 = vadd.f32 %v2396, 1.0
    %v2398 = vrcp.pop %v2397
    %v2399 = vmul.f32 %v2397, %v2398
    %v2400 = vsub.f32 1.0, %v2399
    %v2401 = vmul.f32 %v2398, %v2400
    %v2402 = vadd.f32 %v2398, %v2401
    %vm2403 = vweird.f32 %v2397
    %vm2404 = vweird.f32 %v2398
    %vm2405 = vmor %vm2403, %vm2404
    %v2406 = vsel %vm2405, %v2398, %v2402
    %v2407 = vand.u32 2147483647, %v2397
    %vm2408 = vcmp.eq.f32.partialorder %v2407, 8.507059e+37
    %v2409 = vand.u32 %v2397, 2147483648
    %v2410 = vor.u32 1.1754944e-38, %v2409
    %v2411 = vsel %vm2408, %v2410, %v2406
    %v2412 = vmul.f32 %v2387, %v2411
    %v2413 = vmin.f32 %v2412, 1.0
    %v2414 = vmax.f32 %v2413, -1.0
    %v2415 = vmul.f32 %v1123, %v1123
    %v2416 = vmin.f32 16.0, %v2415
    %v2417 = vmul.f32 %v2416, 2.1237322e-06
    %v2418 = vadd.f32 %v2417, 0.00028619796
    %v2419 = vmul.f32 %v2416, %v2418
    %v2420 = vadd.f32 %v2419, 0.0036580483
    %v2421 = vmul.f32 %v2416, %v2420
    %v2422 = vadd.f32 %v2421, 0.05243302
    %v2423 = vmul.f32 %v2416, %v2422
    %v2424 = vadd.f32 %v2423, 0.18741608
    %v2425 = vmul.f32 %v2416, %v2424
    %v2426 = vadd.f32 %v2425, 1.1283791
    %v2427 = vmul.f32 %v1123, %v2426
    %v2428 = vmul.f32 %v2416, 3.8918573e-05
    %v2429 = vadd.f32 %v2428, 0.001143296
    %v2430 = vmul.f32 %v2416, %v2429
    %v2431 = vadd.f32 %v2430, 0.014752088
    %v2432 = vmul.f32 %v2416, %v2431
    %v2433 = vadd.f32 %v2432, 0.112945676
    %v2434 = vmul.f32 %v2416, %v2433
    %v2435 = vadd.f32 %v2434, 0.4994258
    %v2436 = vmul.f32 %v2416, %v2435
    %v2437 = vadd.f32 %v2436, 1.0
    %v2438 = vrcp.pop %v2437
    %v2439 = vmul.f32 %v2437, %v2438
    %v2440 = vsub.f32 1.0, %v2439
    %v2441 = vmul.f32 %v2438, %v2440
    %v2442 = vadd.f32 %v2438, %v2441
    %vm2443 = vweird.f32 %v2437
    %vm2444 = vweird.f32 %v2438
    %vm2445 = vmor %vm2443, %vm2444
    %v2446 = vsel %vm2445, %v2438, %v2442
    %v2447 = vand.u32 2147483647, %v2437
    %vm2448 = vcmp.eq.f32.partialorder %v2447, 8.507059e+37
    %v2449 = vand.u32 %v2437, 2147483648
    %v2450 = vor.u32 1.1754944e-38, %v2449
    %v2451 = vsel %vm2448, %v2450, %v2446
    %v2452 = vmul.f32 %v2427, %v2451
    %v2453 = vmin.f32 %v2452, 1.0
    %v2454 = vmax.f32 %v2453, -1.0
    %v2455 = vmul.f32 %v1124, %v1124
    %v2456 = vmin.f32 16.0, %v2455
    %v2457 = vmul.f32 %v2456, 2.1237322e-06
    %v2458 = vadd.f32 %v2457, 0.00028619796
    %v2459 = vmul.f32 %v2456, %v2458
    %v2460 = vadd.f32 %v2459, 0.0036580483
    %v2461 = vmul.f32 %v2456, %v2460
    %v2462 = vadd.f32 %v2461, 0.05243302
    %v2463 = vmul.f32 %v2456, %v2462
    %v2464 = vadd.f32 %v2463, 0.18741608
    %v2465 = vmul.f32 %v2456, %v2464
    %v2466 = vadd.f32 %v2465, 1.1283791
    %v2467 = vmul.f32 %v1124, %v2466
    %v2468 = vmul.f32 %v2456, 3.8918573e-05
    %v2469 = vadd.f32 %v2468, 0.001143296
    %v2470 = vmul.f32 %v2456, %v2469
    %v2471 = vadd.f32 %v2470, 0.014752088
    %v2472 = vmul.f32 %v2456, %v2471
    %v2473 = vadd.f32 %v2472, 0.112945676
    %v2474 = vmul.f32 %v2456, %v2473
    %v2475 = vadd.f32 %v2474, 0.4994258
    %v2476 = vmul.f32 %v2456, %v2475
    %v2477 = vadd.f32 %v2476, 1.0
    %v2478 = vrcp.pop %v2477
    %v2479 = vmul.f32 %v2477, %v2478
    %v2480 = vsub.f32 1.0, %v2479
    %v2481 = vmul.f32 %v2478, %v2480
    %v2482 = vadd.f32 %v2478, %v2481
    %vm2483 = vweird.f32 %v2477
    %vm2484 = vweird.f32 %v2478
    %vm2485 = vmor %vm2483, %vm2484
    %v2486 = vsel %vm2485, %v2478, %v2482
    %v2487 = vand.u32 2147483647, %v2477
    %vm2488 = vcmp.eq.f32.partialorder %v2487, 8.507059e+37
    %v2489 = vand.u32 %v2477, 2147483648
    %v2490 = vor.u32 1.1754944e-38, %v2489
    %v2491 = vsel %vm2488, %v2490, %v2486
    %v2492 = vmul.f32 %v2467, %v2491
    %v2493 = vmin.f32 %v2492, 1.0
    %v2494 = vmax.f32 %v2493, -1.0
    %v2495 = vmul.f32 %v1125, %v1125
    %v2496 = vmin.f32 16.0, %v2495
    %v2497 = vmul.f32 %v2496, 2.1237322e-06
    %v2498 = vadd.f32 %v2497, 0.00028619796
    %v2499 = vmul.f32 %v2496, %v2498
    %v2500 = vadd.f32 %v2499, 0.0036580483
    %v2501 = vmul.f32 %v2496, %v2500
    %v2502 = vadd.f32 %v2501, 0.05243302
    %v2503 = vmul.f32 %v2496, %v2502
    %v2504 = vadd.f32 %v2503, 0.18741608
    %v2505 = vmul.f32 %v2496, %v2504
    %v2506 = vadd.f32 %v2505, 1.1283791
    %v2507 = vmul.f32 %v1125, %v2506
    %v2508 = vmul.f32 %v2496, 3.8918573e-05
    %v2509 = vadd.f32 %v2508, 0.001143296
    %v2510 = vmul.f32 %v2496, %v2509
    %v2511 = vadd.f32 %v2510, 0.014752088
    %v2512 = vmul.f32 %v2496, %v2511
    %v2513 = vadd.f32 %v2512, 0.112945676
    %v2514 = vmul.f32 %v2496, %v2513
    %v2515 = vadd.f32 %v2514, 0.4994258
    %v2516 = vmul.f32 %v2496, %v2515
    %v2517 = vadd.f32 %v2516, 1.0
    %v2518 = vrcp.pop %v2517
    %v2519 = vmul.f32 %v2517, %v2518
    %v2520 = vsub.f32 1.0, %v2519
    %v2521 = vmul.f32 %v2518, %v2520
    %v2522 = vadd.f32 %v2518, %v2521
    %vm2523 = vweird.f32 %v2517
    %vm2524 = vweird.f32 %v2518
    %vm2525 = vmor %vm2523, %vm2524
    %v2526 = vsel %vm2525, %v2518, %v2522
    %v2527 = vand.u32 2147483647, %v2517
    %vm2528 = vcmp.eq.f32.partialorder %v2527, 8.507059e+37
    %v2529 = vand.u32 %v2517, 2147483648
    %v2530 = vor.u32 1.1754944e-38, %v2529
    %v2531 = vsel %vm2528, %v2530, %v2526
    %v2532 = vmul.f32 %v2507, %v2531
    %v2533 = vmin.f32 %v2532, 1.0
    %v2534 = vmax.f32 %v2533, -1.0
    %v2535 = vmul.f32 %v1126, %v1126
    %v2536 = vmin.f32 16.0, %v2535
    %v2537 = vmul.f32 %v2536, 2.1237322e-06
    %v2538 = vadd.f32 %v2537, 0.00028619796
    %v2539 = vmul.f32 %v2536, %v2538
    %v2540 = vadd.f32 %v2539, 0.0036580483
    %v2541 = vmul.f32 %v2536, %v2540
    %v2542 = vadd.f32 %v2541, 0.05243302
    %v2543 = vmul.f32 %v2536, %v2542
    %v2544 = vadd.f32 %v2543, 0.18741608
    %v2545 = vmul.f32 %v2536, %v2544
    %v2546 = vadd.f32 %v2545, 1.1283791
    %v2547 = vmul.f32 %v1126, %v2546
    %v2548 = vmul.f32 %v2536, 3.8918573e-05
    %v2549 = vadd.f32 %v2548, 0.001143296
    %v2550 = vmul.f32 %v2536, %v2549
    %v2551 = vadd.f32 %v2550, 0.014752088
    %v2552 = vmul.f32 %v2536, %v2551
    %v2553 = vadd.f32 %v2552, 0.112945676
    %v2554 = vmul.f32 %v2536, %v2553
    %v2555 = vadd.f32 %v2554, 0.4994258
    %v2556 = vmul.f32 %v2536, %v2555
    %v2557 = vadd.f32 %v2556, 1.0
    %v2558 = vrcp.pop %v2557
    %v2559 = vmul.f32 %v2557, %v2558
    %v2560 = vsub.f32 1.0, %v2559
    %v2561 = vmul.f32 %v2558, %v2560
    %v2562 = vadd.f32 %v2558, %v2561
    %vm2563 = vweird.f32 %v2557
    %vm2564 = vweird.f32 %v2558
    %vm2565 = vmor %vm2563, %vm2564
    %v2566 = vsel %vm2565, %v2558, %v2562
    %v2567 = vand.u32 2147483647, %v2557
    %vm2568 = vcmp.eq.f32.partialorder %v2567, 8.507059e+37
    %v2569 = vand.u32 %v2557, 2147483648
    %v2570 = vor.u32 1.1754944e-38, %v2569
    %v2571 = vsel %vm2568, %v2570, %v2566
    %v2572 = vmul.f32 %v2547, %v2571
    %v2573 = vmin.f32 %v2572, 1.0
    %v2574 = vmax.f32 %v2573, -1.0
    %v2575 = vmul.f32 %v1127, %v1127
    %v2576 = vmin.f32 16.0, %v2575
    %v2577 = vmul.f32 %v2576, 2.1237322e-06
    %v2578 = vadd.f32 %v2577, 0.00028619796
    %v2579 = vmul.f32 %v2576, %v2578
    %v2580 = vadd.f32 %v2579, 0.0036580483
    %v2581 = vmul.f32 %v2576, %v2580
    %v2582 = vadd.f32 %v2581, 0.05243302
    %v2583 = vmul.f32 %v2576, %v2582
    %v2584 = vadd.f32 %v2583, 0.18741608
    %v2585 = vmul.f32 %v2576, %v2584
    %v2586 = vadd.f32 %v2585, 1.1283791
    %v2587 = vmul.f32 %v1127, %v2586
    %v2588 = vmul.f32 %v2576, 3.8918573e-05
    %v2589 = vadd.f32 %v2588, 0.001143296
    %v2590 = vmul.f32 %v2576, %v2589
    %v2591 = vadd.f32 %v2590, 0.014752088
    %v2592 = vmul.f32 %v2576, %v2591
    %v2593 = vadd.f32 %v2592, 0.112945676
    %v2594 = vmul.f32 %v2576, %v2593
    %v2595 = vadd.f32 %v2594, 0.4994258
    %v2596 = vmul.f32 %v2576, %v2595
    %v2597 = vadd.f32 %v2596, 1.0
    %v2598 = vrcp.pop %v2597
    %v2599 = vmul.f32 %v2597, %v2598
    %v2600 = vsub.f32 1.0, %v2599
    %v2601 = vmul.f32 %v2598, %v2600
    %v2602 = vadd.f32 %v2598, %v2601
    %vm2603 = vweird.f32 %v2597
    %vm2604 = vweird.f32 %v2598
    %vm2605 = vmor %vm2603, %vm2604
    %v2606 = vsel %vm2605, %v2598, %v2602
    %v2607 = vand.u32 2147483647, %v2597
    %vm2608 = vcmp.eq.f32.partialorder %v2607, 8.507059e+37
    %v2609 = vand.u32 %v2597, 2147483648
    %v2610 = vor.u32 1.1754944e-38, %v2609
    %v2611 = vsel %vm2608, %v2610, %v2606
    %v2612 = vmul.f32 %v2587, %v2611
    %v2613 = vmin.f32 %v2612, 1.0
    %v2614 = vmax.f32 %v2613, -1.0
    %v2615 = vmul.f32 %v1128, %v1128
    %v2616 = vmin.f32 16.0, %v2615
    %v2617 = vmul.f32 %v2616, 2.1237322e-06
    %v2618 = vadd.f32 %v2617, 0.00028619796
    %v2619 = vmul.f32 %v2616, %v2618
    %v2620 = vadd.f32 %v2619, 0.0036580483
    %v2621 = vmul.f32 %v2616, %v2620
    %v2622 = vadd.f32 %v2621, 0.05243302
    %v2623 = vmul.f32 %v2616, %v2622
    %v2624 = vadd.f32 %v2623, 0.18741608
    %v2625 = vmul.f32 %v2616, %v2624
    %v2626 = vadd.f32 %v2625, 1.1283791
    %v2627 = vmul.f32 %v1128, %v2626
    %v2628 = vmul.f32 %v2616, 3.8918573e-05
    %v2629 = vadd.f32 %v2628, 0.001143296
    %v2630 = vmul.f32 %v2616, %v2629
    %v2631 = vadd.f32 %v2630, 0.014752088
    %v2632 = vmul.f32 %v2616, %v2631
    %v2633 = vadd.f32 %v2632, 0.112945676
    %v2634 = vmul.f32 %v2616, %v2633
    %v2635 = vadd.f32 %v2634, 0.4994258
    %v2636 = vmul.f32 %v2616, %v2635
    %v2637 = vadd.f32 %v2636, 1.0
    %v2638 = vrcp.pop %v2637
    %v2639 = vmul.f32 %v2637, %v2638
    %v2640 = vsub.f32 1.0, %v2639
    %v2641 = vmul.f32 %v2638, %v2640
    %v2642 = vadd.f32 %v2638, %v2641
    %vm2643 = vweird.f32 %v2637
    %vm2644 = vweird.f32 %v2638
    %vm2645 = vmor %vm2643, %vm2644
    %v2646 = vsel %vm2645, %v2638, %v2642
    %v2647 = vand.u32 2147483647, %v2637
    %vm2648 = vcmp.eq.f32.partialorder %v2647, 8.507059e+37
    %v2649 = vand.u32 %v2637, 2147483648
    %v2650 = vor.u32 1.1754944e-38, %v2649
    %v2651 = vsel %vm2648, %v2650, %v2646
    %v2652 = vmul.f32 %v2627, %v2651
    %v2653 = vmin.f32 %v2652, 1.0
    %v2654 = vmax.f32 %v2653, -1.0
    %v2655 = vmul.f32 %v1129, %v1129
    %v2656 = vmin.f32 16.0, %v2655
    %v2657 = vmul.f32 %v2656, 2.1237322e-06
    %v2658 = vadd.f32 %v2657, 0.00028619796
    %v2659 = vmul.f32 %v2656, %v2658
    %v2660 = vadd.f32 %v2659, 0.0036580483
    %v2661 = vmul.f32 %v2656, %v2660
    %v2662 = vadd.f32 %v2661, 0.05243302
    %v2663 = vmul.f32 %v2656, %v2662
    %v2664 = vadd.f32 %v2663, 0.18741608
    %v2665 = vmul.f32 %v2656, %v2664
    %v2666 = vadd.f32 %v2665, 1.1283791
    %v2667 = vmul.f32 %v1129, %v2666
    %v2668 = vmul.f32 %v2656, 3.8918573e-05
    %v2669 = vadd.f32 %v2668, 0.001143296
    %v2670 = vmul.f32 %v2656, %v2669
    %v2671 = vadd.f32 %v2670, 0.014752088
    %v2672 = vmul.f32 %v2656, %v2671
    %v2673 = vadd.f32 %v2672, 0.112945676
    %v2674 = vmul.f32 %v2656, %v2673
    %v2675 = vadd.f32 %v2674, 0.4994258
    %v2676 = vmul.f32 %v2656, %v2675
    %v2677 = vadd.f32 %v2676, 1.0
    %v2678 = vrcp.pop %v2677
    %v2679 = vmul.f32 %v2677, %v2678
    %v2680 = vsub.f32 1.0, %v2679
    %v2681 = vmul.f32 %v2678, %v2680
    %v2682 = vadd.f32 %v2678, %v2681
    %vm2683 = vweird.f32 %v2677
    %vm2684 = vweird.f32 %v2678
    %vm2685 = vmor %vm2683, %vm2684
    %v2686 = vsel %vm2685, %v2678, %v2682
    %v2687 = vand.u32 2147483647, %v2677
    %vm2688 = vcmp.eq.f32.partialorder %v2687, 8.507059e+37
    %v2689 = vand.u32 %v2677, 2147483648
    %v2690 = vor.u32 1.1754944e-38, %v2689
    %v2691 = vsel %vm2688, %v2690, %v2686
    %v2692 = vmul.f32 %v2667, %v2691
    %v2693 = vmin.f32 %v2692, 1.0
    %v2694 = vmax.f32 %v2693, -1.0
    %v2695 = vmul.f32 %v1130, %v1130
    %v2696 = vmin.f32 16.0, %v2695
    %v2697 = vmul.f32 %v2696, 2.1237322e-06
    %v2698 = vadd.f32 %v2697, 0.00028619796
    %v2699 = vmul.f32 %v2696, %v2698
    %v2700 = vadd.f32 %v2699, 0.0036580483
    %v2701 = vmul.f32 %v2696, %v2700
    %v2702 = vadd.f32 %v2701, 0.05243302
    %v2703 = vmul.f32 %v2696, %v2702
    %v2704 = vadd.f32 %v2703, 0.18741608
    %v2705 = vmul.f32 %v2696, %v2704
    %v2706 = vadd.f32 %v2705, 1.1283791
    %v2707 = vmul.f32 %v1130, %v2706
    %v2708 = vmul.f32 %v2696, 3.8918573e-05
    %v2709 = vadd.f32 %v2708, 0.001143296
    %v2710 = vmul.f32 %v2696, %v2709
    %v2711 = vadd.f32 %v2710, 0.014752088
    %v2712 = vmul.f32 %v2696, %v2711
    %v2713 = vadd.f32 %v2712, 0.112945676
    %v2714 = vmul.f32 %v2696, %v2713
    %v2715 = vadd.f32 %v2714, 0.4994258
    %v2716 = vmul.f32 %v2696, %v2715
    %v2717 = vadd.f32 %v2716, 1.0
    %v2718 = vrcp.pop %v2717
    %v2719 = vmul.f32 %v2717, %v2718
    %v2720 = vsub.f32 1.0, %v2719
    %v2721 = vmul.f32 %v2718, %v2720
    %v2722 = vadd.f32 %v2718, %v2721
    %vm2723 = vweird.f32 %v2717
    %vm2724 = vweird.f32 %v2718
    %vm2725 = vmor %vm2723, %vm2724
    %v2726 = vsel %vm2725, %v2718, %v2722
    %v2727 = vand.u32 2147483647, %v2717
    %vm2728 = vcmp.eq.f32.partialorder %v2727, 8.507059e+37
    %v2729 = vand.u32 %v2717, 2147483648
    %v2730 = vor.u32 1.1754944e-38, %v2729
    %v2731 = vsel %vm2728, %v2730, %v2726
    %v2732 = vmul.f32 %v2707, %v2731
    %v2733 = vmin.f32 %v2732, 1.0
    %v2734 = vmax.f32 %v2733, -1.0
    %v2735 = vmul.f32 %v1131, %v1131
    %v2736 = vmin.f32 16.0, %v2735
    %v2737 = vmul.f32 %v2736, 2.1237322e-06
    %v2738 = vadd.f32 %v2737, 0.00028619796
    %v2739 = vmul.f32 %v2736, %v2738
    %v2740 = vadd.f32 %v2739, 0.0036580483
    %v2741 = vmul.f32 %v2736, %v2740
    %v2742 = vadd.f32 %v2741, 0.05243302
    %v2743 = vmul.f32 %v2736, %v2742
    %v2744 = vadd.f32 %v2743, 0.18741608
    %v2745 = vmul.f32 %v2736, %v2744
    %v2746 = vadd.f32 %v2745, 1.1283791
    %v2747 = vmul.f32 %v1131, %v2746
    %v2748 = vmul.f32 %v2736, 3.8918573e-05
    %v2749 = vadd.f32 %v2748, 0.001143296
    %v2750 = vmul.f32 %v2736, %v2749
    %v2751 = vadd.f32 %v2750, 0.014752088
    %v2752 = vmul.f32 %v2736, %v2751
    %v2753 = vadd.f32 %v2752, 0.112945676
    %v2754 = vmul.f32 %v2736, %v2753
    %v2755 = vadd.f32 %v2754, 0.4994258
    %v2756 = vmul.f32 %v2736, %v2755
    %v2757 = vadd.f32 %v2756, 1.0
    %v2758 = vrcp.pop %v2757
    %v2759 = vmul.f32 %v2757, %v2758
    %v2760 = vsub.f32 1.0, %v2759
    %v2761 = vmul.f32 %v2758, %v2760
    %v2762 = vadd.f32 %v2758, %v2761
    %vm2763 = vweird.f32 %v2757
    %vm2764 = vweird.f32 %v2758
    %vm2765 = vmor %vm2763, %vm2764
    %v2766 = vsel %vm2765, %v2758, %v2762
    %v2767 = vand.u32 2147483647, %v2757
    %vm2768 = vcmp.eq.f32.partialorder %v2767, 8.507059e+37
    %v2769 = vand.u32 %v2757, 2147483648
    %v2770 = vor.u32 1.1754944e-38, %v2769
    %v2771 = vsel %vm2768, %v2770, %v2766
    %v2772 = vmul.f32 %v2747, %v2771
    %v2773 = vmin.f32 %v2772, 1.0
    %v2774 = vmax.f32 %v2773, -1.0
    %v2775 = vmul.f32 %v1132, %v1132
    %v2776 = vmin.f32 16.0, %v2775
    %v2777 = vmul.f32 %v2776, 2.1237322e-06
    %v2778 = vadd.f32 %v2777, 0.00028619796
    %v2779 = vmul.f32 %v2776, %v2778
    %v2780 = vadd.f32 %v2779, 0.0036580483
    %v2781 = vmul.f32 %v2776, %v2780
    %v2782 = vadd.f32 %v2781, 0.05243302
    %v2783 = vmul.f32 %v2776, %v2782
    %v2784 = vadd.f32 %v2783, 0.18741608
    %v2785 = vmul.f32 %v2776, %v2784
    %v2786 = vadd.f32 %v2785, 1.1283791
    %v2787 = vmul.f32 %v1132, %v2786
    %v2788 = vmul.f32 %v2776, 3.8918573e-05
    %v2789 = vadd.f32 %v2788, 0.001143296
    %v2790 = vmul.f32 %v2776, %v2789
    %v2791 = vadd.f32 %v2790, 0.014752088
    %v2792 = vmul.f32 %v2776, %v2791
    %v2793 = vadd.f32 %v2792, 0.112945676
    %v2794 = vmul.f32 %v2776, %v2793
    %v2795 = vadd.f32 %v2794, 0.4994258
    %v2796 = vmul.f32 %v2776, %v2795
    %v2797 = vadd.f32 %v2796, 1.0
    %v2798 = vrcp.pop %v2797
    %v2799 = vmul.f32 %v2797, %v2798
    %v2800 = vsub.f32 1.0, %v2799
    %v2801 = vmul.f32 %v2798, %v2800
    %v2802 = vadd.f32 %v2798, %v2801
    %vm2803 = vweird.f32 %v2797
    %vm2804 = vweird.f32 %v2798
    %vm2805 = vmor %vm2803, %vm2804
    %v2806 = vsel %vm2805, %v2798, %v2802
    %v2807 = vand.u32 2147483647, %v2797
    %vm2808 = vcmp.eq.f32.partialorder %v2807, 8.507059e+37
    %v2809 = vand.u32 %v2797, 2147483648
    %v2810 = vor.u32 1.1754944e-38, %v2809
    %v2811 = vsel %vm2808, %v2810, %v2806
    %v2812 = vmul.f32 %v2787, %v2811
    %v2813 = vmin.f32 %v2812, 1.0
    %v2814 = vmax.f32 %v2813, -1.0
    %v2815 = vmul.f32 %v1133, %v1133
    %v2816 = vmin.f32 16.0, %v2815
    %v2817 = vmul.f32 %v2816, 2.1237322e-06
    %v2818 = vadd.f32 %v2817, 0.00028619796
    %v2819 = vmul.f32 %v2816, %v2818
    %v2820 = vadd.f32 %v2819, 0.0036580483
    %v2821 = vmul.f32 %v2816, %v2820
    %v2822 = vadd.f32 %v2821, 0.05243302
    %v2823 = vmul.f32 %v2816, %v2822
    %v2824 = vadd.f32 %v2823, 0.18741608
    %v2825 = vmul.f32 %v2816, %v2824
    %v2826 = vadd.f32 %v2825, 1.1283791
    %v2827 = vmul.f32 %v1133, %v2826
    %v2828 = vmul.f32 %v2816, 3.8918573e-05
    %v2829 = vadd.f32 %v2828, 0.001143296
    %v2830 = vmul.f32 %v2816, %v2829
    %v2831 = vadd.f32 %v2830, 0.014752088
    %v2832 = vmul.f32 %v2816, %v2831
    %v2833 = vadd.f32 %v2832, 0.112945676
    %v2834 = vmul.f32 %v2816, %v2833
    %v2835 = vadd.f32 %v2834, 0.4994258
    %v2836 = vmul.f32 %v2816, %v2835
    %v2837 = vadd.f32 %v2836, 1.0
    %v2838 = vrcp.pop %v2837
    %v2839 = vmul.f32 %v2837, %v2838
    %v2840 = vsub.f32 1.0, %v2839
    %v2841 = vmul.f32 %v2838, %v2840
    %v2842 = vadd.f32 %v2838, %v2841
    %vm2843 = vweird.f32 %v2837
    %vm2844 = vweird.f32 %v2838
    %vm2845 = vmor %vm2843, %vm2844
    %v2846 = vsel %vm2845, %v2838, %v2842
    %v2847 = vand.u32 2147483647, %v2837
    %vm2848 = vcmp.eq.f32.partialorder %v2847, 8.507059e+37
    %v2849 = vand.u32 %v2837, 2147483648
    %v2850 = vor.u32 1.1754944e-38, %v2849
    %v2851 = vsel %vm2848, %v2850, %v2846
    %v2852 = vmul.f32 %v2827, %v2851
    %v2853 = vmin.f32 %v2852, 1.0
    %v2854 = vmax.f32 %v2853, -1.0
    %v2855 = vmul.f32 %v1134, %v1134
    %v2856 = vmin.f32 16.0, %v2855
    %v2857 = vmul.f32 %v2856, 2.1237322e-06
    %v2858 = vadd.f32 %v2857, 0.00028619796
    %v2859 = vmul.f32 %v2856, %v2858
    %v2860 = vadd.f32 %v2859, 0.0036580483
    %v2861 = vmul.f32 %v2856, %v2860
    %v2862 = vadd.f32 %v2861, 0.05243302
    %v2863 = vmul.f32 %v2856, %v2862
    %v2864 = vadd.f32 %v2863, 0.18741608
    %v2865 = vmul.f32 %v2856, %v2864
    %v2866 = vadd.f32 %v2865, 1.1283791
    %v2867 = vmul.f32 %v1134, %v2866
    %v2868 = vmul.f32 %v2856, 3.8918573e-05
    %v2869 = vadd.f32 %v2868, 0.001143296
    %v2870 = vmul.f32 %v2856, %v2869
    %v2871 = vadd.f32 %v2870, 0.014752088
    %v2872 = vmul.f32 %v2856, %v2871
    %v2873 = vadd.f32 %v2872, 0.112945676
    %v2874 = vmul.f32 %v2856, %v2873
    %v2875 = vadd.f32 %v2874, 0.4994258
    %v2876 = vmul.f32 %v2856, %v2875
    %v2877 = vadd.f32 %v2876, 1.0
    %v2878 = vrcp.pop %v2877
    %v2879 = vmul.f32 %v2877, %v2878
    %v2880 = vsub.f32 1.0, %v2879
    %v2881 = vmul.f32 %v2878, %v2880
    %v2882 = vadd.f32 %v2878, %v2881
    %vm2883 = vweird.f32 %v2877
    %vm2884 = vweird.f32 %v2878
    %vm2885 = vmor %vm2883, %vm2884
    %v2886 = vsel %vm2885, %v2878, %v2882
    %v2887 = vand.u32 2147483647, %v2877
    %vm2888 = vcmp.eq.f32.partialorder %v2887, 8.507059e+37
    %v2889 = vand.u32 %v2877, 2147483648
    %v2890 = vor.u32 1.1754944e-38, %v2889
    %v2891 = vsel %vm2888, %v2890, %v2886
    %v2892 = vmul.f32 %v2867, %v2891
    %v2893 = vmin.f32 %v2892, 1.0
    %v2894 = vmax.f32 %v2893, -1.0
    %v2895 = vmul.f32 %v1135, %v1135
    %v2896 = vmin.f32 16.0, %v2895
    %v2897 = vmul.f32 %v2896, 2.1237322e-06
    %v2898 = vadd.f32 %v2897, 0.00028619796
    %v2899 = vmul.f32 %v2896, %v2898
    %v2900 = vadd.f32 %v2899, 0.0036580483
    %v2901 = vmul.f32 %v2896, %v2900
    %v2902 = vadd.f32 %v2901, 0.05243302
    %v2903 = vmul.f32 %v2896, %v2902
    %v2904 = vadd.f32 %v2903, 0.18741608
    %v2905 = vmul.f32 %v2896, %v2904
    %v2906 = vadd.f32 %v2905, 1.1283791
    %v2907 = vmul.f32 %v1135, %v2906
    %v2908 = vmul.f32 %v2896, 3.8918573e-05
    %v2909 = vadd.f32 %v2908, 0.001143296
    %v2910 = vmul.f32 %v2896, %v2909
    %v2911 = vadd.f32 %v2910, 0.014752088
    %v2912 = vmul.f32 %v2896, %v2911
    %v2913 = vadd.f32 %v2912, 0.112945676
    %v2914 = vmul.f32 %v2896, %v2913
    %v2915 = vadd.f32 %v2914, 0.4994258
    %v2916 = vmul.f32 %v2896, %v2915
    %v2917 = vadd.f32 %v2916, 1.0
    %v2918 = vrcp.pop %v2917
    %v2919 = vmul.f32 %v2917, %v2918
    %v2920 = vsub.f32 1.0, %v2919
    %v2921 = vmul.f32 %v2918, %v2920
    %v2922 = vadd.f32 %v2918, %v2921
    %vm2923 = vweird.f32 %v2917
    %vm2924 = vweird.f32 %v2918
    %vm2925 = vmor %vm2923, %vm2924
    %v2926 = vsel %vm2925, %v2918, %v2922
    %v2927 = vand.u32 2147483647, %v2917
    %vm2928 = vcmp.eq.f32.partialorder %v2927, 8.507059e+37
    %v2929 = vand.u32 %v2917, 2147483648
    %v2930 = vor.u32 1.1754944e-38, %v2929
    %v2931 = vsel %vm2928, %v2930, %v2926
    %v2932 = vmul.f32 %v2907, %v2931
    %v2933 = vmin.f32 %v2932, 1.0
    %v2934 = vmax.f32 %v2933, -1.0
    %v2935 = vmul.f32 %v1136, %v1136
    %v2936 = vmin.f32 16.0, %v2935
    %v2937 = vmul.f32 %v2936, 2.1237322e-06
    %v2938 = vadd.f32 %v2937, 0.00028619796
    %v2939 = vmul.f32 %v2936, %v2938
    %v2940 = vadd.f32 %v2939, 0.0036580483
    %v2941 = vmul.f32 %v2936, %v2940
    %v2942 = vadd.f32 %v2941, 0.05243302
    %v2943 = vmul.f32 %v2936, %v2942
    %v2944 = vadd.f32 %v2943, 0.18741608
    %v2945 = vmul.f32 %v2936, %v2944
    %v2946 = vadd.f32 %v2945, 1.1283791
    %v2947 = vmul.f32 %v1136, %v2946
    %v2948 = vmul.f32 %v2936, 3.8918573e-05
    %v2949 = vadd.f32 %v2948, 0.001143296
    %v2950 = vmul.f32 %v2936, %v2949
    %v2951 = vadd.f32 %v2950, 0.014752088
    %v2952 = vmul.f32 %v2936, %v2951
    %v2953 = vadd.f32 %v2952, 0.112945676
    %v2954 = vmul.f32 %v2936, %v2953
    %v2955 = vadd.f32 %v2954, 0.4994258
    %v2956 = vmul.f32 %v2936, %v2955
    %v2957 = vadd.f32 %v2956, 1.0
    %v2958 = vrcp.pop %v2957
    %v2959 = vmul.f32 %v2957, %v2958
    %v2960 = vsub.f32 1.0, %v2959
    %v2961 = vmul.f32 %v2958, %v2960
    %v2962 = vadd.f32 %v2958, %v2961
    %vm2963 = vweird.f32 %v2957
    %vm2964 = vweird.f32 %v2958
    %vm2965 = vmor %vm2963, %vm2964
    %v2966 = vsel %vm2965, %v2958, %v2962
    %v2967 = vand.u32 2147483647, %v2957
    %vm2968 = vcmp.eq.f32.partialorder %v2967, 8.507059e+37
    %v2969 = vand.u32 %v2957, 2147483648
    %v2970 = vor.u32 1.1754944e-38, %v2969
    %v2971 = vsel %vm2968, %v2970, %v2966
    %v2972 = vmul.f32 %v2947, %v2971
    %v2973 = vmin.f32 %v2972, 1.0
    %v2974 = vmax.f32 %v2973, -1.0
    %v2975 = vmul.f32 %v1137, %v1137
    %v2976 = vmin.f32 16.0, %v2975
    %v2977 = vmul.f32 %v2976, 2.1237322e-06
    %v2978 = vadd.f32 %v2977, 0.00028619796
    %v2979 = vmul.f32 %v2976, %v2978
    %v2980 = vadd.f32 %v2979, 0.0036580483
    %v2981 = vmul.f32 %v2976, %v2980
    %v2982 = vadd.f32 %v2981, 0.05243302
    %v2983 = vmul.f32 %v2976, %v2982
    %v2984 = vadd.f32 %v2983, 0.18741608
    %v2985 = vmul.f32 %v2976, %v2984
    %v2986 = vadd.f32 %v2985, 1.1283791
    %v2987 = vmul.f32 %v1137, %v2986
    %v2988 = vmul.f32 %v2976, 3.8918573e-05
    %v2989 = vadd.f32 %v2988, 0.001143296
    %v2990 = vmul.f32 %v2976, %v2989
    %v2991 = vadd.f32 %v2990, 0.014752088
    %v2992 = vmul.f32 %v2976, %v2991
    %v2993 = vadd.f32 %v2992, 0.112945676
    %v2994 = vmul.f32 %v2976, %v2993
    %v2995 = vadd.f32 %v2994, 0.4994258
    %v2996 = vmul.f32 %v2976, %v2995
    %v2997 = vadd.f32 %v2996, 1.0
    %v2998 = vrcp.pop %v2997
    %v2999 = vmul.f32 %v2997, %v2998
    %v3000 = vsub.f32 1.0, %v2999
    %v3001 = vmul.f32 %v2998, %v3000
    %v3002 = vadd.f32 %v2998, %v3001
    %vm3003 = vweird.f32 %v2997
    %vm3004 = vweird.f32 %v2998
    %vm3005 = vmor %vm3003, %vm3004
    %v3006 = vsel %vm3005, %v2998, %v3002
    %v3007 = vand.u32 2147483647, %v2997
    %vm3008 = vcmp.eq.f32.partialorder %v3007, 8.507059e+37
    %v3009 = vand.u32 %v2997, 2147483648
    %v3010 = vor.u32 1.1754944e-38, %v3009
    %v3011 = vsel %vm3008, %v3010, %v3006
    %v3012 = vmul.f32 %v2987, %v3011
    %v3013 = vmin.f32 %v3012, 1.0
    %v3014 = vmax.f32 %v3013, -1.0
    %v3015 = vmul.f32 %v1138, %v1138
    %v3016 = vmin.f32 16.0, %v3015
    %v3017 = vmul.f32 %v3016, 2.1237322e-06
    %v3018 = vadd.f32 %v3017, 0.00028619796
    %v3019 = vmul.f32 %v3016, %v3018
    %v3020 = vadd.f32 %v3019, 0.0036580483
    %v3021 = vmul.f32 %v3016, %v3020
    %v3022 = vadd.f32 %v3021, 0.05243302
    %v3023 = vmul.f32 %v3016, %v3022
    %v3024 = vadd.f32 %v3023, 0.18741608
    %v3025 = vmul.f32 %v3016, %v3024
    %v3026 = vadd.f32 %v3025, 1.1283791
    %v3027 = vmul.f32 %v1138, %v3026
    %v3028 = vmul.f32 %v3016, 3.8918573e-05
    %v3029 = vadd.f32 %v3028, 0.001143296
    %v3030 = vmul.f32 %v3016, %v3029
    %v3031 = vadd.f32 %v3030, 0.014752088
    %v3032 = vmul.f32 %v3016, %v3031
    %v3033 = vadd.f32 %v3032, 0.112945676
    %v3034 = vmul.f32 %v3016, %v3033
    %v3035 = vadd.f32 %v3034, 0.4994258
    %v3036 = vmul.f32 %v3016, %v3035
    %v3037 = vadd.f32 %v3036, 1.0
    %v3038 = vrcp.pop %v3037
    %v3039 = vmul.f32 %v3037, %v3038
    %v3040 = vsub.f32 1.0, %v3039
    %v3041 = vmul.f32 %v3038, %v3040
    %v3042 = vadd.f32 %v3038, %v3041
    %vm3043 = vweird.f32 %v3037
    %vm3044 = vweird.f32 %v3038
    %vm3045 = vmor %vm3043, %vm3044
    %v3046 = vsel %vm3045, %v3038, %v3042
    %v3047 = vand.u32 2147483647, %v3037
    %vm3048 = vcmp.eq.f32.partialorder %v3047, 8.507059e+37
    %v3049 = vand.u32 %v3037, 2147483648
    %v3050 = vor.u32 1.1754944e-38, %v3049
    %v3051 = vsel %vm3048, %v3050, %v3046
    %v3052 = vmul.f32 %v3027, %v3051
    %v3053 = vmin.f32 %v3052, 1.0
    %v3054 = vmax.f32 %v3053, -1.0
    %v3055 = vmul.f32 %v1139, %v1139
    %v3056 = vmin.f32 16.0, %v3055
    %v3057 = vmul.f32 %v3056, 2.1237322e-06
    %v3058 = vadd.f32 %v3057, 0.00028619796
    %v3059 = vmul.f32 %v3056, %v3058
    %v3060 = vadd.f32 %v3059, 0.0036580483
    %v3061 = vmul.f32 %v3056, %v3060
    %v3062 = vadd.f32 %v3061, 0.05243302
    %v3063 = vmul.f32 %v3056, %v3062
    %v3064 = vadd.f32 %v3063, 0.18741608
    %v3065 = vmul.f32 %v3056, %v3064
    %v3066 = vadd.f32 %v3065, 1.1283791
    %v3067 = vmul.f32 %v1139, %v3066
    %v3068 = vmul.f32 %v3056, 3.8918573e-05
    %v3069 = vadd.f32 %v3068, 0.001143296
    %v3070 = vmul.f32 %v3056, %v3069
    %v3071 = vadd.f32 %v3070, 0.014752088
    %v3072 = vmul.f32 %v3056, %v3071
    %v3073 = vadd.f32 %v3072, 0.112945676
    %v3074 = vmul.f32 %v3056, %v3073
    %v3075 = vadd.f32 %v3074, 0.4994258
    %v3076 = vmul.f32 %v3056, %v3075
    %v3077 = vadd.f32 %v3076, 1.0
    %v3078 = vrcp.pop %v3077
    %v3079 = vmul.f32 %v3077, %v3078
    %v3080 = vsub.f32 1.0, %v3079
    %v3081 = vmul.f32 %v3078, %v3080
    %v3082 = vadd.f32 %v3078, %v3081
    %vm3083 = vweird.f32 %v3077
    %vm3084 = vweird.f32 %v3078
    %vm3085 = vmor %vm3083, %vm3084
    %v3086 = vsel %vm3085, %v3078, %v3082
    %v3087 = vand.u32 2147483647, %v3077
    %vm3088 = vcmp.eq.f32.partialorder %v3087, 8.507059e+37
    %v3089 = vand.u32 %v3077, 2147483648
    %v3090 = vor.u32 1.1754944e-38, %v3089
    %v3091 = vsel %vm3088, %v3090, %v3086
    %v3092 = vmul.f32 %v3067, %v3091
    %v3093 = vmin.f32 %v3092, 1.0
    %v3094 = vmax.f32 %v3093, -1.0
    %v3095 = vmul.f32 %v1140, %v1140
    %v3096 = vmin.f32 16.0, %v3095
    %v3097 = vmul.f32 %v3096, 2.1237322e-06
    %v3098 = vadd.f32 %v3097, 0.00028619796
    %v3099 = vmul.f32 %v3096, %v3098
    %v3100 = vadd.f32 %v3099, 0.0036580483
    %v3101 = vmul.f32 %v3096, %v3100
    %v3102 = vadd.f32 %v3101, 0.05243302
    %v3103 = vmul.f32 %v3096, %v3102
    %v3104 = vadd.f32 %v3103, 0.18741608
    %v3105 = vmul.f32 %v3096, %v3104
    %v3106 = vadd.f32 %v3105, 1.1283791
    %v3107 = vmul.f32 %v1140, %v3106
    %v3108 = vmul.f32 %v3096, 3.8918573e-05
    %v3109 = vadd.f32 %v3108, 0.001143296
    %v3110 = vmul.f32 %v3096, %v3109
    %v3111 = vadd.f32 %v3110, 0.014752088
    %v3112 = vmul.f32 %v3096, %v3111
    %v3113 = vadd.f32 %v3112, 0.112945676
    %v3114 = vmul.f32 %v3096, %v3113
    %v3115 = vadd.f32 %v3114, 0.4994258
    %v3116 = vmul.f32 %v3096, %v3115
    %v3117 = vadd.f32 %v3116, 1.0
    %v3118 = vrcp.pop %v3117
    %v3119 = vmul.f32 %v3117, %v3118
    %v3120 = vsub.f32 1.0, %v3119
    %v3121 = vmul.f32 %v3118, %v3120
    %v3122 = vadd.f32 %v3118, %v3121
    %vm3123 = vweird.f32 %v3117
    %vm3124 = vweird.f32 %v3118
    %vm3125 = vmor %vm3123, %vm3124
    %v3126 = vsel %vm3125, %v3118, %v3122
    %v3127 = vand.u32 2147483647, %v3117
    %vm3128 = vcmp.eq.f32.partialorder %v3127, 8.507059e+37
    %v3129 = vand.u32 %v3117, 2147483648
    %v3130 = vor.u32 1.1754944e-38, %v3129
    %v3131 = vsel %vm3128, %v3130, %v3126
    %v3132 = vmul.f32 %v3107, %v3131
    %v3133 = vmin.f32 %v3132, 1.0
    %v3134 = vmax.f32 %v3133, -1.0
    %v3135 = vmul.f32 %v1141, %v1141
    %v3136 = vmin.f32 16.0, %v3135
    %v3137 = vmul.f32 %v3136, 2.1237322e-06
    %v3138 = vadd.f32 %v3137, 0.00028619796
    %v3139 = vmul.f32 %v3136, %v3138
    %v3140 = vadd.f32 %v3139, 0.0036580483
    %v3141 = vmul.f32 %v3136, %v3140
    %v3142 = vadd.f32 %v3141, 0.05243302
    %v3143 = vmul.f32 %v3136, %v3142
    %v3144 = vadd.f32 %v3143, 0.18741608
    %v3145 = vmul.f32 %v3136, %v3144
    %v3146 = vadd.f32 %v3145, 1.1283791
    %v3147 = vmul.f32 %v1141, %v3146
    %v3148 = vmul.f32 %v3136, 3.8918573e-05
    %v3149 = vadd.f32 %v3148, 0.001143296
    %v3150 = vmul.f32 %v3136, %v3149
    %v3151 = vadd.f32 %v3150, 0.014752088
    %v3152 = vmul.f32 %v3136, %v3151
    %v3153 = vadd.f32 %v3152, 0.112945676
    %v3154 = vmul.f32 %v3136, %v3153
    %v3155 = vadd.f32 %v3154, 0.4994258
    %v3156 = vmul.f32 %v3136, %v3155
    %v3157 = vadd.f32 %v3156, 1.0
    %v3158 = vrcp.pop %v3157
    %v3159 = vmul.f32 %v3157, %v3158
    %v3160 = vsub.f32 1.0, %v3159
    %v3161 = vmul.f32 %v3158, %v3160
    %v3162 = vadd.f32 %v3158, %v3161
    %vm3163 = vweird.f32 %v3157
    %vm3164 = vweird.f32 %v3158
    %vm3165 = vmor %vm3163, %vm3164
    %v3166 = vsel %vm3165, %v3158, %v3162
    %v3167 = vand.u32 2147483647, %v3157
    %vm3168 = vcmp.eq.f32.partialorder %v3167, 8.507059e+37
    %v3169 = vand.u32 %v3157, 2147483648
    %v3170 = vor.u32 1.1754944e-38, %v3169
    %v3171 = vsel %vm3168, %v3170, %v3166
    %v3172 = vmul.f32 %v3147, %v3171
    %v3173 = vmin.f32 %v3172, 1.0
    %v3174 = vmax.f32 %v3173, -1.0
    %v3175 = vmul.f32 %v1142, %v1142
    %v3176 = vmin.f32 16.0, %v3175
    %v3177 = vmul.f32 %v3176, 2.1237322e-06
    %v3178 = vadd.f32 %v3177, 0.00028619796
    %v3179 = vmul.f32 %v3176, %v3178
    %v3180 = vadd.f32 %v3179, 0.0036580483
    %v3181 = vmul.f32 %v3176, %v3180
    %v3182 = vadd.f32 %v3181, 0.05243302
    %v3183 = vmul.f32 %v3176, %v3182
    %v3184 = vadd.f32 %v3183, 0.18741608
    %v3185 = vmul.f32 %v3176, %v3184
    %v3186 = vadd.f32 %v3185, 1.1283791
    %v3187 = vmul.f32 %v1142, %v3186
    %v3188 = vmul.f32 %v3176, 3.8918573e-05
    %v3189 = vadd.f32 %v3188, 0.001143296
    %v3190 = vmul.f32 %v3176, %v3189
    %v3191 = vadd.f32 %v3190, 0.014752088
    %v3192 = vmul.f32 %v3176, %v3191
    %v3193 = vadd.f32 %v3192, 0.112945676
    %v3194 = vmul.f32 %v3176, %v3193
    %v3195 = vadd.f32 %v3194, 0.4994258
    %v3196 = vmul.f32 %v3176, %v3195
    %v3197 = vadd.f32 %v3196, 1.0
    %v3198 = vrcp.pop %v3197
    %v3199 = vmul.f32 %v3197, %v3198
    %v3200 = vsub.f32 1.0, %v3199
    %v3201 = vmul.f32 %v3198, %v3200
    %v3202 = vadd.f32 %v3198, %v3201
    %vm3203 = vweird.f32 %v3197
    %vm3204 = vweird.f32 %v3198
    %vm3205 = vmor %vm3203, %vm3204
    %v3206 = vsel %vm3205, %v3198, %v3202
    %v3207 = vand.u32 2147483647, %v3197
    %vm3208 = vcmp.eq.f32.partialorder %v3207, 8.507059e+37
    %v3209 = vand.u32 %v3197, 2147483648
    %v3210 = vor.u32 1.1754944e-38, %v3209
    %v3211 = vsel %vm3208, %v3210, %v3206
    %v3212 = vmul.f32 %v3187, %v3211
    %v3213 = vmin.f32 %v3212, 1.0
    %v3214 = vmax.f32 %v3213, -1.0
    %v3215 = vmul.f32 %v1143, %v1143
    %v3216 = vmin.f32 16.0, %v3215
    %v3217 = vmul.f32 %v3216, 2.1237322e-06
    %v3218 = vadd.f32 %v3217, 0.00028619796
    %v3219 = vmul.f32 %v3216, %v3218
    %v3220 = vadd.f32 %v3219, 0.0036580483
    %v3221 = vmul.f32 %v3216, %v3220
    %v3222 = vadd.f32 %v3221, 0.05243302
    %v3223 = vmul.f32 %v3216, %v3222
    %v3224 = vadd.f32 %v3223, 0.18741608
    %v3225 = vmul.f32 %v3216, %v3224
    %v3226 = vadd.f32 %v3225, 1.1283791
    %v3227 = vmul.f32 %v1143, %v3226
    %v3228 = vmul.f32 %v3216, 3.8918573e-05
    %v3229 = vadd.f32 %v3228, 0.001143296
    %v3230 = vmul.f32 %v3216, %v3229
    %v3231 = vadd.f32 %v3230, 0.014752088
    %v3232 = vmul.f32 %v3216, %v3231
    %v3233 = vadd.f32 %v3232, 0.112945676
    %v3234 = vmul.f32 %v3216, %v3233
    %v3235 = vadd.f32 %v3234, 0.4994258
    %v3236 = vmul.f32 %v3216, %v3235
    %v3237 = vadd.f32 %v3236, 1.0
    %v3238 = vrcp.pop %v3237
    %v3239 = vmul.f32 %v3237, %v3238
    %v3240 = vsub.f32 1.0, %v3239
    %v3241 = vmul.f32 %v3238, %v3240
    %v3242 = vadd.f32 %v3238, %v3241
    %vm3243 = vweird.f32 %v3237
    %vm3244 = vweird.f32 %v3238
    %vm3245 = vmor %vm3243, %vm3244
    %v3246 = vsel %vm3245, %v3238, %v3242
    %v3247 = vand.u32 2147483647, %v3237
    %vm3248 = vcmp.eq.f32.partialorder %v3247, 8.507059e+37
    %v3249 = vand.u32 %v3237, 2147483648
    %v3250 = vor.u32 1.1754944e-38, %v3249
    %v3251 = vsel %vm3248, %v3250, %v3246
    %v3252 = vmul.f32 %v3227, %v3251
    %v3253 = vmin.f32 %v3252, 1.0
    %v3254 = vmax.f32 %v3253, -1.0
    %v3255 = vmul.f32 %v1144, %v1144
    %v3256 = vmin.f32 16.0, %v3255
    %v3257 = vmul.f32 %v3256, 2.1237322e-06
    %v3258 = vadd.f32 %v3257, 0.00028619796
    %v3259 = vmul.f32 %v3256, %v3258
    %v3260 = vadd.f32 %v3259, 0.0036580483
    %v3261 = vmul.f32 %v3256, %v3260
    %v3262 = vadd.f32 %v3261, 0.05243302
    %v3263 = vmul.f32 %v3256, %v3262
    %v3264 = vadd.f32 %v3263, 0.18741608
    %v3265 = vmul.f32 %v3256, %v3264
    %v3266 = vadd.f32 %v3265, 1.1283791
    %v3267 = vmul.f32 %v1144, %v3266
    %v3268 = vmul.f32 %v3256, 3.8918573e-05
    %v3269 = vadd.f32 %v3268, 0.001143296
    %v3270 = vmul.f32 %v3256, %v3269
    %v3271 = vadd.f32 %v3270, 0.014752088
    %v3272 = vmul.f32 %v3256, %v3271
    %v3273 = vadd.f32 %v3272, 0.112945676
    %v3274 = vmul.f32 %v3256, %v3273
    %v3275 = vadd.f32 %v3274, 0.4994258
    %v3276 = vmul.f32 %v3256, %v3275
    %v3277 = vadd.f32 %v3276, 1.0
    %v3278 = vrcp.pop %v3277
    %v3279 = vmul.f32 %v3277, %v3278
    %v3280 = vsub.f32 1.0, %v3279
    %v3281 = vmul.f32 %v3278, %v3280
    %v3282 = vadd.f32 %v3278, %v3281
    %vm3283 = vweird.f32 %v3277
    %vm3284 = vweird.f32 %v3278
    %vm3285 = vmor %vm3283, %vm3284
    %v3286 = vsel %vm3285, %v3278, %v3282
    %v3287 = vand.u32 2147483647, %v3277
    %vm3288 = vcmp.eq.f32.partialorder %v3287, 8.507059e+37
    %v3289 = vand.u32 %v3277, 2147483648
    %v3290 = vor.u32 1.1754944e-38, %v3289
    %v3291 = vsel %vm3288, %v3290, %v3286
    %v3292 = vmul.f32 %v3267, %v3291
    %v3293 = vmin.f32 %v3292, 1.0
    %v3294 = vmax.f32 %v3293, -1.0
    %v3295 = vmul.f32 %v1145, %v1145
    %v3296 = vmin.f32 16.0, %v3295
    %v3297 = vmul.f32 %v3296, 2.1237322e-06
    %v3298 = vadd.f32 %v3297, 0.00028619796
    %v3299 = vmul.f32 %v3296, %v3298
    %v3300 = vadd.f32 %v3299, 0.0036580483
    %v3301 = vmul.f32 %v3296, %v3300
    %v3302 = vadd.f32 %v3301, 0.05243302
    %v3303 = vmul.f32 %v3296, %v3302
    %v3304 = vadd.f32 %v3303, 0.18741608
    %v3305 = vmul.f32 %v3296, %v3304
    %v3306 = vadd.f32 %v3305, 1.1283791
    %v3307 = vmul.f32 %v1145, %v3306
    %v3308 = vmul.f32 %v3296, 3.8918573e-05
    %v3309 = vadd.f32 %v3308, 0.001143296
    %v3310 = vmul.f32 %v3296, %v3309
    %v3311 = vadd.f32 %v3310, 0.014752088
    %v3312 = vmul.f32 %v3296, %v3311
    %v3313 = vadd.f32 %v3312, 0.112945676
    %v3314 = vmul.f32 %v3296, %v3313
    %v3315 = vadd.f32 %v3314, 0.4994258
    %v3316 = vmul.f32 %v3296, %v3315
    %v3317 = vadd.f32 %v3316, 1.0
    %v3318 = vrcp.pop %v3317
    %v3319 = vmul.f32 %v3317, %v3318
    %v3320 = vsub.f32 1.0, %v3319
    %v3321 = vmul.f32 %v3318, %v3320
    %v3322 = vadd.f32 %v3318, %v3321
    %vm3323 = vweird.f32 %v3317
    %vm3324 = vweird.f32 %v3318
    %vm3325 = vmor %vm3323, %vm3324
    %v3326 = vsel %vm3325, %v3318, %v3322
    %v3327 = vand.u32 2147483647, %v3317
    %vm3328 = vcmp.eq.f32.partialorder %v3327, 8.507059e+37
    %v3329 = vand.u32 %v3317, 2147483648
    %v3330 = vor.u32 1.1754944e-38, %v3329
    %v3331 = vsel %vm3328, %v3330, %v3326
    %v3332 = vmul.f32 %v3307, %v3331
    %v3333 = vmin.f32 %v3332, 1.0
    %v3334 = vmax.f32 %v3333, -1.0
    %v3335 = vmul.f32 %v1146, %v1146
    %v3336 = vmin.f32 16.0, %v3335
    %v3337 = vmul.f32 %v3336, 2.1237322e-06
    %v3338 = vadd.f32 %v3337, 0.00028619796
    %v3339 = vmul.f32 %v3336, %v3338
    %v3340 = vadd.f32 %v3339, 0.0036580483
    %v3341 = vmul.f32 %v3336, %v3340
    %v3342 = vadd.f32 %v3341, 0.05243302
    %v3343 = vmul.f32 %v3336, %v3342
    %v3344 = vadd.f32 %v3343, 0.18741608
    %v3345 = vmul.f32 %v3336, %v3344
    %v3346 = vadd.f32 %v3345, 1.1283791
    %v3347 = vmul.f32 %v1146, %v3346
    %v3348 = vmul.f32 %v3336, 3.8918573e-05
    %v3349 = vadd.f32 %v3348, 0.001143296
    %v3350 = vmul.f32 %v3336, %v3349
    %v3351 = vadd.f32 %v3350, 0.014752088
    %v3352 = vmul.f32 %v3336, %v3351
    %v3353 = vadd.f32 %v3352, 0.112945676
    %v3354 = vmul.f32 %v3336, %v3353
    %v3355 = vadd.f32 %v3354, 0.4994258
    %v3356 = vmul.f32 %v3336, %v3355
    %v3357 = vadd.f32 %v3356, 1.0
    %v3358 = vrcp.pop %v3357
    %v3359 = vmul.f32 %v3357, %v3358
    %v3360 = vsub.f32 1.0, %v3359
    %v3361 = vmul.f32 %v3358, %v3360
    %v3362 = vadd.f32 %v3358, %v3361
    %vm3363 = vweird.f32 %v3357
    %vm3364 = vweird.f32 %v3358
    %vm3365 = vmor %vm3363, %vm3364
    %v3366 = vsel %vm3365, %v3358, %v3362
    %v3367 = vand.u32 2147483647, %v3357
    %vm3368 = vcmp.eq.f32.partialorder %v3367, 8.507059e+37
    %v3369 = vand.u32 %v3357, 2147483648
    %v3370 = vor.u32 1.1754944e-38, %v3369
    %v3371 = vsel %vm3368, %v3370, %v3366
    %v3372 = vmul.f32 %v3347, %v3371
    %v3373 = vmin.f32 %v3372, 1.0
    %v3374 = vmax.f32 %v3373, -1.0
    %v3375 = vmul.f32 %v1147, %v1147
    %v3376 = vmin.f32 16.0, %v3375
    %v3377 = vmul.f32 %v3376, 2.1237322e-06
    %v3378 = vadd.f32 %v3377, 0.00028619796
    %v3379 = vmul.f32 %v3376, %v3378
    %v3380 = vadd.f32 %v3379, 0.0036580483
    %v3381 = vmul.f32 %v3376, %v3380
    %v3382 = vadd.f32 %v3381, 0.05243302
    %v3383 = vmul.f32 %v3376, %v3382
    %v3384 = vadd.f32 %v3383, 0.18741608
    %v3385 = vmul.f32 %v3376, %v3384
    %v3386 = vadd.f32 %v3385, 1.1283791
    %v3387 = vmul.f32 %v1147, %v3386
    %v3388 = vmul.f32 %v3376, 3.8918573e-05
    %v3389 = vadd.f32 %v3388, 0.001143296
    %v3390 = vmul.f32 %v3376, %v3389
    %v3391 = vadd.f32 %v3390, 0.014752088
    %v3392 = vmul.f32 %v3376, %v3391
    %v3393 = vadd.f32 %v3392, 0.112945676
    %v3394 = vmul.f32 %v3376, %v3393
    %v3395 = vadd.f32 %v3394, 0.4994258
    %v3396 = vmul.f32 %v3376, %v3395
    %v3397 = vadd.f32 %v3396, 1.0
    %v3398 = vrcp.pop %v3397
    %v3399 = vmul.f32 %v3397, %v3398
    %v3400 = vsub.f32 1.0, %v3399
    %v3401 = vmul.f32 %v3398, %v3400
    %v3402 = vadd.f32 %v3398, %v3401
    %vm3403 = vweird.f32 %v3397
    %vm3404 = vweird.f32 %v3398
    %vm3405 = vmor %vm3403, %vm3404
    %v3406 = vsel %vm3405, %v3398, %v3402
    %v3407 = vand.u32 2147483647, %v3397
    %vm3408 = vcmp.eq.f32.partialorder %v3407, 8.507059e+37
    %v3409 = vand.u32 %v3397, 2147483648
    %v3410 = vor.u32 1.1754944e-38, %v3409
    %v3411 = vsel %vm3408, %v3410, %v3406
    %v3412 = vmul.f32 %v3387, %v3411
    %v3413 = vmin.f32 %v3412, 1.0
    %v3414 = vmax.f32 %v3413, -1.0
    %v3415 = vmul.f32 %v1148, %v1148
    %v3416 = vmin.f32 16.0, %v3415
    %v3417 = vmul.f32 %v3416, 2.1237322e-06
    %v3418 = vadd.f32 %v3417, 0.00028619796
    %v3419 = vmul.f32 %v3416, %v3418
    %v3420 = vadd.f32 %v3419, 0.0036580483
    %v3421 = vmul.f32 %v3416, %v3420
    %v3422 = vadd.f32 %v3421, 0.05243302
    %v3423 = vmul.f32 %v3416, %v3422
    %v3424 = vadd.f32 %v3423, 0.18741608
    %v3425 = vmul.f32 %v3416, %v3424
    %v3426 = vadd.f32 %v3425, 1.1283791
    %v3427 = vmul.f32 %v1148, %v3426
    %v3428 = vmul.f32 %v3416, 3.8918573e-05
    %v3429 = vadd.f32 %v3428, 0.001143296
    %v3430 = vmul.f32 %v3416, %v3429
    %v3431 = vadd.f32 %v3430, 0.014752088
    %v3432 = vmul.f32 %v3416, %v3431
    %v3433 = vadd.f32 %v3432, 0.112945676
    %v3434 = vmul.f32 %v3416, %v3433
    %v3435 = vadd.f32 %v3434, 0.4994258
    %v3436 = vmul.f32 %v3416, %v3435
    %v3437 = vadd.f32 %v3436, 1.0
    %v3438 = vrcp.pop %v3437
    %v3439 = vmul.f32 %v3437, %v3438
    %v3440 = vsub.f32 1.0, %v3439
    %v3441 = vmul.f32 %v3438, %v3440
    %v3442 = vadd.f32 %v3438, %v3441
    %vm3443 = vweird.f32 %v3437
    %vm3444 = vweird.f32 %v3438
    %vm3445 = vmor %vm3443, %vm3444
    %v3446 = vsel %vm3445, %v3438, %v3442
    %v3447 = vand.u32 2147483647, %v3437
    %vm3448 = vcmp.eq.f32.partialorder %v3447, 8.507059e+37
    %v3449 = vand.u32 %v3437, 2147483648
    %v3450 = vor.u32 1.1754944e-38, %v3449
    %v3451 = vsel %vm3448, %v3450, %v3446
    %v3452 = vmul.f32 %v3427, %v3451
    %v3453 = vmin.f32 %v3452, 1.0
    %v3454 = vmax.f32 %v3453, -1.0
    %v3455 = vmul.f32 %v1149, %v1149
    %v3456 = vmin.f32 16.0, %v3455
    %v3457 = vmul.f32 %v3456, 2.1237322e-06
    %v3458 = vadd.f32 %v3457, 0.00028619796
    %v3459 = vmul.f32 %v3456, %v3458
    %v3460 = vadd.f32 %v3459, 0.0036580483
    %v3461 = vmul.f32 %v3456, %v3460
    %v3462 = vadd.f32 %v3461, 0.05243302
    %v3463 = vmul.f32 %v3456, %v3462
    %v3464 = vadd.f32 %v3463, 0.18741608
    %v3465 = vmul.f32 %v3456, %v3464
    %v3466 = vadd.f32 %v3465, 1.1283791
    %v3467 = vmul.f32 %v1149, %v3466
    %v3468 = vmul.f32 %v3456, 3.8918573e-05
    %v3469 = vadd.f32 %v3468, 0.001143296
    %v3470 = vmul.f32 %v3456, %v3469
    %v3471 = vadd.f32 %v3470, 0.014752088
    %v3472 = vmul.f32 %v3456, %v3471
    %v3473 = vadd.f32 %v3472, 0.112945676
    %v3474 = vmul.f32 %v3456, %v3473
    %v3475 = vadd.f32 %v3474, 0.4994258
    %v3476 = vmul.f32 %v3456, %v3475
    %v3477 = vadd.f32 %v3476, 1.0
    %v3478 = vrcp.pop %v3477
    %v3479 = vmul.f32 %v3477, %v3478
    %v3480 = vsub.f32 1.0, %v3479
    %v3481 = vmul.f32 %v3478, %v3480
    %v3482 = vadd.f32 %v3478, %v3481
    %vm3483 = vweird.f32 %v3477
    %vm3484 = vweird.f32 %v3478
    %vm3485 = vmor %vm3483, %vm3484
    %v3486 = vsel %vm3485, %v3478, %v3482
    %v3487 = vand.u32 2147483647, %v3477
    %vm3488 = vcmp.eq.f32.partialorder %v3487, 8.507059e+37
    %v3489 = vand.u32 %v3477, 2147483648
    %v3490 = vor.u32 1.1754944e-38, %v3489
    %v3491 = vsel %vm3488, %v3490, %v3486
    %v3492 = vmul.f32 %v3467, %v3491
    %v3493 = vmin.f32 %v3492, 1.0
    %v3494 = vmax.f32 %v3493, -1.0
    %v3495 = vmul.f32 %v1150, %v1150
    %v3496 = vmin.f32 16.0, %v3495
    %v3497 = vmul.f32 %v3496, 2.1237322e-06
    %v3498 = vadd.f32 %v3497, 0.00028619796
    %v3499 = vmul.f32 %v3496, %v3498
    %v3500 = vadd.f32 %v3499, 0.0036580483
    %v3501 = vmul.f32 %v3496, %v3500
    %v3502 = vadd.f32 %v3501, 0.05243302
    %v3503 = vmul.f32 %v3496, %v3502
    %v3504 = vadd.f32 %v3503, 0.18741608
    %v3505 = vmul.f32 %v3496, %v3504
    %v3506 = vadd.f32 %v3505, 1.1283791
    %v3507 = vmul.f32 %v1150, %v3506
    %v3508 = vmul.f32 %v3496, 3.8918573e-05
    %v3509 = vadd.f32 %v3508, 0.001143296
    %v3510 = vmul.f32 %v3496, %v3509
    %v3511 = vadd.f32 %v3510, 0.014752088
    %v3512 = vmul.f32 %v3496, %v3511
    %v3513 = vadd.f32 %v3512, 0.112945676
    %v3514 = vmul.f32 %v3496, %v3513
    %v3515 = vadd.f32 %v3514, 0.4994258
    %v3516 = vmul.f32 %v3496, %v3515
    %v3517 = vadd.f32 %v3516, 1.0
    %v3518 = vrcp.pop %v3517
    %v3519 = vmul.f32 %v3517, %v3518
    %v3520 = vsub.f32 1.0, %v3519
    %v3521 = vmul.f32 %v3518, %v3520
    %v3522 = vadd.f32 %v3518, %v3521
    %vm3523 = vweird.f32 %v3517
    %vm3524 = vweird.f32 %v3518
    %vm3525 = vmor %vm3523, %vm3524
    %v3526 = vsel %vm3525, %v3518, %v3522
    %v3527 = vand.u32 2147483647, %v3517
    %vm3528 = vcmp.eq.f32.partialorder %v3527, 8.507059e+37
    %v3529 = vand.u32 %v3517, 2147483648
    %v3530 = vor.u32 1.1754944e-38, %v3529
    %v3531 = vsel %vm3528, %v3530, %v3526
    %v3532 = vmul.f32 %v3507, %v3531
    %v3533 = vmin.f32 %v3532, 1.0
    %v3534 = vmax.f32 %v3533, -1.0
    %v3535 = vmul.f32 %v1151, %v1151
    %v3536 = vmin.f32 16.0, %v3535
    %v3537 = vmul.f32 %v3536, 2.1237322e-06
    %v3538 = vadd.f32 %v3537, 0.00028619796
    %v3539 = vmul.f32 %v3536, %v3538
    %v3540 = vadd.f32 %v3539, 0.0036580483
    %v3541 = vmul.f32 %v3536, %v3540
    %v3542 = vadd.f32 %v3541, 0.05243302
    %v3543 = vmul.f32 %v3536, %v3542
    %v3544 = vadd.f32 %v3543, 0.18741608
    %v3545 = vmul.f32 %v3536, %v3544
    %v3546 = vadd.f32 %v3545, 1.1283791
    %v3547 = vmul.f32 %v1151, %v3546
    %v3548 = vmul.f32 %v3536, 3.8918573e-05
    %v3549 = vadd.f32 %v3548, 0.001143296
    %v3550 = vmul.f32 %v3536, %v3549
    %v3551 = vadd.f32 %v3550, 0.014752088
    %v3552 = vmul.f32 %v3536, %v3551
    %v3553 = vadd.f32 %v3552, 0.112945676
    %v3554 = vmul.f32 %v3536, %v3553
    %v3555 = vadd.f32 %v3554, 0.4994258
    %v3556 = vmul.f32 %v3536, %v3555
    %v3557 = vadd.f32 %v3556, 1.0
    %v3558 = vrcp.pop %v3557
    %v3559 = vmul.f32 %v3557, %v3558
    %v3560 = vsub.f32 1.0, %v3559
    %v3561 = vmul.f32 %v3558, %v3560
    %v3562 = vadd.f32 %v3558, %v3561
    %vm3563 = vweird.f32 %v3557
    %vm3564 = vweird.f32 %v3558
    %vm3565 = vmor %vm3563, %vm3564
    %v3566 = vsel %vm3565, %v3558, %v3562
    %v3567 = vand.u32 2147483647, %v3557
    %vm3568 = vcmp.eq.f32.partialorder %v3567, 8.507059e+37
    %v3569 = vand.u32 %v3557, 2147483648
    %v3570 = vor.u32 1.1754944e-38, %v3569
    %v3571 = vsel %vm3568, %v3570, %v3566
    %v3572 = vmul.f32 %v3547, %v3571
    %v3573 = vmin.f32 %v3572, 1.0
    %v3574 = vmax.f32 %v3573, -1.0
    %v3575 = vmul.f32 %v1152, %v1152
    %v3576 = vmin.f32 16.0, %v3575
    %v3577 = vmul.f32 %v3576, 2.1237322e-06
    %v3578 = vadd.f32 %v3577, 0.00028619796
    %v3579 = vmul.f32 %v3576, %v3578
    %v3580 = vadd.f32 %v3579, 0.0036580483
    %v3581 = vmul.f32 %v3576, %v3580
    %v3582 = vadd.f32 %v3581, 0.05243302
    %v3583 = vmul.f32 %v3576, %v3582
    %v3584 = vadd.f32 %v3583, 0.18741608
    %v3585 = vmul.f32 %v3576, %v3584
    %v3586 = vadd.f32 %v3585, 1.1283791
    %v3587 = vmul.f32 %v1152, %v3586
    %v3588 = vmul.f32 %v3576, 3.8918573e-05
    %v3589 = vadd.f32 %v3588, 0.001143296
    %v3590 = vmul.f32 %v3576, %v3589
    %v3591 = vadd.f32 %v3590, 0.014752088
    %v3592 = vmul.f32 %v3576, %v3591
    %v3593 = vadd.f32 %v3592, 0.112945676
    %v3594 = vmul.f32 %v3576, %v3593
    %v3595 = vadd.f32 %v3594, 0.4994258
    %v3596 = vmul.f32 %v3576, %v3595
    %v3597 = vadd.f32 %v3596, 1.0
    %v3598 = vrcp.pop %v3597
    %v3599 = vmul.f32 %v3597, %v3598
    %v3600 = vsub.f32 1.0, %v3599
    %v3601 = vmul.f32 %v3598, %v3600
    %v3602 = vadd.f32 %v3598, %v3601
    %vm3603 = vweird.f32 %v3597
    %vm3604 = vweird.f32 %v3598
    %vm3605 = vmor %vm3603, %vm3604
    %v3606 = vsel %vm3605, %v3598, %v3602
    %v3607 = vand.u32 2147483647, %v3597
    %vm3608 = vcmp.eq.f32.partialorder %v3607, 8.507059e+37
    %v3609 = vand.u32 %v3597, 2147483648
    %v3610 = vor.u32 1.1754944e-38, %v3609
    %v3611 = vsel %vm3608, %v3610, %v3606
    %v3612 = vmul.f32 %v3587, %v3611
    %v3613 = vmin.f32 %v3612, 1.0
    %v3614 = vmax.f32 %v3613, -1.0
    %v3615 = vmul.f32 %v1153, %v1153
    %v3616 = vmin.f32 16.0, %v3615
    %v3617 = vmul.f32 %v3616, 2.1237322e-06
    %v3618 = vadd.f32 %v3617, 0.00028619796
    %v3619 = vmul.f32 %v3616, %v3618
    %v3620 = vadd.f32 %v3619, 0.0036580483
    %v3621 = vmul.f32 %v3616, %v3620
    %v3622 = vadd.f32 %v3621, 0.05243302
    %v3623 = vmul.f32 %v3616, %v3622
    %v3624 = vadd.f32 %v3623, 0.18741608
    %v3625 = vmul.f32 %v3616, %v3624
    %v3626 = vadd.f32 %v3625, 1.1283791
    %v3627 = vmul.f32 %v1153, %v3626
    %v3628 = vmul.f32 %v3616, 3.8918573e-05
    %v3629 = vadd.f32 %v3628, 0.001143296
    %v3630 = vmul.f32 %v3616, %v3629
    %v3631 = vadd.f32 %v3630, 0.014752088
    %v3632 = vmul.f32 %v3616, %v3631
    %v3633 = vadd.f32 %v3632, 0.112945676
    %v3634 = vmul.f32 %v3616, %v3633
    %v3635 = vadd.f32 %v3634, 0.4994258
    %v3636 = vmul.f32 %v3616, %v3635
    %v3637 = vadd.f32 %v3636, 1.0
    %v3638 = vrcp.pop %v3637
    %v3639 = vmul.f32 %v3637, %v3638
    %v3640 = vsub.f32 1.0, %v3639
    %v3641 = vmul.f32 %v3638, %v3640
    %v3642 = vadd.f32 %v3638, %v3641
    %vm3643 = vweird.f32 %v3637
    %vm3644 = vweird.f32 %v3638
    %vm3645 = vmor %vm3643, %vm3644
    %v3646 = vsel %vm3645, %v3638, %v3642
    %v3647 = vand.u32 2147483647, %v3637
    %vm3648 = vcmp.eq.f32.partialorder %v3647, 8.507059e+37
    %v3649 = vand.u32 %v3637, 2147483648
    %v3650 = vor.u32 1.1754944e-38, %v3649
    %v3651 = vsel %vm3648, %v3650, %v3646
    %v3652 = vmul.f32 %v3627, %v3651
    %v3653 = vmin.f32 %v3652, 1.0
    %v3654 = vmax.f32 %v3653, -1.0
    %v3655 = vmul.f32 %v1154, %v1154
    %v3656 = vmin.f32 16.0, %v3655
    %v3657 = vmul.f32 %v3656, 2.1237322e-06
    %v3658 = vadd.f32 %v3657, 0.00028619796
    %v3659 = vmul.f32 %v3656, %v3658
    %v3660 = vadd.f32 %v3659, 0.0036580483
    %v3661 = vmul.f32 %v3656, %v3660
    %v3662 = vadd.f32 %v3661, 0.05243302
    %v3663 = vmul.f32 %v3656, %v3662
    %v3664 = vadd.f32 %v3663, 0.18741608
    %v3665 = vmul.f32 %v3656, %v3664
    %v3666 = vadd.f32 %v3665, 1.1283791
    %v3667 = vmul.f32 %v1154, %v3666
    %v3668 = vmul.f32 %v3656, 3.8918573e-05
    %v3669 = vadd.f32 %v3668, 0.001143296
    %v3670 = vmul.f32 %v3656, %v3669
    %v3671 = vadd.f32 %v3670, 0.014752088
    %v3672 = vmul.f32 %v3656, %v3671
    %v3673 = vadd.f32 %v3672, 0.112945676
    %v3674 = vmul.f32 %v3656, %v3673
    %v3675 = vadd.f32 %v3674, 0.4994258
    %v3676 = vmul.f32 %v3656, %v3675
    %v3677 = vadd.f32 %v3676, 1.0
    %v3678 = vrcp.pop %v3677
    %v3679 = vmul.f32 %v3677, %v3678
    %v3680 = vsub.f32 1.0, %v3679
    %v3681 = vmul.f32 %v3678, %v3680
    %v3682 = vadd.f32 %v3678, %v3681
    %vm3683 = vweird.f32 %v3677
    %vm3684 = vweird.f32 %v3678
    %vm3685 = vmor %vm3683, %vm3684
    %v3686 = vsel %vm3685, %v3678, %v3682
    %v3687 = vand.u32 2147483647, %v3677
    %vm3688 = vcmp.eq.f32.partialorder %v3687, 8.507059e+37
    %v3689 = vand.u32 %v3677, 2147483648
    %v3690 = vor.u32 1.1754944e-38, %v3689
    %v3691 = vsel %vm3688, %v3690, %v3686
    %v3692 = vmul.f32 %v3667, %v3691
    %v3693 = vmin.f32 %v3692, 1.0
    %v3694 = vmax.f32 %v3693, -1.0
    %v3695 = vmul.f32 %v1155, %v1155
    %v3696 = vmin.f32 16.0, %v3695
    %v3697 = vmul.f32 %v3696, 2.1237322e-06
    %v3698 = vadd.f32 %v3697, 0.00028619796
    %v3699 = vmul.f32 %v3696, %v3698
    %v3700 = vadd.f32 %v3699, 0.0036580483
    %v3701 = vmul.f32 %v3696, %v3700
    %v3702 = vadd.f32 %v3701, 0.05243302
    %v3703 = vmul.f32 %v3696, %v3702
    %v3704 = vadd.f32 %v3703, 0.18741608
    %v3705 = vmul.f32 %v3696, %v3704
    %v3706 = vadd.f32 %v3705, 1.1283791
    %v3707 = vmul.f32 %v1155, %v3706
    %v3708 = vmul.f32 %v3696, 3.8918573e-05
    %v3709 = vadd.f32 %v3708, 0.001143296
    %v3710 = vmul.f32 %v3696, %v3709
    %v3711 = vadd.f32 %v3710, 0.014752088
    %v3712 = vmul.f32 %v3696, %v3711
    %v3713 = vadd.f32 %v3712, 0.112945676
    %v3714 = vmul.f32 %v3696, %v3713
    %v3715 = vadd.f32 %v3714, 0.4994258
    %v3716 = vmul.f32 %v3696, %v3715
    %v3717 = vadd.f32 %v3716, 1.0
    %v3718 = vrcp.pop %v3717
    %v3719 = vmul.f32 %v3717, %v3718
    %v3720 = vsub.f32 1.0, %v3719
    %v3721 = vmul.f32 %v3718, %v3720
    %v3722 = vadd.f32 %v3718, %v3721
    %vm3723 = vweird.f32 %v3717
    %vm3724 = vweird.f32 %v3718
    %vm3725 = vmor %vm3723, %vm3724
    %v3726 = vsel %vm3725, %v3718, %v3722
    %v3727 = vand.u32 2147483647, %v3717
    %vm3728 = vcmp.eq.f32.partialorder %v3727, 8.507059e+37
    %v3729 = vand.u32 %v3717, 2147483648
    %v3730 = vor.u32 1.1754944e-38, %v3729
    %v3731 = vsel %vm3728, %v3730, %v3726
    %v3732 = vmul.f32 %v3707, %v3731
    %v3733 = vmin.f32 %v3732, 1.0
    %v3734 = vmax.f32 %v3733, -1.0
    %v3735 = vmul.f32 %v1156, %v1156
    %v3736 = vmin.f32 16.0, %v3735
    %v3737 = vmul.f32 %v3736, 2.1237322e-06
    %v3738 = vadd.f32 %v3737, 0.00028619796
    %v3739 = vmul.f32 %v3736, %v3738
    %v3740 = vadd.f32 %v3739, 0.0036580483
    %v3741 = vmul.f32 %v3736, %v3740
    %v3742 = vadd.f32 %v3741, 0.05243302
    %v3743 = vmul.f32 %v3736, %v3742
    %v3744 = vadd.f32 %v3743, 0.18741608
    %v3745 = vmul.f32 %v3736, %v3744
    %v3746 = vadd.f32 %v3745, 1.1283791
    %v3747 = vmul.f32 %v1156, %v3746
    %v3748 = vmul.f32 %v3736, 3.8918573e-05
    %v3749 = vadd.f32 %v3748, 0.001143296
    %v3750 = vmul.f32 %v3736, %v3749
    %v3751 = vadd.f32 %v3750, 0.014752088
    %v3752 = vmul.f32 %v3736, %v3751
    %v3753 = vadd.f32 %v3752, 0.112945676
    %v3754 = vmul.f32 %v3736, %v3753
    %v3755 = vadd.f32 %v3754, 0.4994258
    %v3756 = vmul.f32 %v3736, %v3755
    %v3757 = vadd.f32 %v3756, 1.0
    %v3758 = vrcp.pop %v3757
    %v3759 = vmul.f32 %v3757, %v3758
    %v3760 = vsub.f32 1.0, %v3759
    %v3761 = vmul.f32 %v3758, %v3760
    %v3762 = vadd.f32 %v3758, %v3761
    %vm3763 = vweird.f32 %v3757
    %vm3764 = vweird.f32 %v3758
    %vm3765 = vmor %vm3763, %vm3764
    %v3766 = vsel %vm3765, %v3758, %v3762
    %v3767 = vand.u32 2147483647, %v3757
    %vm3768 = vcmp.eq.f32.partialorder %v3767, 8.507059e+37
    %v3769 = vand.u32 %v3757, 2147483648
    %v3770 = vor.u32 1.1754944e-38, %v3769
    %v3771 = vsel %vm3768, %v3770, %v3766
    %v3772 = vmul.f32 %v3747, %v3771
    %v3773 = vmin.f32 %v3772, 1.0
    %v3774 = vmax.f32 %v3773, -1.0
    %v3775 = vmul.f32 %v1157, %v1157
    %v3776 = vmin.f32 16.0, %v3775
    %v3777 = vmul.f32 %v3776, 2.1237322e-06
    %v3778 = vadd.f32 %v3777, 0.00028619796
    %v3779 = vmul.f32 %v3776, %v3778
    %v3780 = vadd.f32 %v3779, 0.0036580483
    %v3781 = vmul.f32 %v3776, %v3780
    %v3782 = vadd.f32 %v3781, 0.05243302
    %v3783 = vmul.f32 %v3776, %v3782
    %v3784 = vadd.f32 %v3783, 0.18741608
    %v3785 = vmul.f32 %v3776, %v3784
    %v3786 = vadd.f32 %v3785, 1.1283791
    %v3787 = vmul.f32 %v1157, %v3786
    %v3788 = vmul.f32 %v3776, 3.8918573e-05
    %v3789 = vadd.f32 %v3788, 0.001143296
    %v3790 = vmul.f32 %v3776, %v3789
    %v3791 = vadd.f32 %v3790, 0.014752088
    %v3792 = vmul.f32 %v3776, %v3791
    %v3793 = vadd.f32 %v3792, 0.112945676
    %v3794 = vmul.f32 %v3776, %v3793
    %v3795 = vadd.f32 %v3794, 0.4994258
    %v3796 = vmul.f32 %v3776, %v3795
    %v3797 = vadd.f32 %v3796, 1.0
    %v3798 = vrcp.pop %v3797
    %v3799 = vmul.f32 %v3797, %v3798
    %v3800 = vsub.f32 1.0, %v3799
    %v3801 = vmul.f32 %v3798, %v3800
    %v3802 = vadd.f32 %v3798, %v3801
    %vm3803 = vweird.f32 %v3797
    %vm3804 = vweird.f32 %v3798
    %vm3805 = vmor %vm3803, %vm3804
    %v3806 = vsel %vm3805, %v3798, %v3802
    %v3807 = vand.u32 2147483647, %v3797
    %vm3808 = vcmp.eq.f32.partialorder %v3807, 8.507059e+37
    %v3809 = vand.u32 %v3797, 2147483648
    %v3810 = vor.u32 1.1754944e-38, %v3809
    %v3811 = vsel %vm3808, %v3810, %v3806
    %v3812 = vmul.f32 %v3787, %v3811
    %v3813 = vmin.f32 %v3812, 1.0
    %v3814 = vmax.f32 %v3813, -1.0
    %v3815 = vmul.f32 %v1158, %v1158
    %v3816 = vmin.f32 16.0, %v3815
    %v3817 = vmul.f32 %v3816, 2.1237322e-06
    %v3818 = vadd.f32 %v3817, 0.00028619796
    %v3819 = vmul.f32 %v3816, %v3818
    %v3820 = vadd.f32 %v3819, 0.0036580483
    %v3821 = vmul.f32 %v3816, %v3820
    %v3822 = vadd.f32 %v3821, 0.05243302
    %v3823 = vmul.f32 %v3816, %v3822
    %v3824 = vadd.f32 %v3823, 0.18741608
    %v3825 = vmul.f32 %v3816, %v3824
    %v3826 = vadd.f32 %v3825, 1.1283791
    %v3827 = vmul.f32 %v1158, %v3826
    %v3828 = vmul.f32 %v3816, 3.8918573e-05
    %v3829 = vadd.f32 %v3828, 0.001143296
    %v3830 = vmul.f32 %v3816, %v3829
    %v3831 = vadd.f32 %v3830, 0.014752088
    %v3832 = vmul.f32 %v3816, %v3831
    %v3833 = vadd.f32 %v3832, 0.112945676
    %v3834 = vmul.f32 %v3816, %v3833
    %v3835 = vadd.f32 %v3834, 0.4994258
    %v3836 = vmul.f32 %v3816, %v3835
    %v3837 = vadd.f32 %v3836, 1.0
    %v3838 = vrcp.pop %v3837
    %v3839 = vmul.f32 %v3837, %v3838
    %v3840 = vsub.f32 1.0, %v3839
    %v3841 = vmul.f32 %v3838, %v3840
    %v3842 = vadd.f32 %v3838, %v3841
    %vm3843 = vweird.f32 %v3837
    %vm3844 = vweird.f32 %v3838
    %vm3845 = vmor %vm3843, %vm3844
    %v3846 = vsel %vm3845, %v3838, %v3842
    %v3847 = vand.u32 2147483647, %v3837
    %vm3848 = vcmp.eq.f32.partialorder %v3847, 8.507059e+37
    %v3849 = vand.u32 %v3837, 2147483648
    %v3850 = vor.u32 1.1754944e-38, %v3849
    %v3851 = vsel %vm3848, %v3850, %v3846
    %v3852 = vmul.f32 %v3827, %v3851
    %v3853 = vmin.f32 %v3852, 1.0
    %v3854 = vmax.f32 %v3853, -1.0
    %v3855 = vmul.f32 %v1159, %v1159
    %v3856 = vmin.f32 16.0, %v3855
    %v3857 = vmul.f32 %v3856, 2.1237322e-06
    %v3858 = vadd.f32 %v3857, 0.00028619796
    %v3859 = vmul.f32 %v3856, %v3858
    %v3860 = vadd.f32 %v3859, 0.0036580483
    %v3861 = vmul.f32 %v3856, %v3860
    %v3862 = vadd.f32 %v3861, 0.05243302
    %v3863 = vmul.f32 %v3856, %v3862
    %v3864 = vadd.f32 %v3863, 0.18741608
    %v3865 = vmul.f32 %v3856, %v3864
    %v3866 = vadd.f32 %v3865, 1.1283791
    %v3867 = vmul.f32 %v1159, %v3866
    %v3868 = vmul.f32 %v3856, 3.8918573e-05
    %v3869 = vadd.f32 %v3868, 0.001143296
    %v3870 = vmul.f32 %v3856, %v3869
    %v3871 = vadd.f32 %v3870, 0.014752088
    %v3872 = vmul.f32 %v3856, %v3871
    %v3873 = vadd.f32 %v3872, 0.112945676
    %v3874 = vmul.f32 %v3856, %v3873
    %v3875 = vadd.f32 %v3874, 0.4994258
    %v3876 = vmul.f32 %v3856, %v3875
    %v3877 = vadd.f32 %v3876, 1.0
    %v3878 = vrcp.pop %v3877
    %v3879 = vmul.f32 %v3877, %v3878
    %v3880 = vsub.f32 1.0, %v3879
    %v3881 = vmul.f32 %v3878, %v3880
    %v3882 = vadd.f32 %v3878, %v3881
    %vm3883 = vweird.f32 %v3877
    %vm3884 = vweird.f32 %v3878
    %vm3885 = vmor %vm3883, %vm3884
    %v3886 = vsel %vm3885, %v3878, %v3882
    %v3887 = vand.u32 2147483647, %v3877
    %vm3888 = vcmp.eq.f32.partialorder %v3887, 8.507059e+37
    %v3889 = vand.u32 %v3877, 2147483648
    %v3890 = vor.u32 1.1754944e-38, %v3889
    %v3891 = vsel %vm3888, %v3890, %v3886
    %v3892 = vmul.f32 %v3867, %v3891
    %v3893 = vmin.f32 %v3892, 1.0
    %v3894 = vmax.f32 %v3893, -1.0
    %v3895 = vmul.f32 %v1160, %v1160
    %v3896 = vmin.f32 16.0, %v3895
    %v3897 = vmul.f32 %v3896, 2.1237322e-06
    %v3898 = vadd.f32 %v3897, 0.00028619796
    %v3899 = vmul.f32 %v3896, %v3898
    %v3900 = vadd.f32 %v3899, 0.0036580483
    %v3901 = vmul.f32 %v3896, %v3900
    %v3902 = vadd.f32 %v3901, 0.05243302
    %v3903 = vmul.f32 %v3896, %v3902
    %v3904 = vadd.f32 %v3903, 0.18741608
    %v3905 = vmul.f32 %v3896, %v3904
    %v3906 = vadd.f32 %v3905, 1.1283791
    %v3907 = vmul.f32 %v1160, %v3906
    %v3908 = vmul.f32 %v3896, 3.8918573e-05
    %v3909 = vadd.f32 %v3908, 0.001143296
    %v3910 = vmul.f32 %v3896, %v3909
    %v3911 = vadd.f32 %v3910, 0.014752088
    %v3912 = vmul.f32 %v3896, %v3911
    %v3913 = vadd.f32 %v3912, 0.112945676
    %v3914 = vmul.f32 %v3896, %v3913
    %v3915 = vadd.f32 %v3914, 0.4994258
    %v3916 = vmul.f32 %v3896, %v3915
    %v3917 = vadd.f32 %v3916, 1.0
    %v3918 = vrcp.pop %v3917
    %v3919 = vmul.f32 %v3917, %v3918
    %v3920 = vsub.f32 1.0, %v3919
    %v3921 = vmul.f32 %v3918, %v3920
    %v3922 = vadd.f32 %v3918, %v3921
    %vm3923 = vweird.f32 %v3917
    %vm3924 = vweird.f32 %v3918
    %vm3925 = vmor %vm3923, %vm3924
    %v3926 = vsel %vm3925, %v3918, %v3922
    %v3927 = vand.u32 2147483647, %v3917
    %vm3928 = vcmp.eq.f32.partialorder %v3927, 8.507059e+37
    %v3929 = vand.u32 %v3917, 2147483648
    %v3930 = vor.u32 1.1754944e-38, %v3929
    %v3931 = vsel %vm3928, %v3930, %v3926
    %v3932 = vmul.f32 %v3907, %v3931
    %v3933 = vmin.f32 %v3932, 1.0
    %v3934 = vmax.f32 %v3933, -1.0
    %v3935 = vmul.f32 %v1161, %v1161
    %v3936 = vmin.f32 16.0, %v3935
    %v3937 = vmul.f32 %v3936, 2.1237322e-06
    %v3938 = vadd.f32 %v3937, 0.00028619796
    %v3939 = vmul.f32 %v3936, %v3938
    %v3940 = vadd.f32 %v3939, 0.0036580483
    %v3941 = vmul.f32 %v3936, %v3940
    %v3942 = vadd.f32 %v3941, 0.05243302
    %v3943 = vmul.f32 %v3936, %v3942
    %v3944 = vadd.f32 %v3943, 0.18741608
    %v3945 = vmul.f32 %v3936, %v3944
    %v3946 = vadd.f32 %v3945, 1.1283791
    %v3947 = vmul.f32 %v1161, %v3946
    %v3948 = vmul.f32 %v3936, 3.8918573e-05
    %v3949 = vadd.f32 %v3948, 0.001143296
    %v3950 = vmul.f32 %v3936, %v3949
    %v3951 = vadd.f32 %v3950, 0.014752088
    %v3952 = vmul.f32 %v3936, %v3951
    %v3953 = vadd.f32 %v3952, 0.112945676
    %v3954 = vmul.f32 %v3936, %v3953
    %v3955 = vadd.f32 %v3954, 0.4994258
    %v3956 = vmul.f32 %v3936, %v3955
    %v3957 = vadd.f32 %v3956, 1.0
    %v3958 = vrcp.pop %v3957
    %v3959 = vmul.f32 %v3957, %v3958
    %v3960 = vsub.f32 1.0, %v3959
    %v3961 = vmul.f32 %v3958, %v3960
    %v3962 = vadd.f32 %v3958, %v3961
    %vm3963 = vweird.f32 %v3957
    %vm3964 = vweird.f32 %v3958
    %vm3965 = vmor %vm3963, %vm3964
    %v3966 = vsel %vm3965, %v3958, %v3962
    %v3967 = vand.u32 2147483647, %v3957
    %vm3968 = vcmp.eq.f32.partialorder %v3967, 8.507059e+37
    %v3969 = vand.u32 %v3957, 2147483648
    %v3970 = vor.u32 1.1754944e-38, %v3969
    %v3971 = vsel %vm3968, %v3970, %v3966
    %v3972 = vmul.f32 %v3947, %v3971
    %v3973 = vmin.f32 %v3972, 1.0
    %v3974 = vmax.f32 %v3973, -1.0
    %v3975 = vmul.f32 %v1162, %v1162
    %v3976 = vmin.f32 16.0, %v3975
    %v3977 = vmul.f32 %v3976, 2.1237322e-06
    %v3978 = vadd.f32 %v3977, 0.00028619796
    %v3979 = vmul.f32 %v3976, %v3978
    %v3980 = vadd.f32 %v3979, 0.0036580483
    %v3981 = vmul.f32 %v3976, %v3980
    %v3982 = vadd.f32 %v3981, 0.05243302
    %v3983 = vmul.f32 %v3976, %v3982
    %v3984 = vadd.f32 %v3983, 0.18741608
    %v3985 = vmul.f32 %v3976, %v3984
    %v3986 = vadd.f32 %v3985, 1.1283791
    %v3987 = vmul.f32 %v1162, %v3986
    %v3988 = vmul.f32 %v3976, 3.8918573e-05
    %v3989 = vadd.f32 %v3988, 0.001143296
    %v3990 = vmul.f32 %v3976, %v3989
    %v3991 = vadd.f32 %v3990, 0.014752088
    %v3992 = vmul.f32 %v3976, %v3991
    %v3993 = vadd.f32 %v3992, 0.112945676
    %v3994 = vmul.f32 %v3976, %v3993
    %v3995 = vadd.f32 %v3994, 0.4994258
    %v3996 = vmul.f32 %v3976, %v3995
    %v3997 = vadd.f32 %v3996, 1.0
    %v3998 = vrcp.pop %v3997
    %v3999 = vmul.f32 %v3997, %v3998
    %v4000 = vsub.f32 1.0, %v3999
    %v4001 = vmul.f32 %v3998, %v4000
    %v4002 = vadd.f32 %v3998, %v4001
    %vm4003 = vweird.f32 %v3997
    %vm4004 = vweird.f32 %v3998
    %vm4005 = vmor %vm4003, %vm4004
    %v4006 = vsel %vm4005, %v3998, %v4002
    %v4007 = vand.u32 2147483647, %v3997
    %vm4008 = vcmp.eq.f32.partialorder %v4007, 8.507059e+37
    %v4009 = vand.u32 %v3997, 2147483648
    %v4010 = vor.u32 1.1754944e-38, %v4009
    %v4011 = vsel %vm4008, %v4010, %v4006
    %v4012 = vmul.f32 %v3987, %v4011
    %v4013 = vmin.f32 %v4012, 1.0
    %v4014 = vmax.f32 %v4013, -1.0
    %v4015 = vmul.f32 %v1163, %v1163
    %v4016 = vmin.f32 16.0, %v4015
    %v4017 = vmul.f32 %v4016, 2.1237322e-06
    %v4018 = vadd.f32 %v4017, 0.00028619796
    %v4019 = vmul.f32 %v4016, %v4018
    %v4020 = vadd.f32 %v4019, 0.0036580483
    %v4021 = vmul.f32 %v4016, %v4020
    %v4022 = vadd.f32 %v4021, 0.05243302
    %v4023 = vmul.f32 %v4016, %v4022
    %v4024 = vadd.f32 %v4023, 0.18741608
    %v4025 = vmul.f32 %v4016, %v4024
    %v4026 = vadd.f32 %v4025, 1.1283791
    %v4027 = vmul.f32 %v1163, %v4026
    %v4028 = vmul.f32 %v4016, 3.8918573e-05
    %v4029 = vadd.f32 %v4028, 0.001143296
    %v4030 = vmul.f32 %v4016, %v4029
    %v4031 = vadd.f32 %v4030, 0.014752088
    %v4032 = vmul.f32 %v4016, %v4031
    %v4033 = vadd.f32 %v4032, 0.112945676
    %v4034 = vmul.f32 %v4016, %v4033
    %v4035 = vadd.f32 %v4034, 0.4994258
    %v4036 = vmul.f32 %v4016, %v4035
    %v4037 = vadd.f32 %v4036, 1.0
    %v4038 = vrcp.pop %v4037
    %v4039 = vmul.f32 %v4037, %v4038
    %v4040 = vsub.f32 1.0, %v4039
    %v4041 = vmul.f32 %v4038, %v4040
    %v4042 = vadd.f32 %v4038, %v4041
    %vm4043 = vweird.f32 %v4037
    %vm4044 = vweird.f32 %v4038
    %vm4045 = vmor %vm4043, %vm4044
    %v4046 = vsel %vm4045, %v4038, %v4042
    %v4047 = vand.u32 2147483647, %v4037
    %vm4048 = vcmp.eq.f32.partialorder %v4047, 8.507059e+37
    %v4049 = vand.u32 %v4037, 2147483648
    %v4050 = vor.u32 1.1754944e-38, %v4049
    %v4051 = vsel %vm4048, %v4050, %v4046
    %v4052 = vmul.f32 %v4027, %v4051
    %v4053 = vmin.f32 %v4052, 1.0
    %v4054 = vmax.f32 %v4053, -1.0
    %v4055 = vmul.f32 %v1164, %v1164
    %v4056 = vmin.f32 16.0, %v4055
    %v4057 = vmul.f32 %v4056, 2.1237322e-06
    %v4058 = vadd.f32 %v4057, 0.00028619796
    %v4059 = vmul.f32 %v4056, %v4058
    %v4060 = vadd.f32 %v4059, 0.0036580483
    %v4061 = vmul.f32 %v4056, %v4060
    %v4062 = vadd.f32 %v4061, 0.05243302
    %v4063 = vmul.f32 %v4056, %v4062
    %v4064 = vadd.f32 %v4063, 0.18741608
    %v4065 = vmul.f32 %v4056, %v4064
    %v4066 = vadd.f32 %v4065, 1.1283791
    %v4067 = vmul.f32 %v1164, %v4066
    %v4068 = vmul.f32 %v4056, 3.8918573e-05
    %v4069 = vadd.f32 %v4068, 0.001143296
    %v4070 = vmul.f32 %v4056, %v4069
    %v4071 = vadd.f32 %v4070, 0.014752088
    %v4072 = vmul.f32 %v4056, %v4071
    %v4073 = vadd.f32 %v4072, 0.112945676
    %v4074 = vmul.f32 %v4056, %v4073
    %v4075 = vadd.f32 %v4074, 0.4994258
    %v4076 = vmul.f32 %v4056, %v4075
    %v4077 = vadd.f32 %v4076, 1.0
    %v4078 = vrcp.pop %v4077
    %v4079 = vmul.f32 %v4077, %v4078
    %v4080 = vsub.f32 1.0, %v4079
    %v4081 = vmul.f32 %v4078, %v4080
    %v4082 = vadd.f32 %v4078, %v4081
    %vm4083 = vweird.f32 %v4077
    %vm4084 = vweird.f32 %v4078
    %vm4085 = vmor %vm4083, %vm4084
    %v4086 = vsel %vm4085, %v4078, %v4082
    %v4087 = vand.u32 2147483647, %v4077
    %vm4088 = vcmp.eq.f32.partialorder %v4087, 8.507059e+37
    %v4089 = vand.u32 %v4077, 2147483648
    %v4090 = vor.u32 1.1754944e-38, %v4089
    %v4091 = vsel %vm4088, %v4090, %v4086
    %v4092 = vmul.f32 %v4067, %v4091
    %v4093 = vmin.f32 %v4092, 1.0
    %v4094 = vmax.f32 %v4093, -1.0
    %v4095 = vmul.f32 %v1165, %v1165
    %v4096 = vmin.f32 16.0, %v4095
    %v4097 = vmul.f32 %v4096, 2.1237322e-06
    %v4098 = vadd.f32 %v4097, 0.00028619796
    %v4099 = vmul.f32 %v4096, %v4098
    %v4100 = vadd.f32 %v4099, 0.0036580483
    %v4101 = vmul.f32 %v4096, %v4100
    %v4102 = vadd.f32 %v4101, 0.05243302
    %v4103 = vmul.f32 %v4096, %v4102
    %v4104 = vadd.f32 %v4103, 0.18741608
    %v4105 = vmul.f32 %v4096, %v4104
    %v4106 = vadd.f32 %v4105, 1.1283791
    %v4107 = vmul.f32 %v1165, %v4106
    %v4108 = vmul.f32 %v4096, 3.8918573e-05
    %v4109 = vadd.f32 %v4108, 0.001143296
    %v4110 = vmul.f32 %v4096, %v4109
    %v4111 = vadd.f32 %v4110, 0.014752088
    %v4112 = vmul.f32 %v4096, %v4111
    %v4113 = vadd.f32 %v4112, 0.112945676
    %v4114 = vmul.f32 %v4096, %v4113
    %v4115 = vadd.f32 %v4114, 0.4994258
    %v4116 = vmul.f32 %v4096, %v4115
    %v4117 = vadd.f32 %v4116, 1.0
    %v4118 = vrcp.pop %v4117
    %v4119 = vmul.f32 %v4117, %v4118
    %v4120 = vsub.f32 1.0, %v4119
    %v4121 = vmul.f32 %v4118, %v4120
    %v4122 = vadd.f32 %v4118, %v4121
    %vm4123 = vweird.f32 %v4117
    %vm4124 = vweird.f32 %v4118
    %vm4125 = vmor %vm4123, %vm4124
    %v4126 = vsel %vm4125, %v4118, %v4122
    %v4127 = vand.u32 2147483647, %v4117
    %vm4128 = vcmp.eq.f32.partialorder %v4127, 8.507059e+37
    %v4129 = vand.u32 %v4117, 2147483648
    %v4130 = vor.u32 1.1754944e-38, %v4129
    %v4131 = vsel %vm4128, %v4130, %v4126
    %v4132 = vmul.f32 %v4107, %v4131
    %v4133 = vmin.f32 %v4132, 1.0
    %v4134 = vmax.f32 %v4133, -1.0
    %v4135 = vmul.f32 %v1166, %v1166
    %v4136 = vmin.f32 16.0, %v4135
    %v4137 = vmul.f32 %v4136, 2.1237322e-06
    %v4138 = vadd.f32 %v4137, 0.00028619796
    %v4139 = vmul.f32 %v4136, %v4138
    %v4140 = vadd.f32 %v4139, 0.0036580483
    %v4141 = vmul.f32 %v4136, %v4140
    %v4142 = vadd.f32 %v4141, 0.05243302
    %v4143 = vmul.f32 %v4136, %v4142
    %v4144 = vadd.f32 %v4143, 0.18741608
    %v4145 = vmul.f32 %v4136, %v4144
    %v4146 = vadd.f32 %v4145, 1.1283791
    %v4147 = vmul.f32 %v1166, %v4146
    %v4148 = vmul.f32 %v4136, 3.8918573e-05
    %v4149 = vadd.f32 %v4148, 0.001143296
    %v4150 = vmul.f32 %v4136, %v4149
    %v4151 = vadd.f32 %v4150, 0.014752088
    %v4152 = vmul.f32 %v4136, %v4151
    %v4153 = vadd.f32 %v4152, 0.112945676
    %v4154 = vmul.f32 %v4136, %v4153
    %v4155 = vadd.f32 %v4154, 0.4994258
    %v4156 = vmul.f32 %v4136, %v4155
    %v4157 = vadd.f32 %v4156, 1.0
    %v4158 = vrcp.pop %v4157
    %v4159 = vmul.f32 %v4157, %v4158
    %v4160 = vsub.f32 1.0, %v4159
    %v4161 = vmul.f32 %v4158, %v4160
    %v4162 = vadd.f32 %v4158, %v4161
    %vm4163 = vweird.f32 %v4157
    %vm4164 = vweird.f32 %v4158
    %vm4165 = vmor %vm4163, %vm4164
    %v4166 = vsel %vm4165, %v4158, %v4162
    %v4167 = vand.u32 2147483647, %v4157
    %vm4168 = vcmp.eq.f32.partialorder %v4167, 8.507059e+37
    %v4169 = vand.u32 %v4157, 2147483648
    %v4170 = vor.u32 1.1754944e-38, %v4169
    %v4171 = vsel %vm4168, %v4170, %v4166
    %v4172 = vmul.f32 %v4147, %v4171
    %v4173 = vmin.f32 %v4172, 1.0
    %v4174 = vmax.f32 %v4173, -1.0
    %v4175 = vmul.f32 %v1167, %v1167
    %v4176 = vmin.f32 16.0, %v4175
    %v4177 = vmul.f32 %v4176, 2.1237322e-06
    %v4178 = vadd.f32 %v4177, 0.00028619796
    %v4179 = vmul.f32 %v4176, %v4178
    %v4180 = vadd.f32 %v4179, 0.0036580483
    %v4181 = vmul.f32 %v4176, %v4180
    %v4182 = vadd.f32 %v4181, 0.05243302
    %v4183 = vmul.f32 %v4176, %v4182
    %v4184 = vadd.f32 %v4183, 0.18741608
    %v4185 = vmul.f32 %v4176, %v4184
    %v4186 = vadd.f32 %v4185, 1.1283791
    %v4187 = vmul.f32 %v1167, %v4186
    %v4188 = vmul.f32 %v4176, 3.8918573e-05
    %v4189 = vadd.f32 %v4188, 0.001143296
    %v4190 = vmul.f32 %v4176, %v4189
    %v4191 = vadd.f32 %v4190, 0.014752088
    %v4192 = vmul.f32 %v4176, %v4191
    %v4193 = vadd.f32 %v4192, 0.112945676
    %v4194 = vmul.f32 %v4176, %v4193
    %v4195 = vadd.f32 %v4194, 0.4994258
    %v4196 = vmul.f32 %v4176, %v4195
    %v4197 = vadd.f32 %v4196, 1.0
    %v4198 = vrcp.pop %v4197
    %v4199 = vmul.f32 %v4197, %v4198
    %v4200 = vsub.f32 1.0, %v4199
    %v4201 = vmul.f32 %v4198, %v4200
    %v4202 = vadd.f32 %v4198, %v4201
    %vm4203 = vweird.f32 %v4197
    %vm4204 = vweird.f32 %v4198
    %vm4205 = vmor %vm4203, %vm4204
    %v4206 = vsel %vm4205, %v4198, %v4202
    %v4207 = vand.u32 2147483647, %v4197
    %vm4208 = vcmp.eq.f32.partialorder %v4207, 8.507059e+37
    %v4209 = vand.u32 %v4197, 2147483648
    %v4210 = vor.u32 1.1754944e-38, %v4209
    %v4211 = vsel %vm4208, %v4210, %v4206
    %v4212 = vmul.f32 %v4187, %v4211
    %v4213 = vmin.f32 %v4212, 1.0
    %v4214 = vmax.f32 %v4213, -1.0
    %v4215 = vmul.f32 %v1168, %v1168
    %v4216 = vmin.f32 16.0, %v4215
    %v4217 = vmul.f32 %v4216, 2.1237322e-06
    %v4218 = vadd.f32 %v4217, 0.00028619796
    %v4219 = vmul.f32 %v4216, %v4218
    %v4220 = vadd.f32 %v4219, 0.0036580483
    %v4221 = vmul.f32 %v4216, %v4220
    %v4222 = vadd.f32 %v4221, 0.05243302
    %v4223 = vmul.f32 %v4216, %v4222
    %v4224 = vadd.f32 %v4223, 0.18741608
    %v4225 = vmul.f32 %v4216, %v4224
    %v4226 = vadd.f32 %v4225, 1.1283791
    %v4227 = vmul.f32 %v1168, %v4226
    %v4228 = vmul.f32 %v4216, 3.8918573e-05
    %v4229 = vadd.f32 %v4228, 0.001143296
    %v4230 = vmul.f32 %v4216, %v4229
    %v4231 = vadd.f32 %v4230, 0.014752088
    %v4232 = vmul.f32 %v4216, %v4231
    %v4233 = vadd.f32 %v4232, 0.112945676
    %v4234 = vmul.f32 %v4216, %v4233
    %v4235 = vadd.f32 %v4234, 0.4994258
    %v4236 = vmul.f32 %v4216, %v4235
    %v4237 = vadd.f32 %v4236, 1.0
    %v4238 = vrcp.pop %v4237
    %v4239 = vmul.f32 %v4237, %v4238
    %v4240 = vsub.f32 1.0, %v4239
    %v4241 = vmul.f32 %v4238, %v4240
    %v4242 = vadd.f32 %v4238, %v4241
    %vm4243 = vweird.f32 %v4237
    %vm4244 = vweird.f32 %v4238
    %vm4245 = vmor %vm4243, %vm4244
    %v4246 = vsel %vm4245, %v4238, %v4242
    %v4247 = vand.u32 2147483647, %v4237
    %vm4248 = vcmp.eq.f32.partialorder %v4247, 8.507059e+37
    %v4249 = vand.u32 %v4237, 2147483648
    %v4250 = vor.u32 1.1754944e-38, %v4249
    %v4251 = vsel %vm4248, %v4250, %v4246
    %v4252 = vmul.f32 %v4227, %v4251
    %v4253 = vmin.f32 %v4252, 1.0
    %v4254 = vmax.f32 %v4253, -1.0
    %v4255 = vmul.f32 %v1169, %v1169
    %v4256 = vmin.f32 16.0, %v4255
    %v4257 = vmul.f32 %v4256, 2.1237322e-06
    %v4258 = vadd.f32 %v4257, 0.00028619796
    %v4259 = vmul.f32 %v4256, %v4258
    %v4260 = vadd.f32 %v4259, 0.0036580483
    %v4261 = vmul.f32 %v4256, %v4260
    %v4262 = vadd.f32 %v4261, 0.05243302
    %v4263 = vmul.f32 %v4256, %v4262
    %v4264 = vadd.f32 %v4263, 0.18741608
    %v4265 = vmul.f32 %v4256, %v4264
    %v4266 = vadd.f32 %v4265, 1.1283791
    %v4267 = vmul.f32 %v1169, %v4266
    %v4268 = vmul.f32 %v4256, 3.8918573e-05
    %v4269 = vadd.f32 %v4268, 0.001143296
    %v4270 = vmul.f32 %v4256, %v4269
    %v4271 = vadd.f32 %v4270, 0.014752088
    %v4272 = vmul.f32 %v4256, %v4271
    %v4273 = vadd.f32 %v4272, 0.112945676
    %v4274 = vmul.f32 %v4256, %v4273
    %v4275 = vadd.f32 %v4274, 0.4994258
    %v4276 = vmul.f32 %v4256, %v4275
    %v4277 = vadd.f32 %v4276, 1.0
    %v4278 = vrcp.pop %v4277
    %v4279 = vmul.f32 %v4277, %v4278
    %v4280 = vsub.f32 1.0, %v4279
    %v4281 = vmul.f32 %v4278, %v4280
    %v4282 = vadd.f32 %v4278, %v4281
    %vm4283 = vweird.f32 %v4277
    %vm4284 = vweird.f32 %v4278
    %vm4285 = vmor %vm4283, %vm4284
    %v4286 = vsel %vm4285, %v4278, %v4282
    %v4287 = vand.u32 2147483647, %v4277
    %vm4288 = vcmp.eq.f32.partialorder %v4287, 8.507059e+37
    %v4289 = vand.u32 %v4277, 2147483648
    %v4290 = vor.u32 1.1754944e-38, %v4289
    %v4291 = vsel %vm4288, %v4290, %v4286
    %v4292 = vmul.f32 %v4267, %v4291
    %v4293 = vmin.f32 %v4292, 1.0
    %v4294 = vmax.f32 %v4293, -1.0
    %v4295 = vmul.f32 %v1170, %v1170
    %v4296 = vmin.f32 16.0, %v4295
    %v4297 = vmul.f32 %v4296, 2.1237322e-06
    %v4298 = vadd.f32 %v4297, 0.00028619796
    %v4299 = vmul.f32 %v4296, %v4298
    %v4300 = vadd.f32 %v4299, 0.0036580483
    %v4301 = vmul.f32 %v4296, %v4300
    %v4302 = vadd.f32 %v4301, 0.05243302
    %v4303 = vmul.f32 %v4296, %v4302
    %v4304 = vadd.f32 %v4303, 0.18741608
    %v4305 = vmul.f32 %v4296, %v4304
    %v4306 = vadd.f32 %v4305, 1.1283791
    %v4307 = vmul.f32 %v1170, %v4306
    %v4308 = vmul.f32 %v4296, 3.8918573e-05
    %v4309 = vadd.f32 %v4308, 0.001143296
    %v4310 = vmul.f32 %v4296, %v4309
    %v4311 = vadd.f32 %v4310, 0.014752088
    %v4312 = vmul.f32 %v4296, %v4311
    %v4313 = vadd.f32 %v4312, 0.112945676
    %v4314 = vmul.f32 %v4296, %v4313
    %v4315 = vadd.f32 %v4314, 0.4994258
    %v4316 = vmul.f32 %v4296, %v4315
    %v4317 = vadd.f32 %v4316, 1.0
    %v4318 = vrcp.pop %v4317
    %v4319 = vmul.f32 %v4317, %v4318
    %v4320 = vsub.f32 1.0, %v4319
    %v4321 = vmul.f32 %v4318, %v4320
    %v4322 = vadd.f32 %v4318, %v4321
    %vm4323 = vweird.f32 %v4317
    %vm4324 = vweird.f32 %v4318
    %vm4325 = vmor %vm4323, %vm4324
    %v4326 = vsel %vm4325, %v4318, %v4322
    %v4327 = vand.u32 2147483647, %v4317
    %vm4328 = vcmp.eq.f32.partialorder %v4327, 8.507059e+37
    %v4329 = vand.u32 %v4317, 2147483648
    %v4330 = vor.u32 1.1754944e-38, %v4329
    %v4331 = vsel %vm4328, %v4330, %v4326
    %v4332 = vmul.f32 %v4307, %v4331
    %v4333 = vmin.f32 %v4332, 1.0
    %v4334 = vmax.f32 %v4333, -1.0
    %v4335 = vmul.f32 %v1171, %v1171
    %v4336 = vmin.f32 16.0, %v4335
    %v4337 = vmul.f32 %v4336, 2.1237322e-06
    %v4338 = vadd.f32 %v4337, 0.00028619796
    %v4339 = vmul.f32 %v4336, %v4338
    %v4340 = vadd.f32 %v4339, 0.0036580483
    %v4341 = vmul.f32 %v4336, %v4340
    %v4342 = vadd.f32 %v4341, 0.05243302
    %v4343 = vmul.f32 %v4336, %v4342
    %v4344 = vadd.f32 %v4343, 0.18741608
    %v4345 = vmul.f32 %v4336, %v4344
    %v4346 = vadd.f32 %v4345, 1.1283791
    %v4347 = vmul.f32 %v1171, %v4346
    %v4348 = vmul.f32 %v4336, 3.8918573e-05
    %v4349 = vadd.f32 %v4348, 0.001143296
    %v4350 = vmul.f32 %v4336, %v4349
    %v4351 = vadd.f32 %v4350, 0.014752088
    %v4352 = vmul.f32 %v4336, %v4351
    %v4353 = vadd.f32 %v4352, 0.112945676
    %v4354 = vmul.f32 %v4336, %v4353
    %v4355 = vadd.f32 %v4354, 0.4994258
    %v4356 = vmul.f32 %v4336, %v4355
    %v4357 = vadd.f32 %v4356, 1.0
    %v4358 = vrcp.pop %v4357
    %v4359 = vmul.f32 %v4357, %v4358
    %v4360 = vsub.f32 1.0, %v4359
    %v4361 = vmul.f32 %v4358, %v4360
    %v4362 = vadd.f32 %v4358, %v4361
    %vm4363 = vweird.f32 %v4357
    %vm4364 = vweird.f32 %v4358
    %vm4365 = vmor %vm4363, %vm4364
    %v4366 = vsel %vm4365, %v4358, %v4362
    %v4367 = vand.u32 2147483647, %v4357
    %vm4368 = vcmp.eq.f32.partialorder %v4367, 8.507059e+37
    %v4369 = vand.u32 %v4357, 2147483648
    %v4370 = vor.u32 1.1754944e-38, %v4369
    %v4371 = vsel %vm4368, %v4370, %v4366
    %v4372 = vmul.f32 %v4347, %v4371
    %v4373 = vmin.f32 %v4372, 1.0
    %v4374 = vmax.f32 %v4373, -1.0
    %v4375 = vmul.f32 %v1172, %v1172
    %v4376 = vmin.f32 16.0, %v4375
    %v4377 = vmul.f32 %v4376, 2.1237322e-06
    %v4378 = vadd.f32 %v4377, 0.00028619796
    %v4379 = vmul.f32 %v4376, %v4378
    %v4380 = vadd.f32 %v4379, 0.0036580483
    %v4381 = vmul.f32 %v4376, %v4380
    %v4382 = vadd.f32 %v4381, 0.05243302
    %v4383 = vmul.f32 %v4376, %v4382
    %v4384 = vadd.f32 %v4383, 0.18741608
    %v4385 = vmul.f32 %v4376, %v4384
    %v4386 = vadd.f32 %v4385, 1.1283791
    %v4387 = vmul.f32 %v1172, %v4386
    %v4388 = vmul.f32 %v4376, 3.8918573e-05
    %v4389 = vadd.f32 %v4388, 0.001143296
    %v4390 = vmul.f32 %v4376, %v4389
    %v4391 = vadd.f32 %v4390, 0.014752088
    %v4392 = vmul.f32 %v4376, %v4391
    %v4393 = vadd.f32 %v4392, 0.112945676
    %v4394 = vmul.f32 %v4376, %v4393
    %v4395 = vadd.f32 %v4394, 0.4994258
    %v4396 = vmul.f32 %v4376, %v4395
    %v4397 = vadd.f32 %v4396, 1.0
    %v4398 = vrcp.pop %v4397
    %v4399 = vmul.f32 %v4397, %v4398
    %v4400 = vsub.f32 1.0, %v4399
    %v4401 = vmul.f32 %v4398, %v4400
    %v4402 = vadd.f32 %v4398, %v4401
    %vm4403 = vweird.f32 %v4397
    %vm4404 = vweird.f32 %v4398
    %vm4405 = vmor %vm4403, %vm4404
    %v4406 = vsel %vm4405, %v4398, %v4402
    %v4407 = vand.u32 2147483647, %v4397
    %vm4408 = vcmp.eq.f32.partialorder %v4407, 8.507059e+37
    %v4409 = vand.u32 %v4397, 2147483648
    %v4410 = vor.u32 1.1754944e-38, %v4409
    %v4411 = vsel %vm4408, %v4410, %v4406
    %v4412 = vmul.f32 %v4387, %v4411
    %v4413 = vmin.f32 %v4412, 1.0
    %v4414 = vmax.f32 %v4413, -1.0
    %v4415 = vmul.f32 %v1173, %v1173
    %v4416 = vmin.f32 16.0, %v4415
    %v4417 = vmul.f32 %v4416, 2.1237322e-06
    %v4418 = vadd.f32 %v4417, 0.00028619796
    %v4419 = vmul.f32 %v4416, %v4418
    %v4420 = vadd.f32 %v4419, 0.0036580483
    %v4421 = vmul.f32 %v4416, %v4420
    %v4422 = vadd.f32 %v4421, 0.05243302
    %v4423 = vmul.f32 %v4416, %v4422
    %v4424 = vadd.f32 %v4423, 0.18741608
    %v4425 = vmul.f32 %v4416, %v4424
    %v4426 = vadd.f32 %v4425, 1.1283791
    %v4427 = vmul.f32 %v1173, %v4426
    %v4428 = vmul.f32 %v4416, 3.8918573e-05
    %v4429 = vadd.f32 %v4428, 0.001143296
    %v4430 = vmul.f32 %v4416, %v4429
    %v4431 = vadd.f32 %v4430, 0.014752088
    %v4432 = vmul.f32 %v4416, %v4431
    %v4433 = vadd.f32 %v4432, 0.112945676
    %v4434 = vmul.f32 %v4416, %v4433
    %v4435 = vadd.f32 %v4434, 0.4994258
    %v4436 = vmul.f32 %v4416, %v4435
    %v4437 = vadd.f32 %v4436, 1.0
    %v4438 = vrcp.pop %v4437
    %v4439 = vmul.f32 %v4437, %v4438
    %v4440 = vsub.f32 1.0, %v4439
    %v4441 = vmul.f32 %v4438, %v4440
    %v4442 = vadd.f32 %v4438, %v4441
    %vm4443 = vweird.f32 %v4437
    %vm4444 = vweird.f32 %v4438
    %vm4445 = vmor %vm4443, %vm4444
    %v4446 = vsel %vm4445, %v4438, %v4442
    %v4447 = vand.u32 2147483647, %v4437
    %vm4448 = vcmp.eq.f32.partialorder %v4447, 8.507059e+37
    %v4449 = vand.u32 %v4437, 2147483648
    %v4450 = vor.u32 1.1754944e-38, %v4449
    %v4451 = vsel %vm4448, %v4450, %v4446
    %v4452 = vmul.f32 %v4427, %v4451
    %v4453 = vmin.f32 %v4452, 1.0
    %v4454 = vmax.f32 %v4453, -1.0
    %v4455 = vmul.f32 %v1174, %v1174
    %v4456 = vmin.f32 16.0, %v4455
    %v4457 = vmul.f32 %v4456, 2.1237322e-06
    %v4458 = vadd.f32 %v4457, 0.00028619796
    %v4459 = vmul.f32 %v4456, %v4458
    %v4460 = vadd.f32 %v4459, 0.0036580483
    %v4461 = vmul.f32 %v4456, %v4460
    %v4462 = vadd.f32 %v4461, 0.05243302
    %v4463 = vmul.f32 %v4456, %v4462
    %v4464 = vadd.f32 %v4463, 0.18741608
    %v4465 = vmul.f32 %v4456, %v4464
    %v4466 = vadd.f32 %v4465, 1.1283791
    %v4467 = vmul.f32 %v1174, %v4466
    %v4468 = vmul.f32 %v4456, 3.8918573e-05
    %v4469 = vadd.f32 %v4468, 0.001143296
    %v4470 = vmul.f32 %v4456, %v4469
    %v4471 = vadd.f32 %v4470, 0.014752088
    %v4472 = vmul.f32 %v4456, %v4471
    %v4473 = vadd.f32 %v4472, 0.112945676
    %v4474 = vmul.f32 %v4456, %v4473
    %v4475 = vadd.f32 %v4474, 0.4994258
    %v4476 = vmul.f32 %v4456, %v4475
    %v4477 = vadd.f32 %v4476, 1.0
    %v4478 = vrcp.pop %v4477
    %v4479 = vmul.f32 %v4477, %v4478
    %v4480 = vsub.f32 1.0, %v4479
    %v4481 = vmul.f32 %v4478, %v4480
    %v4482 = vadd.f32 %v4478, %v4481
    %vm4483 = vweird.f32 %v4477
    %vm4484 = vweird.f32 %v4478
    %vm4485 = vmor %vm4483, %vm4484
    %v4486 = vsel %vm4485, %v4478, %v4482
    %v4487 = vand.u32 2147483647, %v4477
    %vm4488 = vcmp.eq.f32.partialorder %v4487, 8.507059e+37
    %v4489 = vand.u32 %v4477, 2147483648
    %v4490 = vor.u32 1.1754944e-38, %v4489
    %v4491 = vsel %vm4488, %v4490, %v4486
    %v4492 = vmul.f32 %v4467, %v4491
    %v4493 = vmin.f32 %v4492, 1.0
    %v4494 = vmax.f32 %v4493, -1.0
    %v4495 = vmul.f32 %v1175, %v1175
    %v4496 = vmin.f32 16.0, %v4495
    %v4497 = vmul.f32 %v4496, 2.1237322e-06
    %v4498 = vadd.f32 %v4497, 0.00028619796
    %v4499 = vmul.f32 %v4496, %v4498
    %v4500 = vadd.f32 %v4499, 0.0036580483
    %v4501 = vmul.f32 %v4496, %v4500
    %v4502 = vadd.f32 %v4501, 0.05243302
    %v4503 = vmul.f32 %v4496, %v4502
    %v4504 = vadd.f32 %v4503, 0.18741608
    %v4505 = vmul.f32 %v4496, %v4504
    %v4506 = vadd.f32 %v4505, 1.1283791
    %v4507 = vmul.f32 %v1175, %v4506
    %v4508 = vmul.f32 %v4496, 3.8918573e-05
    %v4509 = vadd.f32 %v4508, 0.001143296
    %v4510 = vmul.f32 %v4496, %v4509
    %v4511 = vadd.f32 %v4510, 0.014752088
    %v4512 = vmul.f32 %v4496, %v4511
    %v4513 = vadd.f32 %v4512, 0.112945676
    %v4514 = vmul.f32 %v4496, %v4513
    %v4515 = vadd.f32 %v4514, 0.4994258
    %v4516 = vmul.f32 %v4496, %v4515
    %v4517 = vadd.f32 %v4516, 1.0
    %v4518 = vrcp.pop %v4517
    %v4519 = vmul.f32 %v4517, %v4518
    %v4520 = vsub.f32 1.0, %v4519
    %v4521 = vmul.f32 %v4518, %v4520
    %v4522 = vadd.f32 %v4518, %v4521
    %vm4523 = vweird.f32 %v4517
    %vm4524 = vweird.f32 %v4518
    %vm4525 = vmor %vm4523, %vm4524
    %v4526 = vsel %vm4525, %v4518, %v4522
    %v4527 = vand.u32 2147483647, %v4517
    %vm4528 = vcmp.eq.f32.partialorder %v4527, 8.507059e+37
    %v4529 = vand.u32 %v4517, 2147483648
    %v4530 = vor.u32 1.1754944e-38, %v4529
    %v4531 = vsel %vm4528, %v4530, %v4526
    %v4532 = vmul.f32 %v4507, %v4531
    %v4533 = vmin.f32 %v4532, 1.0
    %v4534 = vmax.f32 %v4533, -1.0
    %v4535 = vmul.f32 %v1176, %v1176
    %v4536 = vmin.f32 16.0, %v4535
    %v4537 = vmul.f32 %v4536, 2.1237322e-06
    %v4538 = vadd.f32 %v4537, 0.00028619796
    %v4539 = vmul.f32 %v4536, %v4538
    %v4540 = vadd.f32 %v4539, 0.0036580483
    %v4541 = vmul.f32 %v4536, %v4540
    %v4542 = vadd.f32 %v4541, 0.05243302
    %v4543 = vmul.f32 %v4536, %v4542
    %v4544 = vadd.f32 %v4543, 0.18741608
    %v4545 = vmul.f32 %v4536, %v4544
    %v4546 = vadd.f32 %v4545, 1.1283791
    %v4547 = vmul.f32 %v1176, %v4546
    %v4548 = vmul.f32 %v4536, 3.8918573e-05
    %v4549 = vadd.f32 %v4548, 0.001143296
    %v4550 = vmul.f32 %v4536, %v4549
    %v4551 = vadd.f32 %v4550, 0.014752088
    %v4552 = vmul.f32 %v4536, %v4551
    %v4553 = vadd.f32 %v4552, 0.112945676
    %v4554 = vmul.f32 %v4536, %v4553
    %v4555 = vadd.f32 %v4554, 0.4994258
    %v4556 = vmul.f32 %v4536, %v4555
    %v4557 = vadd.f32 %v4556, 1.0
    %v4558 = vrcp.pop %v4557
    %v4559 = vmul.f32 %v4557, %v4558
    %v4560 = vsub.f32 1.0, %v4559
    %v4561 = vmul.f32 %v4558, %v4560
    %v4562 = vadd.f32 %v4558, %v4561
    %vm4563 = vweird.f32 %v4557
    %vm4564 = vweird.f32 %v4558
    %vm4565 = vmor %vm4563, %vm4564
    %v4566 = vsel %vm4565, %v4558, %v4562
    %v4567 = vand.u32 2147483647, %v4557
    %vm4568 = vcmp.eq.f32.partialorder %v4567, 8.507059e+37
    %v4569 = vand.u32 %v4557, 2147483648
    %v4570 = vor.u32 1.1754944e-38, %v4569
    %v4571 = vsel %vm4568, %v4570, %v4566
    %v4572 = vmul.f32 %v4547, %v4571
    %v4573 = vmin.f32 %v4572, 1.0
    %v4574 = vmax.f32 %v4573, -1.0
    %v4575 = vmul.f32 %v1177, %v1177
    %v4576 = vmin.f32 16.0, %v4575
    %v4577 = vmul.f32 %v4576, 2.1237322e-06
    %v4578 = vadd.f32 %v4577, 0.00028619796
    %v4579 = vmul.f32 %v4576, %v4578
    %v4580 = vadd.f32 %v4579, 0.0036580483
    %v4581 = vmul.f32 %v4576, %v4580
    %v4582 = vadd.f32 %v4581, 0.05243302
    %v4583 = vmul.f32 %v4576, %v4582
    %v4584 = vadd.f32 %v4583, 0.18741608
    %v4585 = vmul.f32 %v4576, %v4584
    %v4586 = vadd.f32 %v4585, 1.1283791
    %v4587 = vmul.f32 %v1177, %v4586
    %v4588 = vmul.f32 %v4576, 3.8918573e-05
    %v4589 = vadd.f32 %v4588, 0.001143296
    %v4590 = vmul.f32 %v4576, %v4589
    %v4591 = vadd.f32 %v4590, 0.014752088
    %v4592 = vmul.f32 %v4576, %v4591
    %v4593 = vadd.f32 %v4592, 0.112945676
    %v4594 = vmul.f32 %v4576, %v4593
    %v4595 = vadd.f32 %v4594, 0.4994258
    %v4596 = vmul.f32 %v4576, %v4595
    %v4597 = vadd.f32 %v4596, 1.0
    %v4598 = vrcp.pop %v4597
    %v4599 = vmul.f32 %v4597, %v4598
    %v4600 = vsub.f32 1.0, %v4599
    %v4601 = vmul.f32 %v4598, %v4600
    %v4602 = vadd.f32 %v4598, %v4601
    %vm4603 = vweird.f32 %v4597
    %vm4604 = vweird.f32 %v4598
    %vm4605 = vmor %vm4603, %vm4604
    %v4606 = vsel %vm4605, %v4598, %v4602
    %v4607 = vand.u32 2147483647, %v4597
    %vm4608 = vcmp.eq.f32.partialorder %v4607, 8.507059e+37
    %v4609 = vand.u32 %v4597, 2147483648
    %v4610 = vor.u32 1.1754944e-38, %v4609
    %v4611 = vsel %vm4608, %v4610, %v4606
    %v4612 = vmul.f32 %v4587, %v4611
    %v4613 = vmin.f32 %v4612, 1.0
    %v4614 = vmax.f32 %v4613, -1.0
    %v4615 = vmul.f32 %v1178, %v1178
    %v4616 = vmin.f32 16.0, %v4615
    %v4617 = vmul.f32 %v4616, 2.1237322e-06
    %v4618 = vadd.f32 %v4617, 0.00028619796
    %v4619 = vmul.f32 %v4616, %v4618
    %v4620 = vadd.f32 %v4619, 0.0036580483
    %v4621 = vmul.f32 %v4616, %v4620
    %v4622 = vadd.f32 %v4621, 0.05243302
    %v4623 = vmul.f32 %v4616, %v4622
    %v4624 = vadd.f32 %v4623, 0.18741608
    %v4625 = vmul.f32 %v4616, %v4624
    %v4626 = vadd.f32 %v4625, 1.1283791
    %v4627 = vmul.f32 %v1178, %v4626
    %v4628 = vmul.f32 %v4616, 3.8918573e-05
    %v4629 = vadd.f32 %v4628, 0.001143296
    %v4630 = vmul.f32 %v4616, %v4629
    %v4631 = vadd.f32 %v4630, 0.014752088
    %v4632 = vmul.f32 %v4616, %v4631
    %v4633 = vadd.f32 %v4632, 0.112945676
    %v4634 = vmul.f32 %v4616, %v4633
    %v4635 = vadd.f32 %v4634, 0.4994258
    %v4636 = vmul.f32 %v4616, %v4635
    %v4637 = vadd.f32 %v4636, 1.0
    %v4638 = vrcp.pop %v4637
    %v4639 = vmul.f32 %v4637, %v4638
    %v4640 = vsub.f32 1.0, %v4639
    %v4641 = vmul.f32 %v4638, %v4640
    %v4642 = vadd.f32 %v4638, %v4641
    %vm4643 = vweird.f32 %v4637
    %vm4644 = vweird.f32 %v4638
    %vm4645 = vmor %vm4643, %vm4644
    %v4646 = vsel %vm4645, %v4638, %v4642
    %v4647 = vand.u32 2147483647, %v4637
    %vm4648 = vcmp.eq.f32.partialorder %v4647, 8.507059e+37
    %v4649 = vand.u32 %v4637, 2147483648
    %v4650 = vor.u32 1.1754944e-38, %v4649
    %v4651 = vsel %vm4648, %v4650, %v4646
    %v4652 = vmul.f32 %v4627, %v4651
    %v4653 = vmin.f32 %v4652, 1.0
    %v4654 = vmax.f32 %v4653, -1.0
    %v4655 = vmul.f32 %v1179, %v1179
    %v4656 = vmin.f32 16.0, %v4655
    %v4657 = vmul.f32 %v4656, 2.1237322e-06
    %v4658 = vadd.f32 %v4657, 0.00028619796
    %v4659 = vmul.f32 %v4656, %v4658
    %v4660 = vadd.f32 %v4659, 0.0036580483
    %v4661 = vmul.f32 %v4656, %v4660
    %v4662 = vadd.f32 %v4661, 0.05243302
    %v4663 = vmul.f32 %v4656, %v4662
    %v4664 = vadd.f32 %v4663, 0.18741608
    %v4665 = vmul.f32 %v4656, %v4664
    %v4666 = vadd.f32 %v4665, 1.1283791
    %v4667 = vmul.f32 %v1179, %v4666
    %v4668 = vmul.f32 %v4656, 3.8918573e-05
    %v4669 = vadd.f32 %v4668, 0.001143296
    %v4670 = vmul.f32 %v4656, %v4669
    %v4671 = vadd.f32 %v4670, 0.014752088
    %v4672 = vmul.f32 %v4656, %v4671
    %v4673 = vadd.f32 %v4672, 0.112945676
    %v4674 = vmul.f32 %v4656, %v4673
    %v4675 = vadd.f32 %v4674, 0.4994258
    %v4676 = vmul.f32 %v4656, %v4675
    %v4677 = vadd.f32 %v4676, 1.0
    %v4678 = vrcp.pop %v4677
    %v4679 = vmul.f32 %v4677, %v4678
    %v4680 = vsub.f32 1.0, %v4679
    %v4681 = vmul.f32 %v4678, %v4680
    %v4682 = vadd.f32 %v4678, %v4681
    %vm4683 = vweird.f32 %v4677
    %vm4684 = vweird.f32 %v4678
    %vm4685 = vmor %vm4683, %vm4684
    %v4686 = vsel %vm4685, %v4678, %v4682
    %v4687 = vand.u32 2147483647, %v4677
    %vm4688 = vcmp.eq.f32.partialorder %v4687, 8.507059e+37
    %v4689 = vand.u32 %v4677, 2147483648
    %v4690 = vor.u32 1.1754944e-38, %v4689
    %v4691 = vsel %vm4688, %v4690, %v4686
    %v4692 = vmul.f32 %v4667, %v4691
    %v4693 = vmin.f32 %v4692, 1.0
    %v4694 = vmax.f32 %v4693, -1.0
    %v4695 = vmul.f32 %v1180, %v1180
    %v4696 = vmin.f32 16.0, %v4695
    %v4697 = vmul.f32 %v4696, 2.1237322e-06
    %v4698 = vadd.f32 %v4697, 0.00028619796
    %v4699 = vmul.f32 %v4696, %v4698
    %v4700 = vadd.f32 %v4699, 0.0036580483
    %v4701 = vmul.f32 %v4696, %v4700
    %v4702 = vadd.f32 %v4701, 0.05243302
    %v4703 = vmul.f32 %v4696, %v4702
    %v4704 = vadd.f32 %v4703, 0.18741608
    %v4705 = vmul.f32 %v4696, %v4704
    %v4706 = vadd.f32 %v4705, 1.1283791
    %v4707 = vmul.f32 %v1180, %v4706
    %v4708 = vmul.f32 %v4696, 3.8918573e-05
    %v4709 = vadd.f32 %v4708, 0.001143296
    %v4710 = vmul.f32 %v4696, %v4709
    %v4711 = vadd.f32 %v4710, 0.014752088
    %v4712 = vmul.f32 %v4696, %v4711
    %v4713 = vadd.f32 %v4712, 0.112945676
    %v4714 = vmul.f32 %v4696, %v4713
    %v4715 = vadd.f32 %v4714, 0.4994258
    %v4716 = vmul.f32 %v4696, %v4715
    %v4717 = vadd.f32 %v4716, 1.0
    %v4718 = vrcp.pop %v4717
    %v4719 = vmul.f32 %v4717, %v4718
    %v4720 = vsub.f32 1.0, %v4719
    %v4721 = vmul.f32 %v4718, %v4720
    %v4722 = vadd.f32 %v4718, %v4721
    %vm4723 = vweird.f32 %v4717
    %vm4724 = vweird.f32 %v4718
    %vm4725 = vmor %vm4723, %vm4724
    %v4726 = vsel %vm4725, %v4718, %v4722
    %v4727 = vand.u32 2147483647, %v4717
    %vm4728 = vcmp.eq.f32.partialorder %v4727, 8.507059e+37
    %v4729 = vand.u32 %v4717, 2147483648
    %v4730 = vor.u32 1.1754944e-38, %v4729
    %v4731 = vsel %vm4728, %v4730, %v4726
    %v4732 = vmul.f32 %v4707, %v4731
    %v4733 = vmin.f32 %v4732, 1.0
    %v4734 = vmax.f32 %v4733, -1.0
    %v4735 = vmul.f32 %v1181, %v1181
    %v4736 = vmin.f32 16.0, %v4735
    %v4737 = vmul.f32 %v4736, 2.1237322e-06
    %v4738 = vadd.f32 %v4737, 0.00028619796
    %v4739 = vmul.f32 %v4736, %v4738
    %v4740 = vadd.f32 %v4739, 0.0036580483
    %v4741 = vmul.f32 %v4736, %v4740
    %v4742 = vadd.f32 %v4741, 0.05243302
    %v4743 = vmul.f32 %v4736, %v4742
    %v4744 = vadd.f32 %v4743, 0.18741608
    %v4745 = vmul.f32 %v4736, %v4744
    %v4746 = vadd.f32 %v4745, 1.1283791
    %v4747 = vmul.f32 %v1181, %v4746
    %v4748 = vmul.f32 %v4736, 3.8918573e-05
    %v4749 = vadd.f32 %v4748, 0.001143296
    %v4750 = vmul.f32 %v4736, %v4749
    %v4751 = vadd.f32 %v4750, 0.014752088
    %v4752 = vmul.f32 %v4736, %v4751
    %v4753 = vadd.f32 %v4752, 0.112945676
    %v4754 = vmul.f32 %v4736, %v4753
    %v4755 = vadd.f32 %v4754, 0.4994258
    %v4756 = vmul.f32 %v4736, %v4755
    %v4757 = vadd.f32 %v4756, 1.0
    %v4758 = vrcp.pop %v4757
    %v4759 = vmul.f32 %v4757, %v4758
    %v4760 = vsub.f32 1.0, %v4759
    %v4761 = vmul.f32 %v4758, %v4760
    %v4762 = vadd.f32 %v4758, %v4761
    %vm4763 = vweird.f32 %v4757
    %vm4764 = vweird.f32 %v4758
    %vm4765 = vmor %vm4763, %vm4764
    %v4766 = vsel %vm4765, %v4758, %v4762
    %v4767 = vand.u32 2147483647, %v4757
    %vm4768 = vcmp.eq.f32.partialorder %v4767, 8.507059e+37
    %v4769 = vand.u32 %v4757, 2147483648
    %v4770 = vor.u32 1.1754944e-38, %v4769
    %v4771 = vsel %vm4768, %v4770, %v4766
    %v4772 = vmul.f32 %v4747, %v4771
    %v4773 = vmin.f32 %v4772, 1.0
    %v4774 = vmax.f32 %v4773, -1.0
    %v4775 = vmul.f32 %v1182, %v1182
    %v4776 = vmin.f32 16.0, %v4775
    %v4777 = vmul.f32 %v4776, 2.1237322e-06
    %v4778 = vadd.f32 %v4777, 0.00028619796
    %v4779 = vmul.f32 %v4776, %v4778
    %v4780 = vadd.f32 %v4779, 0.0036580483
    %v4781 = vmul.f32 %v4776, %v4780
    %v4782 = vadd.f32 %v4781, 0.05243302
    %v4783 = vmul.f32 %v4776, %v4782
    %v4784 = vadd.f32 %v4783, 0.18741608
    %v4785 = vmul.f32 %v4776, %v4784
    %v4786 = vadd.f32 %v4785, 1.1283791
    %v4787 = vmul.f32 %v1182, %v4786
    %v4788 = vmul.f32 %v4776, 3.8918573e-05
    %v4789 = vadd.f32 %v4788, 0.001143296
    %v4790 = vmul.f32 %v4776, %v4789
    %v4791 = vadd.f32 %v4790, 0.014752088
    %v4792 = vmul.f32 %v4776, %v4791
    %v4793 = vadd.f32 %v4792, 0.112945676
    %v4794 = vmul.f32 %v4776, %v4793
    %v4795 = vadd.f32 %v4794, 0.4994258
    %v4796 = vmul.f32 %v4776, %v4795
    %v4797 = vadd.f32 %v4796, 1.0
    %v4798 = vrcp.pop %v4797
    %v4799 = vmul.f32 %v4797, %v4798
    %v4800 = vsub.f32 1.0, %v4799
    %v4801 = vmul.f32 %v4798, %v4800
    %v4802 = vadd.f32 %v4798, %v4801
    %vm4803 = vweird.f32 %v4797
    %vm4804 = vweird.f32 %v4798
    %vm4805 = vmor %vm4803, %vm4804
    %v4806 = vsel %vm4805, %v4798, %v4802
    %v4807 = vand.u32 2147483647, %v4797
    %vm4808 = vcmp.eq.f32.partialorder %v4807, 8.507059e+37
    %v4809 = vand.u32 %v4797, 2147483648
    %v4810 = vor.u32 1.1754944e-38, %v4809
    %v4811 = vsel %vm4808, %v4810, %v4806
    %v4812 = vmul.f32 %v4787, %v4811
    %v4813 = vmin.f32 %v4812, 1.0
    %v4814 = vmax.f32 %v4813, -1.0
    %v4815 = vmul.f32 %v1183, %v1183
    %v4816 = vmin.f32 16.0, %v4815
    %v4817 = vmul.f32 %v4816, 2.1237322e-06
    %v4818 = vadd.f32 %v4817, 0.00028619796
    %v4819 = vmul.f32 %v4816, %v4818
    %v4820 = vadd.f32 %v4819, 0.0036580483
    %v4821 = vmul.f32 %v4816, %v4820
    %v4822 = vadd.f32 %v4821, 0.05243302
    %v4823 = vmul.f32 %v4816, %v4822
    %v4824 = vadd.f32 %v4823, 0.18741608
    %v4825 = vmul.f32 %v4816, %v4824
    %v4826 = vadd.f32 %v4825, 1.1283791
    %v4827 = vmul.f32 %v1183, %v4826
    %v4828 = vmul.f32 %v4816, 3.8918573e-05
    %v4829 = vadd.f32 %v4828, 0.001143296
    %v4830 = vmul.f32 %v4816, %v4829
    %v4831 = vadd.f32 %v4830, 0.014752088
    %v4832 = vmul.f32 %v4816, %v4831
    %v4833 = vadd.f32 %v4832, 0.112945676
    %v4834 = vmul.f32 %v4816, %v4833
    %v4835 = vadd.f32 %v4834, 0.4994258
    %v4836 = vmul.f32 %v4816, %v4835
    %v4837 = vadd.f32 %v4836, 1.0
    %v4838 = vrcp.pop %v4837
    %v4839 = vmul.f32 %v4837, %v4838
    %v4840 = vsub.f32 1.0, %v4839
    %v4841 = vmul.f32 %v4838, %v4840
    %v4842 = vadd.f32 %v4838, %v4841
    %vm4843 = vweird.f32 %v4837
    %vm4844 = vweird.f32 %v4838
    %vm4845 = vmor %vm4843, %vm4844
    %v4846 = vsel %vm4845, %v4838, %v4842
    %v4847 = vand.u32 2147483647, %v4837
    %vm4848 = vcmp.eq.f32.partialorder %v4847, 8.507059e+37
    %v4849 = vand.u32 %v4837, 2147483648
    %v4850 = vor.u32 1.1754944e-38, %v4849
    %v4851 = vsel %vm4848, %v4850, %v4846
    %v4852 = vmul.f32 %v4827, %v4851
    %v4853 = vmin.f32 %v4852, 1.0
    %v4854 = vmax.f32 %v4853, -1.0
    %v4855 = vmul.f32 %v1184, %v1184
    %v4856 = vmin.f32 16.0, %v4855
    %v4857 = vmul.f32 %v4856, 2.1237322e-06
    %v4858 = vadd.f32 %v4857, 0.00028619796
    %v4859 = vmul.f32 %v4856, %v4858
    %v4860 = vadd.f32 %v4859, 0.0036580483
    %v4861 = vmul.f32 %v4856, %v4860
    %v4862 = vadd.f32 %v4861, 0.05243302
    %v4863 = vmul.f32 %v4856, %v4862
    %v4864 = vadd.f32 %v4863, 0.18741608
    %v4865 = vmul.f32 %v4856, %v4864
    %v4866 = vadd.f32 %v4865, 1.1283791
    %v4867 = vmul.f32 %v1184, %v4866
    %v4868 = vmul.f32 %v4856, 3.8918573e-05
    %v4869 = vadd.f32 %v4868, 0.001143296
    %v4870 = vmul.f32 %v4856, %v4869
    %v4871 = vadd.f32 %v4870, 0.014752088
    %v4872 = vmul.f32 %v4856, %v4871
    %v4873 = vadd.f32 %v4872, 0.112945676
    %v4874 = vmul.f32 %v4856, %v4873
    %v4875 = vadd.f32 %v4874, 0.4994258
    %v4876 = vmul.f32 %v4856, %v4875
    %v4877 = vadd.f32 %v4876, 1.0
    %v4878 = vrcp.pop %v4877
    %v4879 = vmul.f32 %v4877, %v4878
    %v4880 = vsub.f32 1.0, %v4879
    %v4881 = vmul.f32 %v4878, %v4880
    %v4882 = vadd.f32 %v4878, %v4881
    %vm4883 = vweird.f32 %v4877
    %vm4884 = vweird.f32 %v4878
    %vm4885 = vmor %vm4883, %vm4884
    %v4886 = vsel %vm4885, %v4878, %v4882
    %v4887 = vand.u32 2147483647, %v4877
    %vm4888 = vcmp.eq.f32.partialorder %v4887, 8.507059e+37
    %v4889 = vand.u32 %v4877, 2147483648
    %v4890 = vor.u32 1.1754944e-38, %v4889
    %v4891 = vsel %vm4888, %v4890, %v4886
    %v4892 = vmul.f32 %v4867, %v4891
    %v4893 = vmin.f32 %v4892, 1.0
    %v4894 = vmax.f32 %v4893, -1.0
    %v4895 = vmul.f32 %v1185, %v1185
    %v4896 = vmin.f32 16.0, %v4895
    %v4897 = vmul.f32 %v4896, 2.1237322e-06
    %v4898 = vadd.f32 %v4897, 0.00028619796
    %v4899 = vmul.f32 %v4896, %v4898
    %v4900 = vadd.f32 %v4899, 0.0036580483
    %v4901 = vmul.f32 %v4896, %v4900
    %v4902 = vadd.f32 %v4901, 0.05243302
    %v4903 = vmul.f32 %v4896, %v4902
    %v4904 = vadd.f32 %v4903, 0.18741608
    %v4905 = vmul.f32 %v4896, %v4904
    %v4906 = vadd.f32 %v4905, 1.1283791
    %v4907 = vmul.f32 %v1185, %v4906
    %v4908 = vmul.f32 %v4896, 3.8918573e-05
    %v4909 = vadd.f32 %v4908, 0.001143296
    %v4910 = vmul.f32 %v4896, %v4909
    %v4911 = vadd.f32 %v4910, 0.014752088
    %v4912 = vmul.f32 %v4896, %v4911
    %v4913 = vadd.f32 %v4912, 0.112945676
    %v4914 = vmul.f32 %v4896, %v4913
    %v4915 = vadd.f32 %v4914, 0.4994258
    %v4916 = vmul.f32 %v4896, %v4915
    %v4917 = vadd.f32 %v4916, 1.0
    %v4918 = vrcp.pop %v4917
    %v4919 = vmul.f32 %v4917, %v4918
    %v4920 = vsub.f32 1.0, %v4919
    %v4921 = vmul.f32 %v4918, %v4920
    %v4922 = vadd.f32 %v4918, %v4921
    %vm4923 = vweird.f32 %v4917
    %vm4924 = vweird.f32 %v4918
    %vm4925 = vmor %vm4923, %vm4924
    %v4926 = vsel %vm4925, %v4918, %v4922
    %v4927 = vand.u32 2147483647, %v4917
    %vm4928 = vcmp.eq.f32.partialorder %v4927, 8.507059e+37
    %v4929 = vand.u32 %v4917, 2147483648
    %v4930 = vor.u32 1.1754944e-38, %v4929
    %v4931 = vsel %vm4928, %v4930, %v4926
    %v4932 = vmul.f32 %v4907, %v4931
    %v4933 = vmin.f32 %v4932, 1.0
    %v4934 = vmax.f32 %v4933, -1.0
    %v4935 = vmul.f32 %v1186, %v1186
    %v4936 = vmin.f32 16.0, %v4935
    %v4937 = vmul.f32 %v4936, 2.1237322e-06
    %v4938 = vadd.f32 %v4937, 0.00028619796
    %v4939 = vmul.f32 %v4936, %v4938
    %v4940 = vadd.f32 %v4939, 0.0036580483
    %v4941 = vmul.f32 %v4936, %v4940
    %v4942 = vadd.f32 %v4941, 0.05243302
    %v4943 = vmul.f32 %v4936, %v4942
    %v4944 = vadd.f32 %v4943, 0.18741608
    %v4945 = vmul.f32 %v4936, %v4944
    %v4946 = vadd.f32 %v4945, 1.1283791
    %v4947 = vmul.f32 %v1186, %v4946
    %v4948 = vmul.f32 %v4936, 3.8918573e-05
    %v4949 = vadd.f32 %v4948, 0.001143296
    %v4950 = vmul.f32 %v4936, %v4949
    %v4951 = vadd.f32 %v4950, 0.014752088
    %v4952 = vmul.f32 %v4936, %v4951
    %v4953 = vadd.f32 %v4952, 0.112945676
    %v4954 = vmul.f32 %v4936, %v4953
    %v4955 = vadd.f32 %v4954, 0.4994258
    %v4956 = vmul.f32 %v4936, %v4955
    %v4957 = vadd.f32 %v4956, 1.0
    %v4958 = vrcp.pop %v4957
    %v4959 = vmul.f32 %v4957, %v4958
    %v4960 = vsub.f32 1.0, %v4959
    %v4961 = vmul.f32 %v4958, %v4960
    %v4962 = vadd.f32 %v4958, %v4961
    %vm4963 = vweird.f32 %v4957
    %vm4964 = vweird.f32 %v4958
    %vm4965 = vmor %vm4963, %vm4964
    %v4966 = vsel %vm4965, %v4958, %v4962
    %v4967 = vand.u32 2147483647, %v4957
    %vm4968 = vcmp.eq.f32.partialorder %v4967, 8.507059e+37
    %v4969 = vand.u32 %v4957, 2147483648
    %v4970 = vor.u32 1.1754944e-38, %v4969
    %v4971 = vsel %vm4968, %v4970, %v4966
    %v4972 = vmul.f32 %v4947, %v4971
    %v4973 = vmin.f32 %v4972, 1.0
    %v4974 = vmax.f32 %v4973, -1.0
    %v4975 = vmul.f32 %v1187, %v1187
    %v4976 = vmin.f32 16.0, %v4975
    %v4977 = vmul.f32 %v4976, 2.1237322e-06
    %v4978 = vadd.f32 %v4977, 0.00028619796
    %v4979 = vmul.f32 %v4976, %v4978
    %v4980 = vadd.f32 %v4979, 0.0036580483
    %v4981 = vmul.f32 %v4976, %v4980
    %v4982 = vadd.f32 %v4981, 0.05243302
    %v4983 = vmul.f32 %v4976, %v4982
    %v4984 = vadd.f32 %v4983, 0.18741608
    %v4985 = vmul.f32 %v4976, %v4984
    %v4986 = vadd.f32 %v4985, 1.1283791
    %v4987 = vmul.f32 %v1187, %v4986
    %v4988 = vmul.f32 %v4976, 3.8918573e-05
    %v4989 = vadd.f32 %v4988, 0.001143296
    %v4990 = vmul.f32 %v4976, %v4989
    %v4991 = vadd.f32 %v4990, 0.014752088
    %v4992 = vmul.f32 %v4976, %v4991
    %v4993 = vadd.f32 %v4992, 0.112945676
    %v4994 = vmul.f32 %v4976, %v4993
    %v4995 = vadd.f32 %v4994, 0.4994258
    %v4996 = vmul.f32 %v4976, %v4995
    %v4997 = vadd.f32 %v4996, 1.0
    %v4998 = vrcp.pop %v4997
    %v4999 = vmul.f32 %v4997, %v4998
    %v5000 = vsub.f32 1.0, %v4999
    %v5001 = vmul.f32 %v4998, %v5000
    %v5002 = vadd.f32 %v4998, %v5001
    %vm5003 = vweird.f32 %v4997
    %vm5004 = vweird.f32 %v4998
    %vm5005 = vmor %vm5003, %vm5004
    %v5006 = vsel %vm5005, %v4998, %v5002
    %v5007 = vand.u32 2147483647, %v4997
    %vm5008 = vcmp.eq.f32.partialorder %v5007, 8.507059e+37
    %v5009 = vand.u32 %v4997, 2147483648
    %v5010 = vor.u32 1.1754944e-38, %v5009
    %v5011 = vsel %vm5008, %v5010, %v5006
    %v5012 = vmul.f32 %v4987, %v5011
    %v5013 = vmin.f32 %v5012, 1.0
    %v5014 = vmax.f32 %v5013, -1.0
    %v5015 = vmul.f32 %v1188, %v1188
    %v5016 = vmin.f32 16.0, %v5015
    %v5017 = vmul.f32 %v5016, 2.1237322e-06
    %v5018 = vadd.f32 %v5017, 0.00028619796
    %v5019 = vmul.f32 %v5016, %v5018
    %v5020 = vadd.f32 %v5019, 0.0036580483
    %v5021 = vmul.f32 %v5016, %v5020
    %v5022 = vadd.f32 %v5021, 0.05243302
    %v5023 = vmul.f32 %v5016, %v5022
    %v5024 = vadd.f32 %v5023, 0.18741608
    %v5025 = vmul.f32 %v5016, %v5024
    %v5026 = vadd.f32 %v5025, 1.1283791
    %v5027 = vmul.f32 %v1188, %v5026
    %v5028 = vmul.f32 %v5016, 3.8918573e-05
    %v5029 = vadd.f32 %v5028, 0.001143296
    %v5030 = vmul.f32 %v5016, %v5029
    %v5031 = vadd.f32 %v5030, 0.014752088
    %v5032 = vmul.f32 %v5016, %v5031
    %v5033 = vadd.f32 %v5032, 0.112945676
    %v5034 = vmul.f32 %v5016, %v5033
    %v5035 = vadd.f32 %v5034, 0.4994258
    %v5036 = vmul.f32 %v5016, %v5035
    %v5037 = vadd.f32 %v5036, 1.0
    %v5038 = vrcp.pop %v5037
    %v5039 = vmul.f32 %v5037, %v5038
    %v5040 = vsub.f32 1.0, %v5039
    %v5041 = vmul.f32 %v5038, %v5040
    %v5042 = vadd.f32 %v5038, %v5041
    %vm5043 = vweird.f32 %v5037
    %vm5044 = vweird.f32 %v5038
    %vm5045 = vmor %vm5043, %vm5044
    %v5046 = vsel %vm5045, %v5038, %v5042
    %v5047 = vand.u32 2147483647, %v5037
    %vm5048 = vcmp.eq.f32.partialorder %v5047, 8.507059e+37
    %v5049 = vand.u32 %v5037, 2147483648
    %v5050 = vor.u32 1.1754944e-38, %v5049
    %v5051 = vsel %vm5048, %v5050, %v5046
    %v5052 = vmul.f32 %v5027, %v5051
    %v5053 = vmin.f32 %v5052, 1.0
    %v5054 = vmax.f32 %v5053, -1.0
    %v5055 = vmul.f32 %v1189, %v1189
    %v5056 = vmin.f32 16.0, %v5055
    %v5057 = vmul.f32 %v5056, 2.1237322e-06
    %v5058 = vadd.f32 %v5057, 0.00028619796
    %v5059 = vmul.f32 %v5056, %v5058
    %v5060 = vadd.f32 %v5059, 0.0036580483
    %v5061 = vmul.f32 %v5056, %v5060
    %v5062 = vadd.f32 %v5061, 0.05243302
    %v5063 = vmul.f32 %v5056, %v5062
    %v5064 = vadd.f32 %v5063, 0.18741608
    %v5065 = vmul.f32 %v5056, %v5064
    %v5066 = vadd.f32 %v5065, 1.1283791
    %v5067 = vmul.f32 %v1189, %v5066
    %v5068 = vmul.f32 %v5056, 3.8918573e-05
    %v5069 = vadd.f32 %v5068, 0.001143296
    %v5070 = vmul.f32 %v5056, %v5069
    %v5071 = vadd.f32 %v5070, 0.014752088
    %v5072 = vmul.f32 %v5056, %v5071
    %v5073 = vadd.f32 %v5072, 0.112945676
    %v5074 = vmul.f32 %v5056, %v5073
    %v5075 = vadd.f32 %v5074, 0.4994258
    %v5076 = vmul.f32 %v5056, %v5075
    %v5077 = vadd.f32 %v5076, 1.0
    %v5078 = vrcp.pop %v5077
    %v5079 = vmul.f32 %v5077, %v5078
    %v5080 = vsub.f32 1.0, %v5079
    %v5081 = vmul.f32 %v5078, %v5080
    %v5082 = vadd.f32 %v5078, %v5081
    %vm5083 = vweird.f32 %v5077
    %vm5084 = vweird.f32 %v5078
    %vm5085 = vmor %vm5083, %vm5084
    %v5086 = vsel %vm5085, %v5078, %v5082
    %v5087 = vand.u32 2147483647, %v5077
    %vm5088 = vcmp.eq.f32.partialorder %v5087, 8.507059e+37
    %v5089 = vand.u32 %v5077, 2147483648
    %v5090 = vor.u32 1.1754944e-38, %v5089
    %v5091 = vsel %vm5088, %v5090, %v5086
    %v5092 = vmul.f32 %v5067, %v5091
    %v5093 = vmin.f32 %v5092, 1.0
    %v5094 = vmax.f32 %v5093, -1.0
    %v5095 = vmul.f32 %v1190, %v1190
    %v5096 = vmin.f32 16.0, %v5095
    %v5097 = vmul.f32 %v5096, 2.1237322e-06
    %v5098 = vadd.f32 %v5097, 0.00028619796
    %v5099 = vmul.f32 %v5096, %v5098
    %v5100 = vadd.f32 %v5099, 0.0036580483
    %v5101 = vmul.f32 %v5096, %v5100
    %v5102 = vadd.f32 %v5101, 0.05243302
    %v5103 = vmul.f32 %v5096, %v5102
    %v5104 = vadd.f32 %v5103, 0.18741608
    %v5105 = vmul.f32 %v5096, %v5104
    %v5106 = vadd.f32 %v5105, 1.1283791
    %v5107 = vmul.f32 %v1190, %v5106
    %v5108 = vmul.f32 %v5096, 3.8918573e-05
    %v5109 = vadd.f32 %v5108, 0.001143296
    %v5110 = vmul.f32 %v5096, %v5109
    %v5111 = vadd.f32 %v5110, 0.014752088
    %v5112 = vmul.f32 %v5096, %v5111
    %v5113 = vadd.f32 %v5112, 0.112945676
    %v5114 = vmul.f32 %v5096, %v5113
    %v5115 = vadd.f32 %v5114, 0.4994258
    %v5116 = vmul.f32 %v5096, %v5115
    %v5117 = vadd.f32 %v5116, 1.0
    %v5118 = vrcp.pop %v5117
    %v5119 = vmul.f32 %v5117, %v5118
    %v5120 = vsub.f32 1.0, %v5119
    %v5121 = vmul.f32 %v5118, %v5120
    %v5122 = vadd.f32 %v5118, %v5121
    %vm5123 = vweird.f32 %v5117
    %vm5124 = vweird.f32 %v5118
    %vm5125 = vmor %vm5123, %vm5124
    %v5126 = vsel %vm5125, %v5118, %v5122
    %v5127 = vand.u32 2147483647, %v5117
    %vm5128 = vcmp.eq.f32.partialorder %v5127, 8.507059e+37
    %v5129 = vand.u32 %v5117, 2147483648
    %v5130 = vor.u32 1.1754944e-38, %v5129
    %v5131 = vsel %vm5128, %v5130, %v5126
    %v5132 = vmul.f32 %v5107, %v5131
    %v5133 = vmin.f32 %v5132, 1.0
    %v5134 = vmax.f32 %v5133, -1.0
    %v5135 = vmul.f32 %v1191, %v1191
    %v5136 = vmin.f32 16.0, %v5135
    %v5137 = vmul.f32 %v5136, 2.1237322e-06
    %v5138 = vadd.f32 %v5137, 0.00028619796
    %v5139 = vmul.f32 %v5136, %v5138
    %v5140 = vadd.f32 %v5139, 0.0036580483
    %v5141 = vmul.f32 %v5136, %v5140
    %v5142 = vadd.f32 %v5141, 0.05243302
    %v5143 = vmul.f32 %v5136, %v5142
    %v5144 = vadd.f32 %v5143, 0.18741608
    %v5145 = vmul.f32 %v5136, %v5144
    %v5146 = vadd.f32 %v5145, 1.1283791
    %v5147 = vmul.f32 %v1191, %v5146
    %v5148 = vmul.f32 %v5136, 3.8918573e-05
    %v5149 = vadd.f32 %v5148, 0.001143296
    %v5150 = vmul.f32 %v5136, %v5149
    %v5151 = vadd.f32 %v5150, 0.014752088
    %v5152 = vmul.f32 %v5136, %v5151
    %v5153 = vadd.f32 %v5152, 0.112945676
    %v5154 = vmul.f32 %v5136, %v5153
    %v5155 = vadd.f32 %v5154, 0.4994258
    %v5156 = vmul.f32 %v5136, %v5155
    %v5157 = vadd.f32 %v5156, 1.0
    %v5158 = vrcp.pop %v5157
    %v5159 = vmul.f32 %v5157, %v5158
    %v5160 = vsub.f32 1.0, %v5159
    %v5161 = vmul.f32 %v5158, %v5160
    %v5162 = vadd.f32 %v5158, %v5161
    %vm5163 = vweird.f32 %v5157
    %vm5164 = vweird.f32 %v5158
    %vm5165 = vmor %vm5163, %vm5164
    %v5166 = vsel %vm5165, %v5158, %v5162
    %v5167 = vand.u32 2147483647, %v5157
    %vm5168 = vcmp.eq.f32.partialorder %v5167, 8.507059e+37
    %v5169 = vand.u32 %v5157, 2147483648
    %v5170 = vor.u32 1.1754944e-38, %v5169
    %v5171 = vsel %vm5168, %v5170, %v5166
    %v5172 = vmul.f32 %v5147, %v5171
    %v5173 = vmin.f32 %v5172, 1.0
    %v5174 = vmax.f32 %v5173, -1.0
    %v5175 = vmul.f32 %v1192, %v1192
    %v5176 = vmin.f32 16.0, %v5175
    %v5177 = vmul.f32 %v5176, 2.1237322e-06
    %v5178 = vadd.f32 %v5177, 0.00028619796
    %v5179 = vmul.f32 %v5176, %v5178
    %v5180 = vadd.f32 %v5179, 0.0036580483
    %v5181 = vmul.f32 %v5176, %v5180
    %v5182 = vadd.f32 %v5181, 0.05243302
    %v5183 = vmul.f32 %v5176, %v5182
    %v5184 = vadd.f32 %v5183, 0.18741608
    %v5185 = vmul.f32 %v5176, %v5184
    %v5186 = vadd.f32 %v5185, 1.1283791
    %v5187 = vmul.f32 %v1192, %v5186
    %v5188 = vmul.f32 %v5176, 3.8918573e-05
    %v5189 = vadd.f32 %v5188, 0.001143296
    %v5190 = vmul.f32 %v5176, %v5189
    %v5191 = vadd.f32 %v5190, 0.014752088
    %v5192 = vmul.f32 %v5176, %v5191
    %v5193 = vadd.f32 %v5192, 0.112945676
    %v5194 = vmul.f32 %v5176, %v5193
    %v5195 = vadd.f32 %v5194, 0.4994258
    %v5196 = vmul.f32 %v5176, %v5195
    %v5197 = vadd.f32 %v5196, 1.0
    %v5198 = vrcp.pop %v5197
    %v5199 = vmul.f32 %v5197, %v5198
    %v5200 = vsub.f32 1.0, %v5199
    %v5201 = vmul.f32 %v5198, %v5200
    %v5202 = vadd.f32 %v5198, %v5201
    %vm5203 = vweird.f32 %v5197
    %vm5204 = vweird.f32 %v5198
    %vm5205 = vmor %vm5203, %vm5204
    %v5206 = vsel %vm5205, %v5198, %v5202
    %v5207 = vand.u32 2147483647, %v5197
    %vm5208 = vcmp.eq.f32.partialorder %v5207, 8.507059e+37
    %v5209 = vand.u32 %v5197, 2147483648
    %v5210 = vor.u32 1.1754944e-38, %v5209
    %v5211 = vsel %vm5208, %v5210, %v5206
    %v5212 = vmul.f32 %v5187, %v5211
    %v5213 = vmin.f32 %v5212, 1.0
    %v5214 = vmax.f32 %v5213, -1.0
    %v5215 = vmul.f32 %v1193, %v1193
    %v5216 = vmin.f32 16.0, %v5215
    %v5217 = vmul.f32 %v5216, 2.1237322e-06
    %v5218 = vadd.f32 %v5217, 0.00028619796
    %v5219 = vmul.f32 %v5216, %v5218
    %v5220 = vadd.f32 %v5219, 0.0036580483
    %v5221 = vmul.f32 %v5216, %v5220
    %v5222 = vadd.f32 %v5221, 0.05243302
    %v5223 = vmul.f32 %v5216, %v5222
    %v5224 = vadd.f32 %v5223, 0.18741608
    %v5225 = vmul.f32 %v5216, %v5224
    %v5226 = vadd.f32 %v5225, 1.1283791
    %v5227 = vmul.f32 %v1193, %v5226
    %v5228 = vmul.f32 %v5216, 3.8918573e-05
    %v5229 = vadd.f32 %v5228, 0.001143296
    %v5230 = vmul.f32 %v5216, %v5229
    %v5231 = vadd.f32 %v5230, 0.014752088
    %v5232 = vmul.f32 %v5216, %v5231
    %v5233 = vadd.f32 %v5232, 0.112945676
    %v5234 = vmul.f32 %v5216, %v5233
    %v5235 = vadd.f32 %v5234, 0.4994258
    %v5236 = vmul.f32 %v5216, %v5235
    %v5237 = vadd.f32 %v5236, 1.0
    %v5238 = vrcp.pop %v5237
    %v5239 = vmul.f32 %v5237, %v5238
    %v5240 = vsub.f32 1.0, %v5239
    %v5241 = vmul.f32 %v5238, %v5240
    %v5242 = vadd.f32 %v5238, %v5241
    %vm5243 = vweird.f32 %v5237
    %vm5244 = vweird.f32 %v5238
    %vm5245 = vmor %vm5243, %vm5244
    %v5246 = vsel %vm5245, %v5238, %v5242
    %v5247 = vand.u32 2147483647, %v5237
    %vm5248 = vcmp.eq.f32.partialorder %v5247, 8.507059e+37
    %v5249 = vand.u32 %v5237, 2147483648
    %v5250 = vor.u32 1.1754944e-38, %v5249
    %v5251 = vsel %vm5248, %v5250, %v5246
    %v5252 = vmul.f32 %v5227, %v5251
    %v5253 = vmin.f32 %v5252, 1.0
    %v5254 = vmax.f32 %v5253, -1.0
    %v5255 = vmul.f32 %v1194, %v1194
    %v5256 = vmin.f32 16.0, %v5255
    %v5257 = vmul.f32 %v5256, 2.1237322e-06
    %v5258 = vadd.f32 %v5257, 0.00028619796
    %v5259 = vmul.f32 %v5256, %v5258
    %v5260 = vadd.f32 %v5259, 0.0036580483
    %v5261 = vmul.f32 %v5256, %v5260
    %v5262 = vadd.f32 %v5261, 0.05243302
    %v5263 = vmul.f32 %v5256, %v5262
    %v5264 = vadd.f32 %v5263, 0.18741608
    %v5265 = vmul.f32 %v5256, %v5264
    %v5266 = vadd.f32 %v5265, 1.1283791
    %v5267 = vmul.f32 %v1194, %v5266
    %v5268 = vmul.f32 %v5256, 3.8918573e-05
    %v5269 = vadd.f32 %v5268, 0.001143296
    %v5270 = vmul.f32 %v5256, %v5269
    %v5271 = vadd.f32 %v5270, 0.014752088
    %v5272 = vmul.f32 %v5256, %v5271
    %v5273 = vadd.f32 %v5272, 0.112945676
    %v5274 = vmul.f32 %v5256, %v5273
    %v5275 = vadd.f32 %v5274, 0.4994258
    %v5276 = vmul.f32 %v5256, %v5275
    %v5277 = vadd.f32 %v5276, 1.0
    %v5278 = vrcp.pop %v5277
    %v5279 = vmul.f32 %v5277, %v5278
    %v5280 = vsub.f32 1.0, %v5279
    %v5281 = vmul.f32 %v5278, %v5280
    %v5282 = vadd.f32 %v5278, %v5281
    %vm5283 = vweird.f32 %v5277
    %vm5284 = vweird.f32 %v5278
    %vm5285 = vmor %vm5283, %vm5284
    %v5286 = vsel %vm5285, %v5278, %v5282
    %v5287 = vand.u32 2147483647, %v5277
    %vm5288 = vcmp.eq.f32.partialorder %v5287, 8.507059e+37
    %v5289 = vand.u32 %v5277, 2147483648
    %v5290 = vor.u32 1.1754944e-38, %v5289
    %v5291 = vsel %vm5288, %v5290, %v5286
    %v5292 = vmul.f32 %v5267, %v5291
    %v5293 = vmin.f32 %v5292, 1.0
    %v5294 = vmax.f32 %v5293, -1.0
    %v5295 = vmul.f32 %v1195, %v1195
    %v5296 = vmin.f32 16.0, %v5295
    %v5297 = vmul.f32 %v5296, 2.1237322e-06
    %v5298 = vadd.f32 %v5297, 0.00028619796
    %v5299 = vmul.f32 %v5296, %v5298
    %v5300 = vadd.f32 %v5299, 0.0036580483
    %v5301 = vmul.f32 %v5296, %v5300
    %v5302 = vadd.f32 %v5301, 0.05243302
    %v5303 = vmul.f32 %v5296, %v5302
    %v5304 = vadd.f32 %v5303, 0.18741608
    %v5305 = vmul.f32 %v5296, %v5304
    %v5306 = vadd.f32 %v5305, 1.1283791
    %v5307 = vmul.f32 %v1195, %v5306
    %v5308 = vmul.f32 %v5296, 3.8918573e-05
    %v5309 = vadd.f32 %v5308, 0.001143296
    %v5310 = vmul.f32 %v5296, %v5309
    %v5311 = vadd.f32 %v5310, 0.014752088
    %v5312 = vmul.f32 %v5296, %v5311
    %v5313 = vadd.f32 %v5312, 0.112945676
    %v5314 = vmul.f32 %v5296, %v5313
    %v5315 = vadd.f32 %v5314, 0.4994258
    %v5316 = vmul.f32 %v5296, %v5315
    %v5317 = vadd.f32 %v5316, 1.0
    %v5318 = vrcp.pop %v5317
    %v5319 = vmul.f32 %v5317, %v5318
    %v5320 = vsub.f32 1.0, %v5319
    %v5321 = vmul.f32 %v5318, %v5320
    %v5322 = vadd.f32 %v5318, %v5321
    %vm5323 = vweird.f32 %v5317
    %vm5324 = vweird.f32 %v5318
    %vm5325 = vmor %vm5323, %vm5324
    %v5326 = vsel %vm5325, %v5318, %v5322
    %v5327 = vand.u32 2147483647, %v5317
    %vm5328 = vcmp.eq.f32.partialorder %v5327, 8.507059e+37
    %v5329 = vand.u32 %v5317, 2147483648
    %v5330 = vor.u32 1.1754944e-38, %v5329
    %v5331 = vsel %vm5328, %v5330, %v5326
    %v5332 = vmul.f32 %v5307, %v5331
    %v5333 = vmin.f32 %v5332, 1.0
    %v5334 = vmax.f32 %v5333, -1.0
    %v5335 = vmul.f32 %v1196, %v1196
    %v5336 = vmin.f32 16.0, %v5335
    %v5337 = vmul.f32 %v5336, 2.1237322e-06
    %v5338 = vadd.f32 %v5337, 0.00028619796
    %v5339 = vmul.f32 %v5336, %v5338
    %v5340 = vadd.f32 %v5339, 0.0036580483
    %v5341 = vmul.f32 %v5336, %v5340
    %v5342 = vadd.f32 %v5341, 0.05243302
    %v5343 = vmul.f32 %v5336, %v5342
    %v5344 = vadd.f32 %v5343, 0.18741608
    %v5345 = vmul.f32 %v5336, %v5344
    %v5346 = vadd.f32 %v5345, 1.1283791
    %v5347 = vmul.f32 %v1196, %v5346
    %v5348 = vmul.f32 %v5336, 3.8918573e-05
    %v5349 = vadd.f32 %v5348, 0.001143296
    %v5350 = vmul.f32 %v5336, %v5349
    %v5351 = vadd.f32 %v5350, 0.014752088
    %v5352 = vmul.f32 %v5336, %v5351
    %v5353 = vadd.f32 %v5352, 0.112945676
    %v5354 = vmul.f32 %v5336, %v5353
    %v5355 = vadd.f32 %v5354, 0.4994258
    %v5356 = vmul.f32 %v5336, %v5355
    %v5357 = vadd.f32 %v5356, 1.0
    %v5358 = vrcp.pop %v5357
    %v5359 = vmul.f32 %v5357, %v5358
    %v5360 = vsub.f32 1.0, %v5359
    %v5361 = vmul.f32 %v5358, %v5360
    %v5362 = vadd.f32 %v5358, %v5361
    %vm5363 = vweird.f32 %v5357
    %vm5364 = vweird.f32 %v5358
    %vm5365 = vmor %vm5363, %vm5364
    %v5366 = vsel %vm5365, %v5358, %v5362
    %v5367 = vand.u32 2147483647, %v5357
    %vm5368 = vcmp.eq.f32.partialorder %v5367, 8.507059e+37
    %v5369 = vand.u32 %v5357, 2147483648
    %v5370 = vor.u32 1.1754944e-38, %v5369
    %v5371 = vsel %vm5368, %v5370, %v5366
    %v5372 = vmul.f32 %v5347, %v5371
    %v5373 = vmin.f32 %v5372, 1.0
    %v5374 = vmax.f32 %v5373, -1.0
    %v5375 = vmul.f32 %v1197, %v1197
    %v5376 = vmin.f32 16.0, %v5375
    %v5377 = vmul.f32 %v5376, 2.1237322e-06
    %v5378 = vadd.f32 %v5377, 0.00028619796
    %v5379 = vmul.f32 %v5376, %v5378
    %v5380 = vadd.f32 %v5379, 0.0036580483
    %v5381 = vmul.f32 %v5376, %v5380
    %v5382 = vadd.f32 %v5381, 0.05243302
    %v5383 = vmul.f32 %v5376, %v5382
    %v5384 = vadd.f32 %v5383, 0.18741608
    %v5385 = vmul.f32 %v5376, %v5384
    %v5386 = vadd.f32 %v5385, 1.1283791
    %v5387 = vmul.f32 %v1197, %v5386
    %v5388 = vmul.f32 %v5376, 3.8918573e-05
    %v5389 = vadd.f32 %v5388, 0.001143296
    %v5390 = vmul.f32 %v5376, %v5389
    %v5391 = vadd.f32 %v5390, 0.014752088
    %v5392 = vmul.f32 %v5376, %v5391
    %v5393 = vadd.f32 %v5392, 0.112945676
    %v5394 = vmul.f32 %v5376, %v5393
    %v5395 = vadd.f32 %v5394, 0.4994258
    %v5396 = vmul.f32 %v5376, %v5395
    %v5397 = vadd.f32 %v5396, 1.0
    %v5398 = vrcp.pop %v5397
    %v5399 = vmul.f32 %v5397, %v5398
    %v5400 = vsub.f32 1.0, %v5399
    %v5401 = vmul.f32 %v5398, %v5400
    %v5402 = vadd.f32 %v5398, %v5401
    %vm5403 = vweird.f32 %v5397
    %vm5404 = vweird.f32 %v5398
    %vm5405 = vmor %vm5403, %vm5404
    %v5406 = vsel %vm5405, %v5398, %v5402
    %v5407 = vand.u32 2147483647, %v5397
    %vm5408 = vcmp.eq.f32.partialorder %v5407, 8.507059e+37
    %v5409 = vand.u32 %v5397, 2147483648
    %v5410 = vor.u32 1.1754944e-38, %v5409
    %v5411 = vsel %vm5408, %v5410, %v5406
    %v5412 = vmul.f32 %v5387, %v5411
    %v5413 = vmin.f32 %v5412, 1.0
    %v5414 = vmax.f32 %v5413, -1.0
    %v5415 = vmul.f32 %v1198, %v1198
    %v5416 = vmin.f32 16.0, %v5415
    %v5417 = vmul.f32 %v5416, 2.1237322e-06
    %v5418 = vadd.f32 %v5417, 0.00028619796
    %v5419 = vmul.f32 %v5416, %v5418
    %v5420 = vadd.f32 %v5419, 0.0036580483
    %v5421 = vmul.f32 %v5416, %v5420
    %v5422 = vadd.f32 %v5421, 0.05243302
    %v5423 = vmul.f32 %v5416, %v5422
    %v5424 = vadd.f32 %v5423, 0.18741608
    %v5425 = vmul.f32 %v5416, %v5424
    %v5426 = vadd.f32 %v5425, 1.1283791
    %v5427 = vmul.f32 %v1198, %v5426
    %v5428 = vmul.f32 %v5416, 3.8918573e-05
    %v5429 = vadd.f32 %v5428, 0.001143296
    %v5430 = vmul.f32 %v5416, %v5429
    %v5431 = vadd.f32 %v5430, 0.014752088
    %v5432 = vmul.f32 %v5416, %v5431
    %v5433 = vadd.f32 %v5432, 0.112945676
    %v5434 = vmul.f32 %v5416, %v5433
    %v5435 = vadd.f32 %v5434, 0.4994258
    %v5436 = vmul.f32 %v5416, %v5435
    %v5437 = vadd.f32 %v5436, 1.0
    %v5438 = vrcp.pop %v5437
    %v5439 = vmul.f32 %v5437, %v5438
    %v5440 = vsub.f32 1.0, %v5439
    %v5441 = vmul.f32 %v5438, %v5440
    %v5442 = vadd.f32 %v5438, %v5441
    %vm5443 = vweird.f32 %v5437
    %vm5444 = vweird.f32 %v5438
    %vm5445 = vmor %vm5443, %vm5444
    %v5446 = vsel %vm5445, %v5438, %v5442
    %v5447 = vand.u32 2147483647, %v5437
    %vm5448 = vcmp.eq.f32.partialorder %v5447, 8.507059e+37
    %v5449 = vand.u32 %v5437, 2147483648
    %v5450 = vor.u32 1.1754944e-38, %v5449
    %v5451 = vsel %vm5448, %v5450, %v5446
    %v5452 = vmul.f32 %v5427, %v5451
    %v5453 = vmin.f32 %v5452, 1.0
    %v5454 = vmax.f32 %v5453, -1.0
    %v5455 = vmul.f32 %v1199, %v1199
    %v5456 = vmin.f32 16.0, %v5455
    %v5457 = vmul.f32 %v5456, 2.1237322e-06
    %v5458 = vadd.f32 %v5457, 0.00028619796
    %v5459 = vmul.f32 %v5456, %v5458
    %v5460 = vadd.f32 %v5459, 0.0036580483
    %v5461 = vmul.f32 %v5456, %v5460
    %v5462 = vadd.f32 %v5461, 0.05243302
    %v5463 = vmul.f32 %v5456, %v5462
    %v5464 = vadd.f32 %v5463, 0.18741608
    %v5465 = vmul.f32 %v5456, %v5464
    %v5466 = vadd.f32 %v5465, 1.1283791
    %v5467 = vmul.f32 %v1199, %v5466
    %v5468 = vmul.f32 %v5456, 3.8918573e-05
    %v5469 = vadd.f32 %v5468, 0.001143296
    %v5470 = vmul.f32 %v5456, %v5469
    %v5471 = vadd.f32 %v5470, 0.014752088
    %v5472 = vmul.f32 %v5456, %v5471
    %v5473 = vadd.f32 %v5472, 0.112945676
    %v5474 = vmul.f32 %v5456, %v5473
    %v5475 = vadd.f32 %v5474, 0.4994258
    %v5476 = vmul.f32 %v5456, %v5475
    %v5477 = vadd.f32 %v5476, 1.0
    %v5478 = vrcp.pop %v5477
    %v5479 = vmul.f32 %v5477, %v5478
    %v5480 = vsub.f32 1.0, %v5479
    %v5481 = vmul.f32 %v5478, %v5480
    %v5482 = vadd.f32 %v5478, %v5481
    %vm5483 = vweird.f32 %v5477
    %vm5484 = vweird.f32 %v5478
    %vm5485 = vmor %vm5483, %vm5484
    %v5486 = vsel %vm5485, %v5478, %v5482
    %v5487 = vand.u32 2147483647, %v5477
    %vm5488 = vcmp.eq.f32.partialorder %v5487, 8.507059e+37
    %v5489 = vand.u32 %v5477, 2147483648
    %v5490 = vor.u32 1.1754944e-38, %v5489
    %v5491 = vsel %vm5488, %v5490, %v5486
    %v5492 = vmul.f32 %v5467, %v5491
    %v5493 = vmin.f32 %v5492, 1.0
    %v5494 = vmax.f32 %v5493, -1.0
    %v5495 = vmul.f32 %v1200, %v1200
    %v5496 = vmin.f32 16.0, %v5495
    %v5497 = vmul.f32 %v5496, 2.1237322e-06
    %v5498 = vadd.f32 %v5497, 0.00028619796
    %v5499 = vmul.f32 %v5496, %v5498
    %v5500 = vadd.f32 %v5499, 0.0036580483
    %v5501 = vmul.f32 %v5496, %v5500
    %v5502 = vadd.f32 %v5501, 0.05243302
    %v5503 = vmul.f32 %v5496, %v5502
    %v5504 = vadd.f32 %v5503, 0.18741608
    %v5505 = vmul.f32 %v5496, %v5504
    %v5506 = vadd.f32 %v5505, 1.1283791
    %v5507 = vmul.f32 %v1200, %v5506
    %v5508 = vmul.f32 %v5496, 3.8918573e-05
    %v5509 = vadd.f32 %v5508, 0.001143296
    %v5510 = vmul.f32 %v5496, %v5509
    %v5511 = vadd.f32 %v5510, 0.014752088
    %v5512 = vmul.f32 %v5496, %v5511
    %v5513 = vadd.f32 %v5512, 0.112945676
    %v5514 = vmul.f32 %v5496, %v5513
    %v5515 = vadd.f32 %v5514, 0.4994258
    %v5516 = vmul.f32 %v5496, %v5515
    %v5517 = vadd.f32 %v5516, 1.0
    %v5518 = vrcp.pop %v5517
    %v5519 = vmul.f32 %v5517, %v5518
    %v5520 = vsub.f32 1.0, %v5519
    %v5521 = vmul.f32 %v5518, %v5520
    %v5522 = vadd.f32 %v5518, %v5521
    %vm5523 = vweird.f32 %v5517
    %vm5524 = vweird.f32 %v5518
    %vm5525 = vmor %vm5523, %vm5524
    %v5526 = vsel %vm5525, %v5518, %v5522
    %v5527 = vand.u32 2147483647, %v5517
    %vm5528 = vcmp.eq.f32.partialorder %v5527, 8.507059e+37
    %v5529 = vand.u32 %v5517, 2147483648
    %v5530 = vor.u32 1.1754944e-38, %v5529
    %v5531 = vsel %vm5528, %v5530, %v5526
    %v5532 = vmul.f32 %v5507, %v5531
    %v5533 = vmin.f32 %v5532, 1.0
    %v5534 = vmax.f32 %v5533, -1.0
    %v5535 = vmul.f32 %v1201, %v1201
    %v5536 = vmin.f32 16.0, %v5535
    %v5537 = vmul.f32 %v5536, 2.1237322e-06
    %v5538 = vadd.f32 %v5537, 0.00028619796
    %v5539 = vmul.f32 %v5536, %v5538
    %v5540 = vadd.f32 %v5539, 0.0036580483
    %v5541 = vmul.f32 %v5536, %v5540
    %v5542 = vadd.f32 %v5541, 0.05243302
    %v5543 = vmul.f32 %v5536, %v5542
    %v5544 = vadd.f32 %v5543, 0.18741608
    %v5545 = vmul.f32 %v5536, %v5544
    %v5546 = vadd.f32 %v5545, 1.1283791
    %v5547 = vmul.f32 %v1201, %v5546
    %v5548 = vmul.f32 %v5536, 3.8918573e-05
    %v5549 = vadd.f32 %v5548, 0.001143296
    %v5550 = vmul.f32 %v5536, %v5549
    %v5551 = vadd.f32 %v5550, 0.014752088
    %v5552 = vmul.f32 %v5536, %v5551
    %v5553 = vadd.f32 %v5552, 0.112945676
    %v5554 = vmul.f32 %v5536, %v5553
    %v5555 = vadd.f32 %v5554, 0.4994258
    %v5556 = vmul.f32 %v5536, %v5555
    %v5557 = vadd.f32 %v5556, 1.0
    %v5558 = vrcp.pop %v5557
    %v5559 = vmul.f32 %v5557, %v5558
    %v5560 = vsub.f32 1.0, %v5559
    %v5561 = vmul.f32 %v5558, %v5560
    %v5562 = vadd.f32 %v5558, %v5561
    %vm5563 = vweird.f32 %v5557
    %vm5564 = vweird.f32 %v5558
    %vm5565 = vmor %vm5563, %vm5564
    %v5566 = vsel %vm5565, %v5558, %v5562
    %v5567 = vand.u32 2147483647, %v5557
    %vm5568 = vcmp.eq.f32.partialorder %v5567, 8.507059e+37
    %v5569 = vand.u32 %v5557, 2147483648
    %v5570 = vor.u32 1.1754944e-38, %v5569
    %v5571 = vsel %vm5568, %v5570, %v5566
    %v5572 = vmul.f32 %v5547, %v5571
    %v5573 = vmin.f32 %v5572, 1.0
    %v5574 = vmax.f32 %v5573, -1.0
    %v5575 = vmul.f32 %v1202, %v1202
    %v5576 = vmin.f32 16.0, %v5575
    %v5577 = vmul.f32 %v5576, 2.1237322e-06
    %v5578 = vadd.f32 %v5577, 0.00028619796
    %v5579 = vmul.f32 %v5576, %v5578
    %v5580 = vadd.f32 %v5579, 0.0036580483
    %v5581 = vmul.f32 %v5576, %v5580
    %v5582 = vadd.f32 %v5581, 0.05243302
    %v5583 = vmul.f32 %v5576, %v5582
    %v5584 = vadd.f32 %v5583, 0.18741608
    %v5585 = vmul.f32 %v5576, %v5584
    %v5586 = vadd.f32 %v5585, 1.1283791
    %v5587 = vmul.f32 %v1202, %v5586
    %v5588 = vmul.f32 %v5576, 3.8918573e-05
    %v5589 = vadd.f32 %v5588, 0.001143296
    %v5590 = vmul.f32 %v5576, %v5589
    %v5591 = vadd.f32 %v5590, 0.014752088
    %v5592 = vmul.f32 %v5576, %v5591
    %v5593 = vadd.f32 %v5592, 0.112945676
    %v5594 = vmul.f32 %v5576, %v5593
    %v5595 = vadd.f32 %v5594, 0.4994258
    %v5596 = vmul.f32 %v5576, %v5595
    %v5597 = vadd.f32 %v5596, 1.0
    %v5598 = vrcp.pop %v5597
    %v5599 = vmul.f32 %v5597, %v5598
    %v5600 = vsub.f32 1.0, %v5599
    %v5601 = vmul.f32 %v5598, %v5600
    %v5602 = vadd.f32 %v5598, %v5601
    %vm5603 = vweird.f32 %v5597
    %vm5604 = vweird.f32 %v5598
    %vm5605 = vmor %vm5603, %vm5604
    %v5606 = vsel %vm5605, %v5598, %v5602
    %v5607 = vand.u32 2147483647, %v5597
    %vm5608 = vcmp.eq.f32.partialorder %v5607, 8.507059e+37
    %v5609 = vand.u32 %v5597, 2147483648
    %v5610 = vor.u32 1.1754944e-38, %v5609
    %v5611 = vsel %vm5608, %v5610, %v5606
    %v5612 = vmul.f32 %v5587, %v5611
    %v5613 = vmin.f32 %v5612, 1.0
    %v5614 = vmax.f32 %v5613, -1.0
    %v5615 = vmul.f32 %v1203, %v1203
    %v5616 = vmin.f32 16.0, %v5615
    %v5617 = vmul.f32 %v5616, 2.1237322e-06
    %v5618 = vadd.f32 %v5617, 0.00028619796
    %v5619 = vmul.f32 %v5616, %v5618
    %v5620 = vadd.f32 %v5619, 0.0036580483
    %v5621 = vmul.f32 %v5616, %v5620
    %v5622 = vadd.f32 %v5621, 0.05243302
    %v5623 = vmul.f32 %v5616, %v5622
    %v5624 = vadd.f32 %v5623, 0.18741608
    %v5625 = vmul.f32 %v5616, %v5624
    %v5626 = vadd.f32 %v5625, 1.1283791
    %v5627 = vmul.f32 %v1203, %v5626
    %v5628 = vmul.f32 %v5616, 3.8918573e-05
    %v5629 = vadd.f32 %v5628, 0.001143296
    %v5630 = vmul.f32 %v5616, %v5629
    %v5631 = vadd.f32 %v5630, 0.014752088
    %v5632 = vmul.f32 %v5616, %v5631
    %v5633 = vadd.f32 %v5632, 0.112945676
    %v5634 = vmul.f32 %v5616, %v5633
    %v5635 = vadd.f32 %v5634, 0.4994258
    %v5636 = vmul.f32 %v5616, %v5635
    %v5637 = vadd.f32 %v5636, 1.0
    %v5638 = vrcp.pop %v5637
    %v5639 = vmul.f32 %v5637, %v5638
    %v5640 = vsub.f32 1.0, %v5639
    %v5641 = vmul.f32 %v5638, %v5640
    %v5642 = vadd.f32 %v5638, %v5641
    %vm5643 = vweird.f32 %v5637
    %vm5644 = vweird.f32 %v5638
    %vm5645 = vmor %vm5643, %vm5644
    %v5646 = vsel %vm5645, %v5638, %v5642
    %v5647 = vand.u32 2147483647, %v5637
    %vm5648 = vcmp.eq.f32.partialorder %v5647, 8.507059e+37
    %v5649 = vand.u32 %v5637, 2147483648
    %v5650 = vor.u32 1.1754944e-38, %v5649
    %v5651 = vsel %vm5648, %v5650, %v5646
    %v5652 = vmul.f32 %v5627, %v5651
    %v5653 = vmin.f32 %v5652, 1.0
    %v5654 = vmax.f32 %v5653, -1.0
    %v5655 = vmul.f32 %v1204, %v1204
    %v5656 = vmin.f32 16.0, %v5655
    %v5657 = vmul.f32 %v5656, 2.1237322e-06
    %v5658 = vadd.f32 %v5657, 0.00028619796
    %v5659 = vmul.f32 %v5656, %v5658
    %v5660 = vadd.f32 %v5659, 0.0036580483
    %v5661 = vmul.f32 %v5656, %v5660
    %v5662 = vadd.f32 %v5661, 0.05243302
    %v5663 = vmul.f32 %v5656, %v5662
    %v5664 = vadd.f32 %v5663, 0.18741608
    %v5665 = vmul.f32 %v5656, %v5664
    %v5666 = vadd.f32 %v5665, 1.1283791
    %v5667 = vmul.f32 %v1204, %v5666
    %v5668 = vmul.f32 %v5656, 3.8918573e-05
    %v5669 = vadd.f32 %v5668, 0.001143296
    %v5670 = vmul.f32 %v5656, %v5669
    %v5671 = vadd.f32 %v5670, 0.014752088
    %v5672 = vmul.f32 %v5656, %v5671
    %v5673 = vadd.f32 %v5672, 0.112945676
    %v5674 = vmul.f32 %v5656, %v5673
    %v5675 = vadd.f32 %v5674, 0.4994258
    %v5676 = vmul.f32 %v5656, %v5675
    %v5677 = vadd.f32 %v5676, 1.0
    %v5678 = vrcp.pop %v5677
    %v5679 = vmul.f32 %v5677, %v5678
    %v5680 = vsub.f32 1.0, %v5679
    %v5681 = vmul.f32 %v5678, %v5680
    %v5682 = vadd.f32 %v5678, %v5681
    %vm5683 = vweird.f32 %v5677
    %vm5684 = vweird.f32 %v5678
    %vm5685 = vmor %vm5683, %vm5684
    %v5686 = vsel %vm5685, %v5678, %v5682
    %v5687 = vand.u32 2147483647, %v5677
    %vm5688 = vcmp.eq.f32.partialorder %v5687, 8.507059e+37
    %v5689 = vand.u32 %v5677, 2147483648
    %v5690 = vor.u32 1.1754944e-38, %v5689
    %v5691 = vsel %vm5688, %v5690, %v5686
    %v5692 = vmul.f32 %v5667, %v5691
    %v5693 = vmin.f32 %v5692, 1.0
    %v5694 = vmax.f32 %v5693, -1.0
    %v5695 = vmul.f32 %v1205, %v1205
    %v5696 = vmin.f32 16.0, %v5695
    %v5697 = vmul.f32 %v5696, 2.1237322e-06
    %v5698 = vadd.f32 %v5697, 0.00028619796
    %v5699 = vmul.f32 %v5696, %v5698
    %v5700 = vadd.f32 %v5699, 0.0036580483
    %v5701 = vmul.f32 %v5696, %v5700
    %v5702 = vadd.f32 %v5701, 0.05243302
    %v5703 = vmul.f32 %v5696, %v5702
    %v5704 = vadd.f32 %v5703, 0.18741608
    %v5705 = vmul.f32 %v5696, %v5704
    %v5706 = vadd.f32 %v5705, 1.1283791
    %v5707 = vmul.f32 %v1205, %v5706
    %v5708 = vmul.f32 %v5696, 3.8918573e-05
    %v5709 = vadd.f32 %v5708, 0.001143296
    %v5710 = vmul.f32 %v5696, %v5709
    %v5711 = vadd.f32 %v5710, 0.014752088
    %v5712 = vmul.f32 %v5696, %v5711
    %v5713 = vadd.f32 %v5712, 0.112945676
    %v5714 = vmul.f32 %v5696, %v5713
    %v5715 = vadd.f32 %v5714, 0.4994258
    %v5716 = vmul.f32 %v5696, %v5715
    %v5717 = vadd.f32 %v5716, 1.0
    %v5718 = vrcp.pop %v5717
    %v5719 = vmul.f32 %v5717, %v5718
    %v5720 = vsub.f32 1.0, %v5719
    %v5721 = vmul.f32 %v5718, %v5720
    %v5722 = vadd.f32 %v5718, %v5721
    %vm5723 = vweird.f32 %v5717
    %vm5724 = vweird.f32 %v5718
    %vm5725 = vmor %vm5723, %vm5724
    %v5726 = vsel %vm5725, %v5718, %v5722
    %v5727 = vand.u32 2147483647, %v5717
    %vm5728 = vcmp.eq.f32.partialorder %v5727, 8.507059e+37
    %v5729 = vand.u32 %v5717, 2147483648
    %v5730 = vor.u32 1.1754944e-38, %v5729
    %v5731 = vsel %vm5728, %v5730, %v5726
    %v5732 = vmul.f32 %v5707, %v5731
    %v5733 = vmin.f32 %v5732, 1.0
    %v5734 = vmax.f32 %v5733, -1.0
    %v5735 = vmul.f32 %v1206, %v1206
    %v5736 = vmin.f32 16.0, %v5735
    %v5737 = vmul.f32 %v5736, 2.1237322e-06
    %v5738 = vadd.f32 %v5737, 0.00028619796
    %v5739 = vmul.f32 %v5736, %v5738
    %v5740 = vadd.f32 %v5739, 0.0036580483
    %v5741 = vmul.f32 %v5736, %v5740
    %v5742 = vadd.f32 %v5741, 0.05243302
    %v5743 = vmul.f32 %v5736, %v5742
    %v5744 = vadd.f32 %v5743, 0.18741608
    %v5745 = vmul.f32 %v5736, %v5744
    %v5746 = vadd.f32 %v5745, 1.1283791
    %v5747 = vmul.f32 %v1206, %v5746
    %v5748 = vmul.f32 %v5736, 3.8918573e-05
    %v5749 = vadd.f32 %v5748, 0.001143296
    %v5750 = vmul.f32 %v5736, %v5749
    %v5751 = vadd.f32 %v5750, 0.014752088
    %v5752 = vmul.f32 %v5736, %v5751
    %v5753 = vadd.f32 %v5752, 0.112945676
    %v5754 = vmul.f32 %v5736, %v5753
    %v5755 = vadd.f32 %v5754, 0.4994258
    %v5756 = vmul.f32 %v5736, %v5755
    %v5757 = vadd.f32 %v5756, 1.0
    %v5758 = vrcp.pop %v5757
    %v5759 = vmul.f32 %v5757, %v5758
    %v5760 = vsub.f32 1.0, %v5759
    %v5761 = vmul.f32 %v5758, %v5760
    %v5762 = vadd.f32 %v5758, %v5761
    %vm5763 = vweird.f32 %v5757
    %vm5764 = vweird.f32 %v5758
    %vm5765 = vmor %vm5763, %vm5764
    %v5766 = vsel %vm5765, %v5758, %v5762
    %v5767 = vand.u32 2147483647, %v5757
    %vm5768 = vcmp.eq.f32.partialorder %v5767, 8.507059e+37
    %v5769 = vand.u32 %v5757, 2147483648
    %v5770 = vor.u32 1.1754944e-38, %v5769
    %v5771 = vsel %vm5768, %v5770, %v5766
    %v5772 = vmul.f32 %v5747, %v5771
    %v5773 = vmin.f32 %v5772, 1.0
    %v5774 = vmax.f32 %v5773, -1.0
    %v5775 = vmul.f32 %v1207, %v1207
    %v5776 = vmin.f32 16.0, %v5775
    %v5777 = vmul.f32 %v5776, 2.1237322e-06
    %v5778 = vadd.f32 %v5777, 0.00028619796
    %v5779 = vmul.f32 %v5776, %v5778
    %v5780 = vadd.f32 %v5779, 0.0036580483
    %v5781 = vmul.f32 %v5776, %v5780
    %v5782 = vadd.f32 %v5781, 0.05243302
    %v5783 = vmul.f32 %v5776, %v5782
    %v5784 = vadd.f32 %v5783, 0.18741608
    %v5785 = vmul.f32 %v5776, %v5784
    %v5786 = vadd.f32 %v5785, 1.1283791
    %v5787 = vmul.f32 %v1207, %v5786
    %v5788 = vmul.f32 %v5776, 3.8918573e-05
    %v5789 = vadd.f32 %v5788, 0.001143296
    %v5790 = vmul.f32 %v5776, %v5789
    %v5791 = vadd.f32 %v5790, 0.014752088
    %v5792 = vmul.f32 %v5776, %v5791
    %v5793 = vadd.f32 %v5792, 0.112945676
    %v5794 = vmul.f32 %v5776, %v5793
    %v5795 = vadd.f32 %v5794, 0.4994258
    %v5796 = vmul.f32 %v5776, %v5795
    %v5797 = vadd.f32 %v5796, 1.0
    %v5798 = vrcp.pop %v5797
    %v5799 = vmul.f32 %v5797, %v5798
    %v5800 = vsub.f32 1.0, %v5799
    %v5801 = vmul.f32 %v5798, %v5800
    %v5802 = vadd.f32 %v5798, %v5801
    %vm5803 = vweird.f32 %v5797
    %vm5804 = vweird.f32 %v5798
    %vm5805 = vmor %vm5803, %vm5804
    %v5806 = vsel %vm5805, %v5798, %v5802
    %v5807 = vand.u32 2147483647, %v5797
    %vm5808 = vcmp.eq.f32.partialorder %v5807, 8.507059e+37
    %v5809 = vand.u32 %v5797, 2147483648
    %v5810 = vor.u32 1.1754944e-38, %v5809
    %v5811 = vsel %vm5808, %v5810, %v5806
    %v5812 = vmul.f32 %v5787, %v5811
    %v5813 = vmin.f32 %v5812, 1.0
    %v5814 = vmax.f32 %v5813, -1.0
    %v5815 = vmul.f32 %v1208, %v1208
    %v5816 = vmin.f32 16.0, %v5815
    %v5817 = vmul.f32 %v5816, 2.1237322e-06
    %v5818 = vadd.f32 %v5817, 0.00028619796
    %v5819 = vmul.f32 %v5816, %v5818
    %v5820 = vadd.f32 %v5819, 0.0036580483
    %v5821 = vmul.f32 %v5816, %v5820
    %v5822 = vadd.f32 %v5821, 0.05243302
    %v5823 = vmul.f32 %v5816, %v5822
    %v5824 = vadd.f32 %v5823, 0.18741608
    %v5825 = vmul.f32 %v5816, %v5824
    %v5826 = vadd.f32 %v5825, 1.1283791
    %v5827 = vmul.f32 %v1208, %v5826
    %v5828 = vmul.f32 %v5816, 3.8918573e-05
    %v5829 = vadd.f32 %v5828, 0.001143296
    %v5830 = vmul.f32 %v5816, %v5829
    %v5831 = vadd.f32 %v5830, 0.014752088
    %v5832 = vmul.f32 %v5816, %v5831
    %v5833 = vadd.f32 %v5832, 0.112945676
    %v5834 = vmul.f32 %v5816, %v5833
    %v5835 = vadd.f32 %v5834, 0.4994258
    %v5836 = vmul.f32 %v5816, %v5835
    %v5837 = vadd.f32 %v5836, 1.0
    %v5838 = vrcp.pop %v5837
    %v5839 = vmul.f32 %v5837, %v5838
    %v5840 = vsub.f32 1.0, %v5839
    %v5841 = vmul.f32 %v5838, %v5840
    %v5842 = vadd.f32 %v5838, %v5841
    %vm5843 = vweird.f32 %v5837
    %vm5844 = vweird.f32 %v5838
    %vm5845 = vmor %vm5843, %vm5844
    %v5846 = vsel %vm5845, %v5838, %v5842
    %v5847 = vand.u32 2147483647, %v5837
    %vm5848 = vcmp.eq.f32.partialorder %v5847, 8.507059e+37
    %v5849 = vand.u32 %v5837, 2147483648
    %v5850 = vor.u32 1.1754944e-38, %v5849
    %v5851 = vsel %vm5848, %v5850, %v5846
    %v5852 = vmul.f32 %v5827, %v5851
    %v5853 = vmin.f32 %v5852, 1.0
    %v5854 = vmax.f32 %v5853, -1.0
    %v5855 = vmul.f32 %v1209, %v1209
    %v5856 = vmin.f32 16.0, %v5855
    %v5857 = vmul.f32 %v5856, 2.1237322e-06
    %v5858 = vadd.f32 %v5857, 0.00028619796
    %v5859 = vmul.f32 %v5856, %v5858
    %v5860 = vadd.f32 %v5859, 0.0036580483
    %v5861 = vmul.f32 %v5856, %v5860
    %v5862 = vadd.f32 %v5861, 0.05243302
    %v5863 = vmul.f32 %v5856, %v5862
    %v5864 = vadd.f32 %v5863, 0.18741608
    %v5865 = vmul.f32 %v5856, %v5864
    %v5866 = vadd.f32 %v5865, 1.1283791
    %v5867 = vmul.f32 %v1209, %v5866
    %v5868 = vmul.f32 %v5856, 3.8918573e-05
    %v5869 = vadd.f32 %v5868, 0.001143296
    %v5870 = vmul.f32 %v5856, %v5869
    %v5871 = vadd.f32 %v5870, 0.014752088
    %v5872 = vmul.f32 %v5856, %v5871
    %v5873 = vadd.f32 %v5872, 0.112945676
    %v5874 = vmul.f32 %v5856, %v5873
    %v5875 = vadd.f32 %v5874, 0.4994258
    %v5876 = vmul.f32 %v5856, %v5875
    %v5877 = vadd.f32 %v5876, 1.0
    %v5878 = vrcp.pop %v5877
    %v5879 = vmul.f32 %v5877, %v5878
    %v5880 = vsub.f32 1.0, %v5879
    %v5881 = vmul.f32 %v5878, %v5880
    %v5882 = vadd.f32 %v5878, %v5881
    %vm5883 = vweird.f32 %v5877
    %vm5884 = vweird.f32 %v5878
    %vm5885 = vmor %vm5883, %vm5884
    %v5886 = vsel %vm5885, %v5878, %v5882
    %v5887 = vand.u32 2147483647, %v5877
    %vm5888 = vcmp.eq.f32.partialorder %v5887, 8.507059e+37
    %v5889 = vand.u32 %v5877, 2147483648
    %v5890 = vor.u32 1.1754944e-38, %v5889
    %v5891 = vsel %vm5888, %v5890, %v5886
    %v5892 = vmul.f32 %v5867, %v5891
    %v5893 = vmin.f32 %v5892, 1.0
    %v5894 = vmax.f32 %v5893, -1.0
    %v5895 = vmul.f32 %v1210, %v1210
    %v5896 = vmin.f32 16.0, %v5895
    %v5897 = vmul.f32 %v5896, 2.1237322e-06
    %v5898 = vadd.f32 %v5897, 0.00028619796
    %v5899 = vmul.f32 %v5896, %v5898
    %v5900 = vadd.f32 %v5899, 0.0036580483
    %v5901 = vmul.f32 %v5896, %v5900
    %v5902 = vadd.f32 %v5901, 0.05243302
    %v5903 = vmul.f32 %v5896, %v5902
    %v5904 = vadd.f32 %v5903, 0.18741608
    %v5905 = vmul.f32 %v5896, %v5904
    %v5906 = vadd.f32 %v5905, 1.1283791
    %v5907 = vmul.f32 %v1210, %v5906
    %v5908 = vmul.f32 %v5896, 3.8918573e-05
    %v5909 = vadd.f32 %v5908, 0.001143296
    %v5910 = vmul.f32 %v5896, %v5909
    %v5911 = vadd.f32 %v5910, 0.014752088
    %v5912 = vmul.f32 %v5896, %v5911
    %v5913 = vadd.f32 %v5912, 0.112945676
    %v5914 = vmul.f32 %v5896, %v5913
    %v5915 = vadd.f32 %v5914, 0.4994258
    %v5916 = vmul.f32 %v5896, %v5915
    %v5917 = vadd.f32 %v5916, 1.0
    %v5918 = vrcp.pop %v5917
    %v5919 = vmul.f32 %v5917, %v5918
    %v5920 = vsub.f32 1.0, %v5919
    %v5921 = vmul.f32 %v5918, %v5920
    %v5922 = vadd.f32 %v5918, %v5921
    %vm5923 = vweird.f32 %v5917
    %vm5924 = vweird.f32 %v5918
    %vm5925 = vmor %vm5923, %vm5924
    %v5926 = vsel %vm5925, %v5918, %v5922
    %v5927 = vand.u32 2147483647, %v5917
    %vm5928 = vcmp.eq.f32.partialorder %v5927, 8.507059e+37
    %v5929 = vand.u32 %v5917, 2147483648
    %v5930 = vor.u32 1.1754944e-38, %v5929
    %v5931 = vsel %vm5928, %v5930, %v5926
    %v5932 = vmul.f32 %v5907, %v5931
    %v5933 = vmin.f32 %v5932, 1.0
    %v5934 = vmax.f32 %v5933, -1.0
    %v5935 = vmul.f32 %v1211, %v1211
    %v5936 = vmin.f32 16.0, %v5935
    %v5937 = vmul.f32 %v5936, 2.1237322e-06
    %v5938 = vadd.f32 %v5937, 0.00028619796
    %v5939 = vmul.f32 %v5936, %v5938
    %v5940 = vadd.f32 %v5939, 0.0036580483
    %v5941 = vmul.f32 %v5936, %v5940
    %v5942 = vadd.f32 %v5941, 0.05243302
    %v5943 = vmul.f32 %v5936, %v5942
    %v5944 = vadd.f32 %v5943, 0.18741608
    %v5945 = vmul.f32 %v5936, %v5944
    %v5946 = vadd.f32 %v5945, 1.1283791
    %v5947 = vmul.f32 %v1211, %v5946
    %v5948 = vmul.f32 %v5936, 3.8918573e-05
    %v5949 = vadd.f32 %v5948, 0.001143296
    %v5950 = vmul.f32 %v5936, %v5949
    %v5951 = vadd.f32 %v5950, 0.014752088
    %v5952 = vmul.f32 %v5936, %v5951
    %v5953 = vadd.f32 %v5952, 0.112945676
    %v5954 = vmul.f32 %v5936, %v5953
    %v5955 = vadd.f32 %v5954, 0.4994258
    %v5956 = vmul.f32 %v5936, %v5955
    %v5957 = vadd.f32 %v5956, 1.0
    %v5958 = vrcp.pop %v5957
    %v5959 = vmul.f32 %v5957, %v5958
    %v5960 = vsub.f32 1.0, %v5959
    %v5961 = vmul.f32 %v5958, %v5960
    %v5962 = vadd.f32 %v5958, %v5961
    %vm5963 = vweird.f32 %v5957
    %vm5964 = vweird.f32 %v5958
    %vm5965 = vmor %vm5963, %vm5964
    %v5966 = vsel %vm5965, %v5958, %v5962
    %v5967 = vand.u32 2147483647, %v5957
    %vm5968 = vcmp.eq.f32.partialorder %v5967, 8.507059e+37
    %v5969 = vand.u32 %v5957, 2147483648
    %v5970 = vor.u32 1.1754944e-38, %v5969
    %v5971 = vsel %vm5968, %v5970, %v5966
    %v5972 = vmul.f32 %v5947, %v5971
    %v5973 = vmin.f32 %v5972, 1.0
    %v5974 = vmax.f32 %v5973, -1.0
    %v5975 = vmul.f32 %v1212, %v1212
    %v5976 = vmin.f32 16.0, %v5975
    %v5977 = vmul.f32 %v5976, 2.1237322e-06
    %v5978 = vadd.f32 %v5977, 0.00028619796
    %v5979 = vmul.f32 %v5976, %v5978
    %v5980 = vadd.f32 %v5979, 0.0036580483
    %v5981 = vmul.f32 %v5976, %v5980
    %v5982 = vadd.f32 %v5981, 0.05243302
    %v5983 = vmul.f32 %v5976, %v5982
    %v5984 = vadd.f32 %v5983, 0.18741608
    %v5985 = vmul.f32 %v5976, %v5984
    %v5986 = vadd.f32 %v5985, 1.1283791
    %v5987 = vmul.f32 %v1212, %v5986
    %v5988 = vmul.f32 %v5976, 3.8918573e-05
    %v5989 = vadd.f32 %v5988, 0.001143296
    %v5990 = vmul.f32 %v5976, %v5989
    %v5991 = vadd.f32 %v5990, 0.014752088
    %v5992 = vmul.f32 %v5976, %v5991
    %v5993 = vadd.f32 %v5992, 0.112945676
    %v5994 = vmul.f32 %v5976, %v5993
    %v5995 = vadd.f32 %v5994, 0.4994258
    %v5996 = vmul.f32 %v5976, %v5995
    %v5997 = vadd.f32 %v5996, 1.0
    %v5998 = vrcp.pop %v5997
    %v5999 = vmul.f32 %v5997, %v5998
    %v6000 = vsub.f32 1.0, %v5999
    %v6001 = vmul.f32 %v5998, %v6000
    %v6002 = vadd.f32 %v5998, %v6001
    %vm6003 = vweird.f32 %v5997
    %vm6004 = vweird.f32 %v5998
    %vm6005 = vmor %vm6003, %vm6004
    %v6006 = vsel %vm6005, %v5998, %v6002
    %v6007 = vand.u32 2147483647, %v5997
    %vm6008 = vcmp.eq.f32.partialorder %v6007, 8.507059e+37
    %v6009 = vand.u32 %v5997, 2147483648
    %v6010 = vor.u32 1.1754944e-38, %v6009
    %v6011 = vsel %vm6008, %v6010, %v6006
    %v6012 = vmul.f32 %v5987, %v6011
    %v6013 = vmin.f32 %v6012, 1.0
    %v6014 = vmax.f32 %v6013, -1.0
    %v6015 = vmul.f32 %v1213, %v1213
    %v6016 = vmin.f32 16.0, %v6015
    %v6017 = vmul.f32 %v6016, 2.1237322e-06
    %v6018 = vadd.f32 %v6017, 0.00028619796
    %v6019 = vmul.f32 %v6016, %v6018
    %v6020 = vadd.f32 %v6019, 0.0036580483
    %v6021 = vmul.f32 %v6016, %v6020
    %v6022 = vadd.f32 %v6021, 0.05243302
    %v6023 = vmul.f32 %v6016, %v6022
    %v6024 = vadd.f32 %v6023, 0.18741608
    %v6025 = vmul.f32 %v6016, %v6024
    %v6026 = vadd.f32 %v6025, 1.1283791
    %v6027 = vmul.f32 %v1213, %v6026
    %v6028 = vmul.f32 %v6016, 3.8918573e-05
    %v6029 = vadd.f32 %v6028, 0.001143296
    %v6030 = vmul.f32 %v6016, %v6029
    %v6031 = vadd.f32 %v6030, 0.014752088
    %v6032 = vmul.f32 %v6016, %v6031
    %v6033 = vadd.f32 %v6032, 0.112945676
    %v6034 = vmul.f32 %v6016, %v6033
    %v6035 = vadd.f32 %v6034, 0.4994258
    %v6036 = vmul.f32 %v6016, %v6035
    %v6037 = vadd.f32 %v6036, 1.0
    %v6038 = vrcp.pop %v6037
    %v6039 = vmul.f32 %v6037, %v6038
    %v6040 = vsub.f32 1.0, %v6039
    %v6041 = vmul.f32 %v6038, %v6040
    %v6042 = vadd.f32 %v6038, %v6041
    %vm6043 = vweird.f32 %v6037
    %vm6044 = vweird.f32 %v6038
    %vm6045 = vmor %vm6043, %vm6044
    %v6046 = vsel %vm6045, %v6038, %v6042
    %v6047 = vand.u32 2147483647, %v6037
    %vm6048 = vcmp.eq.f32.partialorder %v6047, 8.507059e+37
    %v6049 = vand.u32 %v6037, 2147483648
    %v6050 = vor.u32 1.1754944e-38, %v6049
    %v6051 = vsel %vm6048, %v6050, %v6046
    %v6052 = vmul.f32 %v6027, %v6051
    %v6053 = vmin.f32 %v6052, 1.0
    %v6054 = vmax.f32 %v6053, -1.0
    %v6055 = vmul.f32 %v1214, %v1214
    %v6056 = vmin.f32 16.0, %v6055
    %v6057 = vmul.f32 %v6056, 2.1237322e-06
    %v6058 = vadd.f32 %v6057, 0.00028619796
    %v6059 = vmul.f32 %v6056, %v6058
    %v6060 = vadd.f32 %v6059, 0.0036580483
    %v6061 = vmul.f32 %v6056, %v6060
    %v6062 = vadd.f32 %v6061, 0.05243302
    %v6063 = vmul.f32 %v6056, %v6062
    %v6064 = vadd.f32 %v6063, 0.18741608
    %v6065 = vmul.f32 %v6056, %v6064
    %v6066 = vadd.f32 %v6065, 1.1283791
    %v6067 = vmul.f32 %v1214, %v6066
    %v6068 = vmul.f32 %v6056, 3.8918573e-05
    %v6069 = vadd.f32 %v6068, 0.001143296
    %v6070 = vmul.f32 %v6056, %v6069
    %v6071 = vadd.f32 %v6070, 0.014752088
    %v6072 = vmul.f32 %v6056, %v6071
    %v6073 = vadd.f32 %v6072, 0.112945676
    %v6074 = vmul.f32 %v6056, %v6073
    %v6075 = vadd.f32 %v6074, 0.4994258
    %v6076 = vmul.f32 %v6056, %v6075
    %v6077 = vadd.f32 %v6076, 1.0
    %v6078 = vrcp.pop %v6077
    %v6079 = vmul.f32 %v6077, %v6078
    %v6080 = vsub.f32 1.0, %v6079
    %v6081 = vmul.f32 %v6078, %v6080
    %v6082 = vadd.f32 %v6078, %v6081
    %vm6083 = vweird.f32 %v6077
    %vm6084 = vweird.f32 %v6078
    %vm6085 = vmor %vm6083, %vm6084
    %v6086 = vsel %vm6085, %v6078, %v6082
    %v6087 = vand.u32 2147483647, %v6077
    %vm6088 = vcmp.eq.f32.partialorder %v6087, 8.507059e+37
    %v6089 = vand.u32 %v6077, 2147483648
    %v6090 = vor.u32 1.1754944e-38, %v6089
    %v6091 = vsel %vm6088, %v6090, %v6086
    %v6092 = vmul.f32 %v6067, %v6091
    %v6093 = vmin.f32 %v6092, 1.0
    %v6094 = vmax.f32 %v6093, -1.0
    %v6095 = vmul.f32 %v1215, %v1215
    %v6096 = vmin.f32 16.0, %v6095
    %v6097 = vmul.f32 %v6096, 2.1237322e-06
    %v6098 = vadd.f32 %v6097, 0.00028619796
    %v6099 = vmul.f32 %v6096, %v6098
    %v6100 = vadd.f32 %v6099, 0.0036580483
    %v6101 = vmul.f32 %v6096, %v6100
    %v6102 = vadd.f32 %v6101, 0.05243302
    %v6103 = vmul.f32 %v6096, %v6102
    %v6104 = vadd.f32 %v6103, 0.18741608
    %v6105 = vmul.f32 %v6096, %v6104
    %v6106 = vadd.f32 %v6105, 1.1283791
    %v6107 = vmul.f32 %v1215, %v6106
    %v6108 = vmul.f32 %v6096, 3.8918573e-05
    %v6109 = vadd.f32 %v6108, 0.001143296
    %v6110 = vmul.f32 %v6096, %v6109
    %v6111 = vadd.f32 %v6110, 0.014752088
    %v6112 = vmul.f32 %v6096, %v6111
    %v6113 = vadd.f32 %v6112, 0.112945676
    %v6114 = vmul.f32 %v6096, %v6113
    %v6115 = vadd.f32 %v6114, 0.4994258
    %v6116 = vmul.f32 %v6096, %v6115
    %v6117 = vadd.f32 %v6116, 1.0
    %v6118 = vrcp.pop %v6117
    %v6119 = vmul.f32 %v6117, %v6118
    %v6120 = vsub.f32 1.0, %v6119
    %v6121 = vmul.f32 %v6118, %v6120
    %v6122 = vadd.f32 %v6118, %v6121
    %vm6123 = vweird.f32 %v6117
    %vm6124 = vweird.f32 %v6118
    %vm6125 = vmor %vm6123, %vm6124
    %v6126 = vsel %vm6125, %v6118, %v6122
    %v6127 = vand.u32 2147483647, %v6117
    %vm6128 = vcmp.eq.f32.partialorder %v6127, 8.507059e+37
    %v6129 = vand.u32 %v6117, 2147483648
    %v6130 = vor.u32 1.1754944e-38, %v6129
    %v6131 = vsel %vm6128, %v6130, %v6126
    %v6132 = vmul.f32 %v6107, %v6131
    %v6133 = vmin.f32 %v6132, 1.0
    %v6134 = vmax.f32 %v6133, -1.0
    %v6135 = vmul.f32 %v1216, %v1216
    %v6136 = vmin.f32 16.0, %v6135
    %v6137 = vmul.f32 %v6136, 2.1237322e-06
    %v6138 = vadd.f32 %v6137, 0.00028619796
    %v6139 = vmul.f32 %v6136, %v6138
    %v6140 = vadd.f32 %v6139, 0.0036580483
    %v6141 = vmul.f32 %v6136, %v6140
    %v6142 = vadd.f32 %v6141, 0.05243302
    %v6143 = vmul.f32 %v6136, %v6142
    %v6144 = vadd.f32 %v6143, 0.18741608
    %v6145 = vmul.f32 %v6136, %v6144
    %v6146 = vadd.f32 %v6145, 1.1283791
    %v6147 = vmul.f32 %v1216, %v6146
    %v6148 = vmul.f32 %v6136, 3.8918573e-05
    %v6149 = vadd.f32 %v6148, 0.001143296
    %v6150 = vmul.f32 %v6136, %v6149
    %v6151 = vadd.f32 %v6150, 0.014752088
    %v6152 = vmul.f32 %v6136, %v6151
    %v6153 = vadd.f32 %v6152, 0.112945676
    %v6154 = vmul.f32 %v6136, %v6153
    %v6155 = vadd.f32 %v6154, 0.4994258
    %v6156 = vmul.f32 %v6136, %v6155
    %v6157 = vadd.f32 %v6156, 1.0
    %v6158 = vrcp.pop %v6157
    %v6159 = vmul.f32 %v6157, %v6158
    %v6160 = vsub.f32 1.0, %v6159
    %v6161 = vmul.f32 %v6158, %v6160
    %v6162 = vadd.f32 %v6158, %v6161
    %vm6163 = vweird.f32 %v6157
    %vm6164 = vweird.f32 %v6158
    %vm6165 = vmor %vm6163, %vm6164
    %v6166 = vsel %vm6165, %v6158, %v6162
    %v6167 = vand.u32 2147483647, %v6157
    %vm6168 = vcmp.eq.f32.partialorder %v6167, 8.507059e+37
    %v6169 = vand.u32 %v6157, 2147483648
    %v6170 = vor.u32 1.1754944e-38, %v6169
    %v6171 = vsel %vm6168, %v6170, %v6166
    %v6172 = vmul.f32 %v6147, %v6171
    %v6173 = vmin.f32 %v6172, 1.0
    %v6174 = vmax.f32 %v6173, -1.0
    %v6175 = vmul.f32 %v1217, %v1217
    %v6176 = vmin.f32 16.0, %v6175
    %v6177 = vmul.f32 %v6176, 2.1237322e-06
    %v6178 = vadd.f32 %v6177, 0.00028619796
    %v6179 = vmul.f32 %v6176, %v6178
    %v6180 = vadd.f32 %v6179, 0.0036580483
    %v6181 = vmul.f32 %v6176, %v6180
    %v6182 = vadd.f32 %v6181, 0.05243302
    %v6183 = vmul.f32 %v6176, %v6182
    %v6184 = vadd.f32 %v6183, 0.18741608
    %v6185 = vmul.f32 %v6176, %v6184
    %v6186 = vadd.f32 %v6185, 1.1283791
    %v6187 = vmul.f32 %v1217, %v6186
    %v6188 = vmul.f32 %v6176, 3.8918573e-05
    %v6189 = vadd.f32 %v6188, 0.001143296
    %v6190 = vmul.f32 %v6176, %v6189
    %v6191 = vadd.f32 %v6190, 0.014752088
    %v6192 = vmul.f32 %v6176, %v6191
    %v6193 = vadd.f32 %v6192, 0.112945676
    %v6194 = vmul.f32 %v6176, %v6193
    %v6195 = vadd.f32 %v6194, 0.4994258
    %v6196 = vmul.f32 %v6176, %v6195
    %v6197 = vadd.f32 %v6196, 1.0
    %v6198 = vrcp.pop %v6197
    %v6199 = vmul.f32 %v6197, %v6198
    %v6200 = vsub.f32 1.0, %v6199
    %v6201 = vmul.f32 %v6198, %v6200
    %v6202 = vadd.f32 %v6198, %v6201
    %vm6203 = vweird.f32 %v6197
    %vm6204 = vweird.f32 %v6198
    %vm6205 = vmor %vm6203, %vm6204
    %v6206 = vsel %vm6205, %v6198, %v6202
    %v6207 = vand.u32 2147483647, %v6197
    %vm6208 = vcmp.eq.f32.partialorder %v6207, 8.507059e+37
    %v6209 = vand.u32 %v6197, 2147483648
    %v6210 = vor.u32 1.1754944e-38, %v6209
    %v6211 = vsel %vm6208, %v6210, %v6206
    %v6212 = vmul.f32 %v6187, %v6211
    %v6213 = vmin.f32 %v6212, 1.0
    %v6214 = vmax.f32 %v6213, -1.0
    %v6215 = vmul.f32 %v1218, %v1218
    %v6216 = vmin.f32 16.0, %v6215
    %v6217 = vmul.f32 %v6216, 2.1237322e-06
    %v6218 = vadd.f32 %v6217, 0.00028619796
    %v6219 = vmul.f32 %v6216, %v6218
    %v6220 = vadd.f32 %v6219, 0.0036580483
    %v6221 = vmul.f32 %v6216, %v6220
    %v6222 = vadd.f32 %v6221, 0.05243302
    %v6223 = vmul.f32 %v6216, %v6222
    %v6224 = vadd.f32 %v6223, 0.18741608
    %v6225 = vmul.f32 %v6216, %v6224
    %v6226 = vadd.f32 %v6225, 1.1283791
    %v6227 = vmul.f32 %v1218, %v6226
    %v6228 = vmul.f32 %v6216, 3.8918573e-05
    %v6229 = vadd.f32 %v6228, 0.001143296
    %v6230 = vmul.f32 %v6216, %v6229
    %v6231 = vadd.f32 %v6230, 0.014752088
    %v6232 = vmul.f32 %v6216, %v6231
    %v6233 = vadd.f32 %v6232, 0.112945676
    %v6234 = vmul.f32 %v6216, %v6233
    %v6235 = vadd.f32 %v6234, 0.4994258
    %v6236 = vmul.f32 %v6216, %v6235
    %v6237 = vadd.f32 %v6236, 1.0
    %v6238 = vrcp.pop %v6237
    %v6239 = vmul.f32 %v6237, %v6238
    %v6240 = vsub.f32 1.0, %v6239
    %v6241 = vmul.f32 %v6238, %v6240
    %v6242 = vadd.f32 %v6238, %v6241
    %vm6243 = vweird.f32 %v6237
    %vm6244 = vweird.f32 %v6238
    %vm6245 = vmor %vm6243, %vm6244
    %v6246 = vsel %vm6245, %v6238, %v6242
    %v6247 = vand.u32 2147483647, %v6237
    %vm6248 = vcmp.eq.f32.partialorder %v6247, 8.507059e+37
    %v6249 = vand.u32 %v6237, 2147483648
    %v6250 = vor.u32 1.1754944e-38, %v6249
    %v6251 = vsel %vm6248, %v6250, %v6246
    %v6252 = vmul.f32 %v6227, %v6251
    %v6253 = vmin.f32 %v6252, 1.0
    %v6254 = vmax.f32 %v6253, -1.0
    %v6255 = vmul.f32 %v1219, %v1219
    %v6256 = vmin.f32 16.0, %v6255
    %v6257 = vmul.f32 %v6256, 2.1237322e-06
    %v6258 = vadd.f32 %v6257, 0.00028619796
    %v6259 = vmul.f32 %v6256, %v6258
    %v6260 = vadd.f32 %v6259, 0.0036580483
    %v6261 = vmul.f32 %v6256, %v6260
    %v6262 = vadd.f32 %v6261, 0.05243302
    %v6263 = vmul.f32 %v6256, %v6262
    %v6264 = vadd.f32 %v6263, 0.18741608
    %v6265 = vmul.f32 %v6256, %v6264
    %v6266 = vadd.f32 %v6265, 1.1283791
    %v6267 = vmul.f32 %v1219, %v6266
    %v6268 = vmul.f32 %v6256, 3.8918573e-05
    %v6269 = vadd.f32 %v6268, 0.001143296
    %v6270 = vmul.f32 %v6256, %v6269
    %v6271 = vadd.f32 %v6270, 0.014752088
    %v6272 = vmul.f32 %v6256, %v6271
    %v6273 = vadd.f32 %v6272, 0.112945676
    %v6274 = vmul.f32 %v6256, %v6273
    %v6275 = vadd.f32 %v6274, 0.4994258
    %v6276 = vmul.f32 %v6256, %v6275
    %v6277 = vadd.f32 %v6276, 1.0
    %v6278 = vrcp.pop %v6277
    %v6279 = vmul.f32 %v6277, %v6278
    %v6280 = vsub.f32 1.0, %v6279
    %v6281 = vmul.f32 %v6278, %v6280
    %v6282 = vadd.f32 %v6278, %v6281
    %vm6283 = vweird.f32 %v6277
    %vm6284 = vweird.f32 %v6278
    %vm6285 = vmor %vm6283, %vm6284
    %v6286 = vsel %vm6285, %v6278, %v6282
    %v6287 = vand.u32 2147483647, %v6277
    %vm6288 = vcmp.eq.f32.partialorder %v6287, 8.507059e+37
    %v6289 = vand.u32 %v6277, 2147483648
    %v6290 = vor.u32 1.1754944e-38, %v6289
    %v6291 = vsel %vm6288, %v6290, %v6286
    %v6292 = vmul.f32 %v6267, %v6291
    %v6293 = vmin.f32 %v6292, 1.0
    %v6294 = vmax.f32 %v6293, -1.0
    %v6295 = vmul.f32 %v1220, %v1220
    %v6296 = vmin.f32 16.0, %v6295
    %v6297 = vmul.f32 %v6296, 2.1237322e-06
    %v6298 = vadd.f32 %v6297, 0.00028619796
    %v6299 = vmul.f32 %v6296, %v6298
    %v6300 = vadd.f32 %v6299, 0.0036580483
    %v6301 = vmul.f32 %v6296, %v6300
    %v6302 = vadd.f32 %v6301, 0.05243302
    %v6303 = vmul.f32 %v6296, %v6302
    %v6304 = vadd.f32 %v6303, 0.18741608
    %v6305 = vmul.f32 %v6296, %v6304
    %v6306 = vadd.f32 %v6305, 1.1283791
    %v6307 = vmul.f32 %v1220, %v6306
    %v6308 = vmul.f32 %v6296, 3.8918573e-05
    %v6309 = vadd.f32 %v6308, 0.001143296
    %v6310 = vmul.f32 %v6296, %v6309
    %v6311 = vadd.f32 %v6310, 0.014752088
    %v6312 = vmul.f32 %v6296, %v6311
    %v6313 = vadd.f32 %v6312, 0.112945676
    %v6314 = vmul.f32 %v6296, %v6313
    %v6315 = vadd.f32 %v6314, 0.4994258
    %v6316 = vmul.f32 %v6296, %v6315
    %v6317 = vadd.f32 %v6316, 1.0
    %v6318 = vrcp.pop %v6317
    %v6319 = vmul.f32 %v6317, %v6318
    %v6320 = vsub.f32 1.0, %v6319
    %v6321 = vmul.f32 %v6318, %v6320
    %v6322 = vadd.f32 %v6318, %v6321
    %vm6323 = vweird.f32 %v6317
    %vm6324 = vweird.f32 %v6318
    %vm6325 = vmor %vm6323, %vm6324
    %v6326 = vsel %vm6325, %v6318, %v6322
    %v6327 = vand.u32 2147483647, %v6317
    %vm6328 = vcmp.eq.f32.partialorder %v6327, 8.507059e+37
    %v6329 = vand.u32 %v6317, 2147483648
    %v6330 = vor.u32 1.1754944e-38, %v6329
    %v6331 = vsel %vm6328, %v6330, %v6326
    %v6332 = vmul.f32 %v6307, %v6331
    %v6333 = vmin.f32 %v6332, 1.0
    %v6334 = vmax.f32 %v6333, -1.0
    %v6335 = vmul.f32 %v1221, %v1221
    %v6336 = vmin.f32 16.0, %v6335
    %v6337 = vmul.f32 %v6336, 2.1237322e-06
    %v6338 = vadd.f32 %v6337, 0.00028619796
    %v6339 = vmul.f32 %v6336, %v6338
    %v6340 = vadd.f32 %v6339, 0.0036580483
    %v6341 = vmul.f32 %v6336, %v6340
    %v6342 = vadd.f32 %v6341, 0.05243302
    %v6343 = vmul.f32 %v6336, %v6342
    %v6344 = vadd.f32 %v6343, 0.18741608
    %v6345 = vmul.f32 %v6336, %v6344
    %v6346 = vadd.f32 %v6345, 1.1283791
    %v6347 = vmul.f32 %v1221, %v6346
    %v6348 = vmul.f32 %v6336, 3.8918573e-05
    %v6349 = vadd.f32 %v6348, 0.001143296
    %v6350 = vmul.f32 %v6336, %v6349
    %v6351 = vadd.f32 %v6350, 0.014752088
    %v6352 = vmul.f32 %v6336, %v6351
    %v6353 = vadd.f32 %v6352, 0.112945676
    %v6354 = vmul.f32 %v6336, %v6353
    %v6355 = vadd.f32 %v6354, 0.4994258
    %v6356 = vmul.f32 %v6336, %v6355
    %v6357 = vadd.f32 %v6356, 1.0
    %v6358 = vrcp.pop %v6357
    %v6359 = vmul.f32 %v6357, %v6358
    %v6360 = vsub.f32 1.0, %v6359
    %v6361 = vmul.f32 %v6358, %v6360
    %v6362 = vadd.f32 %v6358, %v6361
    %vm6363 = vweird.f32 %v6357
    %vm6364 = vweird.f32 %v6358
    %vm6365 = vmor %vm6363, %vm6364
    %v6366 = vsel %vm6365, %v6358, %v6362
    %v6367 = vand.u32 2147483647, %v6357
    %vm6368 = vcmp.eq.f32.partialorder %v6367, 8.507059e+37
    %v6369 = vand.u32 %v6357, 2147483648
    %v6370 = vor.u32 1.1754944e-38, %v6369
    %v6371 = vsel %vm6368, %v6370, %v6366
    %v6372 = vmul.f32 %v6347, %v6371
    %v6373 = vmin.f32 %v6372, 1.0
    %v6374 = vmax.f32 %v6373, -1.0
    %v6375 = vmul.f32 %v1222, %v1222
    %v6376 = vmin.f32 16.0, %v6375
    %v6377 = vmul.f32 %v6376, 2.1237322e-06
    %v6378 = vadd.f32 %v6377, 0.00028619796
    %v6379 = vmul.f32 %v6376, %v6378
    %v6380 = vadd.f32 %v6379, 0.0036580483
    %v6381 = vmul.f32 %v6376, %v6380
    %v6382 = vadd.f32 %v6381, 0.05243302
    %v6383 = vmul.f32 %v6376, %v6382
    %v6384 = vadd.f32 %v6383, 0.18741608
    %v6385 = vmul.f32 %v6376, %v6384
    %v6386 = vadd.f32 %v6385, 1.1283791
    %v6387 = vmul.f32 %v1222, %v6386
    %v6388 = vmul.f32 %v6376, 3.8918573e-05
    %v6389 = vadd.f32 %v6388, 0.001143296
    %v6390 = vmul.f32 %v6376, %v6389
    %v6391 = vadd.f32 %v6390, 0.014752088
    %v6392 = vmul.f32 %v6376, %v6391
    %v6393 = vadd.f32 %v6392, 0.112945676
    %v6394 = vmul.f32 %v6376, %v6393
    %v6395 = vadd.f32 %v6394, 0.4994258
    %v6396 = vmul.f32 %v6376, %v6395
    %v6397 = vadd.f32 %v6396, 1.0
    %v6398 = vrcp.pop %v6397
    %v6399 = vmul.f32 %v6397, %v6398
    %v6400 = vsub.f32 1.0, %v6399
    %v6401 = vmul.f32 %v6398, %v6400
    %v6402 = vadd.f32 %v6398, %v6401
    %vm6403 = vweird.f32 %v6397
    %vm6404 = vweird.f32 %v6398
    %vm6405 = vmor %vm6403, %vm6404
    %v6406 = vsel %vm6405, %v6398, %v6402
    %v6407 = vand.u32 2147483647, %v6397
    %vm6408 = vcmp.eq.f32.partialorder %v6407, 8.507059e+37
    %v6409 = vand.u32 %v6397, 2147483648
    %v6410 = vor.u32 1.1754944e-38, %v6409
    %v6411 = vsel %vm6408, %v6410, %v6406
    %v6412 = vmul.f32 %v6387, %v6411
    %v6413 = vmin.f32 %v6412, 1.0
    %v6414 = vmax.f32 %v6413, -1.0
    %v6415 = vmul.f32 %v1223, %v1223
    %v6416 = vmin.f32 16.0, %v6415
    %v6417 = vmul.f32 %v6416, 2.1237322e-06
    %v6418 = vadd.f32 %v6417, 0.00028619796
    %v6419 = vmul.f32 %v6416, %v6418
    %v6420 = vadd.f32 %v6419, 0.0036580483
    %v6421 = vmul.f32 %v6416, %v6420
    %v6422 = vadd.f32 %v6421, 0.05243302
    %v6423 = vmul.f32 %v6416, %v6422
    %v6424 = vadd.f32 %v6423, 0.18741608
    %v6425 = vmul.f32 %v6416, %v6424
    %v6426 = vadd.f32 %v6425, 1.1283791
    %v6427 = vmul.f32 %v1223, %v6426
    %v6428 = vmul.f32 %v6416, 3.8918573e-05
    %v6429 = vadd.f32 %v6428, 0.001143296
    %v6430 = vmul.f32 %v6416, %v6429
    %v6431 = vadd.f32 %v6430, 0.014752088
    %v6432 = vmul.f32 %v6416, %v6431
    %v6433 = vadd.f32 %v6432, 0.112945676
    %v6434 = vmul.f32 %v6416, %v6433
    %v6435 = vadd.f32 %v6434, 0.4994258
    %v6436 = vmul.f32 %v6416, %v6435
    %v6437 = vadd.f32 %v6436, 1.0
    %v6438 = vrcp.pop %v6437
    %v6439 = vmul.f32 %v6437, %v6438
    %v6440 = vsub.f32 1.0, %v6439
    %v6441 = vmul.f32 %v6438, %v6440
    %v6442 = vadd.f32 %v6438, %v6441
    %vm6443 = vweird.f32 %v6437
    %vm6444 = vweird.f32 %v6438
    %vm6445 = vmor %vm6443, %vm6444
    %v6446 = vsel %vm6445, %v6438, %v6442
    %v6447 = vand.u32 2147483647, %v6437
    %vm6448 = vcmp.eq.f32.partialorder %v6447, 8.507059e+37
    %v6449 = vand.u32 %v6437, 2147483648
    %v6450 = vor.u32 1.1754944e-38, %v6449
    %v6451 = vsel %vm6448, %v6450, %v6446
    %v6452 = vmul.f32 %v6427, %v6451
    %v6453 = vmin.f32 %v6452, 1.0
    %v6454 = vmax.f32 %v6453, -1.0
    %v6455 = vmul.f32 %v1224, %v1224
    %v6456 = vmin.f32 16.0, %v6455
    %v6457 = vmul.f32 %v6456, 2.1237322e-06
    %v6458 = vadd.f32 %v6457, 0.00028619796
    %v6459 = vmul.f32 %v6456, %v6458
    %v6460 = vadd.f32 %v6459, 0.0036580483
    %v6461 = vmul.f32 %v6456, %v6460
    %v6462 = vadd.f32 %v6461, 0.05243302
    %v6463 = vmul.f32 %v6456, %v6462
    %v6464 = vadd.f32 %v6463, 0.18741608
    %v6465 = vmul.f32 %v6456, %v6464
    %v6466 = vadd.f32 %v6465, 1.1283791
    %v6467 = vmul.f32 %v1224, %v6466
    %v6468 = vmul.f32 %v6456, 3.8918573e-05
    %v6469 = vadd.f32 %v6468, 0.001143296
    %v6470 = vmul.f32 %v6456, %v6469
    %v6471 = vadd.f32 %v6470, 0.014752088
    %v6472 = vmul.f32 %v6456, %v6471
    %v6473 = vadd.f32 %v6472, 0.112945676
    %v6474 = vmul.f32 %v6456, %v6473
    %v6475 = vadd.f32 %v6474, 0.4994258
    %v6476 = vmul.f32 %v6456, %v6475
    %v6477 = vadd.f32 %v6476, 1.0
    %v6478 = vrcp.pop %v6477
    %v6479 = vmul.f32 %v6477, %v6478
    %v6480 = vsub.f32 1.0, %v6479
    %v6481 = vmul.f32 %v6478, %v6480
    %v6482 = vadd.f32 %v6478, %v6481
    %vm6483 = vweird.f32 %v6477
    %vm6484 = vweird.f32 %v6478
    %vm6485 = vmor %vm6483, %vm6484
    %v6486 = vsel %vm6485, %v6478, %v6482
    %v6487 = vand.u32 2147483647, %v6477
    %vm6488 = vcmp.eq.f32.partialorder %v6487, 8.507059e+37
    %v6489 = vand.u32 %v6477, 2147483648
    %v6490 = vor.u32 1.1754944e-38, %v6489
    %v6491 = vsel %vm6488, %v6490, %v6486
    %v6492 = vmul.f32 %v6467, %v6491
    %v6493 = vmin.f32 %v6492, 1.0
    %v6494 = vmax.f32 %v6493, -1.0
    %v6495 = vmul.f32 %v1225, %v1225
    %v6496 = vmin.f32 16.0, %v6495
    %v6497 = vmul.f32 %v6496, 2.1237322e-06
    %v6498 = vadd.f32 %v6497, 0.00028619796
    %v6499 = vmul.f32 %v6496, %v6498
    %v6500 = vadd.f32 %v6499, 0.0036580483
    %v6501 = vmul.f32 %v6496, %v6500
    %v6502 = vadd.f32 %v6501, 0.05243302
    %v6503 = vmul.f32 %v6496, %v6502
    %v6504 = vadd.f32 %v6503, 0.18741608
    %v6505 = vmul.f32 %v6496, %v6504
    %v6506 = vadd.f32 %v6505, 1.1283791
    %v6507 = vmul.f32 %v1225, %v6506
    %v6508 = vmul.f32 %v6496, 3.8918573e-05
    %v6509 = vadd.f32 %v6508, 0.001143296
    %v6510 = vmul.f32 %v6496, %v6509
    %v6511 = vadd.f32 %v6510, 0.014752088
    %v6512 = vmul.f32 %v6496, %v6511
    %v6513 = vadd.f32 %v6512, 0.112945676
    %v6514 = vmul.f32 %v6496, %v6513
    %v6515 = vadd.f32 %v6514, 0.4994258
    %v6516 = vmul.f32 %v6496, %v6515
    %v6517 = vadd.f32 %v6516, 1.0
    %v6518 = vrcp.pop %v6517
    %v6519 = vmul.f32 %v6517, %v6518
    %v6520 = vsub.f32 1.0, %v6519
    %v6521 = vmul.f32 %v6518, %v6520
    %v6522 = vadd.f32 %v6518, %v6521
    %vm6523 = vweird.f32 %v6517
    %vm6524 = vweird.f32 %v6518
    %vm6525 = vmor %vm6523, %vm6524
    %v6526 = vsel %vm6525, %v6518, %v6522
    %v6527 = vand.u32 2147483647, %v6517
    %vm6528 = vcmp.eq.f32.partialorder %v6527, 8.507059e+37
    %v6529 = vand.u32 %v6517, 2147483648
    %v6530 = vor.u32 1.1754944e-38, %v6529
    %v6531 = vsel %vm6528, %v6530, %v6526
    %v6532 = vmul.f32 %v6507, %v6531
    %v6533 = vmin.f32 %v6532, 1.0
    %v6534 = vmax.f32 %v6533, -1.0
    %v6535 = vmul.f32 %v1226, %v1226
    %v6536 = vmin.f32 16.0, %v6535
    %v6537 = vmul.f32 %v6536, 2.1237322e-06
    %v6538 = vadd.f32 %v6537, 0.00028619796
    %v6539 = vmul.f32 %v6536, %v6538
    %v6540 = vadd.f32 %v6539, 0.0036580483
    %v6541 = vmul.f32 %v6536, %v6540
    %v6542 = vadd.f32 %v6541, 0.05243302
    %v6543 = vmul.f32 %v6536, %v6542
    %v6544 = vadd.f32 %v6543, 0.18741608
    %v6545 = vmul.f32 %v6536, %v6544
    %v6546 = vadd.f32 %v6545, 1.1283791
    %v6547 = vmul.f32 %v1226, %v6546
    %v6548 = vmul.f32 %v6536, 3.8918573e-05
    %v6549 = vadd.f32 %v6548, 0.001143296
    %v6550 = vmul.f32 %v6536, %v6549
    %v6551 = vadd.f32 %v6550, 0.014752088
    %v6552 = vmul.f32 %v6536, %v6551
    %v6553 = vadd.f32 %v6552, 0.112945676
    %v6554 = vmul.f32 %v6536, %v6553
    %v6555 = vadd.f32 %v6554, 0.4994258
    %v6556 = vmul.f32 %v6536, %v6555
    %v6557 = vadd.f32 %v6556, 1.0
    %v6558 = vrcp.pop %v6557
    %v6559 = vmul.f32 %v6557, %v6558
    %v6560 = vsub.f32 1.0, %v6559
    %v6561 = vmul.f32 %v6558, %v6560
    %v6562 = vadd.f32 %v6558, %v6561
    %vm6563 = vweird.f32 %v6557
    %vm6564 = vweird.f32 %v6558
    %vm6565 = vmor %vm6563, %vm6564
    %v6566 = vsel %vm6565, %v6558, %v6562
    %v6567 = vand.u32 2147483647, %v6557
    %vm6568 = vcmp.eq.f32.partialorder %v6567, 8.507059e+37
    %v6569 = vand.u32 %v6557, 2147483648
    %v6570 = vor.u32 1.1754944e-38, %v6569
    %v6571 = vsel %vm6568, %v6570, %v6566
    %v6572 = vmul.f32 %v6547, %v6571
    %v6573 = vmin.f32 %v6572, 1.0
    %v6574 = vmax.f32 %v6573, -1.0
    %v6575 = vmul.f32 %v1227, %v1227
    %v6576 = vmin.f32 16.0, %v6575
    %v6577 = vmul.f32 %v6576, 2.1237322e-06
    %v6578 = vadd.f32 %v6577, 0.00028619796
    %v6579 = vmul.f32 %v6576, %v6578
    %v6580 = vadd.f32 %v6579, 0.0036580483
    %v6581 = vmul.f32 %v6576, %v6580
    %v6582 = vadd.f32 %v6581, 0.05243302
    %v6583 = vmul.f32 %v6576, %v6582
    %v6584 = vadd.f32 %v6583, 0.18741608
    %v6585 = vmul.f32 %v6576, %v6584
    %v6586 = vadd.f32 %v6585, 1.1283791
    %v6587 = vmul.f32 %v1227, %v6586
    %v6588 = vmul.f32 %v6576, 3.8918573e-05
    %v6589 = vadd.f32 %v6588, 0.001143296
    %v6590 = vmul.f32 %v6576, %v6589
    %v6591 = vadd.f32 %v6590, 0.014752088
    %v6592 = vmul.f32 %v6576, %v6591
    %v6593 = vadd.f32 %v6592, 0.112945676
    %v6594 = vmul.f32 %v6576, %v6593
    %v6595 = vadd.f32 %v6594, 0.4994258
    %v6596 = vmul.f32 %v6576, %v6595
    %v6597 = vadd.f32 %v6596, 1.0
    %v6598 = vrcp.pop %v6597
    %v6599 = vmul.f32 %v6597, %v6598
    %v6600 = vsub.f32 1.0, %v6599
    %v6601 = vmul.f32 %v6598, %v6600
    %v6602 = vadd.f32 %v6598, %v6601
    %vm6603 = vweird.f32 %v6597
    %vm6604 = vweird.f32 %v6598
    %vm6605 = vmor %vm6603, %vm6604
    %v6606 = vsel %vm6605, %v6598, %v6602
    %v6607 = vand.u32 2147483647, %v6597
    %vm6608 = vcmp.eq.f32.partialorder %v6607, 8.507059e+37
    %v6609 = vand.u32 %v6597, 2147483648
    %v6610 = vor.u32 1.1754944e-38, %v6609
    %v6611 = vsel %vm6608, %v6610, %v6606
    %v6612 = vmul.f32 %v6587, %v6611
    %v6613 = vmin.f32 %v6612, 1.0
    %v6614 = vmax.f32 %v6613, -1.0
    %v6615 = vmul.f32 %v1228, %v1228
    %v6616 = vmin.f32 16.0, %v6615
    %v6617 = vmul.f32 %v6616, 2.1237322e-06
    %v6618 = vadd.f32 %v6617, 0.00028619796
    %v6619 = vmul.f32 %v6616, %v6618
    %v6620 = vadd.f32 %v6619, 0.0036580483
    %v6621 = vmul.f32 %v6616, %v6620
    %v6622 = vadd.f32 %v6621, 0.05243302
    %v6623 = vmul.f32 %v6616, %v6622
    %v6624 = vadd.f32 %v6623, 0.18741608
    %v6625 = vmul.f32 %v6616, %v6624
    %v6626 = vadd.f32 %v6625, 1.1283791
    %v6627 = vmul.f32 %v1228, %v6626
    %v6628 = vmul.f32 %v6616, 3.8918573e-05
    %v6629 = vadd.f32 %v6628, 0.001143296
    %v6630 = vmul.f32 %v6616, %v6629
    %v6631 = vadd.f32 %v6630, 0.014752088
    %v6632 = vmul.f32 %v6616, %v6631
    %v6633 = vadd.f32 %v6632, 0.112945676
    %v6634 = vmul.f32 %v6616, %v6633
    %v6635 = vadd.f32 %v6634, 0.4994258
    %v6636 = vmul.f32 %v6616, %v6635
    %v6637 = vadd.f32 %v6636, 1.0
    %v6638 = vrcp.pop %v6637
    %v6639 = vmul.f32 %v6637, %v6638
    %v6640 = vsub.f32 1.0, %v6639
    %v6641 = vmul.f32 %v6638, %v6640
    %v6642 = vadd.f32 %v6638, %v6641
    %vm6643 = vweird.f32 %v6637
    %vm6644 = vweird.f32 %v6638
    %vm6645 = vmor %vm6643, %vm6644
    %v6646 = vsel %vm6645, %v6638, %v6642
    %v6647 = vand.u32 2147483647, %v6637
    %vm6648 = vcmp.eq.f32.partialorder %v6647, 8.507059e+37
    %v6649 = vand.u32 %v6637, 2147483648
    %v6650 = vor.u32 1.1754944e-38, %v6649
    %v6651 = vsel %vm6648, %v6650, %v6646
    %v6652 = vmul.f32 %v6627, %v6651
    %v6653 = vmin.f32 %v6652, 1.0
    %v6654 = vmax.f32 %v6653, -1.0
    %v6655 = vmul.f32 %v1229, %v1229
    %v6656 = vmin.f32 16.0, %v6655
    %v6657 = vmul.f32 %v6656, 2.1237322e-06
    %v6658 = vadd.f32 %v6657, 0.00028619796
    %v6659 = vmul.f32 %v6656, %v6658
    %v6660 = vadd.f32 %v6659, 0.0036580483
    %v6661 = vmul.f32 %v6656, %v6660
    %v6662 = vadd.f32 %v6661, 0.05243302
    %v6663 = vmul.f32 %v6656, %v6662
    %v6664 = vadd.f32 %v6663, 0.18741608
    %v6665 = vmul.f32 %v6656, %v6664
    %v6666 = vadd.f32 %v6665, 1.1283791
    %v6667 = vmul.f32 %v1229, %v6666
    %v6668 = vmul.f32 %v6656, 3.8918573e-05
    %v6669 = vadd.f32 %v6668, 0.001143296
    %v6670 = vmul.f32 %v6656, %v6669
    %v6671 = vadd.f32 %v6670, 0.014752088
    %v6672 = vmul.f32 %v6656, %v6671
    %v6673 = vadd.f32 %v6672, 0.112945676
    %v6674 = vmul.f32 %v6656, %v6673
    %v6675 = vadd.f32 %v6674, 0.4994258
    %v6676 = vmul.f32 %v6656, %v6675
    %v6677 = vadd.f32 %v6676, 1.0
    %v6678 = vrcp.pop %v6677
    %v6679 = vmul.f32 %v6677, %v6678
    %v6680 = vsub.f32 1.0, %v6679
    %v6681 = vmul.f32 %v6678, %v6680
    %v6682 = vadd.f32 %v6678, %v6681
    %vm6683 = vweird.f32 %v6677
    %vm6684 = vweird.f32 %v6678
    %vm6685 = vmor %vm6683, %vm6684
    %v6686 = vsel %vm6685, %v6678, %v6682
    %v6687 = vand.u32 2147483647, %v6677
    %vm6688 = vcmp.eq.f32.partialorder %v6687, 8.507059e+37
    %v6689 = vand.u32 %v6677, 2147483648
    %v6690 = vor.u32 1.1754944e-38, %v6689
    %v6691 = vsel %vm6688, %v6690, %v6686
    %v6692 = vmul.f32 %v6667, %v6691
    %v6693 = vmin.f32 %v6692, 1.0
    %v6694 = vmax.f32 %v6693, -1.0
    %v6695 = vmul.f32 %v1230, %v1230
    %v6696 = vmin.f32 16.0, %v6695
    %v6697 = vmul.f32 %v6696, 2.1237322e-06
    %v6698 = vadd.f32 %v6697, 0.00028619796
    %v6699 = vmul.f32 %v6696, %v6698
    %v6700 = vadd.f32 %v6699, 0.0036580483
    %v6701 = vmul.f32 %v6696, %v6700
    %v6702 = vadd.f32 %v6701, 0.05243302
    %v6703 = vmul.f32 %v6696, %v6702
    %v6704 = vadd.f32 %v6703, 0.18741608
    %v6705 = vmul.f32 %v6696, %v6704
    %v6706 = vadd.f32 %v6705, 1.1283791
    %v6707 = vmul.f32 %v1230, %v6706
    %v6708 = vmul.f32 %v6696, 3.8918573e-05
    %v6709 = vadd.f32 %v6708, 0.001143296
    %v6710 = vmul.f32 %v6696, %v6709
    %v6711 = vadd.f32 %v6710, 0.014752088
    %v6712 = vmul.f32 %v6696, %v6711
    %v6713 = vadd.f32 %v6712, 0.112945676
    %v6714 = vmul.f32 %v6696, %v6713
    %v6715 = vadd.f32 %v6714, 0.4994258
    %v6716 = vmul.f32 %v6696, %v6715
    %v6717 = vadd.f32 %v6716, 1.0
    %v6718 = vrcp.pop %v6717
    %v6719 = vmul.f32 %v6717, %v6718
    %v6720 = vsub.f32 1.0, %v6719
    %v6721 = vmul.f32 %v6718, %v6720
    %v6722 = vadd.f32 %v6718, %v6721
    %vm6723 = vweird.f32 %v6717
    %vm6724 = vweird.f32 %v6718
    %vm6725 = vmor %vm6723, %vm6724
    %v6726 = vsel %vm6725, %v6718, %v6722
    %v6727 = vand.u32 2147483647, %v6717
    %vm6728 = vcmp.eq.f32.partialorder %v6727, 8.507059e+37
    %v6729 = vand.u32 %v6717, 2147483648
    %v6730 = vor.u32 1.1754944e-38, %v6729
    %v6731 = vsel %vm6728, %v6730, %v6726
    %v6732 = vmul.f32 %v6707, %v6731
    %v6733 = vmin.f32 %v6732, 1.0
    %v6734 = vmax.f32 %v6733, -1.0
    %v6735 = vmul.f32 %v1231, %v1231
    %v6736 = vmin.f32 16.0, %v6735
    %v6737 = vmul.f32 %v6736, 2.1237322e-06
    %v6738 = vadd.f32 %v6737, 0.00028619796
    %v6739 = vmul.f32 %v6736, %v6738
    %v6740 = vadd.f32 %v6739, 0.0036580483
    %v6741 = vmul.f32 %v6736, %v6740
    %v6742 = vadd.f32 %v6741, 0.05243302
    %v6743 = vmul.f32 %v6736, %v6742
    %v6744 = vadd.f32 %v6743, 0.18741608
    %v6745 = vmul.f32 %v6736, %v6744
    %v6746 = vadd.f32 %v6745, 1.1283791
    %v6747 = vmul.f32 %v1231, %v6746
    %v6748 = vmul.f32 %v6736, 3.8918573e-05
    %v6749 = vadd.f32 %v6748, 0.001143296
    %v6750 = vmul.f32 %v6736, %v6749
    %v6751 = vadd.f32 %v6750, 0.014752088
    %v6752 = vmul.f32 %v6736, %v6751
    %v6753 = vadd.f32 %v6752, 0.112945676
    %v6754 = vmul.f32 %v6736, %v6753
    %v6755 = vadd.f32 %v6754, 0.4994258
    %v6756 = vmul.f32 %v6736, %v6755
    %v6757 = vadd.f32 %v6756, 1.0
    %v6758 = vrcp.pop %v6757
    %v6759 = vmul.f32 %v6757, %v6758
    %v6760 = vsub.f32 1.0, %v6759
    %v6761 = vmul.f32 %v6758, %v6760
    %v6762 = vadd.f32 %v6758, %v6761
    %vm6763 = vweird.f32 %v6757
    %vm6764 = vweird.f32 %v6758
    %vm6765 = vmor %vm6763, %vm6764
    %v6766 = vsel %vm6765, %v6758, %v6762
    %v6767 = vand.u32 2147483647, %v6757
    %vm6768 = vcmp.eq.f32.partialorder %v6767, 8.507059e+37
    %v6769 = vand.u32 %v6757, 2147483648
    %v6770 = vor.u32 1.1754944e-38, %v6769
    %v6771 = vsel %vm6768, %v6770, %v6766
    %v6772 = vmul.f32 %v6747, %v6771
    %v6773 = vmin.f32 %v6772, 1.0
    %v6774 = vmax.f32 %v6773, -1.0
    %v6775 = vmul.f32 %v1232, %v1232
    %v6776 = vmin.f32 16.0, %v6775
    %v6777 = vmul.f32 %v6776, 2.1237322e-06
    %v6778 = vadd.f32 %v6777, 0.00028619796
    %v6779 = vmul.f32 %v6776, %v6778
    %v6780 = vadd.f32 %v6779, 0.0036580483
    %v6781 = vmul.f32 %v6776, %v6780
    %v6782 = vadd.f32 %v6781, 0.05243302
    %v6783 = vmul.f32 %v6776, %v6782
    %v6784 = vadd.f32 %v6783, 0.18741608
    %v6785 = vmul.f32 %v6776, %v6784
    %v6786 = vadd.f32 %v6785, 1.1283791
    %v6787 = vmul.f32 %v1232, %v6786
    %v6788 = vmul.f32 %v6776, 3.8918573e-05
    %v6789 = vadd.f32 %v6788, 0.001143296
    %v6790 = vmul.f32 %v6776, %v6789
    %v6791 = vadd.f32 %v6790, 0.014752088
    %v6792 = vmul.f32 %v6776, %v6791
    %v6793 = vadd.f32 %v6792, 0.112945676
    %v6794 = vmul.f32 %v6776, %v6793
    %v6795 = vadd.f32 %v6794, 0.4994258
    %v6796 = vmul.f32 %v6776, %v6795
    %v6797 = vadd.f32 %v6796, 1.0
    %v6798 = vrcp.pop %v6797
    %v6799 = vmul.f32 %v6797, %v6798
    %v6800 = vsub.f32 1.0, %v6799
    %v6801 = vmul.f32 %v6798, %v6800
    %v6802 = vadd.f32 %v6798, %v6801
    %vm6803 = vweird.f32 %v6797
    %vm6804 = vweird.f32 %v6798
    %vm6805 = vmor %vm6803, %vm6804
    %v6806 = vsel %vm6805, %v6798, %v6802
    %v6807 = vand.u32 2147483647, %v6797
    %vm6808 = vcmp.eq.f32.partialorder %v6807, 8.507059e+37
    %v6809 = vand.u32 %v6797, 2147483648
    %v6810 = vor.u32 1.1754944e-38, %v6809
    %v6811 = vsel %vm6808, %v6810, %v6806
    %v6812 = vmul.f32 %v6787, %v6811
    %v6813 = vmin.f32 %v6812, 1.0
    %v6814 = vmax.f32 %v6813, -1.0
    %v6815 = vmul.f32 %v1233, %v1233
    %v6816 = vmin.f32 16.0, %v6815
    %v6817 = vmul.f32 %v6816, 2.1237322e-06
    %v6818 = vadd.f32 %v6817, 0.00028619796
    %v6819 = vmul.f32 %v6816, %v6818
    %v6820 = vadd.f32 %v6819, 0.0036580483
    %v6821 = vmul.f32 %v6816, %v6820
    %v6822 = vadd.f32 %v6821, 0.05243302
    %v6823 = vmul.f32 %v6816, %v6822
    %v6824 = vadd.f32 %v6823, 0.18741608
    %v6825 = vmul.f32 %v6816, %v6824
    %v6826 = vadd.f32 %v6825, 1.1283791
    %v6827 = vmul.f32 %v1233, %v6826
    %v6828 = vmul.f32 %v6816, 3.8918573e-05
    %v6829 = vadd.f32 %v6828, 0.001143296
    %v6830 = vmul.f32 %v6816, %v6829
    %v6831 = vadd.f32 %v6830, 0.014752088
    %v6832 = vmul.f32 %v6816, %v6831
    %v6833 = vadd.f32 %v6832, 0.112945676
    %v6834 = vmul.f32 %v6816, %v6833
    %v6835 = vadd.f32 %v6834, 0.4994258
    %v6836 = vmul.f32 %v6816, %v6835
    %v6837 = vadd.f32 %v6836, 1.0
    %v6838 = vrcp.pop %v6837
    %v6839 = vmul.f32 %v6837, %v6838
    %v6840 = vsub.f32 1.0, %v6839
    %v6841 = vmul.f32 %v6838, %v6840
    %v6842 = vadd.f32 %v6838, %v6841
    %vm6843 = vweird.f32 %v6837
    %vm6844 = vweird.f32 %v6838
    %vm6845 = vmor %vm6843, %vm6844
    %v6846 = vsel %vm6845, %v6838, %v6842
    %v6847 = vand.u32 2147483647, %v6837
    %vm6848 = vcmp.eq.f32.partialorder %v6847, 8.507059e+37
    %v6849 = vand.u32 %v6837, 2147483648
    %v6850 = vor.u32 1.1754944e-38, %v6849
    %v6851 = vsel %vm6848, %v6850, %v6846
    %v6852 = vmul.f32 %v6827, %v6851
    %v6853 = vmin.f32 %v6852, 1.0
    %v6854 = vmax.f32 %v6853, -1.0
    %v6855 = vmul.f32 %v1234, %v1234
    %v6856 = vmin.f32 16.0, %v6855
    %v6857 = vmul.f32 %v6856, 2.1237322e-06
    %v6858 = vadd.f32 %v6857, 0.00028619796
    %v6859 = vmul.f32 %v6856, %v6858
    %v6860 = vadd.f32 %v6859, 0.0036580483
    %v6861 = vmul.f32 %v6856, %v6860
    %v6862 = vadd.f32 %v6861, 0.05243302
    %v6863 = vmul.f32 %v6856, %v6862
    %v6864 = vadd.f32 %v6863, 0.18741608
    %v6865 = vmul.f32 %v6856, %v6864
    %v6866 = vadd.f32 %v6865, 1.1283791
    %v6867 = vmul.f32 %v1234, %v6866
    %v6868 = vmul.f32 %v6856, 3.8918573e-05
    %v6869 = vadd.f32 %v6868, 0.001143296
    %v6870 = vmul.f32 %v6856, %v6869
    %v6871 = vadd.f32 %v6870, 0.014752088
    %v6872 = vmul.f32 %v6856, %v6871
    %v6873 = vadd.f32 %v6872, 0.112945676
    %v6874 = vmul.f32 %v6856, %v6873
    %v6875 = vadd.f32 %v6874, 0.4994258
    %v6876 = vmul.f32 %v6856, %v6875
    %v6877 = vadd.f32 %v6876, 1.0
    %v6878 = vrcp.pop %v6877
    %v6879 = vmul.f32 %v6877, %v6878
    %v6880 = vsub.f32 1.0, %v6879
    %v6881 = vmul.f32 %v6878, %v6880
    %v6882 = vadd.f32 %v6878, %v6881
    %vm6883 = vweird.f32 %v6877
    %vm6884 = vweird.f32 %v6878
    %vm6885 = vmor %vm6883, %vm6884
    %v6886 = vsel %vm6885, %v6878, %v6882
    %v6887 = vand.u32 2147483647, %v6877
    %vm6888 = vcmp.eq.f32.partialorder %v6887, 8.507059e+37
    %v6889 = vand.u32 %v6877, 2147483648
    %v6890 = vor.u32 1.1754944e-38, %v6889
    %v6891 = vsel %vm6888, %v6890, %v6886
    %v6892 = vmul.f32 %v6867, %v6891
    %v6893 = vmin.f32 %v6892, 1.0
    %v6894 = vmax.f32 %v6893, -1.0
    %v6895 = vmul.f32 %v1235, %v1235
    %v6896 = vmin.f32 16.0, %v6895
    %v6897 = vmul.f32 %v6896, 2.1237322e-06
    %v6898 = vadd.f32 %v6897, 0.00028619796
    %v6899 = vmul.f32 %v6896, %v6898
    %v6900 = vadd.f32 %v6899, 0.0036580483
    %v6901 = vmul.f32 %v6896, %v6900
    %v6902 = vadd.f32 %v6901, 0.05243302
    %v6903 = vmul.f32 %v6896, %v6902
    %v6904 = vadd.f32 %v6903, 0.18741608
    %v6905 = vmul.f32 %v6896, %v6904
    %v6906 = vadd.f32 %v6905, 1.1283791
    %v6907 = vmul.f32 %v1235, %v6906
    %v6908 = vmul.f32 %v6896, 3.8918573e-05
    %v6909 = vadd.f32 %v6908, 0.001143296
    %v6910 = vmul.f32 %v6896, %v6909
    %v6911 = vadd.f32 %v6910, 0.014752088
    %v6912 = vmul.f32 %v6896, %v6911
    %v6913 = vadd.f32 %v6912, 0.112945676
    %v6914 = vmul.f32 %v6896, %v6913
    %v6915 = vadd.f32 %v6914, 0.4994258
    %v6916 = vmul.f32 %v6896, %v6915
    %v6917 = vadd.f32 %v6916, 1.0
    %v6918 = vrcp.pop %v6917
    %v6919 = vmul.f32 %v6917, %v6918
    %v6920 = vsub.f32 1.0, %v6919
    %v6921 = vmul.f32 %v6918, %v6920
    %v6922 = vadd.f32 %v6918, %v6921
    %vm6923 = vweird.f32 %v6917
    %vm6924 = vweird.f32 %v6918
    %vm6925 = vmor %vm6923, %vm6924
    %v6926 = vsel %vm6925, %v6918, %v6922
    %v6927 = vand.u32 2147483647, %v6917
    %vm6928 = vcmp.eq.f32.partialorder %v6927, 8.507059e+37
    %v6929 = vand.u32 %v6917, 2147483648
    %v6930 = vor.u32 1.1754944e-38, %v6929
    %v6931 = vsel %vm6928, %v6930, %v6926
    %v6932 = vmul.f32 %v6907, %v6931
    %v6933 = vmin.f32 %v6932, 1.0
    %v6934 = vmax.f32 %v6933, -1.0
    %v6935 = vmul.f32 %v1236, %v1236
    %v6936 = vmin.f32 16.0, %v6935
    %v6937 = vmul.f32 %v6936, 2.1237322e-06
    %v6938 = vadd.f32 %v6937, 0.00028619796
    %v6939 = vmul.f32 %v6936, %v6938
    %v6940 = vadd.f32 %v6939, 0.0036580483
    %v6941 = vmul.f32 %v6936, %v6940
    %v6942 = vadd.f32 %v6941, 0.05243302
    %v6943 = vmul.f32 %v6936, %v6942
    %v6944 = vadd.f32 %v6943, 0.18741608
    %v6945 = vmul.f32 %v6936, %v6944
    %v6946 = vadd.f32 %v6945, 1.1283791
    %v6947 = vmul.f32 %v1236, %v6946
    %v6948 = vmul.f32 %v6936, 3.8918573e-05
    %v6949 = vadd.f32 %v6948, 0.001143296
    %v6950 = vmul.f32 %v6936, %v6949
    %v6951 = vadd.f32 %v6950, 0.014752088
    %v6952 = vmul.f32 %v6936, %v6951
    %v6953 = vadd.f32 %v6952, 0.112945676
    %v6954 = vmul.f32 %v6936, %v6953
    %v6955 = vadd.f32 %v6954, 0.4994258
    %v6956 = vmul.f32 %v6936, %v6955
    %v6957 = vadd.f32 %v6956, 1.0
    %v6958 = vrcp.pop %v6957
    %v6959 = vmul.f32 %v6957, %v6958
    %v6960 = vsub.f32 1.0, %v6959
    %v6961 = vmul.f32 %v6958, %v6960
    %v6962 = vadd.f32 %v6958, %v6961
    %vm6963 = vweird.f32 %v6957
    %vm6964 = vweird.f32 %v6958
    %vm6965 = vmor %vm6963, %vm6964
    %v6966 = vsel %vm6965, %v6958, %v6962
    %v6967 = vand.u32 2147483647, %v6957
    %vm6968 = vcmp.eq.f32.partialorder %v6967, 8.507059e+37
    %v6969 = vand.u32 %v6957, 2147483648
    %v6970 = vor.u32 1.1754944e-38, %v6969
    %v6971 = vsel %vm6968, %v6970, %v6966
    %v6972 = vmul.f32 %v6947, %v6971
    %v6973 = vmin.f32 %v6972, 1.0
    %v6974 = vmax.f32 %v6973, -1.0
    %v6975 = vmul.f32 %v1237, %v1237
    %v6976 = vmin.f32 16.0, %v6975
    %v6977 = vmul.f32 %v6976, 2.1237322e-06
    %v6978 = vadd.f32 %v6977, 0.00028619796
    %v6979 = vmul.f32 %v6976, %v6978
    %v6980 = vadd.f32 %v6979, 0.0036580483
    %v6981 = vmul.f32 %v6976, %v6980
    %v6982 = vadd.f32 %v6981, 0.05243302
    %v6983 = vmul.f32 %v6976, %v6982
    %v6984 = vadd.f32 %v6983, 0.18741608
    %v6985 = vmul.f32 %v6976, %v6984
    %v6986 = vadd.f32 %v6985, 1.1283791
    %v6987 = vmul.f32 %v1237, %v6986
    %v6988 = vmul.f32 %v6976, 3.8918573e-05
    %v6989 = vadd.f32 %v6988, 0.001143296
    %v6990 = vmul.f32 %v6976, %v6989
    %v6991 = vadd.f32 %v6990, 0.014752088
    %v6992 = vmul.f32 %v6976, %v6991
    %v6993 = vadd.f32 %v6992, 0.112945676
    %v6994 = vmul.f32 %v6976, %v6993
    %v6995 = vadd.f32 %v6994, 0.4994258
    %v6996 = vmul.f32 %v6976, %v6995
    %v6997 = vadd.f32 %v6996, 1.0
    %v6998 = vrcp.pop %v6997
    %v6999 = vmul.f32 %v6997, %v6998
    %v7000 = vsub.f32 1.0, %v6999
    %v7001 = vmul.f32 %v6998, %v7000
    %v7002 = vadd.f32 %v6998, %v7001
    %vm7003 = vweird.f32 %v6997
    %vm7004 = vweird.f32 %v6998
    %vm7005 = vmor %vm7003, %vm7004
    %v7006 = vsel %vm7005, %v6998, %v7002
    %v7007 = vand.u32 2147483647, %v6997
    %vm7008 = vcmp.eq.f32.partialorder %v7007, 8.507059e+37
    %v7009 = vand.u32 %v6997, 2147483648
    %v7010 = vor.u32 1.1754944e-38, %v7009
    %v7011 = vsel %vm7008, %v7010, %v7006
    %v7012 = vmul.f32 %v6987, %v7011
    %v7013 = vmin.f32 %v7012, 1.0
    %v7014 = vmax.f32 %v7013, -1.0
    %v7015 = vmul.f32 %v1238, %v1238
    %v7016 = vmin.f32 16.0, %v7015
    %v7017 = vmul.f32 %v7016, 2.1237322e-06
    %v7018 = vadd.f32 %v7017, 0.00028619796
    %v7019 = vmul.f32 %v7016, %v7018
    %v7020 = vadd.f32 %v7019, 0.0036580483
    %v7021 = vmul.f32 %v7016, %v7020
    %v7022 = vadd.f32 %v7021, 0.05243302
    %v7023 = vmul.f32 %v7016, %v7022
    %v7024 = vadd.f32 %v7023, 0.18741608
    %v7025 = vmul.f32 %v7016, %v7024
    %v7026 = vadd.f32 %v7025, 1.1283791
    %v7027 = vmul.f32 %v1238, %v7026
    %v7028 = vmul.f32 %v7016, 3.8918573e-05
    %v7029 = vadd.f32 %v7028, 0.001143296
    %v7030 = vmul.f32 %v7016, %v7029
    %v7031 = vadd.f32 %v7030, 0.014752088
    %v7032 = vmul.f32 %v7016, %v7031
    %v7033 = vadd.f32 %v7032, 0.112945676
    %v7034 = vmul.f32 %v7016, %v7033
    %v7035 = vadd.f32 %v7034, 0.4994258
    %v7036 = vmul.f32 %v7016, %v7035
    %v7037 = vadd.f32 %v7036, 1.0
    %v7038 = vrcp.pop %v7037
    %v7039 = vmul.f32 %v7037, %v7038
    %v7040 = vsub.f32 1.0, %v7039
    %v7041 = vmul.f32 %v7038, %v7040
    %v7042 = vadd.f32 %v7038, %v7041
    %vm7043 = vweird.f32 %v7037
    %vm7044 = vweird.f32 %v7038
    %vm7045 = vmor %vm7043, %vm7044
    %v7046 = vsel %vm7045, %v7038, %v7042
    %v7047 = vand.u32 2147483647, %v7037
    %vm7048 = vcmp.eq.f32.partialorder %v7047, 8.507059e+37
    %v7049 = vand.u32 %v7037, 2147483648
    %v7050 = vor.u32 1.1754944e-38, %v7049
    %v7051 = vsel %vm7048, %v7050, %v7046
    %v7052 = vmul.f32 %v7027, %v7051
    %v7053 = vmin.f32 %v7052, 1.0
    %v7054 = vmax.f32 %v7053, -1.0
    %v7055 = vmul.f32 %v1239, %v1239
    %v7056 = vmin.f32 16.0, %v7055
    %v7057 = vmul.f32 %v7056, 2.1237322e-06
    %v7058 = vadd.f32 %v7057, 0.00028619796
    %v7059 = vmul.f32 %v7056, %v7058
    %v7060 = vadd.f32 %v7059, 0.0036580483
    %v7061 = vmul.f32 %v7056, %v7060
    %v7062 = vadd.f32 %v7061, 0.05243302
    %v7063 = vmul.f32 %v7056, %v7062
    %v7064 = vadd.f32 %v7063, 0.18741608
    %v7065 = vmul.f32 %v7056, %v7064
    %v7066 = vadd.f32 %v7065, 1.1283791
    %v7067 = vmul.f32 %v1239, %v7066
    %v7068 = vmul.f32 %v7056, 3.8918573e-05
    %v7069 = vadd.f32 %v7068, 0.001143296
    %v7070 = vmul.f32 %v7056, %v7069
    %v7071 = vadd.f32 %v7070, 0.014752088
    %v7072 = vmul.f32 %v7056, %v7071
    %v7073 = vadd.f32 %v7072, 0.112945676
    %v7074 = vmul.f32 %v7056, %v7073
    %v7075 = vadd.f32 %v7074, 0.4994258
    %v7076 = vmul.f32 %v7056, %v7075
    %v7077 = vadd.f32 %v7076, 1.0
    %v7078 = vrcp.pop %v7077
    %v7079 = vmul.f32 %v7077, %v7078
    %v7080 = vsub.f32 1.0, %v7079
    %v7081 = vmul.f32 %v7078, %v7080
    %v7082 = vadd.f32 %v7078, %v7081
    %vm7083 = vweird.f32 %v7077
    %vm7084 = vweird.f32 %v7078
    %vm7085 = vmor %vm7083, %vm7084
    %v7086 = vsel %vm7085, %v7078, %v7082
    %v7087 = vand.u32 2147483647, %v7077
    %vm7088 = vcmp.eq.f32.partialorder %v7087, 8.507059e+37
    %v7089 = vand.u32 %v7077, 2147483648
    %v7090 = vor.u32 1.1754944e-38, %v7089
    %v7091 = vsel %vm7088, %v7090, %v7086
    %v7092 = vmul.f32 %v7067, %v7091
    %v7093 = vmin.f32 %v7092, 1.0
    %v7094 = vmax.f32 %v7093, -1.0
    %v7095 = vmul.f32 %v1240, %v1240
    %v7096 = vmin.f32 16.0, %v7095
    %v7097 = vmul.f32 %v7096, 2.1237322e-06
    %v7098 = vadd.f32 %v7097, 0.00028619796
    %v7099 = vmul.f32 %v7096, %v7098
    %v7100 = vadd.f32 %v7099, 0.0036580483
    %v7101 = vmul.f32 %v7096, %v7100
    %v7102 = vadd.f32 %v7101, 0.05243302
    %v7103 = vmul.f32 %v7096, %v7102
    %v7104 = vadd.f32 %v7103, 0.18741608
    %v7105 = vmul.f32 %v7096, %v7104
    %v7106 = vadd.f32 %v7105, 1.1283791
    %v7107 = vmul.f32 %v1240, %v7106
    %v7108 = vmul.f32 %v7096, 3.8918573e-05
    %v7109 = vadd.f32 %v7108, 0.001143296
    %v7110 = vmul.f32 %v7096, %v7109
    %v7111 = vadd.f32 %v7110, 0.014752088
    %v7112 = vmul.f32 %v7096, %v7111
    %v7113 = vadd.f32 %v7112, 0.112945676
    %v7114 = vmul.f32 %v7096, %v7113
    %v7115 = vadd.f32 %v7114, 0.4994258
    %v7116 = vmul.f32 %v7096, %v7115
    %v7117 = vadd.f32 %v7116, 1.0
    %v7118 = vrcp.pop %v7117
    %v7119 = vmul.f32 %v7117, %v7118
    %v7120 = vsub.f32 1.0, %v7119
    %v7121 = vmul.f32 %v7118, %v7120
    %v7122 = vadd.f32 %v7118, %v7121
    %vm7123 = vweird.f32 %v7117
    %vm7124 = vweird.f32 %v7118
    %vm7125 = vmor %vm7123, %vm7124
    %v7126 = vsel %vm7125, %v7118, %v7122
    %v7127 = vand.u32 2147483647, %v7117
    %vm7128 = vcmp.eq.f32.partialorder %v7127, 8.507059e+37
    %v7129 = vand.u32 %v7117, 2147483648
    %v7130 = vor.u32 1.1754944e-38, %v7129
    %v7131 = vsel %vm7128, %v7130, %v7126
    %v7132 = vmul.f32 %v7107, %v7131
    %v7133 = vmin.f32 %v7132, 1.0
    %v7134 = vmax.f32 %v7133, -1.0
    %v7135 = vmul.f32 %v1241, %v1241
    %v7136 = vmin.f32 16.0, %v7135
    %v7137 = vmul.f32 %v7136, 2.1237322e-06
    %v7138 = vadd.f32 %v7137, 0.00028619796
    %v7139 = vmul.f32 %v7136, %v7138
    %v7140 = vadd.f32 %v7139, 0.0036580483
    %v7141 = vmul.f32 %v7136, %v7140
    %v7142 = vadd.f32 %v7141, 0.05243302
    %v7143 = vmul.f32 %v7136, %v7142
    %v7144 = vadd.f32 %v7143, 0.18741608
    %v7145 = vmul.f32 %v7136, %v7144
    %v7146 = vadd.f32 %v7145, 1.1283791
    %v7147 = vmul.f32 %v1241, %v7146
    %v7148 = vmul.f32 %v7136, 3.8918573e-05
    %v7149 = vadd.f32 %v7148, 0.001143296
    %v7150 = vmul.f32 %v7136, %v7149
    %v7151 = vadd.f32 %v7150, 0.014752088
    %v7152 = vmul.f32 %v7136, %v7151
    %v7153 = vadd.f32 %v7152, 0.112945676
    %v7154 = vmul.f32 %v7136, %v7153
    %v7155 = vadd.f32 %v7154, 0.4994258
    %v7156 = vmul.f32 %v7136, %v7155
    %v7157 = vadd.f32 %v7156, 1.0
    %v7158 = vrcp.pop %v7157
    %v7159 = vmul.f32 %v7157, %v7158
    %v7160 = vsub.f32 1.0, %v7159
    %v7161 = vmul.f32 %v7158, %v7160
    %v7162 = vadd.f32 %v7158, %v7161
    %vm7163 = vweird.f32 %v7157
    %vm7164 = vweird.f32 %v7158
    %vm7165 = vmor %vm7163, %vm7164
    %v7166 = vsel %vm7165, %v7158, %v7162
    %v7167 = vand.u32 2147483647, %v7157
    %vm7168 = vcmp.eq.f32.partialorder %v7167, 8.507059e+37
    %v7169 = vand.u32 %v7157, 2147483648
    %v7170 = vor.u32 1.1754944e-38, %v7169
    %v7171 = vsel %vm7168, %v7170, %v7166
    %v7172 = vmul.f32 %v7147, %v7171
    %v7173 = vmin.f32 %v7172, 1.0
    %v7174 = vmax.f32 %v7173, -1.0
    %v7175 = vmul.f32 %v1242, %v1242
    %v7176 = vmin.f32 16.0, %v7175
    %v7177 = vmul.f32 %v7176, 2.1237322e-06
    %v7178 = vadd.f32 %v7177, 0.00028619796
    %v7179 = vmul.f32 %v7176, %v7178
    %v7180 = vadd.f32 %v7179, 0.0036580483
    %v7181 = vmul.f32 %v7176, %v7180
    %v7182 = vadd.f32 %v7181, 0.05243302
    %v7183 = vmul.f32 %v7176, %v7182
    %v7184 = vadd.f32 %v7183, 0.18741608
    %v7185 = vmul.f32 %v7176, %v7184
    %v7186 = vadd.f32 %v7185, 1.1283791
    %v7187 = vmul.f32 %v1242, %v7186
    %v7188 = vmul.f32 %v7176, 3.8918573e-05
    %v7189 = vadd.f32 %v7188, 0.001143296
    %v7190 = vmul.f32 %v7176, %v7189
    %v7191 = vadd.f32 %v7190, 0.014752088
    %v7192 = vmul.f32 %v7176, %v7191
    %v7193 = vadd.f32 %v7192, 0.112945676
    %v7194 = vmul.f32 %v7176, %v7193
    %v7195 = vadd.f32 %v7194, 0.4994258
    %v7196 = vmul.f32 %v7176, %v7195
    %v7197 = vadd.f32 %v7196, 1.0
    %v7198 = vrcp.pop %v7197
    %v7199 = vmul.f32 %v7197, %v7198
    %v7200 = vsub.f32 1.0, %v7199
    %v7201 = vmul.f32 %v7198, %v7200
    %v7202 = vadd.f32 %v7198, %v7201
    %vm7203 = vweird.f32 %v7197
    %vm7204 = vweird.f32 %v7198
    %vm7205 = vmor %vm7203, %vm7204
    %v7206 = vsel %vm7205, %v7198, %v7202
    %v7207 = vand.u32 2147483647, %v7197
    %vm7208 = vcmp.eq.f32.partialorder %v7207, 8.507059e+37
    %v7209 = vand.u32 %v7197, 2147483648
    %v7210 = vor.u32 1.1754944e-38, %v7209
    %v7211 = vsel %vm7208, %v7210, %v7206
    %v7212 = vmul.f32 %v7187, %v7211
    %v7213 = vmin.f32 %v7212, 1.0
    %v7214 = vmax.f32 %v7213, -1.0
    %v7215 = vmul.f32 %v1243, %v1243
    %v7216 = vmin.f32 16.0, %v7215
    %v7217 = vmul.f32 %v7216, 2.1237322e-06
    %v7218 = vadd.f32 %v7217, 0.00028619796
    %v7219 = vmul.f32 %v7216, %v7218
    %v7220 = vadd.f32 %v7219, 0.0036580483
    %v7221 = vmul.f32 %v7216, %v7220
    %v7222 = vadd.f32 %v7221, 0.05243302
    %v7223 = vmul.f32 %v7216, %v7222
    %v7224 = vadd.f32 %v7223, 0.18741608
    %v7225 = vmul.f32 %v7216, %v7224
    %v7226 = vadd.f32 %v7225, 1.1283791
    %v7227 = vmul.f32 %v1243, %v7226
    %v7228 = vmul.f32 %v7216, 3.8918573e-05
    %v7229 = vadd.f32 %v7228, 0.001143296
    %v7230 = vmul.f32 %v7216, %v7229
    %v7231 = vadd.f32 %v7230, 0.014752088
    %v7232 = vmul.f32 %v7216, %v7231
    %v7233 = vadd.f32 %v7232, 0.112945676
    %v7234 = vmul.f32 %v7216, %v7233
    %v7235 = vadd.f32 %v7234, 0.4994258
    %v7236 = vmul.f32 %v7216, %v7235
    %v7237 = vadd.f32 %v7236, 1.0
    %v7238 = vrcp.pop %v7237
    %v7239 = vmul.f32 %v7237, %v7238
    %v7240 = vsub.f32 1.0, %v7239
    %v7241 = vmul.f32 %v7238, %v7240
    %v7242 = vadd.f32 %v7238, %v7241
    %vm7243 = vweird.f32 %v7237
    %vm7244 = vweird.f32 %v7238
    %vm7245 = vmor %vm7243, %vm7244
    %v7246 = vsel %vm7245, %v7238, %v7242
    %v7247 = vand.u32 2147483647, %v7237
    %vm7248 = vcmp.eq.f32.partialorder %v7247, 8.507059e+37
    %v7249 = vand.u32 %v7237, 2147483648
    %v7250 = vor.u32 1.1754944e-38, %v7249
    %v7251 = vsel %vm7248, %v7250, %v7246
    %v7252 = vmul.f32 %v7227, %v7251
    %v7253 = vmin.f32 %v7252, 1.0
    %v7254 = vmax.f32 %v7253, -1.0
    %v7255 = vmul.f32 %v1244, %v1244
    %v7256 = vmin.f32 16.0, %v7255
    %v7257 = vmul.f32 %v7256, 2.1237322e-06
    %v7258 = vadd.f32 %v7257, 0.00028619796
    %v7259 = vmul.f32 %v7256, %v7258
    %v7260 = vadd.f32 %v7259, 0.0036580483
    %v7261 = vmul.f32 %v7256, %v7260
    %v7262 = vadd.f32 %v7261, 0.05243302
    %v7263 = vmul.f32 %v7256, %v7262
    %v7264 = vadd.f32 %v7263, 0.18741608
    %v7265 = vmul.f32 %v7256, %v7264
    %v7266 = vadd.f32 %v7265, 1.1283791
    %v7267 = vmul.f32 %v1244, %v7266
    %v7268 = vmul.f32 %v7256, 3.8918573e-05
    %v7269 = vadd.f32 %v7268, 0.001143296
    %v7270 = vmul.f32 %v7256, %v7269
    %v7271 = vadd.f32 %v7270, 0.014752088
    %v7272 = vmul.f32 %v7256, %v7271
    %v7273 = vadd.f32 %v7272, 0.112945676
    %v7274 = vmul.f32 %v7256, %v7273
    %v7275 = vadd.f32 %v7274, 0.4994258
    %v7276 = vmul.f32 %v7256, %v7275
    %v7277 = vadd.f32 %v7276, 1.0
    %v7278 = vrcp.pop %v7277
    %v7279 = vmul.f32 %v7277, %v7278
    %v7280 = vsub.f32 1.0, %v7279
    %v7281 = vmul.f32 %v7278, %v7280
    %v7282 = vadd.f32 %v7278, %v7281
    %vm7283 = vweird.f32 %v7277
    %vm7284 = vweird.f32 %v7278
    %vm7285 = vmor %vm7283, %vm7284
    %v7286 = vsel %vm7285, %v7278, %v7282
    %v7287 = vand.u32 2147483647, %v7277
    %vm7288 = vcmp.eq.f32.partialorder %v7287, 8.507059e+37
    %v7289 = vand.u32 %v7277, 2147483648
    %v7290 = vor.u32 1.1754944e-38, %v7289
    %v7291 = vsel %vm7288, %v7290, %v7286
    %v7292 = vmul.f32 %v7267, %v7291
    %v7293 = vmin.f32 %v7292, 1.0
    %v7294 = vmax.f32 %v7293, -1.0
    %v7295 = vmul.f32 %v1245, %v1245
    %v7296 = vmin.f32 16.0, %v7295
    %v7297 = vmul.f32 %v7296, 2.1237322e-06
    %v7298 = vadd.f32 %v7297, 0.00028619796
    %v7299 = vmul.f32 %v7296, %v7298
    %v7300 = vadd.f32 %v7299, 0.0036580483
    %v7301 = vmul.f32 %v7296, %v7300
    %v7302 = vadd.f32 %v7301, 0.05243302
    %v7303 = vmul.f32 %v7296, %v7302
    %v7304 = vadd.f32 %v7303, 0.18741608
    %v7305 = vmul.f32 %v7296, %v7304
    %v7306 = vadd.f32 %v7305, 1.1283791
    %v7307 = vmul.f32 %v1245, %v7306
    %v7308 = vmul.f32 %v7296, 3.8918573e-05
    %v7309 = vadd.f32 %v7308, 0.001143296
    %v7310 = vmul.f32 %v7296, %v7309
    %v7311 = vadd.f32 %v7310, 0.014752088
    %v7312 = vmul.f32 %v7296, %v7311
    %v7313 = vadd.f32 %v7312, 0.112945676
    %v7314 = vmul.f32 %v7296, %v7313
    %v7315 = vadd.f32 %v7314, 0.4994258
    %v7316 = vmul.f32 %v7296, %v7315
    %v7317 = vadd.f32 %v7316, 1.0
    %v7318 = vrcp.pop %v7317
    %v7319 = vmul.f32 %v7317, %v7318
    %v7320 = vsub.f32 1.0, %v7319
    %v7321 = vmul.f32 %v7318, %v7320
    %v7322 = vadd.f32 %v7318, %v7321
    %vm7323 = vweird.f32 %v7317
    %vm7324 = vweird.f32 %v7318
    %vm7325 = vmor %vm7323, %vm7324
    %v7326 = vsel %vm7325, %v7318, %v7322
    %v7327 = vand.u32 2147483647, %v7317
    %vm7328 = vcmp.eq.f32.partialorder %v7327, 8.507059e+37
    %v7329 = vand.u32 %v7317, 2147483648
    %v7330 = vor.u32 1.1754944e-38, %v7329
    %v7331 = vsel %vm7328, %v7330, %v7326
    %v7332 = vmul.f32 %v7307, %v7331
    %v7333 = vmin.f32 %v7332, 1.0
    %v7334 = vmax.f32 %v7333, -1.0
    %v7335 = vmul.f32 %v1246, %v1246
    %v7336 = vmin.f32 16.0, %v7335
    %v7337 = vmul.f32 %v7336, 2.1237322e-06
    %v7338 = vadd.f32 %v7337, 0.00028619796
    %v7339 = vmul.f32 %v7336, %v7338
    %v7340 = vadd.f32 %v7339, 0.0036580483
    %v7341 = vmul.f32 %v7336, %v7340
    %v7342 = vadd.f32 %v7341, 0.05243302
    %v7343 = vmul.f32 %v7336, %v7342
    %v7344 = vadd.f32 %v7343, 0.18741608
    %v7345 = vmul.f32 %v7336, %v7344
    %v7346 = vadd.f32 %v7345, 1.1283791
    %v7347 = vmul.f32 %v1246, %v7346
    %v7348 = vmul.f32 %v7336, 3.8918573e-05
    %v7349 = vadd.f32 %v7348, 0.001143296
    %v7350 = vmul.f32 %v7336, %v7349
    %v7351 = vadd.f32 %v7350, 0.014752088
    %v7352 = vmul.f32 %v7336, %v7351
    %v7353 = vadd.f32 %v7352, 0.112945676
    %v7354 = vmul.f32 %v7336, %v7353
    %v7355 = vadd.f32 %v7354, 0.4994258
    %v7356 = vmul.f32 %v7336, %v7355
    %v7357 = vadd.f32 %v7356, 1.0
    %v7358 = vrcp.pop %v7357
    %v7359 = vmul.f32 %v7357, %v7358
    %v7360 = vsub.f32 1.0, %v7359
    %v7361 = vmul.f32 %v7358, %v7360
    %v7362 = vadd.f32 %v7358, %v7361
    %vm7363 = vweird.f32 %v7357
    %vm7364 = vweird.f32 %v7358
    %vm7365 = vmor %vm7363, %vm7364
    %v7366 = vsel %vm7365, %v7358, %v7362
    %v7367 = vand.u32 2147483647, %v7357
    %vm7368 = vcmp.eq.f32.partialorder %v7367, 8.507059e+37
    %v7369 = vand.u32 %v7357, 2147483648
    %v7370 = vor.u32 1.1754944e-38, %v7369
    %v7371 = vsel %vm7368, %v7370, %v7366
    %v7372 = vmul.f32 %v7347, %v7371
    %v7373 = vmin.f32 %v7372, 1.0
    %v7374 = vmax.f32 %v7373, -1.0
    %v7375 = vmul.f32 %v1247, %v1247
    %v7376 = vmin.f32 16.0, %v7375
    %v7377 = vmul.f32 %v7376, 2.1237322e-06
    %v7378 = vadd.f32 %v7377, 0.00028619796
    %v7379 = vmul.f32 %v7376, %v7378
    %v7380 = vadd.f32 %v7379, 0.0036580483
    %v7381 = vmul.f32 %v7376, %v7380
    %v7382 = vadd.f32 %v7381, 0.05243302
    %v7383 = vmul.f32 %v7376, %v7382
    %v7384 = vadd.f32 %v7383, 0.18741608
    %v7385 = vmul.f32 %v7376, %v7384
    %v7386 = vadd.f32 %v7385, 1.1283791
    %v7387 = vmul.f32 %v1247, %v7386
    %v7388 = vmul.f32 %v7376, 3.8918573e-05
    %v7389 = vadd.f32 %v7388, 0.001143296
    %v7390 = vmul.f32 %v7376, %v7389
    %v7391 = vadd.f32 %v7390, 0.014752088
    %v7392 = vmul.f32 %v7376, %v7391
    %v7393 = vadd.f32 %v7392, 0.112945676
    %v7394 = vmul.f32 %v7376, %v7393
    %v7395 = vadd.f32 %v7394, 0.4994258
    %v7396 = vmul.f32 %v7376, %v7395
    %v7397 = vadd.f32 %v7396, 1.0
    %v7398 = vrcp.pop %v7397
    %v7399 = vmul.f32 %v7397, %v7398
    %v7400 = vsub.f32 1.0, %v7399
    %v7401 = vmul.f32 %v7398, %v7400
    %v7402 = vadd.f32 %v7398, %v7401
    %vm7403 = vweird.f32 %v7397
    %vm7404 = vweird.f32 %v7398
    %vm7405 = vmor %vm7403, %vm7404
    %v7406 = vsel %vm7405, %v7398, %v7402
    %v7407 = vand.u32 2147483647, %v7397
    %vm7408 = vcmp.eq.f32.partialorder %v7407, 8.507059e+37
    %v7409 = vand.u32 %v7397, 2147483648
    %v7410 = vor.u32 1.1754944e-38, %v7409
    %v7411 = vsel %vm7408, %v7410, %v7406
    %v7412 = vmul.f32 %v7387, %v7411
    %v7413 = vmin.f32 %v7412, 1.0
    %v7414 = vmax.f32 %v7413, -1.0
    %v7415 = vmul.f32 %v1248, %v1248
    %v7416 = vmin.f32 16.0, %v7415
    %v7417 = vmul.f32 %v7416, 2.1237322e-06
    %v7418 = vadd.f32 %v7417, 0.00028619796
    %v7419 = vmul.f32 %v7416, %v7418
    %v7420 = vadd.f32 %v7419, 0.0036580483
    %v7421 = vmul.f32 %v7416, %v7420
    %v7422 = vadd.f32 %v7421, 0.05243302
    %v7423 = vmul.f32 %v7416, %v7422
    %v7424 = vadd.f32 %v7423, 0.18741608
    %v7425 = vmul.f32 %v7416, %v7424
    %v7426 = vadd.f32 %v7425, 1.1283791
    %v7427 = vmul.f32 %v1248, %v7426
    %v7428 = vmul.f32 %v7416, 3.8918573e-05
    %v7429 = vadd.f32 %v7428, 0.001143296
    %v7430 = vmul.f32 %v7416, %v7429
    %v7431 = vadd.f32 %v7430, 0.014752088
    %v7432 = vmul.f32 %v7416, %v7431
    %v7433 = vadd.f32 %v7432, 0.112945676
    %v7434 = vmul.f32 %v7416, %v7433
    %v7435 = vadd.f32 %v7434, 0.4994258
    %v7436 = vmul.f32 %v7416, %v7435
    %v7437 = vadd.f32 %v7436, 1.0
    %v7438 = vrcp.pop %v7437
    %v7439 = vmul.f32 %v7437, %v7438
    %v7440 = vsub.f32 1.0, %v7439
    %v7441 = vmul.f32 %v7438, %v7440
    %v7442 = vadd.f32 %v7438, %v7441
    %vm7443 = vweird.f32 %v7437
    %vm7444 = vweird.f32 %v7438
    %vm7445 = vmor %vm7443, %vm7444
    %v7446 = vsel %vm7445, %v7438, %v7442
    %v7447 = vand.u32 2147483647, %v7437
    %vm7448 = vcmp.eq.f32.partialorder %v7447, 8.507059e+37
    %v7449 = vand.u32 %v7437, 2147483648
    %v7450 = vor.u32 1.1754944e-38, %v7449
    %v7451 = vsel %vm7448, %v7450, %v7446
    %v7452 = vmul.f32 %v7427, %v7451
    %v7453 = vmin.f32 %v7452, 1.0
    %v7454 = vmax.f32 %v7453, -1.0
    %v7455 = vmul.f32 %v1249, %v1249
    %v7456 = vmin.f32 16.0, %v7455
    %v7457 = vmul.f32 %v7456, 2.1237322e-06
    %v7458 = vadd.f32 %v7457, 0.00028619796
    %v7459 = vmul.f32 %v7456, %v7458
    %v7460 = vadd.f32 %v7459, 0.0036580483
    %v7461 = vmul.f32 %v7456, %v7460
    %v7462 = vadd.f32 %v7461, 0.05243302
    %v7463 = vmul.f32 %v7456, %v7462
    %v7464 = vadd.f32 %v7463, 0.18741608
    %v7465 = vmul.f32 %v7456, %v7464
    %v7466 = vadd.f32 %v7465, 1.1283791
    %v7467 = vmul.f32 %v1249, %v7466
    %v7468 = vmul.f32 %v7456, 3.8918573e-05
    %v7469 = vadd.f32 %v7468, 0.001143296
    %v7470 = vmul.f32 %v7456, %v7469
    %v7471 = vadd.f32 %v7470, 0.014752088
    %v7472 = vmul.f32 %v7456, %v7471
    %v7473 = vadd.f32 %v7472, 0.112945676
    %v7474 = vmul.f32 %v7456, %v7473
    %v7475 = vadd.f32 %v7474, 0.4994258
    %v7476 = vmul.f32 %v7456, %v7475
    %v7477 = vadd.f32 %v7476, 1.0
    %v7478 = vrcp.pop %v7477
    %v7479 = vmul.f32 %v7477, %v7478
    %v7480 = vsub.f32 1.0, %v7479
    %v7481 = vmul.f32 %v7478, %v7480
    %v7482 = vadd.f32 %v7478, %v7481
    %vm7483 = vweird.f32 %v7477
    %vm7484 = vweird.f32 %v7478
    %vm7485 = vmor %vm7483, %vm7484
    %v7486 = vsel %vm7485, %v7478, %v7482
    %v7487 = vand.u32 2147483647, %v7477
    %vm7488 = vcmp.eq.f32.partialorder %v7487, 8.507059e+37
    %v7489 = vand.u32 %v7477, 2147483648
    %v7490 = vor.u32 1.1754944e-38, %v7489
    %v7491 = vsel %vm7488, %v7490, %v7486
    %v7492 = vmul.f32 %v7467, %v7491
    %v7493 = vmin.f32 %v7492, 1.0
    %v7494 = vmax.f32 %v7493, -1.0
    %v7495 = vmul.f32 %v1250, %v1250
    %v7496 = vmin.f32 16.0, %v7495
    %v7497 = vmul.f32 %v7496, 2.1237322e-06
    %v7498 = vadd.f32 %v7497, 0.00028619796
    %v7499 = vmul.f32 %v7496, %v7498
    %v7500 = vadd.f32 %v7499, 0.0036580483
    %v7501 = vmul.f32 %v7496, %v7500
    %v7502 = vadd.f32 %v7501, 0.05243302
    %v7503 = vmul.f32 %v7496, %v7502
    %v7504 = vadd.f32 %v7503, 0.18741608
    %v7505 = vmul.f32 %v7496, %v7504
    %v7506 = vadd.f32 %v7505, 1.1283791
    %v7507 = vmul.f32 %v1250, %v7506
    %v7508 = vmul.f32 %v7496, 3.8918573e-05
    %v7509 = vadd.f32 %v7508, 0.001143296
    %v7510 = vmul.f32 %v7496, %v7509
    %v7511 = vadd.f32 %v7510, 0.014752088
    %v7512 = vmul.f32 %v7496, %v7511
    %v7513 = vadd.f32 %v7512, 0.112945676
    %v7514 = vmul.f32 %v7496, %v7513
    %v7515 = vadd.f32 %v7514, 0.4994258
    %v7516 = vmul.f32 %v7496, %v7515
    %v7517 = vadd.f32 %v7516, 1.0
    %v7518 = vrcp.pop %v7517
    %v7519 = vmul.f32 %v7517, %v7518
    %v7520 = vsub.f32 1.0, %v7519
    %v7521 = vmul.f32 %v7518, %v7520
    %v7522 = vadd.f32 %v7518, %v7521
    %vm7523 = vweird.f32 %v7517
    %vm7524 = vweird.f32 %v7518
    %vm7525 = vmor %vm7523, %vm7524
    %v7526 = vsel %vm7525, %v7518, %v7522
    %v7527 = vand.u32 2147483647, %v7517
    %vm7528 = vcmp.eq.f32.partialorder %v7527, 8.507059e+37
    %v7529 = vand.u32 %v7517, 2147483648
    %v7530 = vor.u32 1.1754944e-38, %v7529
    %v7531 = vsel %vm7528, %v7530, %v7526
    %v7532 = vmul.f32 %v7507, %v7531
    %v7533 = vmin.f32 %v7532, 1.0
    %v7534 = vmax.f32 %v7533, -1.0
    %v7535 = vmul.f32 %v1251, %v1251
    %v7536 = vmin.f32 16.0, %v7535
    %v7537 = vmul.f32 %v7536, 2.1237322e-06
    %v7538 = vadd.f32 %v7537, 0.00028619796
    %v7539 = vmul.f32 %v7536, %v7538
    %v7540 = vadd.f32 %v7539, 0.0036580483
    %v7541 = vmul.f32 %v7536, %v7540
    %v7542 = vadd.f32 %v7541, 0.05243302
    %v7543 = vmul.f32 %v7536, %v7542
    %v7544 = vadd.f32 %v7543, 0.18741608
    %v7545 = vmul.f32 %v7536, %v7544
    %v7546 = vadd.f32 %v7545, 1.1283791
    %v7547 = vmul.f32 %v1251, %v7546
    %v7548 = vmul.f32 %v7536, 3.8918573e-05
    %v7549 = vadd.f32 %v7548, 0.001143296
    %v7550 = vmul.f32 %v7536, %v7549
    %v7551 = vadd.f32 %v7550, 0.014752088
    %v7552 = vmul.f32 %v7536, %v7551
    %v7553 = vadd.f32 %v7552, 0.112945676
    %v7554 = vmul.f32 %v7536, %v7553
    %v7555 = vadd.f32 %v7554, 0.4994258
    %v7556 = vmul.f32 %v7536, %v7555
    %v7557 = vadd.f32 %v7556, 1.0
    %v7558 = vrcp.pop %v7557
    %v7559 = vmul.f32 %v7557, %v7558
    %v7560 = vsub.f32 1.0, %v7559
    %v7561 = vmul.f32 %v7558, %v7560
    %v7562 = vadd.f32 %v7558, %v7561
    %vm7563 = vweird.f32 %v7557
    %vm7564 = vweird.f32 %v7558
    %vm7565 = vmor %vm7563, %vm7564
    %v7566 = vsel %vm7565, %v7558, %v7562
    %v7567 = vand.u32 2147483647, %v7557
    %vm7568 = vcmp.eq.f32.partialorder %v7567, 8.507059e+37
    %v7569 = vand.u32 %v7557, 2147483648
    %v7570 = vor.u32 1.1754944e-38, %v7569
    %v7571 = vsel %vm7568, %v7570, %v7566
    %v7572 = vmul.f32 %v7547, %v7571
    %v7573 = vmin.f32 %v7572, 1.0
    %v7574 = vmax.f32 %v7573, -1.0
    %v7575 = vmul.f32 %v1252, %v1252
    %v7576 = vmin.f32 16.0, %v7575
    %v7577 = vmul.f32 %v7576, 2.1237322e-06
    %v7578 = vadd.f32 %v7577, 0.00028619796
    %v7579 = vmul.f32 %v7576, %v7578
    %v7580 = vadd.f32 %v7579, 0.0036580483
    %v7581 = vmul.f32 %v7576, %v7580
    %v7582 = vadd.f32 %v7581, 0.05243302
    %v7583 = vmul.f32 %v7576, %v7582
    %v7584 = vadd.f32 %v7583, 0.18741608
    %v7585 = vmul.f32 %v7576, %v7584
    %v7586 = vadd.f32 %v7585, 1.1283791
    %v7587 = vmul.f32 %v1252, %v7586
    %v7588 = vmul.f32 %v7576, 3.8918573e-05
    %v7589 = vadd.f32 %v7588, 0.001143296
    %v7590 = vmul.f32 %v7576, %v7589
    %v7591 = vadd.f32 %v7590, 0.014752088
    %v7592 = vmul.f32 %v7576, %v7591
    %v7593 = vadd.f32 %v7592, 0.112945676
    %v7594 = vmul.f32 %v7576, %v7593
    %v7595 = vadd.f32 %v7594, 0.4994258
    %v7596 = vmul.f32 %v7576, %v7595
    %v7597 = vadd.f32 %v7596, 1.0
    %v7598 = vrcp.pop %v7597
    %v7599 = vmul.f32 %v7597, %v7598
    %v7600 = vsub.f32 1.0, %v7599
    %v7601 = vmul.f32 %v7598, %v7600
    %v7602 = vadd.f32 %v7598, %v7601
    %vm7603 = vweird.f32 %v7597
    %vm7604 = vweird.f32 %v7598
    %vm7605 = vmor %vm7603, %vm7604
    %v7606 = vsel %vm7605, %v7598, %v7602
    %v7607 = vand.u32 2147483647, %v7597
    %vm7608 = vcmp.eq.f32.partialorder %v7607, 8.507059e+37
    %v7609 = vand.u32 %v7597, 2147483648
    %v7610 = vor.u32 1.1754944e-38, %v7609
    %v7611 = vsel %vm7608, %v7610, %v7606
    %v7612 = vmul.f32 %v7587, %v7611
    %v7613 = vmin.f32 %v7612, 1.0
    %v7614 = vmax.f32 %v7613, -1.0
    %v7615 = vmul.f32 %v1253, %v1253
    %v7616 = vmin.f32 16.0, %v7615
    %v7617 = vmul.f32 %v7616, 2.1237322e-06
    %v7618 = vadd.f32 %v7617, 0.00028619796
    %v7619 = vmul.f32 %v7616, %v7618
    %v7620 = vadd.f32 %v7619, 0.0036580483
    %v7621 = vmul.f32 %v7616, %v7620
    %v7622 = vadd.f32 %v7621, 0.05243302
    %v7623 = vmul.f32 %v7616, %v7622
    %v7624 = vadd.f32 %v7623, 0.18741608
    %v7625 = vmul.f32 %v7616, %v7624
    %v7626 = vadd.f32 %v7625, 1.1283791
    %v7627 = vmul.f32 %v1253, %v7626
    %v7628 = vmul.f32 %v7616, 3.8918573e-05
    %v7629 = vadd.f32 %v7628, 0.001143296
    %v7630 = vmul.f32 %v7616, %v7629
    %v7631 = vadd.f32 %v7630, 0.014752088
    %v7632 = vmul.f32 %v7616, %v7631
    %v7633 = vadd.f32 %v7632, 0.112945676
    %v7634 = vmul.f32 %v7616, %v7633
    %v7635 = vadd.f32 %v7634, 0.4994258
    %v7636 = vmul.f32 %v7616, %v7635
    %v7637 = vadd.f32 %v7636, 1.0
    %v7638 = vrcp.pop %v7637
    %v7639 = vmul.f32 %v7637, %v7638
    %v7640 = vsub.f32 1.0, %v7639
    %v7641 = vmul.f32 %v7638, %v7640
    %v7642 = vadd.f32 %v7638, %v7641
    %vm7643 = vweird.f32 %v7637
    %vm7644 = vweird.f32 %v7638
    %vm7645 = vmor %vm7643, %vm7644
    %v7646 = vsel %vm7645, %v7638, %v7642
    %v7647 = vand.u32 2147483647, %v7637
    %vm7648 = vcmp.eq.f32.partialorder %v7647, 8.507059e+37
    %v7649 = vand.u32 %v7637, 2147483648
    %v7650 = vor.u32 1.1754944e-38, %v7649
    %v7651 = vsel %vm7648, %v7650, %v7646
    %v7652 = vmul.f32 %v7627, %v7651
    %v7653 = vmin.f32 %v7652, 1.0
    %v7654 = vmax.f32 %v7653, -1.0
    %v7655 = vmul.f32 %v1254, %v1254
    %v7656 = vmin.f32 16.0, %v7655
    %v7657 = vmul.f32 %v7656, 2.1237322e-06
    %v7658 = vadd.f32 %v7657, 0.00028619796
    %v7659 = vmul.f32 %v7656, %v7658
    %v7660 = vadd.f32 %v7659, 0.0036580483
    %v7661 = vmul.f32 %v7656, %v7660
    %v7662 = vadd.f32 %v7661, 0.05243302
    %v7663 = vmul.f32 %v7656, %v7662
    %v7664 = vadd.f32 %v7663, 0.18741608
    %v7665 = vmul.f32 %v7656, %v7664
    %v7666 = vadd.f32 %v7665, 1.1283791
    %v7667 = vmul.f32 %v1254, %v7666
    %v7668 = vmul.f32 %v7656, 3.8918573e-05
    %v7669 = vadd.f32 %v7668, 0.001143296
    %v7670 = vmul.f32 %v7656, %v7669
    %v7671 = vadd.f32 %v7670, 0.014752088
    %v7672 = vmul.f32 %v7656, %v7671
    %v7673 = vadd.f32 %v7672, 0.112945676
    %v7674 = vmul.f32 %v7656, %v7673
    %v7675 = vadd.f32 %v7674, 0.4994258
    %v7676 = vmul.f32 %v7656, %v7675
    %v7677 = vadd.f32 %v7676, 1.0
    %v7678 = vrcp.pop %v7677
    %v7679 = vmul.f32 %v7677, %v7678
    %v7680 = vsub.f32 1.0, %v7679
    %v7681 = vmul.f32 %v7678, %v7680
    %v7682 = vadd.f32 %v7678, %v7681
    %vm7683 = vweird.f32 %v7677
    %vm7684 = vweird.f32 %v7678
    %vm7685 = vmor %vm7683, %vm7684
    %v7686 = vsel %vm7685, %v7678, %v7682
    %v7687 = vand.u32 2147483647, %v7677
    %vm7688 = vcmp.eq.f32.partialorder %v7687, 8.507059e+37
    %v7689 = vand.u32 %v7677, 2147483648
    %v7690 = vor.u32 1.1754944e-38, %v7689
    %v7691 = vsel %vm7688, %v7690, %v7686
    %v7692 = vmul.f32 %v7667, %v7691
    %v7693 = vmin.f32 %v7692, 1.0
    %v7694 = vmax.f32 %v7693, -1.0
    %v7695 = vmul.f32 %v1255, %v1255
    %v7696 = vmin.f32 16.0, %v7695
    %v7697 = vmul.f32 %v7696, 2.1237322e-06
    %v7698 = vadd.f32 %v7697, 0.00028619796
    %v7699 = vmul.f32 %v7696, %v7698
    %v7700 = vadd.f32 %v7699, 0.0036580483
    %v7701 = vmul.f32 %v7696, %v7700
    %v7702 = vadd.f32 %v7701, 0.05243302
    %v7703 = vmul.f32 %v7696, %v7702
    %v7704 = vadd.f32 %v7703, 0.18741608
    %v7705 = vmul.f32 %v7696, %v7704
    %v7706 = vadd.f32 %v7705, 1.1283791
    %v7707 = vmul.f32 %v1255, %v7706
    %v7708 = vmul.f32 %v7696, 3.8918573e-05
    %v7709 = vadd.f32 %v7708, 0.001143296
    %v7710 = vmul.f32 %v7696, %v7709
    %v7711 = vadd.f32 %v7710, 0.014752088
    %v7712 = vmul.f32 %v7696, %v7711
    %v7713 = vadd.f32 %v7712, 0.112945676
    %v7714 = vmul.f32 %v7696, %v7713
    %v7715 = vadd.f32 %v7714, 0.4994258
    %v7716 = vmul.f32 %v7696, %v7715
    %v7717 = vadd.f32 %v7716, 1.0
    %v7718 = vrcp.pop %v7717
    %v7719 = vmul.f32 %v7717, %v7718
    %v7720 = vsub.f32 1.0, %v7719
    %v7721 = vmul.f32 %v7718, %v7720
    %v7722 = vadd.f32 %v7718, %v7721
    %vm7723 = vweird.f32 %v7717
    %vm7724 = vweird.f32 %v7718
    %vm7725 = vmor %vm7723, %vm7724
    %v7726 = vsel %vm7725, %v7718, %v7722
    %v7727 = vand.u32 2147483647, %v7717
    %vm7728 = vcmp.eq.f32.partialorder %v7727, 8.507059e+37
    %v7729 = vand.u32 %v7717, 2147483648
    %v7730 = vor.u32 1.1754944e-38, %v7729
    %v7731 = vsel %vm7728, %v7730, %v7726
    %v7732 = vmul.f32 %v7707, %v7731
    %v7733 = vmin.f32 %v7732, 1.0
    %v7734 = vmax.f32 %v7733, -1.0
    %v7735 = vmul.f32 %v1256, %v1256
    %v7736 = vmin.f32 16.0, %v7735
    %v7737 = vmul.f32 %v7736, 2.1237322e-06
    %v7738 = vadd.f32 %v7737, 0.00028619796
    %v7739 = vmul.f32 %v7736, %v7738
    %v7740 = vadd.f32 %v7739, 0.0036580483
    %v7741 = vmul.f32 %v7736, %v7740
    %v7742 = vadd.f32 %v7741, 0.05243302
    %v7743 = vmul.f32 %v7736, %v7742
    %v7744 = vadd.f32 %v7743, 0.18741608
    %v7745 = vmul.f32 %v7736, %v7744
    %v7746 = vadd.f32 %v7745, 1.1283791
    %v7747 = vmul.f32 %v1256, %v7746
    %v7748 = vmul.f32 %v7736, 3.8918573e-05
    %v7749 = vadd.f32 %v7748, 0.001143296
    %v7750 = vmul.f32 %v7736, %v7749
    %v7751 = vadd.f32 %v7750, 0.014752088
    %v7752 = vmul.f32 %v7736, %v7751
    %v7753 = vadd.f32 %v7752, 0.112945676
    %v7754 = vmul.f32 %v7736, %v7753
    %v7755 = vadd.f32 %v7754, 0.4994258
    %v7756 = vmul.f32 %v7736, %v7755
    %v7757 = vadd.f32 %v7756, 1.0
    %v7758 = vrcp.pop %v7757
    %v7759 = vmul.f32 %v7757, %v7758
    %v7760 = vsub.f32 1.0, %v7759
    %v7761 = vmul.f32 %v7758, %v7760
    %v7762 = vadd.f32 %v7758, %v7761
    %vm7763 = vweird.f32 %v7757
    %vm7764 = vweird.f32 %v7758
    %vm7765 = vmor %vm7763, %vm7764
    %v7766 = vsel %vm7765, %v7758, %v7762
    %v7767 = vand.u32 2147483647, %v7757
    %vm7768 = vcmp.eq.f32.partialorder %v7767, 8.507059e+37
    %v7769 = vand.u32 %v7757, 2147483648
    %v7770 = vor.u32 1.1754944e-38, %v7769
    %v7771 = vsel %vm7768, %v7770, %v7766
    %v7772 = vmul.f32 %v7747, %v7771
    %v7773 = vmin.f32 %v7772, 1.0
    %v7774 = vmax.f32 %v7773, -1.0
    %v7775 = vmul.f32 %v1257, %v1257
    %v7776 = vmin.f32 16.0, %v7775
    %v7777 = vmul.f32 %v7776, 2.1237322e-06
    %v7778 = vadd.f32 %v7777, 0.00028619796
    %v7779 = vmul.f32 %v7776, %v7778
    %v7780 = vadd.f32 %v7779, 0.0036580483
    %v7781 = vmul.f32 %v7776, %v7780
    %v7782 = vadd.f32 %v7781, 0.05243302
    %v7783 = vmul.f32 %v7776, %v7782
    %v7784 = vadd.f32 %v7783, 0.18741608
    %v7785 = vmul.f32 %v7776, %v7784
    %v7786 = vadd.f32 %v7785, 1.1283791
    %v7787 = vmul.f32 %v1257, %v7786
    %v7788 = vmul.f32 %v7776, 3.8918573e-05
    %v7789 = vadd.f32 %v7788, 0.001143296
    %v7790 = vmul.f32 %v7776, %v7789
    %v7791 = vadd.f32 %v7790, 0.014752088
    %v7792 = vmul.f32 %v7776, %v7791
    %v7793 = vadd.f32 %v7792, 0.112945676
    %v7794 = vmul.f32 %v7776, %v7793
    %v7795 = vadd.f32 %v7794, 0.4994258
    %v7796 = vmul.f32 %v7776, %v7795
    %v7797 = vadd.f32 %v7796, 1.0
    %v7798 = vrcp.pop %v7797
    %v7799 = vmul.f32 %v7797, %v7798
    %v7800 = vsub.f32 1.0, %v7799
    %v7801 = vmul.f32 %v7798, %v7800
    %v7802 = vadd.f32 %v7798, %v7801
    %vm7803 = vweird.f32 %v7797
    %vm7804 = vweird.f32 %v7798
    %vm7805 = vmor %vm7803, %vm7804
    %v7806 = vsel %vm7805, %v7798, %v7802
    %v7807 = vand.u32 2147483647, %v7797
    %vm7808 = vcmp.eq.f32.partialorder %v7807, 8.507059e+37
    %v7809 = vand.u32 %v7797, 2147483648
    %v7810 = vor.u32 1.1754944e-38, %v7809
    %v7811 = vsel %vm7808, %v7810, %v7806
    %v7812 = vmul.f32 %v7787, %v7811
    %v7813 = vmin.f32 %v7812, 1.0
    %v7814 = vmax.f32 %v7813, -1.0
    %v7815 = vmul.f32 %v1258, %v1258
    %v7816 = vmin.f32 16.0, %v7815
    %v7817 = vmul.f32 %v7816, 2.1237322e-06
    %v7818 = vadd.f32 %v7817, 0.00028619796
    %v7819 = vmul.f32 %v7816, %v7818
    %v7820 = vadd.f32 %v7819, 0.0036580483
    %v7821 = vmul.f32 %v7816, %v7820
    %v7822 = vadd.f32 %v7821, 0.05243302
    %v7823 = vmul.f32 %v7816, %v7822
    %v7824 = vadd.f32 %v7823, 0.18741608
    %v7825 = vmul.f32 %v7816, %v7824
    %v7826 = vadd.f32 %v7825, 1.1283791
    %v7827 = vmul.f32 %v1258, %v7826
    %v7828 = vmul.f32 %v7816, 3.8918573e-05
    %v7829 = vadd.f32 %v7828, 0.001143296
    %v7830 = vmul.f32 %v7816, %v7829
    %v7831 = vadd.f32 %v7830, 0.014752088
    %v7832 = vmul.f32 %v7816, %v7831
    %v7833 = vadd.f32 %v7832, 0.112945676
    %v7834 = vmul.f32 %v7816, %v7833
    %v7835 = vadd.f32 %v7834, 0.4994258
    %v7836 = vmul.f32 %v7816, %v7835
    %v7837 = vadd.f32 %v7836, 1.0
    %v7838 = vrcp.pop %v7837
    %v7839 = vmul.f32 %v7837, %v7838
    %v7840 = vsub.f32 1.0, %v7839
    %v7841 = vmul.f32 %v7838, %v7840
    %v7842 = vadd.f32 %v7838, %v7841
    %vm7843 = vweird.f32 %v7837
    %vm7844 = vweird.f32 %v7838
    %vm7845 = vmor %vm7843, %vm7844
    %v7846 = vsel %vm7845, %v7838, %v7842
    %v7847 = vand.u32 2147483647, %v7837
    %vm7848 = vcmp.eq.f32.partialorder %v7847, 8.507059e+37
    %v7849 = vand.u32 %v7837, 2147483648
    %v7850 = vor.u32 1.1754944e-38, %v7849
    %v7851 = vsel %vm7848, %v7850, %v7846
    %v7852 = vmul.f32 %v7827, %v7851
    %v7853 = vmin.f32 %v7852, 1.0
    %v7854 = vmax.f32 %v7853, -1.0
    %v7855 = vmul.f32 %v1259, %v1259
    %v7856 = vmin.f32 16.0, %v7855
    %v7857 = vmul.f32 %v7856, 2.1237322e-06
    %v7858 = vadd.f32 %v7857, 0.00028619796
    %v7859 = vmul.f32 %v7856, %v7858
    %v7860 = vadd.f32 %v7859, 0.0036580483
    %v7861 = vmul.f32 %v7856, %v7860
    %v7862 = vadd.f32 %v7861, 0.05243302
    %v7863 = vmul.f32 %v7856, %v7862
    %v7864 = vadd.f32 %v7863, 0.18741608
    %v7865 = vmul.f32 %v7856, %v7864
    %v7866 = vadd.f32 %v7865, 1.1283791
    %v7867 = vmul.f32 %v1259, %v7866
    %v7868 = vmul.f32 %v7856, 3.8918573e-05
    %v7869 = vadd.f32 %v7868, 0.001143296
    %v7870 = vmul.f32 %v7856, %v7869
    %v7871 = vadd.f32 %v7870, 0.014752088
    %v7872 = vmul.f32 %v7856, %v7871
    %v7873 = vadd.f32 %v7872, 0.112945676
    %v7874 = vmul.f32 %v7856, %v7873
    %v7875 = vadd.f32 %v7874, 0.4994258
    %v7876 = vmul.f32 %v7856, %v7875
    %v7877 = vadd.f32 %v7876, 1.0
    %v7878 = vrcp.pop %v7877
    %v7879 = vmul.f32 %v7877, %v7878
    %v7880 = vsub.f32 1.0, %v7879
    %v7881 = vmul.f32 %v7878, %v7880
    %v7882 = vadd.f32 %v7878, %v7881
    %vm7883 = vweird.f32 %v7877
    %vm7884 = vweird.f32 %v7878
    %vm7885 = vmor %vm7883, %vm7884
    %v7886 = vsel %vm7885, %v7878, %v7882
    %v7887 = vand.u32 2147483647, %v7877
    %vm7888 = vcmp.eq.f32.partialorder %v7887, 8.507059e+37
    %v7889 = vand.u32 %v7877, 2147483648
    %v7890 = vor.u32 1.1754944e-38, %v7889
    %v7891 = vsel %vm7888, %v7890, %v7886
    %v7892 = vmul.f32 %v7867, %v7891
    %v7893 = vmin.f32 %v7892, 1.0
    %v7894 = vmax.f32 %v7893, -1.0
    %v7895 = vmul.f32 %v1260, %v1260
    %v7896 = vmin.f32 16.0, %v7895
    %v7897 = vmul.f32 %v7896, 2.1237322e-06
    %v7898 = vadd.f32 %v7897, 0.00028619796
    %v7899 = vmul.f32 %v7896, %v7898
    %v7900 = vadd.f32 %v7899, 0.0036580483
    %v7901 = vmul.f32 %v7896, %v7900
    %v7902 = vadd.f32 %v7901, 0.05243302
    %v7903 = vmul.f32 %v7896, %v7902
    %v7904 = vadd.f32 %v7903, 0.18741608
    %v7905 = vmul.f32 %v7896, %v7904
    %v7906 = vadd.f32 %v7905, 1.1283791
    %v7907 = vmul.f32 %v1260, %v7906
    %v7908 = vmul.f32 %v7896, 3.8918573e-05
    %v7909 = vadd.f32 %v7908, 0.001143296
    %v7910 = vmul.f32 %v7896, %v7909
    %v7911 = vadd.f32 %v7910, 0.014752088
    %v7912 = vmul.f32 %v7896, %v7911
    %v7913 = vadd.f32 %v7912, 0.112945676
    %v7914 = vmul.f32 %v7896, %v7913
    %v7915 = vadd.f32 %v7914, 0.4994258
    %v7916 = vmul.f32 %v7896, %v7915
    %v7917 = vadd.f32 %v7916, 1.0
    %v7918 = vrcp.pop %v7917
    %v7919 = vmul.f32 %v7917, %v7918
    %v7920 = vsub.f32 1.0, %v7919
    %v7921 = vmul.f32 %v7918, %v7920
    %v7922 = vadd.f32 %v7918, %v7921
    %vm7923 = vweird.f32 %v7917
    %vm7924 = vweird.f32 %v7918
    %vm7925 = vmor %vm7923, %vm7924
    %v7926 = vsel %vm7925, %v7918, %v7922
    %v7927 = vand.u32 2147483647, %v7917
    %vm7928 = vcmp.eq.f32.partialorder %v7927, 8.507059e+37
    %v7929 = vand.u32 %v7917, 2147483648
    %v7930 = vor.u32 1.1754944e-38, %v7929
    %v7931 = vsel %vm7928, %v7930, %v7926
    %v7932 = vmul.f32 %v7907, %v7931
    %v7933 = vmin.f32 %v7932, 1.0
    %v7934 = vmax.f32 %v7933, -1.0
    %v7935 = vmul.f32 %v1261, %v1261
    %v7936 = vmin.f32 16.0, %v7935
    %v7937 = vmul.f32 %v7936, 2.1237322e-06
    %v7938 = vadd.f32 %v7937, 0.00028619796
    %v7939 = vmul.f32 %v7936, %v7938
    %v7940 = vadd.f32 %v7939, 0.0036580483
    %v7941 = vmul.f32 %v7936, %v7940
    %v7942 = vadd.f32 %v7941, 0.05243302
    %v7943 = vmul.f32 %v7936, %v7942
    %v7944 = vadd.f32 %v7943, 0.18741608
    %v7945 = vmul.f32 %v7936, %v7944
    %v7946 = vadd.f32 %v7945, 1.1283791
    %v7947 = vmul.f32 %v1261, %v7946
    %v7948 = vmul.f32 %v7936, 3.8918573e-05
    %v7949 = vadd.f32 %v7948, 0.001143296
    %v7950 = vmul.f32 %v7936, %v7949
    %v7951 = vadd.f32 %v7950, 0.014752088
    %v7952 = vmul.f32 %v7936, %v7951
    %v7953 = vadd.f32 %v7952, 0.112945676
    %v7954 = vmul.f32 %v7936, %v7953
    %v7955 = vadd.f32 %v7954, 0.4994258
    %v7956 = vmul.f32 %v7936, %v7955
    %v7957 = vadd.f32 %v7956, 1.0
    %v7958 = vrcp.pop %v7957
    %v7959 = vmul.f32 %v7957, %v7958
    %v7960 = vsub.f32 1.0, %v7959
    %v7961 = vmul.f32 %v7958, %v7960
    %v7962 = vadd.f32 %v7958, %v7961
    %vm7963 = vweird.f32 %v7957
    %vm7964 = vweird.f32 %v7958
    %vm7965 = vmor %vm7963, %vm7964
    %v7966 = vsel %vm7965, %v7958, %v7962
    %v7967 = vand.u32 2147483647, %v7957
    %vm7968 = vcmp.eq.f32.partialorder %v7967, 8.507059e+37
    %v7969 = vand.u32 %v7957, 2147483648
    %v7970 = vor.u32 1.1754944e-38, %v7969
    %v7971 = vsel %vm7968, %v7970, %v7966
    %v7972 = vmul.f32 %v7947, %v7971
    %v7973 = vmin.f32 %v7972, 1.0
    %v7974 = vmax.f32 %v7973, -1.0
    %v7975 = vmul.f32 %v1262, %v1262
    %v7976 = vmin.f32 16.0, %v7975
    %v7977 = vmul.f32 %v7976, 2.1237322e-06
    %v7978 = vadd.f32 %v7977, 0.00028619796
    %v7979 = vmul.f32 %v7976, %v7978
    %v7980 = vadd.f32 %v7979, 0.0036580483
    %v7981 = vmul.f32 %v7976, %v7980
    %v7982 = vadd.f32 %v7981, 0.05243302
    %v7983 = vmul.f32 %v7976, %v7982
    %v7984 = vadd.f32 %v7983, 0.18741608
    %v7985 = vmul.f32 %v7976, %v7984
    %v7986 = vadd.f32 %v7985, 1.1283791
    %v7987 = vmul.f32 %v1262, %v7986
    %v7988 = vmul.f32 %v7976, 3.8918573e-05
    %v7989 = vadd.f32 %v7988, 0.001143296
    %v7990 = vmul.f32 %v7976, %v7989
    %v7991 = vadd.f32 %v7990, 0.014752088
    %v7992 = vmul.f32 %v7976, %v7991
    %v7993 = vadd.f32 %v7992, 0.112945676
    %v7994 = vmul.f32 %v7976, %v7993
    %v7995 = vadd.f32 %v7994, 0.4994258
    %v7996 = vmul.f32 %v7976, %v7995
    %v7997 = vadd.f32 %v7996, 1.0
    %v7998 = vrcp.pop %v7997
    %v7999 = vmul.f32 %v7997, %v7998
    %v8000 = vsub.f32 1.0, %v7999
    %v8001 = vmul.f32 %v7998, %v8000
    %v8002 = vadd.f32 %v7998, %v8001
    %vm8003 = vweird.f32 %v7997
    %vm8004 = vweird.f32 %v7998
    %vm8005 = vmor %vm8003, %vm8004
    %v8006 = vsel %vm8005, %v7998, %v8002
    %v8007 = vand.u32 2147483647, %v7997
    %vm8008 = vcmp.eq.f32.partialorder %v8007, 8.507059e+37
    %v8009 = vand.u32 %v7997, 2147483648
    %v8010 = vor.u32 1.1754944e-38, %v8009
    %v8011 = vsel %vm8008, %v8010, %v8006
    %v8012 = vmul.f32 %v7987, %v8011
    %v8013 = vmin.f32 %v8012, 1.0
    %v8014 = vmax.f32 %v8013, -1.0
    %v8015 = vmul.f32 %v1263, %v1263
    %v8016 = vmin.f32 16.0, %v8015
    %v8017 = vmul.f32 %v8016, 2.1237322e-06
    %v8018 = vadd.f32 %v8017, 0.00028619796
    %v8019 = vmul.f32 %v8016, %v8018
    %v8020 = vadd.f32 %v8019, 0.0036580483
    %v8021 = vmul.f32 %v8016, %v8020
    %v8022 = vadd.f32 %v8021, 0.05243302
    %v8023 = vmul.f32 %v8016, %v8022
    %v8024 = vadd.f32 %v8023, 0.18741608
    %v8025 = vmul.f32 %v8016, %v8024
    %v8026 = vadd.f32 %v8025, 1.1283791
    %v8027 = vmul.f32 %v1263, %v8026
    %v8028 = vmul.f32 %v8016, 3.8918573e-05
    %v8029 = vadd.f32 %v8028, 0.001143296
    %v8030 = vmul.f32 %v8016, %v8029
    %v8031 = vadd.f32 %v8030, 0.014752088
    %v8032 = vmul.f32 %v8016, %v8031
    %v8033 = vadd.f32 %v8032, 0.112945676
    %v8034 = vmul.f32 %v8016, %v8033
    %v8035 = vadd.f32 %v8034, 0.4994258
    %v8036 = vmul.f32 %v8016, %v8035
    %v8037 = vadd.f32 %v8036, 1.0
    %v8038 = vrcp.pop %v8037
    %v8039 = vmul.f32 %v8037, %v8038
    %v8040 = vsub.f32 1.0, %v8039
    %v8041 = vmul.f32 %v8038, %v8040
    %v8042 = vadd.f32 %v8038, %v8041
    %vm8043 = vweird.f32 %v8037
    %vm8044 = vweird.f32 %v8038
    %vm8045 = vmor %vm8043, %vm8044
    %v8046 = vsel %vm8045, %v8038, %v8042
    %v8047 = vand.u32 2147483647, %v8037
    %vm8048 = vcmp.eq.f32.partialorder %v8047, 8.507059e+37
    %v8049 = vand.u32 %v8037, 2147483648
    %v8050 = vor.u32 1.1754944e-38, %v8049
    %v8051 = vsel %vm8048, %v8050, %v8046
    %v8052 = vmul.f32 %v8027, %v8051
    %v8053 = vmin.f32 %v8052, 1.0
    %v8054 = vmax.f32 %v8053, -1.0
    %v8055 = vmul.f32 %v1264, %v1264
    %v8056 = vmin.f32 16.0, %v8055
    %v8057 = vmul.f32 %v8056, 2.1237322e-06
    %v8058 = vadd.f32 %v8057, 0.00028619796
    %v8059 = vmul.f32 %v8056, %v8058
    %v8060 = vadd.f32 %v8059, 0.0036580483
    %v8061 = vmul.f32 %v8056, %v8060
    %v8062 = vadd.f32 %v8061, 0.05243302
    %v8063 = vmul.f32 %v8056, %v8062
    %v8064 = vadd.f32 %v8063, 0.18741608
    %v8065 = vmul.f32 %v8056, %v8064
    %v8066 = vadd.f32 %v8065, 1.1283791
    %v8067 = vmul.f32 %v1264, %v8066
    %v8068 = vmul.f32 %v8056, 3.8918573e-05
    %v8069 = vadd.f32 %v8068, 0.001143296
    %v8070 = vmul.f32 %v8056, %v8069
    %v8071 = vadd.f32 %v8070, 0.014752088
    %v8072 = vmul.f32 %v8056, %v8071
    %v8073 = vadd.f32 %v8072, 0.112945676
    %v8074 = vmul.f32 %v8056, %v8073
    %v8075 = vadd.f32 %v8074, 0.4994258
    %v8076 = vmul.f32 %v8056, %v8075
    %v8077 = vadd.f32 %v8076, 1.0
    %v8078 = vrcp.pop %v8077
    %v8079 = vmul.f32 %v8077, %v8078
    %v8080 = vsub.f32 1.0, %v8079
    %v8081 = vmul.f32 %v8078, %v8080
    %v8082 = vadd.f32 %v8078, %v8081
    %vm8083 = vweird.f32 %v8077
    %vm8084 = vweird.f32 %v8078
    %vm8085 = vmor %vm8083, %vm8084
    %v8086 = vsel %vm8085, %v8078, %v8082
    %v8087 = vand.u32 2147483647, %v8077
    %vm8088 = vcmp.eq.f32.partialorder %v8087, 8.507059e+37
    %v8089 = vand.u32 %v8077, 2147483648
    %v8090 = vor.u32 1.1754944e-38, %v8089
    %v8091 = vsel %vm8088, %v8090, %v8086
    %v8092 = vmul.f32 %v8067, %v8091
    %v8093 = vmin.f32 %v8092, 1.0
    %v8094 = vmax.f32 %v8093, -1.0
    %v8095 = vmul.f32 %v1265, %v1265
    %v8096 = vmin.f32 16.0, %v8095
    %v8097 = vmul.f32 %v8096, 2.1237322e-06
    %v8098 = vadd.f32 %v8097, 0.00028619796
    %v8099 = vmul.f32 %v8096, %v8098
    %v8100 = vadd.f32 %v8099, 0.0036580483
    %v8101 = vmul.f32 %v8096, %v8100
    %v8102 = vadd.f32 %v8101, 0.05243302
    %v8103 = vmul.f32 %v8096, %v8102
    %v8104 = vadd.f32 %v8103, 0.18741608
    %v8105 = vmul.f32 %v8096, %v8104
    %v8106 = vadd.f32 %v8105, 1.1283791
    %v8107 = vmul.f32 %v1265, %v8106
    %v8108 = vmul.f32 %v8096, 3.8918573e-05
    %v8109 = vadd.f32 %v8108, 0.001143296
    %v8110 = vmul.f32 %v8096, %v8109
    %v8111 = vadd.f32 %v8110, 0.014752088
    %v8112 = vmul.f32 %v8096, %v8111
    %v8113 = vadd.f32 %v8112, 0.112945676
    %v8114 = vmul.f32 %v8096, %v8113
    %v8115 = vadd.f32 %v8114, 0.4994258
    %v8116 = vmul.f32 %v8096, %v8115
    %v8117 = vadd.f32 %v8116, 1.0
    %v8118 = vrcp.pop %v8117
    %v8119 = vmul.f32 %v8117, %v8118
    %v8120 = vsub.f32 1.0, %v8119
    %v8121 = vmul.f32 %v8118, %v8120
    %v8122 = vadd.f32 %v8118, %v8121
    %vm8123 = vweird.f32 %v8117
    %vm8124 = vweird.f32 %v8118
    %vm8125 = vmor %vm8123, %vm8124
    %v8126 = vsel %vm8125, %v8118, %v8122
    %v8127 = vand.u32 2147483647, %v8117
    %vm8128 = vcmp.eq.f32.partialorder %v8127, 8.507059e+37
    %v8129 = vand.u32 %v8117, 2147483648
    %v8130 = vor.u32 1.1754944e-38, %v8129
    %v8131 = vsel %vm8128, %v8130, %v8126
    %v8132 = vmul.f32 %v8107, %v8131
    %v8133 = vmin.f32 %v8132, 1.0
    %v8134 = vmax.f32 %v8133, -1.0
    %v8135 = vmul.f32 %v1266, %v1266
    %v8136 = vmin.f32 16.0, %v8135
    %v8137 = vmul.f32 %v8136, 2.1237322e-06
    %v8138 = vadd.f32 %v8137, 0.00028619796
    %v8139 = vmul.f32 %v8136, %v8138
    %v8140 = vadd.f32 %v8139, 0.0036580483
    %v8141 = vmul.f32 %v8136, %v8140
    %v8142 = vadd.f32 %v8141, 0.05243302
    %v8143 = vmul.f32 %v8136, %v8142
    %v8144 = vadd.f32 %v8143, 0.18741608
    %v8145 = vmul.f32 %v8136, %v8144
    %v8146 = vadd.f32 %v8145, 1.1283791
    %v8147 = vmul.f32 %v1266, %v8146
    %v8148 = vmul.f32 %v8136, 3.8918573e-05
    %v8149 = vadd.f32 %v8148, 0.001143296
    %v8150 = vmul.f32 %v8136, %v8149
    %v8151 = vadd.f32 %v8150, 0.014752088
    %v8152 = vmul.f32 %v8136, %v8151
    %v8153 = vadd.f32 %v8152, 0.112945676
    %v8154 = vmul.f32 %v8136, %v8153
    %v8155 = vadd.f32 %v8154, 0.4994258
    %v8156 = vmul.f32 %v8136, %v8155
    %v8157 = vadd.f32 %v8156, 1.0
    %v8158 = vrcp.pop %v8157
    %v8159 = vmul.f32 %v8157, %v8158
    %v8160 = vsub.f32 1.0, %v8159
    %v8161 = vmul.f32 %v8158, %v8160
    %v8162 = vadd.f32 %v8158, %v8161
    %vm8163 = vweird.f32 %v8157
    %vm8164 = vweird.f32 %v8158
    %vm8165 = vmor %vm8163, %vm8164
    %v8166 = vsel %vm8165, %v8158, %v8162
    %v8167 = vand.u32 2147483647, %v8157
    %vm8168 = vcmp.eq.f32.partialorder %v8167, 8.507059e+37
    %v8169 = vand.u32 %v8157, 2147483648
    %v8170 = vor.u32 1.1754944e-38, %v8169
    %v8171 = vsel %vm8168, %v8170, %v8166
    %v8172 = vmul.f32 %v8147, %v8171
    %v8173 = vmin.f32 %v8172, 1.0
    %v8174 = vmax.f32 %v8173, -1.0
    %v8175 = vmul.f32 %v1267, %v1267
    %v8176 = vmin.f32 16.0, %v8175
    %v8177 = vmul.f32 %v8176, 2.1237322e-06
    %v8178 = vadd.f32 %v8177, 0.00028619796
    %v8179 = vmul.f32 %v8176, %v8178
    %v8180 = vadd.f32 %v8179, 0.0036580483
    %v8181 = vmul.f32 %v8176, %v8180
    %v8182 = vadd.f32 %v8181, 0.05243302
    %v8183 = vmul.f32 %v8176, %v8182
    %v8184 = vadd.f32 %v8183, 0.18741608
    %v8185 = vmul.f32 %v8176, %v8184
    %v8186 = vadd.f32 %v8185, 1.1283791
    %v8187 = vmul.f32 %v1267, %v8186
    %v8188 = vmul.f32 %v8176, 3.8918573e-05
    %v8189 = vadd.f32 %v8188, 0.001143296
    %v8190 = vmul.f32 %v8176, %v8189
    %v8191 = vadd.f32 %v8190, 0.014752088
    %v8192 = vmul.f32 %v8176, %v8191
    %v8193 = vadd.f32 %v8192, 0.112945676
    %v8194 = vmul.f32 %v8176, %v8193
    %v8195 = vadd.f32 %v8194, 0.4994258
    %v8196 = vmul.f32 %v8176, %v8195
    %v8197 = vadd.f32 %v8196, 1.0
    %v8198 = vrcp.pop %v8197
    %v8199 = vmul.f32 %v8197, %v8198
    %v8200 = vsub.f32 1.0, %v8199
    %v8201 = vmul.f32 %v8198, %v8200
    %v8202 = vadd.f32 %v8198, %v8201
    %vm8203 = vweird.f32 %v8197
    %vm8204 = vweird.f32 %v8198
    %vm8205 = vmor %vm8203, %vm8204
    %v8206 = vsel %vm8205, %v8198, %v8202
    %v8207 = vand.u32 2147483647, %v8197
    %vm8208 = vcmp.eq.f32.partialorder %v8207, 8.507059e+37
    %v8209 = vand.u32 %v8197, 2147483648
    %v8210 = vor.u32 1.1754944e-38, %v8209
    %v8211 = vsel %vm8208, %v8210, %v8206
    %v8212 = vmul.f32 %v8187, %v8211
    %v8213 = vmin.f32 %v8212, 1.0
    %v8214 = vmax.f32 %v8213, -1.0
    %v8215 = vmul.f32 %v1268, %v1268
    %v8216 = vmin.f32 16.0, %v8215
    %v8217 = vmul.f32 %v8216, 2.1237322e-06
    %v8218 = vadd.f32 %v8217, 0.00028619796
    %v8219 = vmul.f32 %v8216, %v8218
    %v8220 = vadd.f32 %v8219, 0.0036580483
    %v8221 = vmul.f32 %v8216, %v8220
    %v8222 = vadd.f32 %v8221, 0.05243302
    %v8223 = vmul.f32 %v8216, %v8222
    %v8224 = vadd.f32 %v8223, 0.18741608
    %v8225 = vmul.f32 %v8216, %v8224
    %v8226 = vadd.f32 %v8225, 1.1283791
    %v8227 = vmul.f32 %v1268, %v8226
    %v8228 = vmul.f32 %v8216, 3.8918573e-05
    %v8229 = vadd.f32 %v8228, 0.001143296
    %v8230 = vmul.f32 %v8216, %v8229
    %v8231 = vadd.f32 %v8230, 0.014752088
    %v8232 = vmul.f32 %v8216, %v8231
    %v8233 = vadd.f32 %v8232, 0.112945676
    %v8234 = vmul.f32 %v8216, %v8233
    %v8235 = vadd.f32 %v8234, 0.4994258
    %v8236 = vmul.f32 %v8216, %v8235
    %v8237 = vadd.f32 %v8236, 1.0
    %v8238 = vrcp.pop %v8237
    %v8239 = vmul.f32 %v8237, %v8238
    %v8240 = vsub.f32 1.0, %v8239
    %v8241 = vmul.f32 %v8238, %v8240
    %v8242 = vadd.f32 %v8238, %v8241
    %vm8243 = vweird.f32 %v8237
    %vm8244 = vweird.f32 %v8238
    %vm8245 = vmor %vm8243, %vm8244
    %v8246 = vsel %vm8245, %v8238, %v8242
    %v8247 = vand.u32 2147483647, %v8237
    %vm8248 = vcmp.eq.f32.partialorder %v8247, 8.507059e+37
    %v8249 = vand.u32 %v8237, 2147483648
    %v8250 = vor.u32 1.1754944e-38, %v8249
    %v8251 = vsel %vm8248, %v8250, %v8246
    %v8252 = vmul.f32 %v8227, %v8251
    %v8253 = vmin.f32 %v8252, 1.0
    %v8254 = vmax.f32 %v8253, -1.0
    %v8255 = vmul.f32 %v1269, %v1269
    %v8256 = vmin.f32 16.0, %v8255
    %v8257 = vmul.f32 %v8256, 2.1237322e-06
    %v8258 = vadd.f32 %v8257, 0.00028619796
    %v8259 = vmul.f32 %v8256, %v8258
    %v8260 = vadd.f32 %v8259, 0.0036580483
    %v8261 = vmul.f32 %v8256, %v8260
    %v8262 = vadd.f32 %v8261, 0.05243302
    %v8263 = vmul.f32 %v8256, %v8262
    %v8264 = vadd.f32 %v8263, 0.18741608
    %v8265 = vmul.f32 %v8256, %v8264
    %v8266 = vadd.f32 %v8265, 1.1283791
    %v8267 = vmul.f32 %v1269, %v8266
    %v8268 = vmul.f32 %v8256, 3.8918573e-05
    %v8269 = vadd.f32 %v8268, 0.001143296
    %v8270 = vmul.f32 %v8256, %v8269
    %v8271 = vadd.f32 %v8270, 0.014752088
    %v8272 = vmul.f32 %v8256, %v8271
    %v8273 = vadd.f32 %v8272, 0.112945676
    %v8274 = vmul.f32 %v8256, %v8273
    %v8275 = vadd.f32 %v8274, 0.4994258
    %v8276 = vmul.f32 %v8256, %v8275
    %v8277 = vadd.f32 %v8276, 1.0
    %v8278 = vrcp.pop %v8277
    %v8279 = vmul.f32 %v8277, %v8278
    %v8280 = vsub.f32 1.0, %v8279
    %v8281 = vmul.f32 %v8278, %v8280
    %v8282 = vadd.f32 %v8278, %v8281
    %vm8283 = vweird.f32 %v8277
    %vm8284 = vweird.f32 %v8278
    %vm8285 = vmor %vm8283, %vm8284
    %v8286 = vsel %vm8285, %v8278, %v8282
    %v8287 = vand.u32 2147483647, %v8277
    %vm8288 = vcmp.eq.f32.partialorder %v8287, 8.507059e+37
    %v8289 = vand.u32 %v8277, 2147483648
    %v8290 = vor.u32 1.1754944e-38, %v8289
    %v8291 = vsel %vm8288, %v8290, %v8286
    %v8292 = vmul.f32 %v8267, %v8291
    %v8293 = vmin.f32 %v8292, 1.0
    %v8294 = vmax.f32 %v8293, -1.0
    %v8295 = vmul.f32 %v1270, %v1270
    %v8296 = vmin.f32 16.0, %v8295
    %v8297 = vmul.f32 %v8296, 2.1237322e-06
    %v8298 = vadd.f32 %v8297, 0.00028619796
    %v8299 = vmul.f32 %v8296, %v8298
    %v8300 = vadd.f32 %v8299, 0.0036580483
    %v8301 = vmul.f32 %v8296, %v8300
    %v8302 = vadd.f32 %v8301, 0.05243302
    %v8303 = vmul.f32 %v8296, %v8302
    %v8304 = vadd.f32 %v8303, 0.18741608
    %v8305 = vmul.f32 %v8296, %v8304
    %v8306 = vadd.f32 %v8305, 1.1283791
    %v8307 = vmul.f32 %v1270, %v8306
    %v8308 = vmul.f32 %v8296, 3.8918573e-05
    %v8309 = vadd.f32 %v8308, 0.001143296
    %v8310 = vmul.f32 %v8296, %v8309
    %v8311 = vadd.f32 %v8310, 0.014752088
    %v8312 = vmul.f32 %v8296, %v8311
    %v8313 = vadd.f32 %v8312, 0.112945676
    %v8314 = vmul.f32 %v8296, %v8313
    %v8315 = vadd.f32 %v8314, 0.4994258
    %v8316 = vmul.f32 %v8296, %v8315
    %v8317 = vadd.f32 %v8316, 1.0
    %v8318 = vrcp.pop %v8317
    %v8319 = vmul.f32 %v8317, %v8318
    %v8320 = vsub.f32 1.0, %v8319
    %v8321 = vmul.f32 %v8318, %v8320
    %v8322 = vadd.f32 %v8318, %v8321
    %vm8323 = vweird.f32 %v8317
    %vm8324 = vweird.f32 %v8318
    %vm8325 = vmor %vm8323, %vm8324
    %v8326 = vsel %vm8325, %v8318, %v8322
    %v8327 = vand.u32 2147483647, %v8317
    %vm8328 = vcmp.eq.f32.partialorder %v8327, 8.507059e+37
    %v8329 = vand.u32 %v8317, 2147483648
    %v8330 = vor.u32 1.1754944e-38, %v8329
    %v8331 = vsel %vm8328, %v8330, %v8326
    %v8332 = vmul.f32 %v8307, %v8331
    %v8333 = vmin.f32 %v8332, 1.0
    %v8334 = vmax.f32 %v8333, -1.0
    %v8335 = vmul.f32 %v1271, %v1271
    %v8336 = vmin.f32 16.0, %v8335
    %v8337 = vmul.f32 %v8336, 2.1237322e-06
    %v8338 = vadd.f32 %v8337, 0.00028619796
    %v8339 = vmul.f32 %v8336, %v8338
    %v8340 = vadd.f32 %v8339, 0.0036580483
    %v8341 = vmul.f32 %v8336, %v8340
    %v8342 = vadd.f32 %v8341, 0.05243302
    %v8343 = vmul.f32 %v8336, %v8342
    %v8344 = vadd.f32 %v8343, 0.18741608
    %v8345 = vmul.f32 %v8336, %v8344
    %v8346 = vadd.f32 %v8345, 1.1283791
    %v8347 = vmul.f32 %v1271, %v8346
    %v8348 = vmul.f32 %v8336, 3.8918573e-05
    %v8349 = vadd.f32 %v8348, 0.001143296
    %v8350 = vmul.f32 %v8336, %v8349
    %v8351 = vadd.f32 %v8350, 0.014752088
    %v8352 = vmul.f32 %v8336, %v8351
    %v8353 = vadd.f32 %v8352, 0.112945676
    %v8354 = vmul.f32 %v8336, %v8353
    %v8355 = vadd.f32 %v8354, 0.4994258
    %v8356 = vmul.f32 %v8336, %v8355
    %v8357 = vadd.f32 %v8356, 1.0
    %v8358 = vrcp.pop %v8357
    %v8359 = vmul.f32 %v8357, %v8358
    %v8360 = vsub.f32 1.0, %v8359
    %v8361 = vmul.f32 %v8358, %v8360
    %v8362 = vadd.f32 %v8358, %v8361
    %vm8363 = vweird.f32 %v8357
    %vm8364 = vweird.f32 %v8358
    %vm8365 = vmor %vm8363, %vm8364
    %v8366 = vsel %vm8365, %v8358, %v8362
    %v8367 = vand.u32 2147483647, %v8357
    %vm8368 = vcmp.eq.f32.partialorder %v8367, 8.507059e+37
    %v8369 = vand.u32 %v8357, 2147483648
    %v8370 = vor.u32 1.1754944e-38, %v8369
    %v8371 = vsel %vm8368, %v8370, %v8366
    %v8372 = vmul.f32 %v8347, %v8371
    %v8373 = vmin.f32 %v8372, 1.0
    %v8374 = vmax.f32 %v8373, -1.0
    %v8375 = vmul.f32 %v1272, %v1272
    %v8376 = vmin.f32 16.0, %v8375
    %v8377 = vmul.f32 %v8376, 2.1237322e-06
    %v8378 = vadd.f32 %v8377, 0.00028619796
    %v8379 = vmul.f32 %v8376, %v8378
    %v8380 = vadd.f32 %v8379, 0.0036580483
    %v8381 = vmul.f32 %v8376, %v8380
    %v8382 = vadd.f32 %v8381, 0.05243302
    %v8383 = vmul.f32 %v8376, %v8382
    %v8384 = vadd.f32 %v8383, 0.18741608
    %v8385 = vmul.f32 %v8376, %v8384
    %v8386 = vadd.f32 %v8385, 1.1283791
    %v8387 = vmul.f32 %v1272, %v8386
    %v8388 = vmul.f32 %v8376, 3.8918573e-05
    %v8389 = vadd.f32 %v8388, 0.001143296
    %v8390 = vmul.f32 %v8376, %v8389
    %v8391 = vadd.f32 %v8390, 0.014752088
    %v8392 = vmul.f32 %v8376, %v8391
    %v8393 = vadd.f32 %v8392, 0.112945676
    %v8394 = vmul.f32 %v8376, %v8393
    %v8395 = vadd.f32 %v8394, 0.4994258
    %v8396 = vmul.f32 %v8376, %v8395
    %v8397 = vadd.f32 %v8396, 1.0
    %v8398 = vrcp.pop %v8397
    %v8399 = vmul.f32 %v8397, %v8398
    %v8400 = vsub.f32 1.0, %v8399
    %v8401 = vmul.f32 %v8398, %v8400
    %v8402 = vadd.f32 %v8398, %v8401
    %vm8403 = vweird.f32 %v8397
    %vm8404 = vweird.f32 %v8398
    %vm8405 = vmor %vm8403, %vm8404
    %v8406 = vsel %vm8405, %v8398, %v8402
    %v8407 = vand.u32 2147483647, %v8397
    %vm8408 = vcmp.eq.f32.partialorder %v8407, 8.507059e+37
    %v8409 = vand.u32 %v8397, 2147483648
    %v8410 = vor.u32 1.1754944e-38, %v8409
    %v8411 = vsel %vm8408, %v8410, %v8406
    %v8412 = vmul.f32 %v8387, %v8411
    %v8413 = vmin.f32 %v8412, 1.0
    %v8414 = vmax.f32 %v8413, -1.0
    %v8415 = vmul.f32 %v1273, %v1273
    %v8416 = vmin.f32 16.0, %v8415
    %v8417 = vmul.f32 %v8416, 2.1237322e-06
    %v8418 = vadd.f32 %v8417, 0.00028619796
    %v8419 = vmul.f32 %v8416, %v8418
    %v8420 = vadd.f32 %v8419, 0.0036580483
    %v8421 = vmul.f32 %v8416, %v8420
    %v8422 = vadd.f32 %v8421, 0.05243302
    %v8423 = vmul.f32 %v8416, %v8422
    %v8424 = vadd.f32 %v8423, 0.18741608
    %v8425 = vmul.f32 %v8416, %v8424
    %v8426 = vadd.f32 %v8425, 1.1283791
    %v8427 = vmul.f32 %v1273, %v8426
    %v8428 = vmul.f32 %v8416, 3.8918573e-05
    %v8429 = vadd.f32 %v8428, 0.001143296
    %v8430 = vmul.f32 %v8416, %v8429
    %v8431 = vadd.f32 %v8430, 0.014752088
    %v8432 = vmul.f32 %v8416, %v8431
    %v8433 = vadd.f32 %v8432, 0.112945676
    %v8434 = vmul.f32 %v8416, %v8433
    %v8435 = vadd.f32 %v8434, 0.4994258
    %v8436 = vmul.f32 %v8416, %v8435
    %v8437 = vadd.f32 %v8436, 1.0
    %v8438 = vrcp.pop %v8437
    %v8439 = vmul.f32 %v8437, %v8438
    %v8440 = vsub.f32 1.0, %v8439
    %v8441 = vmul.f32 %v8438, %v8440
    %v8442 = vadd.f32 %v8438, %v8441
    %vm8443 = vweird.f32 %v8437
    %vm8444 = vweird.f32 %v8438
    %vm8445 = vmor %vm8443, %vm8444
    %v8446 = vsel %vm8445, %v8438, %v8442
    %v8447 = vand.u32 2147483647, %v8437
    %vm8448 = vcmp.eq.f32.partialorder %v8447, 8.507059e+37
    %v8449 = vand.u32 %v8437, 2147483648
    %v8450 = vor.u32 1.1754944e-38, %v8449
    %v8451 = vsel %vm8448, %v8450, %v8446
    %v8452 = vmul.f32 %v8427, %v8451
    %v8453 = vmin.f32 %v8452, 1.0
    %v8454 = vmax.f32 %v8453, -1.0
    %v8455 = vmul.f32 %v1274, %v1274
    %v8456 = vmin.f32 16.0, %v8455
    %v8457 = vmul.f32 %v8456, 2.1237322e-06
    %v8458 = vadd.f32 %v8457, 0.00028619796
    %v8459 = vmul.f32 %v8456, %v8458
    %v8460 = vadd.f32 %v8459, 0.0036580483
    %v8461 = vmul.f32 %v8456, %v8460
    %v8462 = vadd.f32 %v8461, 0.05243302
    %v8463 = vmul.f32 %v8456, %v8462
    %v8464 = vadd.f32 %v8463, 0.18741608
    %v8465 = vmul.f32 %v8456, %v8464
    %v8466 = vadd.f32 %v8465, 1.1283791
    %v8467 = vmul.f32 %v1274, %v8466
    %v8468 = vmul.f32 %v8456, 3.8918573e-05
    %v8469 = vadd.f32 %v8468, 0.001143296
    %v8470 = vmul.f32 %v8456, %v8469
    %v8471 = vadd.f32 %v8470, 0.014752088
    %v8472 = vmul.f32 %v8456, %v8471
    %v8473 = vadd.f32 %v8472, 0.112945676
    %v8474 = vmul.f32 %v8456, %v8473
    %v8475 = vadd.f32 %v8474, 0.4994258
    %v8476 = vmul.f32 %v8456, %v8475
    %v8477 = vadd.f32 %v8476, 1.0
    %v8478 = vrcp.pop %v8477
    %v8479 = vmul.f32 %v8477, %v8478
    %v8480 = vsub.f32 1.0, %v8479
    %v8481 = vmul.f32 %v8478, %v8480
    %v8482 = vadd.f32 %v8478, %v8481
    %vm8483 = vweird.f32 %v8477
    %vm8484 = vweird.f32 %v8478
    %vm8485 = vmor %vm8483, %vm8484
    %v8486 = vsel %vm8485, %v8478, %v8482
    %v8487 = vand.u32 2147483647, %v8477
    %vm8488 = vcmp.eq.f32.partialorder %v8487, 8.507059e+37
    %v8489 = vand.u32 %v8477, 2147483648
    %v8490 = vor.u32 1.1754944e-38, %v8489
    %v8491 = vsel %vm8488, %v8490, %v8486
    %v8492 = vmul.f32 %v8467, %v8491
    %v8493 = vmin.f32 %v8492, 1.0
    %v8494 = vmax.f32 %v8493, -1.0
    %v8495 = vmul.f32 %v1275, %v1275
    %v8496 = vmin.f32 16.0, %v8495
    %v8497 = vmul.f32 %v8496, 2.1237322e-06
    %v8498 = vadd.f32 %v8497, 0.00028619796
    %v8499 = vmul.f32 %v8496, %v8498
    %v8500 = vadd.f32 %v8499, 0.0036580483
    %v8501 = vmul.f32 %v8496, %v8500
    %v8502 = vadd.f32 %v8501, 0.05243302
    %v8503 = vmul.f32 %v8496, %v8502
    %v8504 = vadd.f32 %v8503, 0.18741608
    %v8505 = vmul.f32 %v8496, %v8504
    %v8506 = vadd.f32 %v8505, 1.1283791
    %v8507 = vmul.f32 %v1275, %v8506
    %v8508 = vmul.f32 %v8496, 3.8918573e-05
    %v8509 = vadd.f32 %v8508, 0.001143296
    %v8510 = vmul.f32 %v8496, %v8509
    %v8511 = vadd.f32 %v8510, 0.014752088
    %v8512 = vmul.f32 %v8496, %v8511
    %v8513 = vadd.f32 %v8512, 0.112945676
    %v8514 = vmul.f32 %v8496, %v8513
    %v8515 = vadd.f32 %v8514, 0.4994258
    %v8516 = vmul.f32 %v8496, %v8515
    %v8517 = vadd.f32 %v8516, 1.0
    %v8518 = vrcp.pop %v8517
    %v8519 = vmul.f32 %v8517, %v8518
    %v8520 = vsub.f32 1.0, %v8519
    %v8521 = vmul.f32 %v8518, %v8520
    %v8522 = vadd.f32 %v8518, %v8521
    %vm8523 = vweird.f32 %v8517
    %vm8524 = vweird.f32 %v8518
    %vm8525 = vmor %vm8523, %vm8524
    %v8526 = vsel %vm8525, %v8518, %v8522
    %v8527 = vand.u32 2147483647, %v8517
    %vm8528 = vcmp.eq.f32.partialorder %v8527, 8.507059e+37
    %v8529 = vand.u32 %v8517, 2147483648
    %v8530 = vor.u32 1.1754944e-38, %v8529
    %v8531 = vsel %vm8528, %v8530, %v8526
    %v8532 = vmul.f32 %v8507, %v8531
    %v8533 = vmin.f32 %v8532, 1.0
    %v8534 = vmax.f32 %v8533, -1.0
    %v8535 = vmul.f32 %v1276, %v1276
    %v8536 = vmin.f32 16.0, %v8535
    %v8537 = vmul.f32 %v8536, 2.1237322e-06
    %v8538 = vadd.f32 %v8537, 0.00028619796
    %v8539 = vmul.f32 %v8536, %v8538
    %v8540 = vadd.f32 %v8539, 0.0036580483
    %v8541 = vmul.f32 %v8536, %v8540
    %v8542 = vadd.f32 %v8541, 0.05243302
    %v8543 = vmul.f32 %v8536, %v8542
    %v8544 = vadd.f32 %v8543, 0.18741608
    %v8545 = vmul.f32 %v8536, %v8544
    %v8546 = vadd.f32 %v8545, 1.1283791
    %v8547 = vmul.f32 %v1276, %v8546
    %v8548 = vmul.f32 %v8536, 3.8918573e-05
    %v8549 = vadd.f32 %v8548, 0.001143296
    %v8550 = vmul.f32 %v8536, %v8549
    %v8551 = vadd.f32 %v8550, 0.014752088
    %v8552 = vmul.f32 %v8536, %v8551
    %v8553 = vadd.f32 %v8552, 0.112945676
    %v8554 = vmul.f32 %v8536, %v8553
    %v8555 = vadd.f32 %v8554, 0.4994258
    %v8556 = vmul.f32 %v8536, %v8555
    %v8557 = vadd.f32 %v8556, 1.0
    %v8558 = vrcp.pop %v8557
    %v8559 = vmul.f32 %v8557, %v8558
    %v8560 = vsub.f32 1.0, %v8559
    %v8561 = vmul.f32 %v8558, %v8560
    %v8562 = vadd.f32 %v8558, %v8561
    %vm8563 = vweird.f32 %v8557
    %vm8564 = vweird.f32 %v8558
    %vm8565 = vmor %vm8563, %vm8564
    %v8566 = vsel %vm8565, %v8558, %v8562
    %v8567 = vand.u32 2147483647, %v8557
    %vm8568 = vcmp.eq.f32.partialorder %v8567, 8.507059e+37
    %v8569 = vand.u32 %v8557, 2147483648
    %v8570 = vor.u32 1.1754944e-38, %v8569
    %v8571 = vsel %vm8568, %v8570, %v8566
    %v8572 = vmul.f32 %v8547, %v8571
    %v8573 = vmin.f32 %v8572, 1.0
    %v8574 = vmax.f32 %v8573, -1.0
    %v8575 = vmul.f32 %v1277, %v1277
    %v8576 = vmin.f32 16.0, %v8575
    %v8577 = vmul.f32 %v8576, 2.1237322e-06
    %v8578 = vadd.f32 %v8577, 0.00028619796
    %v8579 = vmul.f32 %v8576, %v8578
    %v8580 = vadd.f32 %v8579, 0.0036580483
    %v8581 = vmul.f32 %v8576, %v8580
    %v8582 = vadd.f32 %v8581, 0.05243302
    %v8583 = vmul.f32 %v8576, %v8582
    %v8584 = vadd.f32 %v8583, 0.18741608
    %v8585 = vmul.f32 %v8576, %v8584
    %v8586 = vadd.f32 %v8585, 1.1283791
    %v8587 = vmul.f32 %v1277, %v8586
    %v8588 = vmul.f32 %v8576, 3.8918573e-05
    %v8589 = vadd.f32 %v8588, 0.001143296
    %v8590 = vmul.f32 %v8576, %v8589
    %v8591 = vadd.f32 %v8590, 0.014752088
    %v8592 = vmul.f32 %v8576, %v8591
    %v8593 = vadd.f32 %v8592, 0.112945676
    %v8594 = vmul.f32 %v8576, %v8593
    %v8595 = vadd.f32 %v8594, 0.4994258
    %v8596 = vmul.f32 %v8576, %v8595
    %v8597 = vadd.f32 %v8596, 1.0
    %v8598 = vrcp.pop %v8597
    %v8599 = vmul.f32 %v8597, %v8598
    %v8600 = vsub.f32 1.0, %v8599
    %v8601 = vmul.f32 %v8598, %v8600
    %v8602 = vadd.f32 %v8598, %v8601
    %vm8603 = vweird.f32 %v8597
    %vm8604 = vweird.f32 %v8598
    %vm8605 = vmor %vm8603, %vm8604
    %v8606 = vsel %vm8605, %v8598, %v8602
    %v8607 = vand.u32 2147483647, %v8597
    %vm8608 = vcmp.eq.f32.partialorder %v8607, 8.507059e+37
    %v8609 = vand.u32 %v8597, 2147483648
    %v8610 = vor.u32 1.1754944e-38, %v8609
    %v8611 = vsel %vm8608, %v8610, %v8606
    %v8612 = vmul.f32 %v8587, %v8611
    %v8613 = vmin.f32 %v8612, 1.0
    %v8614 = vmax.f32 %v8613, -1.0
    %v8615 = vmul.f32 %v1278, %v1278
    %v8616 = vmin.f32 16.0, %v8615
    %v8617 = vmul.f32 %v8616, 2.1237322e-06
    %v8618 = vadd.f32 %v8617, 0.00028619796
    %v8619 = vmul.f32 %v8616, %v8618
    %v8620 = vadd.f32 %v8619, 0.0036580483
    %v8621 = vmul.f32 %v8616, %v8620
    %v8622 = vadd.f32 %v8621, 0.05243302
    %v8623 = vmul.f32 %v8616, %v8622
    %v8624 = vadd.f32 %v8623, 0.18741608
    %v8625 = vmul.f32 %v8616, %v8624
    %v8626 = vadd.f32 %v8625, 1.1283791
    %v8627 = vmul.f32 %v1278, %v8626
    %v8628 = vmul.f32 %v8616, 3.8918573e-05
    %v8629 = vadd.f32 %v8628, 0.001143296
    %v8630 = vmul.f32 %v8616, %v8629
    %v8631 = vadd.f32 %v8630, 0.014752088
    %v8632 = vmul.f32 %v8616, %v8631
    %v8633 = vadd.f32 %v8632, 0.112945676
    %v8634 = vmul.f32 %v8616, %v8633
    %v8635 = vadd.f32 %v8634, 0.4994258
    %v8636 = vmul.f32 %v8616, %v8635
    %v8637 = vadd.f32 %v8636, 1.0
    %v8638 = vrcp.pop %v8637
    %v8639 = vmul.f32 %v8637, %v8638
    %v8640 = vsub.f32 1.0, %v8639
    %v8641 = vmul.f32 %v8638, %v8640
    %v8642 = vadd.f32 %v8638, %v8641
    %vm8643 = vweird.f32 %v8637
    %vm8644 = vweird.f32 %v8638
    %vm8645 = vmor %vm8643, %vm8644
    %v8646 = vsel %vm8645, %v8638, %v8642
    %v8647 = vand.u32 2147483647, %v8637
    %vm8648 = vcmp.eq.f32.partialorder %v8647, 8.507059e+37
    %v8649 = vand.u32 %v8637, 2147483648
    %v8650 = vor.u32 1.1754944e-38, %v8649
    %v8651 = vsel %vm8648, %v8650, %v8646
    %v8652 = vmul.f32 %v8627, %v8651
    %v8653 = vmin.f32 %v8652, 1.0
    %v8654 = vmax.f32 %v8653, -1.0
    %v8655 = vmul.f32 %v1279, %v1279
    %v8656 = vmin.f32 16.0, %v8655
    %v8657 = vmul.f32 %v8656, 2.1237322e-06
    %v8658 = vadd.f32 %v8657, 0.00028619796
    %v8659 = vmul.f32 %v8656, %v8658
    %v8660 = vadd.f32 %v8659, 0.0036580483
    %v8661 = vmul.f32 %v8656, %v8660
    %v8662 = vadd.f32 %v8661, 0.05243302
    %v8663 = vmul.f32 %v8656, %v8662
    %v8664 = vadd.f32 %v8663, 0.18741608
    %v8665 = vmul.f32 %v8656, %v8664
    %v8666 = vadd.f32 %v8665, 1.1283791
    %v8667 = vmul.f32 %v1279, %v8666
    %v8668 = vmul.f32 %v8656, 3.8918573e-05
    %v8669 = vadd.f32 %v8668, 0.001143296
    %v8670 = vmul.f32 %v8656, %v8669
    %v8671 = vadd.f32 %v8670, 0.014752088
    %v8672 = vmul.f32 %v8656, %v8671
    %v8673 = vadd.f32 %v8672, 0.112945676
    %v8674 = vmul.f32 %v8656, %v8673
    %v8675 = vadd.f32 %v8674, 0.4994258
    %v8676 = vmul.f32 %v8656, %v8675
    %v8677 = vadd.f32 %v8676, 1.0
    %v8678 = vrcp.pop %v8677
    %v8679 = vmul.f32 %v8677, %v8678
    %v8680 = vsub.f32 1.0, %v8679
    %v8681 = vmul.f32 %v8678, %v8680
    %v8682 = vadd.f32 %v8678, %v8681
    %vm8683 = vweird.f32 %v8677
    %vm8684 = vweird.f32 %v8678
    %vm8685 = vmor %vm8683, %vm8684
    %v8686 = vsel %vm8685, %v8678, %v8682
    %v8687 = vand.u32 2147483647, %v8677
    %vm8688 = vcmp.eq.f32.partialorder %v8687, 8.507059e+37
    %v8689 = vand.u32 %v8677, 2147483648
    %v8690 = vor.u32 1.1754944e-38, %v8689
    %v8691 = vsel %vm8688, %v8690, %v8686
    %v8692 = vmul.f32 %v8667, %v8691
    %v8693 = vmin.f32 %v8692, 1.0
    %v8694 = vmax.f32 %v8693, -1.0
    %v8695 = vmul.f32 %v1280, %v1280
    %v8696 = vmin.f32 16.0, %v8695
    %v8697 = vmul.f32 %v8696, 2.1237322e-06
    %v8698 = vadd.f32 %v8697, 0.00028619796
    %v8699 = vmul.f32 %v8696, %v8698
    %v8700 = vadd.f32 %v8699, 0.0036580483
    %v8701 = vmul.f32 %v8696, %v8700
    %v8702 = vadd.f32 %v8701, 0.05243302
    %v8703 = vmul.f32 %v8696, %v8702
    %v8704 = vadd.f32 %v8703, 0.18741608
    %v8705 = vmul.f32 %v8696, %v8704
    %v8706 = vadd.f32 %v8705, 1.1283791
    %v8707 = vmul.f32 %v1280, %v8706
    %v8708 = vmul.f32 %v8696, 3.8918573e-05
    %v8709 = vadd.f32 %v8708, 0.001143296
    %v8710 = vmul.f32 %v8696, %v8709
    %v8711 = vadd.f32 %v8710, 0.014752088
    %v8712 = vmul.f32 %v8696, %v8711
    %v8713 = vadd.f32 %v8712, 0.112945676
    %v8714 = vmul.f32 %v8696, %v8713
    %v8715 = vadd.f32 %v8714, 0.4994258
    %v8716 = vmul.f32 %v8696, %v8715
    %v8717 = vadd.f32 %v8716, 1.0
    %v8718 = vrcp.pop %v8717
    %v8719 = vmul.f32 %v8717, %v8718
    %v8720 = vsub.f32 1.0, %v8719
    %v8721 = vmul.f32 %v8718, %v8720
    %v8722 = vadd.f32 %v8718, %v8721
    %vm8723 = vweird.f32 %v8717
    %vm8724 = vweird.f32 %v8718
    %vm8725 = vmor %vm8723, %vm8724
    %v8726 = vsel %vm8725, %v8718, %v8722
    %v8727 = vand.u32 2147483647, %v8717
    %vm8728 = vcmp.eq.f32.partialorder %v8727, 8.507059e+37
    %v8729 = vand.u32 %v8717, 2147483648
    %v8730 = vor.u32 1.1754944e-38, %v8729
    %v8731 = vsel %vm8728, %v8730, %v8726
    %v8732 = vmul.f32 %v8707, %v8731
    %v8733 = vmin.f32 %v8732, 1.0
    %v8734 = vmax.f32 %v8733, -1.0
    %v8735 = vmul.f32 %v1281, %v1281
    %v8736 = vmin.f32 16.0, %v8735
    %v8737 = vmul.f32 %v8736, 2.1237322e-06
    %v8738 = vadd.f32 %v8737, 0.00028619796
    %v8739 = vmul.f32 %v8736, %v8738
    %v8740 = vadd.f32 %v8739, 0.0036580483
    %v8741 = vmul.f32 %v8736, %v8740
    %v8742 = vadd.f32 %v8741, 0.05243302
    %v8743 = vmul.f32 %v8736, %v8742
    %v8744 = vadd.f32 %v8743, 0.18741608
    %v8745 = vmul.f32 %v8736, %v8744
    %v8746 = vadd.f32 %v8745, 1.1283791
    %v8747 = vmul.f32 %v1281, %v8746
    %v8748 = vmul.f32 %v8736, 3.8918573e-05
    %v8749 = vadd.f32 %v8748, 0.001143296
    %v8750 = vmul.f32 %v8736, %v8749
    %v8751 = vadd.f32 %v8750, 0.014752088
    %v8752 = vmul.f32 %v8736, %v8751
    %v8753 = vadd.f32 %v8752, 0.112945676
    %v8754 = vmul.f32 %v8736, %v8753
    %v8755 = vadd.f32 %v8754, 0.4994258
    %v8756 = vmul.f32 %v8736, %v8755
    %v8757 = vadd.f32 %v8756, 1.0
    %v8758 = vrcp.pop %v8757
    %v8759 = vmul.f32 %v8757, %v8758
    %v8760 = vsub.f32 1.0, %v8759
    %v8761 = vmul.f32 %v8758, %v8760
    %v8762 = vadd.f32 %v8758, %v8761
    %vm8763 = vweird.f32 %v8757
    %vm8764 = vweird.f32 %v8758
    %vm8765 = vmor %vm8763, %vm8764
    %v8766 = vsel %vm8765, %v8758, %v8762
    %v8767 = vand.u32 2147483647, %v8757
    %vm8768 = vcmp.eq.f32.partialorder %v8767, 8.507059e+37
    %v8769 = vand.u32 %v8757, 2147483648
    %v8770 = vor.u32 1.1754944e-38, %v8769
    %v8771 = vsel %vm8768, %v8770, %v8766
    %v8772 = vmul.f32 %v8747, %v8771
    %v8773 = vmin.f32 %v8772, 1.0
    %v8774 = vmax.f32 %v8773, -1.0
    %v8775 = vmul.f32 %v1282, %v1282
    %v8776 = vmin.f32 16.0, %v8775
    %v8777 = vmul.f32 %v8776, 2.1237322e-06
    %v8778 = vadd.f32 %v8777, 0.00028619796
    %v8779 = vmul.f32 %v8776, %v8778
    %v8780 = vadd.f32 %v8779, 0.0036580483
    %v8781 = vmul.f32 %v8776, %v8780
    %v8782 = vadd.f32 %v8781, 0.05243302
    %v8783 = vmul.f32 %v8776, %v8782
    %v8784 = vadd.f32 %v8783, 0.18741608
    %v8785 = vmul.f32 %v8776, %v8784
    %v8786 = vadd.f32 %v8785, 1.1283791
    %v8787 = vmul.f32 %v1282, %v8786
    %v8788 = vmul.f32 %v8776, 3.8918573e-05
    %v8789 = vadd.f32 %v8788, 0.001143296
    %v8790 = vmul.f32 %v8776, %v8789
    %v8791 = vadd.f32 %v8790, 0.014752088
    %v8792 = vmul.f32 %v8776, %v8791
    %v8793 = vadd.f32 %v8792, 0.112945676
    %v8794 = vmul.f32 %v8776, %v8793
    %v8795 = vadd.f32 %v8794, 0.4994258
    %v8796 = vmul.f32 %v8776, %v8795
    %v8797 = vadd.f32 %v8796, 1.0
    %v8798 = vrcp.pop %v8797
    %v8799 = vmul.f32 %v8797, %v8798
    %v8800 = vsub.f32 1.0, %v8799
    %v8801 = vmul.f32 %v8798, %v8800
    %v8802 = vadd.f32 %v8798, %v8801
    %vm8803 = vweird.f32 %v8797
    %vm8804 = vweird.f32 %v8798
    %vm8805 = vmor %vm8803, %vm8804
    %v8806 = vsel %vm8805, %v8798, %v8802
    %v8807 = vand.u32 2147483647, %v8797
    %vm8808 = vcmp.eq.f32.partialorder %v8807, 8.507059e+37
    %v8809 = vand.u32 %v8797, 2147483648
    %v8810 = vor.u32 1.1754944e-38, %v8809
    %v8811 = vsel %vm8808, %v8810, %v8806
    %v8812 = vmul.f32 %v8787, %v8811
    %v8813 = vmin.f32 %v8812, 1.0
    %v8814 = vmax.f32 %v8813, -1.0
    %v8815 = vmul.f32 %v1283, %v1283
    %v8816 = vmin.f32 16.0, %v8815
    %v8817 = vmul.f32 %v8816, 2.1237322e-06
    %v8818 = vadd.f32 %v8817, 0.00028619796
    %v8819 = vmul.f32 %v8816, %v8818
    %v8820 = vadd.f32 %v8819, 0.0036580483
    %v8821 = vmul.f32 %v8816, %v8820
    %v8822 = vadd.f32 %v8821, 0.05243302
    %v8823 = vmul.f32 %v8816, %v8822
    %v8824 = vadd.f32 %v8823, 0.18741608
    %v8825 = vmul.f32 %v8816, %v8824
    %v8826 = vadd.f32 %v8825, 1.1283791
    %v8827 = vmul.f32 %v1283, %v8826
    %v8828 = vmul.f32 %v8816, 3.8918573e-05
    %v8829 = vadd.f32 %v8828, 0.001143296
    %v8830 = vmul.f32 %v8816, %v8829
    %v8831 = vadd.f32 %v8830, 0.014752088
    %v8832 = vmul.f32 %v8816, %v8831
    %v8833 = vadd.f32 %v8832, 0.112945676
    %v8834 = vmul.f32 %v8816, %v8833
    %v8835 = vadd.f32 %v8834, 0.4994258
    %v8836 = vmul.f32 %v8816, %v8835
    %v8837 = vadd.f32 %v8836, 1.0
    %v8838 = vrcp.pop %v8837
    %v8839 = vmul.f32 %v8837, %v8838
    %v8840 = vsub.f32 1.0, %v8839
    %v8841 = vmul.f32 %v8838, %v8840
    %v8842 = vadd.f32 %v8838, %v8841
    %vm8843 = vweird.f32 %v8837
    %vm8844 = vweird.f32 %v8838
    %vm8845 = vmor %vm8843, %vm8844
    %v8846 = vsel %vm8845, %v8838, %v8842
    %v8847 = vand.u32 2147483647, %v8837
    %vm8848 = vcmp.eq.f32.partialorder %v8847, 8.507059e+37
    %v8849 = vand.u32 %v8837, 2147483648
    %v8850 = vor.u32 1.1754944e-38, %v8849
    %v8851 = vsel %vm8848, %v8850, %v8846
    %v8852 = vmul.f32 %v8827, %v8851
    %v8853 = vmin.f32 %v8852, 1.0
    %v8854 = vmax.f32 %v8853, -1.0
    %v8855 = vmul.f32 %v1284, %v1284
    %v8856 = vmin.f32 16.0, %v8855
    %v8857 = vmul.f32 %v8856, 2.1237322e-06
    %v8858 = vadd.f32 %v8857, 0.00028619796
    %v8859 = vmul.f32 %v8856, %v8858
    %v8860 = vadd.f32 %v8859, 0.0036580483
    %v8861 = vmul.f32 %v8856, %v8860
    %v8862 = vadd.f32 %v8861, 0.05243302
    %v8863 = vmul.f32 %v8856, %v8862
    %v8864 = vadd.f32 %v8863, 0.18741608
    %v8865 = vmul.f32 %v8856, %v8864
    %v8866 = vadd.f32 %v8865, 1.1283791
    %v8867 = vmul.f32 %v1284, %v8866
    %v8868 = vmul.f32 %v8856, 3.8918573e-05
    %v8869 = vadd.f32 %v8868, 0.001143296
    %v8870 = vmul.f32 %v8856, %v8869
    %v8871 = vadd.f32 %v8870, 0.014752088
    %v8872 = vmul.f32 %v8856, %v8871
    %v8873 = vadd.f32 %v8872, 0.112945676
    %v8874 = vmul.f32 %v8856, %v8873
    %v8875 = vadd.f32 %v8874, 0.4994258
    %v8876 = vmul.f32 %v8856, %v8875
    %v8877 = vadd.f32 %v8876, 1.0
    %v8878 = vrcp.pop %v8877
    %v8879 = vmul.f32 %v8877, %v8878
    %v8880 = vsub.f32 1.0, %v8879
    %v8881 = vmul.f32 %v8878, %v8880
    %v8882 = vadd.f32 %v8878, %v8881
    %vm8883 = vweird.f32 %v8877
    %vm8884 = vweird.f32 %v8878
    %vm8885 = vmor %vm8883, %vm8884
    %v8886 = vsel %vm8885, %v8878, %v8882
    %v8887 = vand.u32 2147483647, %v8877
    %vm8888 = vcmp.eq.f32.partialorder %v8887, 8.507059e+37
    %v8889 = vand.u32 %v8877, 2147483648
    %v8890 = vor.u32 1.1754944e-38, %v8889
    %v8891 = vsel %vm8888, %v8890, %v8886
    %v8892 = vmul.f32 %v8867, %v8891
    %v8893 = vmin.f32 %v8892, 1.0
    %v8894 = vmax.f32 %v8893, -1.0
    %v8895 = vmul.f32 %v1285, %v1285
    %v8896 = vmin.f32 16.0, %v8895
    %v8897 = vmul.f32 %v8896, 2.1237322e-06
    %v8898 = vadd.f32 %v8897, 0.00028619796
    %v8899 = vmul.f32 %v8896, %v8898
    %v8900 = vadd.f32 %v8899, 0.0036580483
    %v8901 = vmul.f32 %v8896, %v8900
    %v8902 = vadd.f32 %v8901, 0.05243302
    %v8903 = vmul.f32 %v8896, %v8902
    %v8904 = vadd.f32 %v8903, 0.18741608
    %v8905 = vmul.f32 %v8896, %v8904
    %v8906 = vadd.f32 %v8905, 1.1283791
    %v8907 = vmul.f32 %v1285, %v8906
    %v8908 = vmul.f32 %v8896, 3.8918573e-05
    %v8909 = vadd.f32 %v8908, 0.001143296
    %v8910 = vmul.f32 %v8896, %v8909
    %v8911 = vadd.f32 %v8910, 0.014752088
    %v8912 = vmul.f32 %v8896, %v8911
    %v8913 = vadd.f32 %v8912, 0.112945676
    %v8914 = vmul.f32 %v8896, %v8913
    %v8915 = vadd.f32 %v8914, 0.4994258
    %v8916 = vmul.f32 %v8896, %v8915
    %v8917 = vadd.f32 %v8916, 1.0
    %v8918 = vrcp.pop %v8917
    %v8919 = vmul.f32 %v8917, %v8918
    %v8920 = vsub.f32 1.0, %v8919
    %v8921 = vmul.f32 %v8918, %v8920
    %v8922 = vadd.f32 %v8918, %v8921
    %vm8923 = vweird.f32 %v8917
    %vm8924 = vweird.f32 %v8918
    %vm8925 = vmor %vm8923, %vm8924
    %v8926 = vsel %vm8925, %v8918, %v8922
    %v8927 = vand.u32 2147483647, %v8917
    %vm8928 = vcmp.eq.f32.partialorder %v8927, 8.507059e+37
    %v8929 = vand.u32 %v8917, 2147483648
    %v8930 = vor.u32 1.1754944e-38, %v8929
    %v8931 = vsel %vm8928, %v8930, %v8926
    %v8932 = vmul.f32 %v8907, %v8931
    %v8933 = vmin.f32 %v8932, 1.0
    %v8934 = vmax.f32 %v8933, -1.0
    %v8935 = vmul.f32 %v1286, %v1286
    %v8936 = vmin.f32 16.0, %v8935
    %v8937 = vmul.f32 %v8936, 2.1237322e-06
    %v8938 = vadd.f32 %v8937, 0.00028619796
    %v8939 = vmul.f32 %v8936, %v8938
    %v8940 = vadd.f32 %v8939, 0.0036580483
    %v8941 = vmul.f32 %v8936, %v8940
    %v8942 = vadd.f32 %v8941, 0.05243302
    %v8943 = vmul.f32 %v8936, %v8942
    %v8944 = vadd.f32 %v8943, 0.18741608
    %v8945 = vmul.f32 %v8936, %v8944
    %v8946 = vadd.f32 %v8945, 1.1283791
    %v8947 = vmul.f32 %v1286, %v8946
    %v8948 = vmul.f32 %v8936, 3.8918573e-05
    %v8949 = vadd.f32 %v8948, 0.001143296
    %v8950 = vmul.f32 %v8936, %v8949
    %v8951 = vadd.f32 %v8950, 0.014752088
    %v8952 = vmul.f32 %v8936, %v8951
    %v8953 = vadd.f32 %v8952, 0.112945676
    %v8954 = vmul.f32 %v8936, %v8953
    %v8955 = vadd.f32 %v8954, 0.4994258
    %v8956 = vmul.f32 %v8936, %v8955
    %v8957 = vadd.f32 %v8956, 1.0
    %v8958 = vrcp.pop %v8957
    %v8959 = vmul.f32 %v8957, %v8958
    %v8960 = vsub.f32 1.0, %v8959
    %v8961 = vmul.f32 %v8958, %v8960
    %v8962 = vadd.f32 %v8958, %v8961
    %vm8963 = vweird.f32 %v8957
    %vm8964 = vweird.f32 %v8958
    %vm8965 = vmor %vm8963, %vm8964
    %v8966 = vsel %vm8965, %v8958, %v8962
    %v8967 = vand.u32 2147483647, %v8957
    %vm8968 = vcmp.eq.f32.partialorder %v8967, 8.507059e+37
    %v8969 = vand.u32 %v8957, 2147483648
    %v8970 = vor.u32 1.1754944e-38, %v8969
    %v8971 = vsel %vm8968, %v8970, %v8966
    %v8972 = vmul.f32 %v8947, %v8971
    %v8973 = vmin.f32 %v8972, 1.0
    %v8974 = vmax.f32 %v8973, -1.0
    %v8975 = vmul.f32 %v1287, %v1287
    %v8976 = vmin.f32 16.0, %v8975
    %v8977 = vmul.f32 %v8976, 2.1237322e-06
    %v8978 = vadd.f32 %v8977, 0.00028619796
    %v8979 = vmul.f32 %v8976, %v8978
    %v8980 = vadd.f32 %v8979, 0.0036580483
    %v8981 = vmul.f32 %v8976, %v8980
    %v8982 = vadd.f32 %v8981, 0.05243302
    %v8983 = vmul.f32 %v8976, %v8982
    %v8984 = vadd.f32 %v8983, 0.18741608
    %v8985 = vmul.f32 %v8976, %v8984
    %v8986 = vadd.f32 %v8985, 1.1283791
    %v8987 = vmul.f32 %v1287, %v8986
    %v8988 = vmul.f32 %v8976, 3.8918573e-05
    %v8989 = vadd.f32 %v8988, 0.001143296
    %v8990 = vmul.f32 %v8976, %v8989
    %v8991 = vadd.f32 %v8990, 0.014752088
    %v8992 = vmul.f32 %v8976, %v8991
    %v8993 = vadd.f32 %v8992, 0.112945676
    %v8994 = vmul.f32 %v8976, %v8993
    %v8995 = vadd.f32 %v8994, 0.4994258
    %v8996 = vmul.f32 %v8976, %v8995
    %v8997 = vadd.f32 %v8996, 1.0
    %v8998 = vrcp.pop %v8997
    %v8999 = vmul.f32 %v8997, %v8998
    %v9000 = vsub.f32 1.0, %v8999
    %v9001 = vmul.f32 %v8998, %v9000
    %v9002 = vadd.f32 %v8998, %v9001
    %vm9003 = vweird.f32 %v8997
    %vm9004 = vweird.f32 %v8998
    %vm9005 = vmor %vm9003, %vm9004
    %v9006 = vsel %vm9005, %v8998, %v9002
    %v9007 = vand.u32 2147483647, %v8997
    %vm9008 = vcmp.eq.f32.partialorder %v9007, 8.507059e+37
    %v9009 = vand.u32 %v8997, 2147483648
    %v9010 = vor.u32 1.1754944e-38, %v9009
    %v9011 = vsel %vm9008, %v9010, %v9006
    %v9012 = vmul.f32 %v8987, %v9011
    %v9013 = vmin.f32 %v9012, 1.0
    %v9014 = vmax.f32 %v9013, -1.0
    %v9015 = vmul.f32 %v1288, %v1288
    %v9016 = vmin.f32 16.0, %v9015
    %v9017 = vmul.f32 %v9016, 2.1237322e-06
    %v9018 = vadd.f32 %v9017, 0.00028619796
    %v9019 = vmul.f32 %v9016, %v9018
    %v9020 = vadd.f32 %v9019, 0.0036580483
    %v9021 = vmul.f32 %v9016, %v9020
    %v9022 = vadd.f32 %v9021, 0.05243302
    %v9023 = vmul.f32 %v9016, %v9022
    %v9024 = vadd.f32 %v9023, 0.18741608
    %v9025 = vmul.f32 %v9016, %v9024
    %v9026 = vadd.f32 %v9025, 1.1283791
    %v9027 = vmul.f32 %v1288, %v9026
    %v9028 = vmul.f32 %v9016, 3.8918573e-05
    %v9029 = vadd.f32 %v9028, 0.001143296
    %v9030 = vmul.f32 %v9016, %v9029
    %v9031 = vadd.f32 %v9030, 0.014752088
    %v9032 = vmul.f32 %v9016, %v9031
    %v9033 = vadd.f32 %v9032, 0.112945676
    %v9034 = vmul.f32 %v9016, %v9033
    %v9035 = vadd.f32 %v9034, 0.4994258
    %v9036 = vmul.f32 %v9016, %v9035
    %v9037 = vadd.f32 %v9036, 1.0
    %v9038 = vrcp.pop %v9037
    %v9039 = vmul.f32 %v9037, %v9038
    %v9040 = vsub.f32 1.0, %v9039
    %v9041 = vmul.f32 %v9038, %v9040
    %v9042 = vadd.f32 %v9038, %v9041
    %vm9043 = vweird.f32 %v9037
    %vm9044 = vweird.f32 %v9038
    %vm9045 = vmor %vm9043, %vm9044
    %v9046 = vsel %vm9045, %v9038, %v9042
    %v9047 = vand.u32 2147483647, %v9037
    %vm9048 = vcmp.eq.f32.partialorder %v9047, 8.507059e+37
    %v9049 = vand.u32 %v9037, 2147483648
    %v9050 = vor.u32 1.1754944e-38, %v9049
    %v9051 = vsel %vm9048, %v9050, %v9046
    %v9052 = vmul.f32 %v9027, %v9051
    %v9053 = vmin.f32 %v9052, 1.0
    %v9054 = vmax.f32 %v9053, -1.0
    %v9055 = vmul.f32 %v1289, %v1289
    %v9056 = vmin.f32 16.0, %v9055
    %v9057 = vmul.f32 %v9056, 2.1237322e-06
    %v9058 = vadd.f32 %v9057, 0.00028619796
    %v9059 = vmul.f32 %v9056, %v9058
    %v9060 = vadd.f32 %v9059, 0.0036580483
    %v9061 = vmul.f32 %v9056, %v9060
    %v9062 = vadd.f32 %v9061, 0.05243302
    %v9063 = vmul.f32 %v9056, %v9062
    %v9064 = vadd.f32 %v9063, 0.18741608
    %v9065 = vmul.f32 %v9056, %v9064
    %v9066 = vadd.f32 %v9065, 1.1283791
    %v9067 = vmul.f32 %v1289, %v9066
    %v9068 = vmul.f32 %v9056, 3.8918573e-05
    %v9069 = vadd.f32 %v9068, 0.001143296
    %v9070 = vmul.f32 %v9056, %v9069
    %v9071 = vadd.f32 %v9070, 0.014752088
    %v9072 = vmul.f32 %v9056, %v9071
    %v9073 = vadd.f32 %v9072, 0.112945676
    %v9074 = vmul.f32 %v9056, %v9073
    %v9075 = vadd.f32 %v9074, 0.4994258
    %v9076 = vmul.f32 %v9056, %v9075
    %v9077 = vadd.f32 %v9076, 1.0
    %v9078 = vrcp.pop %v9077
    %v9079 = vmul.f32 %v9077, %v9078
    %v9080 = vsub.f32 1.0, %v9079
    %v9081 = vmul.f32 %v9078, %v9080
    %v9082 = vadd.f32 %v9078, %v9081
    %vm9083 = vweird.f32 %v9077
    %vm9084 = vweird.f32 %v9078
    %vm9085 = vmor %vm9083, %vm9084
    %v9086 = vsel %vm9085, %v9078, %v9082
    %v9087 = vand.u32 2147483647, %v9077
    %vm9088 = vcmp.eq.f32.partialorder %v9087, 8.507059e+37
    %v9089 = vand.u32 %v9077, 2147483648
    %v9090 = vor.u32 1.1754944e-38, %v9089
    %v9091 = vsel %vm9088, %v9090, %v9086
    %v9092 = vmul.f32 %v9067, %v9091
    %v9093 = vmin.f32 %v9092, 1.0
    %v9094 = vmax.f32 %v9093, -1.0
    %v9095 = vmul.f32 %v1290, %v1290
    %v9096 = vmin.f32 16.0, %v9095
    %v9097 = vmul.f32 %v9096, 2.1237322e-06
    %v9098 = vadd.f32 %v9097, 0.00028619796
    %v9099 = vmul.f32 %v9096, %v9098
    %v9100 = vadd.f32 %v9099, 0.0036580483
    %v9101 = vmul.f32 %v9096, %v9100
    %v9102 = vadd.f32 %v9101, 0.05243302
    %v9103 = vmul.f32 %v9096, %v9102
    %v9104 = vadd.f32 %v9103, 0.18741608
    %v9105 = vmul.f32 %v9096, %v9104
    %v9106 = vadd.f32 %v9105, 1.1283791
    %v9107 = vmul.f32 %v1290, %v9106
    %v9108 = vmul.f32 %v9096, 3.8918573e-05
    %v9109 = vadd.f32 %v9108, 0.001143296
    %v9110 = vmul.f32 %v9096, %v9109
    %v9111 = vadd.f32 %v9110, 0.014752088
    %v9112 = vmul.f32 %v9096, %v9111
    %v9113 = vadd.f32 %v9112, 0.112945676
    %v9114 = vmul.f32 %v9096, %v9113
    %v9115 = vadd.f32 %v9114, 0.4994258
    %v9116 = vmul.f32 %v9096, %v9115
    %v9117 = vadd.f32 %v9116, 1.0
    %v9118 = vrcp.pop %v9117
    %v9119 = vmul.f32 %v9117, %v9118
    %v9120 = vsub.f32 1.0, %v9119
    %v9121 = vmul.f32 %v9118, %v9120
    %v9122 = vadd.f32 %v9118, %v9121
    %vm9123 = vweird.f32 %v9117
    %vm9124 = vweird.f32 %v9118
    %vm9125 = vmor %vm9123, %vm9124
    %v9126 = vsel %vm9125, %v9118, %v9122
    %v9127 = vand.u32 2147483647, %v9117
    %vm9128 = vcmp.eq.f32.partialorder %v9127, 8.507059e+37
    %v9129 = vand.u32 %v9117, 2147483648
    %v9130 = vor.u32 1.1754944e-38, %v9129
    %v9131 = vsel %vm9128, %v9130, %v9126
    %v9132 = vmul.f32 %v9107, %v9131
    %v9133 = vmin.f32 %v9132, 1.0
    %v9134 = vmax.f32 %v9133, -1.0
    %v9135 = vmul.f32 %v1291, %v1291
    %v9136 = vmin.f32 16.0, %v9135
    %v9137 = vmul.f32 %v9136, 2.1237322e-06
    %v9138 = vadd.f32 %v9137, 0.00028619796
    %v9139 = vmul.f32 %v9136, %v9138
    %v9140 = vadd.f32 %v9139, 0.0036580483
    %v9141 = vmul.f32 %v9136, %v9140
    %v9142 = vadd.f32 %v9141, 0.05243302
    %v9143 = vmul.f32 %v9136, %v9142
    %v9144 = vadd.f32 %v9143, 0.18741608
    %v9145 = vmul.f32 %v9136, %v9144
    %v9146 = vadd.f32 %v9145, 1.1283791
    %v9147 = vmul.f32 %v1291, %v9146
    %v9148 = vmul.f32 %v9136, 3.8918573e-05
    %v9149 = vadd.f32 %v9148, 0.001143296
    %v9150 = vmul.f32 %v9136, %v9149
    %v9151 = vadd.f32 %v9150, 0.014752088
    %v9152 = vmul.f32 %v9136, %v9151
    %v9153 = vadd.f32 %v9152, 0.112945676
    %v9154 = vmul.f32 %v9136, %v9153
    %v9155 = vadd.f32 %v9154, 0.4994258
    %v9156 = vmul.f32 %v9136, %v9155
    %v9157 = vadd.f32 %v9156, 1.0
    %v9158 = vrcp.pop %v9157
    %v9159 = vmul.f32 %v9157, %v9158
    %v9160 = vsub.f32 1.0, %v9159
    %v9161 = vmul.f32 %v9158, %v9160
    %v9162 = vadd.f32 %v9158, %v9161
    %vm9163 = vweird.f32 %v9157
    %vm9164 = vweird.f32 %v9158
    %vm9165 = vmor %vm9163, %vm9164
    %v9166 = vsel %vm9165, %v9158, %v9162
    %v9167 = vand.u32 2147483647, %v9157
    %vm9168 = vcmp.eq.f32.partialorder %v9167, 8.507059e+37
    %v9169 = vand.u32 %v9157, 2147483648
    %v9170 = vor.u32 1.1754944e-38, %v9169
    %v9171 = vsel %vm9168, %v9170, %v9166
    %v9172 = vmul.f32 %v9147, %v9171
    %v9173 = vmin.f32 %v9172, 1.0
    %v9174 = vmax.f32 %v9173, -1.0
    %v9175 = vmul.f32 %v1292, %v1292
    %v9176 = vmin.f32 16.0, %v9175
    %v9177 = vmul.f32 %v9176, 2.1237322e-06
    %v9178 = vadd.f32 %v9177, 0.00028619796
    %v9179 = vmul.f32 %v9176, %v9178
    %v9180 = vadd.f32 %v9179, 0.0036580483
    %v9181 = vmul.f32 %v9176, %v9180
    %v9182 = vadd.f32 %v9181, 0.05243302
    %v9183 = vmul.f32 %v9176, %v9182
    %v9184 = vadd.f32 %v9183, 0.18741608
    %v9185 = vmul.f32 %v9176, %v9184
    %v9186 = vadd.f32 %v9185, 1.1283791
    %v9187 = vmul.f32 %v1292, %v9186
    %v9188 = vmul.f32 %v9176, 3.8918573e-05
    %v9189 = vadd.f32 %v9188, 0.001143296
    %v9190 = vmul.f32 %v9176, %v9189
    %v9191 = vadd.f32 %v9190, 0.014752088
    %v9192 = vmul.f32 %v9176, %v9191
    %v9193 = vadd.f32 %v9192, 0.112945676
    %v9194 = vmul.f32 %v9176, %v9193
    %v9195 = vadd.f32 %v9194, 0.4994258
    %v9196 = vmul.f32 %v9176, %v9195
    %v9197 = vadd.f32 %v9196, 1.0
    %v9198 = vrcp.pop %v9197
    %v9199 = vmul.f32 %v9197, %v9198
    %v9200 = vsub.f32 1.0, %v9199
    %v9201 = vmul.f32 %v9198, %v9200
    %v9202 = vadd.f32 %v9198, %v9201
    %vm9203 = vweird.f32 %v9197
    %vm9204 = vweird.f32 %v9198
    %vm9205 = vmor %vm9203, %vm9204
    %v9206 = vsel %vm9205, %v9198, %v9202
    %v9207 = vand.u32 2147483647, %v9197
    %vm9208 = vcmp.eq.f32.partialorder %v9207, 8.507059e+37
    %v9209 = vand.u32 %v9197, 2147483648
    %v9210 = vor.u32 1.1754944e-38, %v9209
    %v9211 = vsel %vm9208, %v9210, %v9206
    %v9212 = vmul.f32 %v9187, %v9211
    %v9213 = vmin.f32 %v9212, 1.0
    %v9214 = vmax.f32 %v9213, -1.0
    %v9215 = vmul.f32 %v1293, %v1293
    %v9216 = vmin.f32 16.0, %v9215
    %v9217 = vmul.f32 %v9216, 2.1237322e-06
    %v9218 = vadd.f32 %v9217, 0.00028619796
    %v9219 = vmul.f32 %v9216, %v9218
    %v9220 = vadd.f32 %v9219, 0.0036580483
    %v9221 = vmul.f32 %v9216, %v9220
    %v9222 = vadd.f32 %v9221, 0.05243302
    %v9223 = vmul.f32 %v9216, %v9222
    %v9224 = vadd.f32 %v9223, 0.18741608
    %v9225 = vmul.f32 %v9216, %v9224
    %v9226 = vadd.f32 %v9225, 1.1283791
    %v9227 = vmul.f32 %v1293, %v9226
    %v9228 = vmul.f32 %v9216, 3.8918573e-05
    %v9229 = vadd.f32 %v9228, 0.001143296
    %v9230 = vmul.f32 %v9216, %v9229
    %v9231 = vadd.f32 %v9230, 0.014752088
    %v9232 = vmul.f32 %v9216, %v9231
    %v9233 = vadd.f32 %v9232, 0.112945676
    %v9234 = vmul.f32 %v9216, %v9233
    %v9235 = vadd.f32 %v9234, 0.4994258
    %v9236 = vmul.f32 %v9216, %v9235
    %v9237 = vadd.f32 %v9236, 1.0
    %v9238 = vrcp.pop %v9237
    %v9239 = vmul.f32 %v9237, %v9238
    %v9240 = vsub.f32 1.0, %v9239
    %v9241 = vmul.f32 %v9238, %v9240
    %v9242 = vadd.f32 %v9238, %v9241
    %vm9243 = vweird.f32 %v9237
    %vm9244 = vweird.f32 %v9238
    %vm9245 = vmor %vm9243, %vm9244
    %v9246 = vsel %vm9245, %v9238, %v9242
    %v9247 = vand.u32 2147483647, %v9237
    %vm9248 = vcmp.eq.f32.partialorder %v9247, 8.507059e+37
    %v9249 = vand.u32 %v9237, 2147483648
    %v9250 = vor.u32 1.1754944e-38, %v9249
    %v9251 = vsel %vm9248, %v9250, %v9246
    %v9252 = vmul.f32 %v9227, %v9251
    %v9253 = vmin.f32 %v9252, 1.0
    %v9254 = vmax.f32 %v9253, -1.0
    %v9255 = vmul.f32 %v1294, %v1294
    %v9256 = vmin.f32 16.0, %v9255
    %v9257 = vmul.f32 %v9256, 2.1237322e-06
    %v9258 = vadd.f32 %v9257, 0.00028619796
    %v9259 = vmul.f32 %v9256, %v9258
    %v9260 = vadd.f32 %v9259, 0.0036580483
    %v9261 = vmul.f32 %v9256, %v9260
    %v9262 = vadd.f32 %v9261, 0.05243302
    %v9263 = vmul.f32 %v9256, %v9262
    %v9264 = vadd.f32 %v9263, 0.18741608
    %v9265 = vmul.f32 %v9256, %v9264
    %v9266 = vadd.f32 %v9265, 1.1283791
    %v9267 = vmul.f32 %v1294, %v9266
    %v9268 = vmul.f32 %v9256, 3.8918573e-05
    %v9269 = vadd.f32 %v9268, 0.001143296
    %v9270 = vmul.f32 %v9256, %v9269
    %v9271 = vadd.f32 %v9270, 0.014752088
    %v9272 = vmul.f32 %v9256, %v9271
    %v9273 = vadd.f32 %v9272, 0.112945676
    %v9274 = vmul.f32 %v9256, %v9273
    %v9275 = vadd.f32 %v9274, 0.4994258
    %v9276 = vmul.f32 %v9256, %v9275
    %v9277 = vadd.f32 %v9276, 1.0
    %v9278 = vrcp.pop %v9277
    %v9279 = vmul.f32 %v9277, %v9278
    %v9280 = vsub.f32 1.0, %v9279
    %v9281 = vmul.f32 %v9278, %v9280
    %v9282 = vadd.f32 %v9278, %v9281
    %vm9283 = vweird.f32 %v9277
    %vm9284 = vweird.f32 %v9278
    %vm9285 = vmor %vm9283, %vm9284
    %v9286 = vsel %vm9285, %v9278, %v9282
    %v9287 = vand.u32 2147483647, %v9277
    %vm9288 = vcmp.eq.f32.partialorder %v9287, 8.507059e+37
    %v9289 = vand.u32 %v9277, 2147483648
    %v9290 = vor.u32 1.1754944e-38, %v9289
    %v9291 = vsel %vm9288, %v9290, %v9286
    %v9292 = vmul.f32 %v9267, %v9291
    %v9293 = vmin.f32 %v9292, 1.0
    %v9294 = vmax.f32 %v9293, -1.0
    %v9295 = vadd.f32 %v1334, 1.0
    %v9296 = vadd.f32 %v1374, 1.0
    %v9297 = vadd.f32 %v1414, 1.0
    %v9298 = vadd.f32 %v1454, 1.0
    %v9299 = vadd.f32 %v1494, 1.0
    %v9300 = vadd.f32 %v1534, 1.0
    %v9301 = vadd.f32 %v1574, 1.0
    %v9302 = vadd.f32 %v1614, 1.0
    %v9303 = vadd.f32 %v1654, 1.0
    %v9304 = vadd.f32 %v1694, 1.0
    %v9305 = vadd.f32 %v1734, 1.0
    %v9306 = vadd.f32 %v1774, 1.0
    %v9307 = vadd.f32 %v1814, 1.0
    %v9308 = vadd.f32 %v1854, 1.0
    %v9309 = vadd.f32 %v1894, 1.0
    %v9310 = vadd.f32 %v1934, 1.0
    %v9311 = vadd.f32 %v1974, 1.0
    %v9312 = vadd.f32 %v2014, 1.0
    %v9313 = vadd.f32 %v2054, 1.0
    %v9314 = vadd.f32 %v2094, 1.0
    %v9315 = vadd.f32 %v2134, 1.0
    %v9316 = vadd.f32 %v2174, 1.0
    %v9317 = vadd.f32 %v2214, 1.0
    %v9318 = vadd.f32 %v2254, 1.0
    %v9319 = vadd.f32 %v2294, 1.0
    %v9320 = vadd.f32 %v2334, 1.0
    %v9321 = vadd.f32 %v2374, 1.0
    %v9322 = vadd.f32 %v2414, 1.0
    %v9323 = vadd.f32 %v2454, 1.0
    %v9324 = vadd.f32 %v2494, 1.0
    %v9325 = vadd.f32 %v2534, 1.0
    %v9326 = vadd.f32 %v2574, 1.0
    %v9327 = vadd.f32 %v2614, 1.0
    %v9328 = vadd.f32 %v2654, 1.0
    %v9329 = vadd.f32 %v2694, 1.0
    %v9330 = vadd.f32 %v2734, 1.0
    %v9331 = vadd.f32 %v2774, 1.0
    %v9332 = vadd.f32 %v2814, 1.0
    %v9333 = vadd.f32 %v2854, 1.0
    %v9334 = vadd.f32 %v2894, 1.0
    %v9335 = vadd.f32 %v2934, 1.0
    %v9336 = vadd.f32 %v2974, 1.0
    %v9337 = vadd.f32 %v3014, 1.0
    %v9338 = vadd.f32 %v3054, 1.0
    %v9339 = vadd.f32 %v3094, 1.0
    %v9340 = vadd.f32 %v3134, 1.0
    %v9341 = vadd.f32 %v3174, 1.0
    %v9342 = vadd.f32 %v3214, 1.0
    %v9343 = vadd.f32 %v3254, 1.0
    %v9344 = vadd.f32 %v3294, 1.0
    %v9345 = vadd.f32 %v3334, 1.0
    %v9346 = vadd.f32 %v3374, 1.0
    %v9347 = vadd.f32 %v3414, 1.0
    %v9348 = vadd.f32 %v3454, 1.0
    %v9349 = vadd.f32 %v3494, 1.0
    %v9350 = vadd.f32 %v3534, 1.0
    %v9351 = vadd.f32 %v3574, 1.0
    %v9352 = vadd.f32 %v3614, 1.0
    %v9353 = vadd.f32 %v3654, 1.0
    %v9354 = vadd.f32 %v3694, 1.0
    %v9355 = vadd.f32 %v3734, 1.0
    %v9356 = vadd.f32 %v3774, 1.0
    %v9357 = vadd.f32 %v3814, 1.0
    %v9358 = vadd.f32 %v3854, 1.0
    %v9359 = vadd.f32 %v3894, 1.0
    %v9360 = vadd.f32 %v3934, 1.0
    %v9361 = vadd.f32 %v3974, 1.0
    %v9362 = vadd.f32 %v4014, 1.0
    %v9363 = vadd.f32 %v4054, 1.0
    %v9364 = vadd.f32 %v4094, 1.0
    %v9365 = vadd.f32 %v4134, 1.0
    %v9366 = vadd.f32 %v4174, 1.0
    %v9367 = vadd.f32 %v4214, 1.0
    %v9368 = vadd.f32 %v4254, 1.0
    %v9369 = vadd.f32 %v4294, 1.0
    %v9370 = vadd.f32 %v4334, 1.0
    %v9371 = vadd.f32 %v4374, 1.0
    %v9372 = vadd.f32 %v4414, 1.0
    %v9373 = vadd.f32 %v4454, 1.0
    %v9374 = vadd.f32 %v4494, 1.0
    %v9375 = vadd.f32 %v4534, 1.0
    %v9376 = vadd.f32 %v4574, 1.0
    %v9377 = vadd.f32 %v4614, 1.0
    %v9378 = vadd.f32 %v4654, 1.0
    %v9379 = vadd.f32 %v4694, 1.0
    %v9380 = vadd.f32 %v4734, 1.0
    %v9381 = vadd.f32 %v4774, 1.0
    %v9382 = vadd.f32 %v4814, 1.0
    %v9383 = vadd.f32 %v4854, 1.0
    %v9384 = vadd.f32 %v4894, 1.0
    %v9385 = vadd.f32 %v4934, 1.0
    %v9386 = vadd.f32 %v4974, 1.0
    %v9387 = vadd.f32 %v5014, 1.0
    %v9388 = vadd.f32 %v5054, 1.0
    %v9389 = vadd.f32 %v5094, 1.0
    %v9390 = vadd.f32 %v5134, 1.0
    %v9391 = vadd.f32 %v5174, 1.0
    %v9392 = vadd.f32 %v5214, 1.0
    %v9393 = vadd.f32 %v5254, 1.0
    %v9394 = vadd.f32 %v5294, 1.0
    %v9395 = vadd.f32 %v5334, 1.0
    %v9396 = vadd.f32 %v5374, 1.0
    %v9397 = vadd.f32 %v5414, 1.0
    %v9398 = vadd.f32 %v5454, 1.0
    %v9399 = vadd.f32 %v5494, 1.0
    %v9400 = vadd.f32 %v5534, 1.0
    %v9401 = vadd.f32 %v5574, 1.0
    %v9402 = vadd.f32 %v5614, 1.0
    %v9403 = vadd.f32 %v5654, 1.0
    %v9404 = vadd.f32 %v5694, 1.0
    %v9405 = vadd.f32 %v5734, 1.0
    %v9406 = vadd.f32 %v5774, 1.0
    %v9407 = vadd.f32 %v5814, 1.0
    %v9408 = vadd.f32 %v5854, 1.0
    %v9409 = vadd.f32 %v5894, 1.0
    %v9410 = vadd.f32 %v5934, 1.0
    %v9411 = vadd.f32 %v5974, 1.0
    %v9412 = vadd.f32 %v6014, 1.0
    %v9413 = vadd.f32 %v6054, 1.0
    %v9414 = vadd.f32 %v6094, 1.0
    %v9415 = vadd.f32 %v6134, 1.0
    %v9416 = vadd.f32 %v6174, 1.0
    %v9417 = vadd.f32 %v6214, 1.0
    %v9418 = vadd.f32 %v6254, 1.0
    %v9419 = vadd.f32 %v6294, 1.0
    %v9420 = vadd.f32 %v6334, 1.0
    %v9421 = vadd.f32 %v6374, 1.0
    %v9422 = vadd.f32 %v6414, 1.0
    %v9423 = vadd.f32 %v6454, 1.0
    %v9424 = vadd.f32 %v6494, 1.0
    %v9425 = vadd.f32 %v6534, 1.0
    %v9426 = vadd.f32 %v6574, 1.0
    %v9427 = vadd.f32 %v6614, 1.0
    %v9428 = vadd.f32 %v6654, 1.0
    %v9429 = vadd.f32 %v6694, 1.0
    %v9430 = vadd.f32 %v6734, 1.0
    %v9431 = vadd.f32 %v6774, 1.0
    %v9432 = vadd.f32 %v6814, 1.0
    %v9433 = vadd.f32 %v6854, 1.0
    %v9434 = vadd.f32 %v6894, 1.0
    %v9435 = vadd.f32 %v6934, 1.0
    %v9436 = vadd.f32 %v6974, 1.0
    %v9437 = vadd.f32 %v7014, 1.0
    %v9438 = vadd.f32 %v7054, 1.0
    %v9439 = vadd.f32 %v7094, 1.0
    %v9440 = vadd.f32 %v7134, 1.0
    %v9441 = vadd.f32 %v7174, 1.0
    %v9442 = vadd.f32 %v7214, 1.0
    %v9443 = vadd.f32 %v7254, 1.0
    %v9444 = vadd.f32 %v7294, 1.0
    %v9445 = vadd.f32 %v7334, 1.0
    %v9446 = vadd.f32 %v7374, 1.0
    %v9447 = vadd.f32 %v7414, 1.0
    %v9448 = vadd.f32 %v7454, 1.0
    %v9449 = vadd.f32 %v7494, 1.0
    %v9450 = vadd.f32 %v7534, 1.0
    %v9451 = vadd.f32 %v7574, 1.0
    %v9452 = vadd.f32 %v7614, 1.0
    %v9453 = vadd.f32 %v7654, 1.0
    %v9454 = vadd.f32 %v7694, 1.0
    %v9455 = vadd.f32 %v7734, 1.0
    %v9456 = vadd.f32 %v7774, 1.0
    %v9457 = vadd.f32 %v7814, 1.0
    %v9458 = vadd.f32 %v7854, 1.0
    %v9459 = vadd.f32 %v7894, 1.0
    %v9460 = vadd.f32 %v7934, 1.0
    %v9461 = vadd.f32 %v7974, 1.0
    %v9462 = vadd.f32 %v8014, 1.0
    %v9463 = vadd.f32 %v8054, 1.0
    %v9464 = vadd.f32 %v8094, 1.0
    %v9465 = vadd.f32 %v8134, 1.0
    %v9466 = vadd.f32 %v8174, 1.0
    %v9467 = vadd.f32 %v8214, 1.0
    %v9468 = vadd.f32 %v8254, 1.0
    %v9469 = vadd.f32 %v8294, 1.0
    %v9470 = vadd.f32 %v8334, 1.0
    %v9471 = vadd.f32 %v8374, 1.0
    %v9472 = vadd.f32 %v8414, 1.0
    %v9473 = vadd.f32 %v8454, 1.0
    %v9474 = vadd.f32 %v8494, 1.0
    %v9475 = vadd.f32 %v8534, 1.0
    %v9476 = vadd.f32 %v8574, 1.0
    %v9477 = vadd.f32 %v8614, 1.0
    %v9478 = vadd.f32 %v8654, 1.0
    %v9479 = vadd.f32 %v8694, 1.0
    %v9480 = vadd.f32 %v8734, 1.0
    %v9481 = vadd.f32 %v8774, 1.0
    %v9482 = vadd.f32 %v8814, 1.0
    %v9483 = vadd.f32 %v8854, 1.0
    %v9484 = vadd.f32 %v8894, 1.0
    %v9485 = vadd.f32 %v8934, 1.0
    %v9486 = vadd.f32 %v8974, 1.0
    %v9487 = vadd.f32 %v9014, 1.0
    %v9488 = vadd.f32 %v9054, 1.0
    %v9489 = vadd.f32 %v9094, 1.0
    %v9490 = vadd.f32 %v9134, 1.0
    %v9491 = vadd.f32 %v9174, 1.0
    %v9492 = vadd.f32 %v9214, 1.0
    %v9493 = vadd.f32 %v9254, 1.0
    %v9494 = vadd.f32 %v9294, 1.0
    %v9495 = vmul.f32 %v895, %v9295
    %v9496 = vmul.f32 %v896, %v9296
    %v9497 = vmul.f32 %v897, %v9297
    %v9498 = vmul.f32 %v898, %v9298
    %v9499 = vmul.f32 %v899, %v9299
    %v9500 = vmul.f32 %v900, %v9300
    %v9501 = vmul.f32 %v901, %v9301
    %v9502 = vmul.f32 %v902, %v9302
    %v9503 = vmul.f32 %v903, %v9303
    %v9504 = vmul.f32 %v904, %v9304
    %v9505 = vmul.f32 %v905, %v9305
    %v9506 = vmul.f32 %v906, %v9306
    %v9507 = vmul.f32 %v907, %v9307
    %v9508 = vmul.f32 %v908, %v9308
    %v9509 = vmul.f32 %v909, %v9309
    %v9510 = vmul.f32 %v910, %v9310
    %v9511 = vmul.f32 %v911, %v9311
    %v9512 = vmul.f32 %v912, %v9312
    %v9513 = vmul.f32 %v913, %v9313
    %v9514 = vmul.f32 %v914, %v9314
    %v9515 = vmul.f32 %v915, %v9315
    %v9516 = vmul.f32 %v916, %v9316
    %v9517 = vmul.f32 %v917, %v9317
    %v9518 = vmul.f32 %v918, %v9318
    %v9519 = vmul.f32 %v919, %v9319
    %v9520 = vmul.f32 %v920, %v9320
    %v9521 = vmul.f32 %v921, %v9321
    %v9522 = vmul.f32 %v922, %v9322
    %v9523 = vmul.f32 %v923, %v9323
    %v9524 = vmul.f32 %v924, %v9324
    %v9525 = vmul.f32 %v925, %v9325
    %v9526 = vmul.f32 %v926, %v9326
    %v9527 = vmul.f32 %v927, %v9327
    %v9528 = vmul.f32 %v928, %v9328
    %v9529 = vmul.f32 %v929, %v9329
    %v9530 = vmul.f32 %v930, %v9330
    %v9531 = vmul.f32 %v931, %v9331
    %v9532 = vmul.f32 %v932, %v9332
    %v9533 = vmul.f32 %v933, %v9333
    %v9534 = vmul.f32 %v934, %v9334
    %v9535 = vmul.f32 %v935, %v9335
    %v9536 = vmul.f32 %v936, %v9336
    %v9537 = vmul.f32 %v937, %v9337
    %v9538 = vmul.f32 %v938, %v9338
    %v9539 = vmul.f32 %v939, %v9339
    %v9540 = vmul.f32 %v940, %v9340
    %v9541 = vmul.f32 %v941, %v9341
    %v9542 = vmul.f32 %v942, %v9342
    %v9543 = vmul.f32 %v943, %v9343
    %v9544 = vmul.f32 %v944, %v9344
    %v9545 = vmul.f32 %v945, %v9345
    %v9546 = vmul.f32 %v946, %v9346
    %v9547 = vmul.f32 %v947, %v9347
    %v9548 = vmul.f32 %v948, %v9348
    %v9549 = vmul.f32 %v949, %v9349
    %v9550 = vmul.f32 %v950, %v9350
    %v9551 = vmul.f32 %v951, %v9351
    %v9552 = vmul.f32 %v952, %v9352
    %v9553 = vmul.f32 %v953, %v9353
    %v9554 = vmul.f32 %v954, %v9354
    %v9555 = vmul.f32 %v955, %v9355
    %v9556 = vmul.f32 %v956, %v9356
    %v9557 = vmul.f32 %v957, %v9357
    %v9558 = vmul.f32 %v958, %v9358
    %v9559 = vmul.f32 %v959, %v9359
    %v9560 = vmul.f32 %v960, %v9360
    %v9561 = vmul.f32 %v961, %v9361
    %v9562 = vmul.f32 %v962, %v9362
    %v9563 = vmul.f32 %v963, %v9363
    %v9564 = vmul.f32 %v964, %v9364
    %v9565 = vmul.f32 %v965, %v9365
    %v9566 = vmul.f32 %v966, %v9366
    %v9567 = vmul.f32 %v967, %v9367
    %v9568 = vmul.f32 %v968, %v9368
    %v9569 = vmul.f32 %v969, %v9369
    %v9570 = vmul.f32 %v970, %v9370
    %v9571 = vmul.f32 %v971, %v9371
    %v9572 = vmul.f32 %v972, %v9372
    %v9573 = vmul.f32 %v973, %v9373
    %v9574 = vmul.f32 %v974, %v9374
    %v9575 = vmul.f32 %v975, %v9375
    %v9576 = vmul.f32 %v976, %v9376
    %v9577 = vmul.f32 %v977, %v9377
    %v9578 = vmul.f32 %v978, %v9378
    %v9579 = vmul.f32 %v979, %v9379
    %v9580 = vmul.f32 %v980, %v9380
    %v9581 = vmul.f32 %v981, %v9381
    %v9582 = vmul.f32 %v982, %v9382
    %v9583 = vmul.f32 %v983, %v9383
    %v9584 = vmul.f32 %v984, %v9384
    %v9585 = vmul.f32 %v985, %v9385
    %v9586 = vmul.f32 %v986, %v9386
    %v9587 = vmul.f32 %v987, %v9387
    %v9588 = vmul.f32 %v988, %v9388
    %v9589 = vmul.f32 %v989, %v9389
    %v9590 = vmul.f32 %v990, %v9390
    %v9591 = vmul.f32 %v991, %v9391
    %v9592 = vmul.f32 %v992, %v9392
    %v9593 = vmul.f32 %v993, %v9393
    %v9594 = vmul.f32 %v994, %v9394
    %v9595 = vmul.f32 %v995, %v9395
    %v9596 = vmul.f32 %v996, %v9396
    %v9597 = vmul.f32 %v997, %v9397
    %v9598 = vmul.f32 %v998, %v9398
    %v9599 = vmul.f32 %v999, %v9399
    %v9600 = vmul.f32 %v1000, %v9400
    %v9601 = vmul.f32 %v1001, %v9401
    %v9602 = vmul.f32 %v1002, %v9402
    %v9603 = vmul.f32 %v1003, %v9403
    %v9604 = vmul.f32 %v1004, %v9404
    %v9605 = vmul.f32 %v1005, %v9405
    %v9606 = vmul.f32 %v1006, %v9406
    %v9607 = vmul.f32 %v1007, %v9407
    %v9608 = vmul.f32 %v1008, %v9408
    %v9609 = vmul.f32 %v1009, %v9409
    %v9610 = vmul.f32 %v1010, %v9410
    %v9611 = vmul.f32 %v1011, %v9411
    %v9612 = vmul.f32 %v1012, %v9412
    %v9613 = vmul.f32 %v1013, %v9413
    %v9614 = vmul.f32 %v1014, %v9414
    %v9615 = vmul.f32 %v1015, %v9415
    %v9616 = vmul.f32 %v1016, %v9416
    %v9617 = vmul.f32 %v1017, %v9417
    %v9618 = vmul.f32 %v1018, %v9418
    %v9619 = vmul.f32 %v1019, %v9419
    %v9620 = vmul.f32 %v1020, %v9420
    %v9621 = vmul.f32 %v1021, %v9421
    %v9622 = vmul.f32 %v1022, %v9422
    %v9623 = vmul.f32 %v1023, %v9423
    %v9624 = vmul.f32 %v1024, %v9424
    %v9625 = vmul.f32 %v1025, %v9425
    %v9626 = vmul.f32 %v1026, %v9426
    %v9627 = vmul.f32 %v1027, %v9427
    %v9628 = vmul.f32 %v1028, %v9428
    %v9629 = vmul.f32 %v1029, %v9429
    %v9630 = vmul.f32 %v1030, %v9430
    %v9631 = vmul.f32 %v1031, %v9431
    %v9632 = vmul.f32 %v1032, %v9432
    %v9633 = vmul.f32 %v1033, %v9433
    %v9634 = vmul.f32 %v1034, %v9434
    %v9635 = vmul.f32 %v1035, %v9435
    %v9636 = vmul.f32 %v1036, %v9436
    %v9637 = vmul.f32 %v1037, %v9437
    %v9638 = vmul.f32 %v1038, %v9438
    %v9639 = vmul.f32 %v1039, %v9439
    %v9640 = vmul.f32 %v1040, %v9440
    %v9641 = vmul.f32 %v1041, %v9441
    %v9642 = vmul.f32 %v1042, %v9442
    %v9643 = vmul.f32 %v1043, %v9443
    %v9644 = vmul.f32 %v1044, %v9444
    %v9645 = vmul.f32 %v1045, %v9445
    %v9646 = vmul.f32 %v1046, %v9446
    %v9647 = vmul.f32 %v1047, %v9447
    %v9648 = vmul.f32 %v1048, %v9448
    %v9649 = vmul.f32 %v1049, %v9449
    %v9650 = vmul.f32 %v1050, %v9450
    %v9651 = vmul.f32 %v1051, %v9451
    %v9652 = vmul.f32 %v1052, %v9452
    %v9653 = vmul.f32 %v1053, %v9453
    %v9654 = vmul.f32 %v1054, %v9454
    %v9655 = vmul.f32 %v1055, %v9455
    %v9656 = vmul.f32 %v1056, %v9456
    %v9657 = vmul.f32 %v1057, %v9457
    %v9658 = vmul.f32 %v1058, %v9458
    %v9659 = vmul.f32 %v1059, %v9459
    %v9660 = vmul.f32 %v1060, %v9460
    %v9661 = vmul.f32 %v1061, %v9461
    %v9662 = vmul.f32 %v1062, %v9462
    %v9663 = vmul.f32 %v1063, %v9463
    %v9664 = vmul.f32 %v1064, %v9464
    %v9665 = vmul.f32 %v1065, %v9465
    %v9666 = vmul.f32 %v1066, %v9466
    %v9667 = vmul.f32 %v1067, %v9467
    %v9668 = vmul.f32 %v1068, %v9468
    %v9669 = vmul.f32 %v1069, %v9469
    %v9670 = vmul.f32 %v1070, %v9470
    %v9671 = vmul.f32 %v1071, %v9471
    %v9672 = vmul.f32 %v1072, %v9472
    %v9673 = vmul.f32 %v1073, %v9473
    %v9674 = vmul.f32 %v1074, %v9474
    %v9675 = vmul.f32 %v1075, %v9475
    %v9676 = vmul.f32 %v1076, %v9476
    %v9677 = vmul.f32 %v1077, %v9477
    %v9678 = vmul.f32 %v1078, %v9478
    %v9679 = vmul.f32 %v1079, %v9479
    %v9680 = vmul.f32 %v1080, %v9480
    %v9681 = vmul.f32 %v1081, %v9481
    %v9682 = vmul.f32 %v1082, %v9482
    %v9683 = vmul.f32 %v1083, %v9483
    %v9684 = vmul.f32 %v1084, %v9484
    %v9685 = vmul.f32 %v1085, %v9485
    %v9686 = vmul.f32 %v1086, %v9486
    %v9687 = vmul.f32 %v1087, %v9487
    %v9688 = vmul.f32 %v1088, %v9488
    %v9689 = vmul.f32 %v1089, %v9489
    %v9690 = vmul.f32 %v1090, %v9490
    %v9691 = vmul.f32 %v1091, %v9491
    %v9692 = vmul.f32 %v1092, %v9492
    %v9693 = vmul.f32 %v1093, %v9493
    %v9694 = vmul.f32 %v1094, %v9494
    %v9695 = vld [vmem:[#allocation8] sm:$0xf]
    %v9696 = vld [vmem:[#allocation8 + $0x4] sm:$0xf]
    %v9697 = vld [vmem:[#allocation8 + $0x8] sm:$0xf]
    %v9698 = vld [vmem:[#allocation8 + $0xc] sm:$0xf]
    %v9699 = vld [vmem:[#allocation8 + $0x10] sm:$0xf]
    %v9700 = vld [vmem:[#allocation8 + $0x14] sm:$0xf]
    %v9701 = vld [vmem:[#allocation8 + $0x18] sm:$0xf]
    %v9702 = vld [vmem:[#allocation8 + $0x1c] sm:$0xf]
    %v9703 = vld [vmem:[#allocation8 + $0x20] sm:$0xf]
    %v9704 = vld [vmem:[#allocation8 + $0x24] sm:$0xf]
    %v9705 = vld [vmem:[#allocation8 + $0x28] sm:$0xf]
    %v9706 = vld [vmem:[#allocation8 + $0x2c] sm:$0xf]
    %v9707 = vld [vmem:[#allocation8 + $0x30] sm:$0xf]
    %v9708 = vld [vmem:[#allocation8 + $0x34] sm:$0xf]
    %v9709 = vld [vmem:[#allocation8 + $0x38] sm:$0xf]
    %v9710 = vld [vmem:[#allocation8 + $0x3c] sm:$0xf]
    %v9711 = vld [vmem:[#allocation8 + $0x40] sm:$0xf]
    %v9712 = vld [vmem:[#allocation8 + $0x44] sm:$0xf]
    %v9713 = vld [vmem:[#allocation8 + $0x48] sm:$0xf]
    %v9714 = vld [vmem:[#allocation8 + $0x4c] sm:$0xf]
    %v9715 = vld [vmem:[#allocation8 + $0x50] sm:$0xf]
    %v9716 = vld [vmem:[#allocation8 + $0x54] sm:$0xf]
    %v9717 = vld [vmem:[#allocation8 + $0x58] sm:$0xf]
    %v9718 = vld [vmem:[#allocation8 + $0x5c] sm:$0xf]
    %v9719 = vld [vmem:[#allocation8 + $0x60] sm:$0xf]
    %v9720 = vld [vmem:[#allocation8 + $0x64] sm:$0xf]
    %v9721 = vld [vmem:[#allocation8 + $0x68] sm:$0xf]
    %v9722 = vld [vmem:[#allocation8 + $0x6c] sm:$0xf]
    %v9723 = vld [vmem:[#allocation8 + $0x70] sm:$0xf]
    %v9724 = vld [vmem:[#allocation8 + $0x74] sm:$0xf]
    %v9725 = vld [vmem:[#allocation8 + $0x78] sm:$0xf]
    %v9726 = vld [vmem:[#allocation8 + $0x7c] sm:$0xf]
    %v9727 = vld [vmem:[#allocation8 + $0x80] sm:$0xf]
    %v9728 = vld [vmem:[#allocation8 + $0x84] sm:$0xf]
    %v9729 = vld [vmem:[#allocation8 + $0x88] sm:$0xf]
    %v9730 = vld [vmem:[#allocation8 + $0x8c] sm:$0xf]
    %v9731 = vld [vmem:[#allocation8 + $0x90] sm:$0xf]
    %v9732 = vld [vmem:[#allocation8 + $0x94] sm:$0xf]
    %v9733 = vld [vmem:[#allocation8 + $0x98] sm:$0xf]
    %v9734 = vld [vmem:[#allocation8 + $0x9c] sm:$0xf]
    %v9735 = vld [vmem:[#allocation8 + $0xa0] sm:$0xf]
    %v9736 = vld [vmem:[#allocation8 + $0xa4] sm:$0xf]
    %v9737 = vld [vmem:[#allocation8 + $0xa8] sm:$0xf]
    %v9738 = vld [vmem:[#allocation8 + $0xac] sm:$0xf]
    %v9739 = vld [vmem:[#allocation8 + $0xb0] sm:$0xf]
    %v9740 = vld [vmem:[#allocation8 + $0xb4] sm:$0xf]
    %v9741 = vld [vmem:[#allocation8 + $0xb8] sm:$0xf]
    %v9742 = vld [vmem:[#allocation8 + $0xbc] sm:$0xf]
    %v9743 = vld [vmem:[#allocation8 + $0xc0] sm:$0xf]
    %v9744 = vld [vmem:[#allocation8 + $0xc4] sm:$0xf]
    %v9745 = vld [vmem:[#allocation8 + $0xc8] sm:$0xf]
    %v9746 = vld [vmem:[#allocation8 + $0xcc] sm:$0xf]
    %v9747 = vld [vmem:[#allocation8 + $0xd0] sm:$0xf]
    %v9748 = vld [vmem:[#allocation8 + $0xd4] sm:$0xf]
    %v9749 = vld [vmem:[#allocation8 + $0xd8] sm:$0xf]
    %v9750 = vld [vmem:[#allocation8 + $0xdc] sm:$0xf]
    %v9751 = vld [vmem:[#allocation8 + $0xe0] sm:$0xf]
    %v9752 = vld [vmem:[#allocation8 + $0xe4] sm:$0xf]
    %v9753 = vld [vmem:[#allocation8 + $0xe8] sm:$0xf]
    %v9754 = vld [vmem:[#allocation8 + $0xec] sm:$0xf]
    %v9755 = vld [vmem:[#allocation8 + $0xf0] sm:$0xf]
    %v9756 = vld [vmem:[#allocation8 + $0xf4] sm:$0xf]
    %v9757 = vld [vmem:[#allocation8 + $0xf8] sm:$0xf]
    %v9758 = vld [vmem:[#allocation8 + $0xfc] sm:$0xf]
    %v9759 = vld [vmem:[%s4] sm:$0x1]
    %v9760 = vpack.c.bf16 %v9499, %v9495
    %v9761 = vpack.c.bf16 %v9500, %v9496
    %v9762 = vpack.c.bf16 %v9501, %v9497
    %v9763 = vpack.c.bf16 %v9502, %v9498
    %v9764 = vpack.c.bf16 %v9507, %v9503
    %v9765 = vpack.c.bf16 %v9508, %v9504
    %v9766 = vpack.c.bf16 %v9509, %v9505
    %v9767 = vpack.c.bf16 %v9510, %v9506
    %v9768 = vpack.c.bf16 %v9515, %v9511
    %v9769 = vpack.c.bf16 %v9516, %v9512
    %v9770 = vpack.c.bf16 %v9517, %v9513
    %v9771 = vpack.c.bf16 %v9518, %v9514
    %v9772 = vpack.c.bf16 %v9523, %v9519
    %v9773 = vpack.c.bf16 %v9524, %v9520
    %v9774 = vpack.c.bf16 %v9525, %v9521
    %v9775 = vpack.c.bf16 %v9526, %v9522
    %v9776 = vpack.c.bf16 %v9531, %v9527
    %v9777 = vpack.c.bf16 %v9532, %v9528
    %v9778 = vpack.c.bf16 %v9533, %v9529
    %v9779 = vpack.c.bf16 %v9534, %v9530
    %v9780 = vpack.c.bf16 %v9539, %v9535
    %v9781 = vpack.c.bf16 %v9540, %v9536
    %v9782 = vpack.c.bf16 %v9541, %v9537
    %v9783 = vpack.c.bf16 %v9542, %v9538
    %v9784 = vpack.c.bf16 %v9547, %v9543
    %v9785 = vpack.c.bf16 %v9548, %v9544
    %v9786 = vpack.c.bf16 %v9549, %v9545
    %v9787 = vpack.c.bf16 %v9550, %v9546
    %v9788 = vpack.c.bf16 %v9555, %v9551
    %v9789 = vpack.c.bf16 %v9556, %v9552
    %v9790 = vpack.c.bf16 %v9557, %v9553
    %v9791 = vpack.c.bf16 %v9558, %v9554
    %v9792 = vpack.c.bf16 %v9563, %v9559
    %v9793 = vpack.c.bf16 %v9564, %v9560
    %v9794 = vpack.c.bf16 %v9565, %v9561
    %v9795 = vpack.c.bf16 %v9566, %v9562
    %v9796 = vpack.c.bf16 %v9571, %v9567
    %v9797 = vpack.c.bf16 %v9572, %v9568
    %v9798 = vpack.c.bf16 %v9573, %v9569
    %v9799 = vpack.c.bf16 %v9574, %v9570
    %v9800 = vpack.c.bf16 %v9579, %v9575
    %v9801 = vpack.c.bf16 %v9580, %v9576
    %v9802 = vpack.c.bf16 %v9581, %v9577
    %v9803 = vpack.c.bf16 %v9582, %v9578
    %v9804 = vpack.c.bf16 %v9587, %v9583
    %v9805 = vpack.c.bf16 %v9588, %v9584
    %v9806 = vpack.c.bf16 %v9589, %v9585
    %v9807 = vpack.c.bf16 %v9590, %v9586
    %v9808 = vpack.c.bf16 %v9595, %v9591
    %v9809 = vpack.c.bf16 %v9596, %v9592
    %v9810 = vpack.c.bf16 %v9597, %v9593
    %v9811 = vpack.c.bf16 %v9598, %v9594
    %v9812 = vpack.c.bf16 %v9603, %v9599
    %v9813 = vpack.c.bf16 %v9604, %v9600
    %v9814 = vpack.c.bf16 %v9605, %v9601
    %v9815 = vpack.c.bf16 %v9606, %v9602
    %v9816 = vpack.c.bf16 %v9611, %v9607
    %v9817 = vpack.c.bf16 %v9612, %v9608
    %v9818 = vpack.c.bf16 %v9613, %v9609
    %v9819 = vpack.c.bf16 %v9614, %v9610
    %v9820 = vpack.c.bf16 %v9619, %v9615
    %v9821 = vpack.c.bf16 %v9620, %v9616
    %v9822 = vpack.c.bf16 %v9621, %v9617
    %v9823 = vpack.c.bf16 %v9622, %v9618
    %v9824 = vpack.c.bf16 %v9627, %v9623
    %v9825 = vpack.c.bf16 %v9628, %v9624
    %v9826 = vpack.c.bf16 %v9629, %v9625
    %v9827 = vpack.c.bf16 %v9630, %v9626
    %v9828 = vpack.c.bf16 %v9635, %v9631
    %v9829 = vpack.c.bf16 %v9636, %v9632
    %v9830 = vpack.c.bf16 %v9637, %v9633
    %v9831 = vpack.c.bf16 %v9638, %v9634
    %v9832 = vpack.c.bf16 %v9643, %v9639
    %v9833 = vpack.c.bf16 %v9644, %v9640
    %v9834 = vpack.c.bf16 %v9645, %v9641
    %v9835 = vpack.c.bf16 %v9646, %v9642
    %v9836 = vpack.c.bf16 %v9651, %v9647
    %v9837 = vpack.c.bf16 %v9652, %v9648
    %v9838 = vpack.c.bf16 %v9653, %v9649
    %v9839 = vpack.c.bf16 %v9654, %v9650
    %v9840 = vpack.c.bf16 %v9659, %v9655
    %v9841 = vpack.c.bf16 %v9660, %v9656
    %v9842 = vpack.c.bf16 %v9661, %v9657
    %v9843 = vpack.c.bf16 %v9662, %v9658
    %v9844 = vpack.c.bf16 %v9667, %v9663
    %v9845 = vpack.c.bf16 %v9668, %v9664
    %v9846 = vpack.c.bf16 %v9669, %v9665
    %v9847 = vpack.c.bf16 %v9670, %v9666
    %v9848 = vpack.c.bf16 %v9675, %v9671
    %v9849 = vpack.c.bf16 %v9676, %v9672
    %v9850 = vpack.c.bf16 %v9677, %v9673
    %v9851 = vpack.c.bf16 %v9678, %v9674
    %v9852 = vpack.c.bf16 %v9683, %v9679
    %v9853 = vpack.c.bf16 %v9684, %v9680
    %v9854 = vpack.c.bf16 %v9685, %v9681
    %v9855 = vpack.c.bf16 %v9686, %v9682
    %v9856 = vpack.c.bf16 %v9691, %v9687
    %v9857 = vpack.c.bf16 %v9692, %v9688
    %v9858 = vpack.c.bf16 %v9693, %v9689
    %v9859 = vpack.c.bf16 %v9694, %v9690
    %v9861 = vperm.slane %v9759, 0
    %v9927 = vunpack.c.l.b16 %v9695
    %v9928 = vunpack.c.l.b16 %v9696
    %v9929 = vunpack.c.l.b16 %v9697
    %v9930 = vunpack.c.l.b16 %v9698
    %v9931 = vunpack.c.l.b16 %v9699
    %v9932 = vunpack.c.l.b16 %v9700
    %v9933 = vunpack.c.l.b16 %v9701
    %v9934 = vunpack.c.l.b16 %v9702
    %v9935 = vunpack.c.l.b16 %v9703
    %v9936 = vunpack.c.l.b16 %v9704
    %v9937 = vunpack.c.l.b16 %v9705
    %v9938 = vunpack.c.l.b16 %v9706
    %v9939 = vunpack.c.l.b16 %v9707
    %v9940 = vunpack.c.l.b16 %v9708
    %v9941 = vunpack.c.l.b16 %v9709
    %v9942 = vunpack.c.l.b16 %v9710
    %v9943 = vunpack.c.l.b16 %v9711
    %v9944 = vunpack.c.l.b16 %v9712
    %v9945 = vunpack.c.l.b16 %v9713
    %v9946 = vunpack.c.l.b16 %v9714
    %v9947 = vunpack.c.l.b16 %v9715
    %v9948 = vunpack.c.l.b16 %v9716
    %v9949 = vunpack.c.l.b16 %v9717
    %v9950 = vunpack.c.l.b16 %v9718
    %v9951 = vunpack.c.l.b16 %v9719
    %v9952 = vunpack.c.l.b16 %v9720
    %v9953 = vunpack.c.l.b16 %v9721
    %v9954 = vunpack.c.l.b16 %v9722
    %v9955 = vunpack.c.l.b16 %v9723
    %v9956 = vunpack.c.l.b16 %v9724
    %v9957 = vunpack.c.l.b16 %v9725
    %v9958 = vunpack.c.l.b16 %v9726
    %v9959 = vunpack.c.l.b16 %v9727
    %v9960 = vunpack.c.l.b16 %v9728
    %v9961 = vunpack.c.l.b16 %v9729
    %v9962 = vunpack.c.l.b16 %v9730
    %v9963 = vunpack.c.l.b16 %v9731
    %v9964 = vunpack.c.l.b16 %v9732
    %v9965 = vunpack.c.l.b16 %v9733
    %v9966 = vunpack.c.l.b16 %v9734
    %v9967 = vunpack.c.l.b16 %v9735
    %v9968 = vunpack.c.l.b16 %v9736
    %v9969 = vunpack.c.l.b16 %v9737
    %v9970 = vunpack.c.l.b16 %v9738
    %v9971 = vunpack.c.l.b16 %v9739
    %v9972 = vunpack.c.l.b16 %v9740
    %v9973 = vunpack.c.l.b16 %v9741
    %v9974 = vunpack.c.l.b16 %v9742
    %v9975 = vunpack.c.l.b16 %v9743
    %v9976 = vunpack.c.l.b16 %v9744
    %v9977 = vunpack.c.l.b16 %v9745
    %v9978 = vunpack.c.l.b16 %v9746
    %v9979 = vunpack.c.l.b16 %v9747
    %v9980 = vunpack.c.l.b16 %v9748
    %v9981 = vunpack.c.l.b16 %v9749
    %v9982 = vunpack.c.l.b16 %v9750
    %v9983 = vunpack.c.l.b16 %v9751
    %v9984 = vunpack.c.l.b16 %v9752
    %v9985 = vunpack.c.l.b16 %v9753
    %v9986 = vunpack.c.l.b16 %v9754
    %v9987 = vunpack.c.l.b16 %v9755
    %v9988 = vunpack.c.l.b16 %v9756
    %v9989 = vunpack.c.l.b16 %v9757
    %v9990 = vunpack.c.l.b16 %v9758
    %v9991 = vpack.c.b16 %v9928, %v9927
    %v9992 = vpack.c.b16 %v9930, %v9929
    %v9993 = vpack.c.b16 %v9932, %v9931
    %v9994 = vpack.c.b16 %v9934, %v9933
    %v9995 = vpack.c.b16 %v9936, %v9935
    %v9996 = vpack.c.b16 %v9938, %v9937
    %v9997 = vpack.c.b16 %v9940, %v9939
    %v9998 = vpack.c.b16 %v9942, %v9941
    %v9999 = vpack.c.b16 %v9944, %v9943
    %v10000 = vpack.c.b16 %v9946, %v9945
    %v10001 = vpack.c.b16 %v9948, %v9947
    %v10002 = vpack.c.b16 %v9950, %v9949
    %v10003 = vpack.c.b16 %v9952, %v9951
    %v10004 = vpack.c.b16 %v9954, %v9953
    %v10005 = vpack.c.b16 %v9956, %v9955
    %v10006 = vpack.c.b16 %v9958, %v9957
    %v10007 = vpack.c.b16 %v9960, %v9959
    %v10008 = vpack.c.b16 %v9962, %v9961
    %v10009 = vpack.c.b16 %v9964, %v9963
    %v10010 = vpack.c.b16 %v9966, %v9965
    %v10011 = vpack.c.b16 %v9968, %v9967
    %v10012 = vpack.c.b16 %v9970, %v9969
    %v10013 = vpack.c.b16 %v9972, %v9971
    %v10014 = vpack.c.b16 %v9974, %v9973
    %v10015 = vpack.c.b16 %v9976, %v9975
    %v10016 = vpack.c.b16 %v9978, %v9977
    %v10017 = vpack.c.b16 %v9980, %v9979
    %v10018 = vpack.c.b16 %v9982, %v9981
    %v10019 = vpack.c.b16 %v9984, %v9983
    %v10020 = vpack.c.b16 %v9986, %v9985
    %v10021 = vpack.c.b16 %v9988, %v9987
    %v10022 = vpack.c.b16 %v9990, %v9989
    %10055 = vmatpush.bf16.msra.mxu0 %v9998
    %10056 = vmatpush.bf16.msra.mxu0 %v9997
    %10057 = vmatpush.bf16.msra.mxu0 %v9996
    %10058 = vmatpush.bf16.msra.mxu0 %v9995
    %10059 = vmatpush.bf16.msra.mxu0 %v9994
    %10060 = vmatpush.bf16.msra.mxu0 %v9993
    %10061 = vmatpush.bf16.msra.mxu0 %v9992
    %10062 = vmatpush.bf16.msra.mxu0 %v9991
    %10063 = vmatmul.bf16.gmra.mxu0 %v9760
    %v10064 = vpop.f32.mrf.mxu0
    %v10065 = vadd.f32 %v9861, %v10064
    %v10066 = vpop.f32.mrf.mxu0
    %v10067 = vadd.f32 %v9861, %v10066
    %10068 = vmatmul.bf16.gmra.mxu0 %v9764
    %v10069 = vpop.f32.mrf.mxu0
    %v10070 = vadd.f32 %v9861, %v10069
    %v10071 = vpop.f32.mrf.mxu0
    %v10072 = vadd.f32 %v9861, %v10071
    %10073 = vmatmul.bf16.gmra.mxu0 %v9768
    %v10074 = vpop.f32.mrf.mxu0
    %v10075 = vadd.f32 %v9861, %v10074
    %v10076 = vpop.f32.mrf.mxu0
    %v10077 = vadd.f32 %v9861, %v10076
    %10078 = vmatmul.bf16.gmra.mxu0 %v9772
    %v10079 = vpop.f32.mrf.mxu0
    %v10080 = vadd.f32 %v9861, %v10079
    %v10081 = vpop.f32.mrf.mxu0
    %v10082 = vadd.f32 %v9861, %v10081
    %10083 = vmatmul.bf16.gmra.mxu0 %v9776
    %v10084 = vpop.f32.mrf.mxu0
    %v10085 = vadd.f32 %v9861, %v10084
    %v10086 = vpop.f32.mrf.mxu0
    %v10087 = vadd.f32 %v9861, %v10086
    %10088 = vmatmul.bf16.gmra.mxu0 %v9780
    %v10089 = vpop.f32.mrf.mxu0
    %v10090 = vadd.f32 %v9861, %v10089
    %v10091 = vpop.f32.mrf.mxu0
    %v10092 = vadd.f32 %v9861, %v10091
    %10093 = vmatmul.bf16.gmra.mxu0 %v9784
    %v10094 = vpop.f32.mrf.mxu0
    %v10095 = vadd.f32 %v9861, %v10094
    %v10096 = vpop.f32.mrf.mxu0
    %v10097 = vadd.f32 %v9861, %v10096
    %10098 = vmatmul.bf16.gmra.mxu0 %v9788
    %v10099 = vpop.f32.mrf.mxu0
    %v10100 = vadd.f32 %v9861, %v10099
    %v10101 = vpop.f32.mrf.mxu0
    %v10102 = vadd.f32 %v9861, %v10101
    %10103 = vmatmul.bf16.gmra.mxu0 %v9792
    %v10104 = vpop.f32.mrf.mxu0
    %v10105 = vadd.f32 %v9861, %v10104
    %v10106 = vpop.f32.mrf.mxu0
    %v10107 = vadd.f32 %v9861, %v10106
    %10108 = vmatmul.bf16.gmra.mxu0 %v9796
    %v10109 = vpop.f32.mrf.mxu0
    %v10110 = vadd.f32 %v9861, %v10109
    %v10111 = vpop.f32.mrf.mxu0
    %v10112 = vadd.f32 %v9861, %v10111
    %10113 = vmatmul.bf16.gmra.mxu0 %v9800
    %v10114 = vpop.f32.mrf.mxu0
    %v10115 = vadd.f32 %v9861, %v10114
    %v10116 = vpop.f32.mrf.mxu0
    %v10117 = vadd.f32 %v9861, %v10116
    %10118 = vmatmul.bf16.gmra.mxu0 %v9804
    %v10119 = vpop.f32.mrf.mxu0
    %v10120 = vadd.f32 %v9861, %v10119
    %v10121 = vpop.f32.mrf.mxu0
    %v10122 = vadd.f32 %v9861, %v10121
    %10123 = vmatmul.bf16.gmra.mxu0 %v9808
    %v10124 = vpop.f32.mrf.mxu0
    %v10125 = vadd.f32 %v9861, %v10124
    %v10126 = vpop.f32.mrf.mxu0
    %v10127 = vadd.f32 %v9861, %v10126
    %10128 = vmatmul.bf16.gmra.mxu0 %v9812
    %v10129 = vpop.f32.mrf.mxu0
    %v10130 = vadd.f32 %v9861, %v10129
    %v10131 = vpop.f32.mrf.mxu0
    %v10132 = vadd.f32 %v9861, %v10131
    %10133 = vmatmul.bf16.gmra.mxu0 %v9816
    %v10134 = vpop.f32.mrf.mxu0
    %v10135 = vadd.f32 %v9861, %v10134
    %v10136 = vpop.f32.mrf.mxu0
    %v10137 = vadd.f32 %v9861, %v10136
    %10138 = vmatmul.bf16.gmra.mxu0 %v9820
    %v10139 = vpop.f32.mrf.mxu0
    %v10140 = vadd.f32 %v9861, %v10139
    %v10141 = vpop.f32.mrf.mxu0
    %v10142 = vadd.f32 %v9861, %v10141
    %10143 = vmatmul.bf16.gmra.mxu0 %v9824
    %v10144 = vpop.f32.mrf.mxu0
    %v10145 = vadd.f32 %v9861, %v10144
    %v10146 = vpop.f32.mrf.mxu0
    %v10147 = vadd.f32 %v9861, %v10146
    %10148 = vmatmul.bf16.gmra.mxu0 %v9828
    %v10149 = vpop.f32.mrf.mxu0
    %v10150 = vadd.f32 %v9861, %v10149
    %v10151 = vpop.f32.mrf.mxu0
    %v10152 = vadd.f32 %v9861, %v10151
    %10153 = vmatmul.bf16.gmra.mxu0 %v9832
    %v10154 = vpop.f32.mrf.mxu0
    %v10155 = vadd.f32 %v9861, %v10154
    %v10156 = vpop.f32.mrf.mxu0
    %v10157 = vadd.f32 %v9861, %v10156
    %10158 = vmatmul.bf16.gmra.mxu0 %v9836
    %v10159 = vpop.f32.mrf.mxu0
    %v10160 = vadd.f32 %v9861, %v10159
    %v10161 = vpop.f32.mrf.mxu0
    %v10162 = vadd.f32 %v9861, %v10161
    %10163 = vmatmul.bf16.gmra.mxu0 %v9840
    %v10164 = vpop.f32.mrf.mxu0
    %v10165 = vadd.f32 %v9861, %v10164
    %v10166 = vpop.f32.mrf.mxu0
    %v10167 = vadd.f32 %v9861, %v10166
    %10168 = vmatmul.bf16.gmra.mxu0 %v9844
    %v10169 = vpop.f32.mrf.mxu0
    %v10170 = vadd.f32 %v9861, %v10169
    %v10171 = vpop.f32.mrf.mxu0
    %v10172 = vadd.f32 %v9861, %v10171
    %10173 = vmatmul.bf16.gmra.mxu0 %v9848
    %v10174 = vpop.f32.mrf.mxu0
    %v10175 = vadd.f32 %v9861, %v10174
    %v10176 = vpop.f32.mrf.mxu0
    %v10177 = vadd.f32 %v9861, %v10176
    %10178 = vmatmul.bf16.gmra.mxu0 %v9852
    %v10179 = vpop.f32.mrf.mxu0
    %v10180 = vadd.f32 %v9861, %v10179
    %v10181 = vpop.f32.mrf.mxu0
    %v10182 = vadd.f32 %v9861, %v10181
    %10183 = vmatmul.bf16.gmra.mxu0 %v9856
    %v10184 = vpop.f32.mrf.mxu0
    %v10185 = vadd.f32 %v9861, %v10184
    %v10186 = vpop.f32.mrf.mxu0
    %v10187 = vadd.f32 %v9861, %v10186
    %10188 = vdwg.mxu0
    %10189 = vmatpush.bf16.msra.mxu0 %v10006
    %10190 = vmatpush.bf16.msra.mxu0 %v10005
    %10191 = vmatpush.bf16.msra.mxu0 %v10004
    %10192 = vmatpush.bf16.msra.mxu0 %v10003
    %10193 = vmatpush.bf16.msra.mxu0 %v10002
    %10194 = vmatpush.bf16.msra.mxu0 %v10001
    %10195 = vmatpush.bf16.msra.mxu0 %v10000
    %10196 = vmatpush.bf16.msra.mxu0 %v9999
    %10197 = vmatmul.bf16.gmra.mxu0 %v9761
    %v10198 = vpop.f32.mrf.mxu0
    %v10199 = vadd.f32 %v10065, %v10198
    %v10200 = vpop.f32.mrf.mxu0
    %v10201 = vadd.f32 %v10067, %v10200
    %10202 = vmatmul.bf16.gmra.mxu0 %v9765
    %v10203 = vpop.f32.mrf.mxu0
    %v10204 = vadd.f32 %v10070, %v10203
    %v10205 = vpop.f32.mrf.mxu0
    %v10206 = vadd.f32 %v10072, %v10205
    %10207 = vmatmul.bf16.gmra.mxu0 %v9769
    %v10208 = vpop.f32.mrf.mxu0
    %v10209 = vadd.f32 %v10075, %v10208
    %v10210 = vpop.f32.mrf.mxu0
    %v10211 = vadd.f32 %v10077, %v10210
    %10212 = vmatmul.bf16.gmra.mxu0 %v9773
    %v10213 = vpop.f32.mrf.mxu0
    %v10214 = vadd.f32 %v10080, %v10213
    %v10215 = vpop.f32.mrf.mxu0
    %v10216 = vadd.f32 %v10082, %v10215
    %10217 = vmatmul.bf16.gmra.mxu0 %v9777
    %v10218 = vpop.f32.mrf.mxu0
    %v10219 = vadd.f32 %v10085, %v10218
    %v10220 = vpop.f32.mrf.mxu0
    %v10221 = vadd.f32 %v10087, %v10220
    %10222 = vmatmul.bf16.gmra.mxu0 %v9781
    %v10223 = vpop.f32.mrf.mxu0
    %v10224 = vadd.f32 %v10090, %v10223
    %v10225 = vpop.f32.mrf.mxu0
    %v10226 = vadd.f32 %v10092, %v10225
    %10227 = vmatmul.bf16.gmra.mxu0 %v9785
    %v10228 = vpop.f32.mrf.mxu0
    %v10229 = vadd.f32 %v10095, %v10228
    %v10230 = vpop.f32.mrf.mxu0
    %v10231 = vadd.f32 %v10097, %v10230
    %10232 = vmatmul.bf16.gmra.mxu0 %v9789
    %v10233 = vpop.f32.mrf.mxu0
    %v10234 = vadd.f32 %v10100, %v10233
    %v10235 = vpop.f32.mrf.mxu0
    %v10236 = vadd.f32 %v10102, %v10235
    %10237 = vmatmul.bf16.gmra.mxu0 %v9793
    %v10238 = vpop.f32.mrf.mxu0
    %v10239 = vadd.f32 %v10105, %v10238
    %v10240 = vpop.f32.mrf.mxu0
    %v10241 = vadd.f32 %v10107, %v10240
    %10242 = vmatmul.bf16.gmra.mxu0 %v9797
    %v10243 = vpop.f32.mrf.mxu0
    %v10244 = vadd.f32 %v10110, %v10243
    %v10245 = vpop.f32.mrf.mxu0
    %v10246 = vadd.f32 %v10112, %v10245
    %10247 = vmatmul.bf16.gmra.mxu0 %v9801
    %v10248 = vpop.f32.mrf.mxu0
    %v10249 = vadd.f32 %v10115, %v10248
    %v10250 = vpop.f32.mrf.mxu0
    %v10251 = vadd.f32 %v10117, %v10250
    %10252 = vmatmul.bf16.gmra.mxu0 %v9805
    %v10253 = vpop.f32.mrf.mxu0
    %v10254 = vadd.f32 %v10120, %v10253
    %v10255 = vpop.f32.mrf.mxu0
    %v10256 = vadd.f32 %v10122, %v10255
    %10257 = vmatmul.bf16.gmra.mxu0 %v9809
    %v10258 = vpop.f32.mrf.mxu0
    %v10259 = vadd.f32 %v10125, %v10258
    %v10260 = vpop.f32.mrf.mxu0
    %v10261 = vadd.f32 %v10127, %v10260
    %10262 = vmatmul.bf16.gmra.mxu0 %v9813
    %v10263 = vpop.f32.mrf.mxu0
    %v10264 = vadd.f32 %v10130, %v10263
    %v10265 = vpop.f32.mrf.mxu0
    %v10266 = vadd.f32 %v10132, %v10265
    %10267 = vmatmul.bf16.gmra.mxu0 %v9817
    %v10268 = vpop.f32.mrf.mxu0
    %v10269 = vadd.f32 %v10135, %v10268
    %v10270 = vpop.f32.mrf.mxu0
    %v10271 = vadd.f32 %v10137, %v10270
    %10272 = vmatmul.bf16.gmra.mxu0 %v9821
    %v10273 = vpop.f32.mrf.mxu0
    %v10274 = vadd.f32 %v10140, %v10273
    %v10275 = vpop.f32.mrf.mxu0
    %v10276 = vadd.f32 %v10142, %v10275
    %10277 = vmatmul.bf16.gmra.mxu0 %v9825
    %v10278 = vpop.f32.mrf.mxu0
    %v10279 = vadd.f32 %v10145, %v10278
    %v10280 = vpop.f32.mrf.mxu0
    %v10281 = vadd.f32 %v10147, %v10280
    %10282 = vmatmul.bf16.gmra.mxu0 %v9829
    %v10283 = vpop.f32.mrf.mxu0
    %v10284 = vadd.f32 %v10150, %v10283
    %v10285 = vpop.f32.mrf.mxu0
    %v10286 = vadd.f32 %v10152, %v10285
    %10287 = vmatmul.bf16.gmra.mxu0 %v9833
    %v10288 = vpop.f32.mrf.mxu0
    %v10289 = vadd.f32 %v10155, %v10288
    %v10290 = vpop.f32.mrf.mxu0
    %v10291 = vadd.f32 %v10157, %v10290
    %10292 = vmatmul.bf16.gmra.mxu0 %v9837
    %v10293 = vpop.f32.mrf.mxu0
    %v10294 = vadd.f32 %v10160, %v10293
    %v10295 = vpop.f32.mrf.mxu0
    %v10296 = vadd.f32 %v10162, %v10295
    %10297 = vmatmul.bf16.gmra.mxu0 %v9841
    %v10298 = vpop.f32.mrf.mxu0
    %v10299 = vadd.f32 %v10165, %v10298
    %v10300 = vpop.f32.mrf.mxu0
    %v10301 = vadd.f32 %v10167, %v10300
    %10302 = vmatmul.bf16.gmra.mxu0 %v9845
    %v10303 = vpop.f32.mrf.mxu0
    %v10304 = vadd.f32 %v10170, %v10303
    %v10305 = vpop.f32.mrf.mxu0
    %v10306 = vadd.f32 %v10172, %v10305
    %10307 = vmatmul.bf16.gmra.mxu0 %v9849
    %v10308 = vpop.f32.mrf.mxu0
    %v10309 = vadd.f32 %v10175, %v10308
    %v10310 = vpop.f32.mrf.mxu0
    %v10311 = vadd.f32 %v10177, %v10310
    %10312 = vmatmul.bf16.gmra.mxu0 %v9853
    %v10313 = vpop.f32.mrf.mxu0
    %v10314 = vadd.f32 %v10180, %v10313
    %v10315 = vpop.f32.mrf.mxu0
    %v10316 = vadd.f32 %v10182, %v10315
    %10317 = vmatmul.bf16.gmra.mxu0 %v9857
    %v10318 = vpop.f32.mrf.mxu0
    %v10319 = vadd.f32 %v10185, %v10318
    %v10320 = vpop.f32.mrf.mxu0
    %v10321 = vadd.f32 %v10187, %v10320
    %10322 = vdwg.mxu0
    %10323 = vmatpush.bf16.msra.mxu0 %v10014
    %10324 = vmatpush.bf16.msra.mxu0 %v10013
    %10325 = vmatpush.bf16.msra.mxu0 %v10012
    %10326 = vmatpush.bf16.msra.mxu0 %v10011
    %10327 = vmatpush.bf16.msra.mxu0 %v10010
    %10328 = vmatpush.bf16.msra.mxu0 %v10009
    %10329 = vmatpush.bf16.msra.mxu0 %v10008
    %10330 = vmatpush.bf16.msra.mxu0 %v10007
    %10331 = vmatmul.bf16.gmra.mxu0 %v9762
    %v10332 = vpop.f32.mrf.mxu0
    %v10333 = vadd.f32 %v10199, %v10332
    %v10334 = vpop.f32.mrf.mxu0
    %v10335 = vadd.f32 %v10201, %v10334
    %10336 = vmatmul.bf16.gmra.mxu0 %v9766
    %v10337 = vpop.f32.mrf.mxu0
    %v10338 = vadd.f32 %v10204, %v10337
    %v10339 = vpop.f32.mrf.mxu0
    %v10340 = vadd.f32 %v10206, %v10339
    %10341 = vmatmul.bf16.gmra.mxu0 %v9770
    %v10342 = vpop.f32.mrf.mxu0
    %v10343 = vadd.f32 %v10209, %v10342
    %v10344 = vpop.f32.mrf.mxu0
    %v10345 = vadd.f32 %v10211, %v10344
    %10346 = vmatmul.bf16.gmra.mxu0 %v9774
    %v10347 = vpop.f32.mrf.mxu0
    %v10348 = vadd.f32 %v10214, %v10347
    %v10349 = vpop.f32.mrf.mxu0
    %v10350 = vadd.f32 %v10216, %v10349
    %10351 = vmatmul.bf16.gmra.mxu0 %v9778
    %v10352 = vpop.f32.mrf.mxu0
    %v10353 = vadd.f32 %v10219, %v10352
    %v10354 = vpop.f32.mrf.mxu0
    %v10355 = vadd.f32 %v10221, %v10354
    %10356 = vmatmul.bf16.gmra.mxu0 %v9782
    %v10357 = vpop.f32.mrf.mxu0
    %v10358 = vadd.f32 %v10224, %v10357
    %v10359 = vpop.f32.mrf.mxu0
    %v10360 = vadd.f32 %v10226, %v10359
    %10361 = vmatmul.bf16.gmra.mxu0 %v9786
    %v10362 = vpop.f32.mrf.mxu0
    %v10363 = vadd.f32 %v10229, %v10362
    %v10364 = vpop.f32.mrf.mxu0
    %v10365 = vadd.f32 %v10231, %v10364
    %10366 = vmatmul.bf16.gmra.mxu0 %v9790
    %v10367 = vpop.f32.mrf.mxu0
    %v10368 = vadd.f32 %v10234, %v10367
    %v10369 = vpop.f32.mrf.mxu0
    %v10370 = vadd.f32 %v10236, %v10369
    %10371 = vmatmul.bf16.gmra.mxu0 %v9794
    %v10372 = vpop.f32.mrf.mxu0
    %v10373 = vadd.f32 %v10239, %v10372
    %v10374 = vpop.f32.mrf.mxu0
    %v10375 = vadd.f32 %v10241, %v10374
    %10376 = vmatmul.bf16.gmra.mxu0 %v9798
    %v10377 = vpop.f32.mrf.mxu0
    %v10378 = vadd.f32 %v10244, %v10377
    %v10379 = vpop.f32.mrf.mxu0
    %v10380 = vadd.f32 %v10246, %v10379
    %10381 = vmatmul.bf16.gmra.mxu0 %v9802
    %v10382 = vpop.f32.mrf.mxu0
    %v10383 = vadd.f32 %v10249, %v10382
    %v10384 = vpop.f32.mrf.mxu0
    %v10385 = vadd.f32 %v10251, %v10384
    %10386 = vmatmul.bf16.gmra.mxu0 %v9806
    %v10387 = vpop.f32.mrf.mxu0
    %v10388 = vadd.f32 %v10254, %v10387
    %v10389 = vpop.f32.mrf.mxu0
    %v10390 = vadd.f32 %v10256, %v10389
    %10391 = vmatmul.bf16.gmra.mxu0 %v9810
    %v10392 = vpop.f32.mrf.mxu0
    %v10393 = vadd.f32 %v10259, %v10392
    %v10394 = vpop.f32.mrf.mxu0
    %v10395 = vadd.f32 %v10261, %v10394
    %10396 = vmatmul.bf16.gmra.mxu0 %v9814
    %v10397 = vpop.f32.mrf.mxu0
    %v10398 = vadd.f32 %v10264, %v10397
    %v10399 = vpop.f32.mrf.mxu0
    %v10400 = vadd.f32 %v10266, %v10399
    %10401 = vmatmul.bf16.gmra.mxu0 %v9818
    %v10402 = vpop.f32.mrf.mxu0
    %v10403 = vadd.f32 %v10269, %v10402
    %v10404 = vpop.f32.mrf.mxu0
    %v10405 = vadd.f32 %v10271, %v10404
    %10406 = vmatmul.bf16.gmra.mxu0 %v9822
    %v10407 = vpop.f32.mrf.mxu0
    %v10408 = vadd.f32 %v10274, %v10407
    %v10409 = vpop.f32.mrf.mxu0
    %v10410 = vadd.f32 %v10276, %v10409
    %10411 = vmatmul.bf16.gmra.mxu0 %v9826
    %v10412 = vpop.f32.mrf.mxu0
    %v10413 = vadd.f32 %v10279, %v10412
    %v10414 = vpop.f32.mrf.mxu0
    %v10415 = vadd.f32 %v10281, %v10414
    %10416 = vmatmul.bf16.gmra.mxu0 %v9830
    %v10417 = vpop.f32.mrf.mxu0
    %v10418 = vadd.f32 %v10284, %v10417
    %v10419 = vpop.f32.mrf.mxu0
    %v10420 = vadd.f32 %v10286, %v10419
    %10421 = vmatmul.bf16.gmra.mxu0 %v9834
    %v10422 = vpop.f32.mrf.mxu0
    %v10423 = vadd.f32 %v10289, %v10422
    %v10424 = vpop.f32.mrf.mxu0
    %v10425 = vadd.f32 %v10291, %v10424
    %10426 = vmatmul.bf16.gmra.mxu0 %v9838
    %v10427 = vpop.f32.mrf.mxu0
    %v10428 = vadd.f32 %v10294, %v10427
    %v10429 = vpop.f32.mrf.mxu0
    %v10430 = vadd.f32 %v10296, %v10429
    %10431 = vmatmul.bf16.gmra.mxu0 %v9842
    %v10432 = vpop.f32.mrf.mxu0
    %v10433 = vadd.f32 %v10299, %v10432
    %v10434 = vpop.f32.mrf.mxu0
    %v10435 = vadd.f32 %v10301, %v10434
    %10436 = vmatmul.bf16.gmra.mxu0 %v9846
    %v10437 = vpop.f32.mrf.mxu0
    %v10438 = vadd.f32 %v10304, %v10437
    %v10439 = vpop.f32.mrf.mxu0
    %v10440 = vadd.f32 %v10306, %v10439
    %10441 = vmatmul.bf16.gmra.mxu0 %v9850
    %v10442 = vpop.f32.mrf.mxu0
    %v10443 = vadd.f32 %v10309, %v10442
    %v10444 = vpop.f32.mrf.mxu0
    %v10445 = vadd.f32 %v10311, %v10444
    %10446 = vmatmul.bf16.gmra.mxu0 %v9854
    %v10447 = vpop.f32.mrf.mxu0
    %v10448 = vadd.f32 %v10314, %v10447
    %v10449 = vpop.f32.mrf.mxu0
    %v10450 = vadd.f32 %v10316, %v10449
    %10451 = vmatmul.bf16.gmra.mxu0 %v9858
    %v10452 = vpop.f32.mrf.mxu0
    %v10453 = vadd.f32 %v10319, %v10452
    %v10454 = vpop.f32.mrf.mxu0
    %v10455 = vadd.f32 %v10321, %v10454
    %10456 = vdwg.mxu0
    %10457 = vmatpush.bf16.msra.mxu0 %v10022
    %10458 = vmatpush.bf16.msra.mxu0 %v10021
    %10459 = vmatpush.bf16.msra.mxu0 %v10020
    %10460 = vmatpush.bf16.msra.mxu0 %v10019
    %10461 = vmatpush.bf16.msra.mxu0 %v10018
    %10462 = vmatpush.bf16.msra.mxu0 %v10017
    %10463 = vmatpush.bf16.msra.mxu0 %v10016
    %10464 = vmatpush.bf16.msra.mxu0 %v10015
    %10465 = vmatmul.bf16.gmra.mxu0 %v9763
    %v10466 = vpop.f32.mrf.mxu0
    %v10467 = vadd.f32 %v10333, %v10466
    %v10468 = vpop.f32.mrf.mxu0
    %v10469 = vadd.f32 %v10335, %v10468
    %10470 = vmatmul.bf16.gmra.mxu0 %v9767
    %v10471 = vpop.f32.mrf.mxu0
    %v10472 = vadd.f32 %v10338, %v10471
    %v10473 = vpop.f32.mrf.mxu0
    %v10474 = vadd.f32 %v10340, %v10473
    %10475 = vmatmul.bf16.gmra.mxu0 %v9771
    %v10476 = vpop.f32.mrf.mxu0
    %v10477 = vadd.f32 %v10343, %v10476
    %v10478 = vpop.f32.mrf.mxu0
    %v10479 = vadd.f32 %v10345, %v10478
    %10480 = vmatmul.bf16.gmra.mxu0 %v9775
    %v10481 = vpop.f32.mrf.mxu0
    %v10482 = vadd.f32 %v10348, %v10481
    %v10483 = vpop.f32.mrf.mxu0
    %v10484 = vadd.f32 %v10350, %v10483
    %10485 = vmatmul.bf16.gmra.mxu0 %v9779
    %v10486 = vpop.f32.mrf.mxu0
    %v10487 = vadd.f32 %v10353, %v10486
    %v10488 = vpop.f32.mrf.mxu0
    %v10489 = vadd.f32 %v10355, %v10488
    %10490 = vmatmul.bf16.gmra.mxu0 %v9783
    %v10491 = vpop.f32.mrf.mxu0
    %v10492 = vadd.f32 %v10358, %v10491
    %v10493 = vpop.f32.mrf.mxu0
    %v10494 = vadd.f32 %v10360, %v10493
    %10495 = vmatmul.bf16.gmra.mxu0 %v9787
    %v10496 = vpop.f32.mrf.mxu0
    %v10497 = vadd.f32 %v10363, %v10496
    %v10498 = vpop.f32.mrf.mxu0
    %v10499 = vadd.f32 %v10365, %v10498
    %10500 = vmatmul.bf16.gmra.mxu0 %v9791
    %v10501 = vpop.f32.mrf.mxu0
    %v10502 = vadd.f32 %v10368, %v10501
    %v10503 = vpop.f32.mrf.mxu0
    %v10504 = vadd.f32 %v10370, %v10503
    %10505 = vmatmul.bf16.gmra.mxu0 %v9795
    %v10506 = vpop.f32.mrf.mxu0
    %v10507 = vadd.f32 %v10373, %v10506
    %v10508 = vpop.f32.mrf.mxu0
    %v10509 = vadd.f32 %v10375, %v10508
    %10510 = vmatmul.bf16.gmra.mxu0 %v9799
    %v10511 = vpop.f32.mrf.mxu0
    %v10512 = vadd.f32 %v10378, %v10511
    %v10513 = vpop.f32.mrf.mxu0
    %v10514 = vadd.f32 %v10380, %v10513
    %10515 = vmatmul.bf16.gmra.mxu0 %v9803
    %v10516 = vpop.f32.mrf.mxu0
    %v10517 = vadd.f32 %v10383, %v10516
    %v10518 = vpop.f32.mrf.mxu0
    %v10519 = vadd.f32 %v10385, %v10518
    %10520 = vmatmul.bf16.gmra.mxu0 %v9807
    %v10521 = vpop.f32.mrf.mxu0
    %v10522 = vadd.f32 %v10388, %v10521
    %v10523 = vpop.f32.mrf.mxu0
    %v10524 = vadd.f32 %v10390, %v10523
    %10525 = vmatmul.bf16.gmra.mxu0 %v9811
    %v10526 = vpop.f32.mrf.mxu0
    %v10527 = vadd.f32 %v10393, %v10526
    %v10528 = vpop.f32.mrf.mxu0
    %v10529 = vadd.f32 %v10395, %v10528
    %10530 = vmatmul.bf16.gmra.mxu0 %v9815
    %v10531 = vpop.f32.mrf.mxu0
    %v10532 = vadd.f32 %v10398, %v10531
    %v10533 = vpop.f32.mrf.mxu0
    %v10534 = vadd.f32 %v10400, %v10533
    %10535 = vmatmul.bf16.gmra.mxu0 %v9819
    %v10536 = vpop.f32.mrf.mxu0
    %v10537 = vadd.f32 %v10403, %v10536
    %v10538 = vpop.f32.mrf.mxu0
    %v10539 = vadd.f32 %v10405, %v10538
    %10540 = vmatmul.bf16.gmra.mxu0 %v9823
    %v10541 = vpop.f32.mrf.mxu0
    %v10542 = vadd.f32 %v10408, %v10541
    %v10543 = vpop.f32.mrf.mxu0
    %v10544 = vadd.f32 %v10410, %v10543
    %10545 = vmatmul.bf16.gmra.mxu0 %v9827
    %v10546 = vpop.f32.mrf.mxu0
    %v10547 = vadd.f32 %v10413, %v10546
    %v10548 = vpop.f32.mrf.mxu0
    %v10549 = vadd.f32 %v10415, %v10548
    %10550 = vmatmul.bf16.gmra.mxu0 %v9831
    %v10551 = vpop.f32.mrf.mxu0
    %v10552 = vadd.f32 %v10418, %v10551
    %v10553 = vpop.f32.mrf.mxu0
    %v10554 = vadd.f32 %v10420, %v10553
    %10555 = vmatmul.bf16.gmra.mxu0 %v9835
    %v10556 = vpop.f32.mrf.mxu0
    %v10557 = vadd.f32 %v10423, %v10556
    %v10558 = vpop.f32.mrf.mxu0
    %v10559 = vadd.f32 %v10425, %v10558
    %10560 = vmatmul.bf16.gmra.mxu0 %v9839
    %v10561 = vpop.f32.mrf.mxu0
    %v10562 = vadd.f32 %v10428, %v10561
    %v10563 = vpop.f32.mrf.mxu0
    %v10564 = vadd.f32 %v10430, %v10563
    %10565 = vmatmul.bf16.gmra.mxu0 %v9843
    %v10566 = vpop.f32.mrf.mxu0
    %v10567 = vadd.f32 %v10433, %v10566
    %v10568 = vpop.f32.mrf.mxu0
    %v10569 = vadd.f32 %v10435, %v10568
    %10570 = vmatmul.bf16.gmra.mxu0 %v9847
    %v10571 = vpop.f32.mrf.mxu0
    %v10572 = vadd.f32 %v10438, %v10571
    %v10573 = vpop.f32.mrf.mxu0
    %v10574 = vadd.f32 %v10440, %v10573
    %10575 = vmatmul.bf16.gmra.mxu0 %v9851
    %v10576 = vpop.f32.mrf.mxu0
    %v10577 = vadd.f32 %v10443, %v10576
    %v10578 = vpop.f32.mrf.mxu0
    %v10579 = vadd.f32 %v10445, %v10578
    %10580 = vmatmul.bf16.gmra.mxu0 %v9855
    %v10581 = vpop.f32.mrf.mxu0
    %v10582 = vadd.f32 %v10448, %v10581
    %v10583 = vpop.f32.mrf.mxu0
    %v10584 = vadd.f32 %v10450, %v10583
    %10585 = vmatmul.bf16.gmra.mxu0 %v9859
    %v10586 = vpop.f32.mrf.mxu0
    %v10587 = vadd.f32 %v10453, %v10586
    %v10588 = vpop.f32.mrf.mxu0
    %v10589 = vadd.f32 %v10455, %v10588
    %10590 = vdwg.mxu0
    %v10591 = vadd.f32 %v10467, %v82
    %v10592 = vadd.f32 %v10469, %v83
    %v10593 = vadd.f32 %v10472, %v84
    %v10594 = vadd.f32 %v10474, %v85
    %v10595 = vadd.f32 %v10477, %v86
    %v10596 = vadd.f32 %v10479, %v87
    %v10597 = vadd.f32 %v10482, %v88
    %v10598 = vadd.f32 %v10484, %v89
    %v10599 = vadd.f32 %v10487, %v90
    %v10600 = vadd.f32 %v10489, %v91
    %v10601 = vadd.f32 %v10492, %v92
    %v10602 = vadd.f32 %v10494, %v93
    %v10603 = vadd.f32 %v10497, %v94
    %v10604 = vadd.f32 %v10499, %v95
    %v10605 = vadd.f32 %v10502, %v96
    %v10606 = vadd.f32 %v10504, %v97
    %v10607 = vadd.f32 %v10507, %v98
    %v10608 = vadd.f32 %v10509, %v99
    %v10609 = vadd.f32 %v10512, %v100
    %v10610 = vadd.f32 %v10514, %v101
    %v10611 = vadd.f32 %v10517, %v102
    %v10612 = vadd.f32 %v10519, %v103
    %v10613 = vadd.f32 %v10522, %v104
    %v10614 = vadd.f32 %v10524, %v105
    %v10615 = vadd.f32 %v10527, %v106
    %v10616 = vadd.f32 %v10529, %v107
    %v10617 = vadd.f32 %v10532, %v108
    %v10618 = vadd.f32 %v10534, %v109
    %v10619 = vadd.f32 %v10537, %v110
    %v10620 = vadd.f32 %v10539, %v111
    %v10621 = vadd.f32 %v10542, %v112
    %v10622 = vadd.f32 %v10544, %v113
    %v10623 = vadd.f32 %v10547, %v114
    %v10624 = vadd.f32 %v10549, %v115
    %v10625 = vadd.f32 %v10552, %v116
    %v10626 = vadd.f32 %v10554, %v117
    %v10627 = vadd.f32 %v10557, %v118
    %v10628 = vadd.f32 %v10559, %v119
    %v10629 = vadd.f32 %v10562, %v120
    %v10630 = vadd.f32 %v10564, %v121
    %v10631 = vadd.f32 %v10567, %v122
    %v10632 = vadd.f32 %v10569, %v123
    %v10633 = vadd.f32 %v10572, %v124
    %v10634 = vadd.f32 %v10574, %v125
    %v10635 = vadd.f32 %v10577, %v126
    %v10636 = vadd.f32 %v10579, %v127
    %v10637 = vadd.f32 %v10582, %v128
    %v10638 = vadd.f32 %v10584, %v129
    %v10639 = vadd.f32 %v10587, %v130
    %v10640 = vadd.f32 %v10589, %v131
    %10641 = vst [vmem:[#allocation10] sm:$0xff] %v10591
    %10642 = vst [vmem:[#allocation10 + $0x8] sm:$0xff] %v10592
    %10643 = vst [vmem:[#allocation10 + $0x10] sm:$0xff] %v10593
    %10644 = vst [vmem:[#allocation10 + $0x18] sm:$0xff] %v10594
    %10645 = vst [vmem:[#allocation10 + $0x20] sm:$0xff] %v10595
    %10646 = vst [vmem:[#allocation10 + $0x28] sm:$0xff] %v10596
    %10647 = vst [vmem:[#allocation10 + $0x30] sm:$0xff] %v10597
    %10648 = vst [vmem:[#allocation10 + $0x38] sm:$0xff] %v10598
    %10649 = vst [vmem:[#allocation10 + $0x40] sm:$0xff] %v10599
    %10650 = vst [vmem:[#allocation10 + $0x48] sm:$0xff] %v10600
    %10651 = vst [vmem:[#allocation10 + $0x50] sm:$0xff] %v10601
    %10652 = vst [vmem:[#allocation10 + $0x58] sm:$0xff] %v10602
    %10653 = vst [vmem:[#allocation10 + $0x60] sm:$0xff] %v10603
    %10654 = vst [vmem:[#allocation10 + $0x68] sm:$0xff] %v10604
    %10655 = vst [vmem:[#allocation10 + $0x70] sm:$0xff] %v10605
    %10656 = vst [vmem:[#allocation10 + $0x78] sm:$0xff] %v10606
    %10657 = vst [vmem:[#allocation10 + $0x80] sm:$0xff] %v10607
    %10658 = vst [vmem:[#allocation10 + $0x88] sm:$0xff] %v10608
    %10659 = vst [vmem:[#allocation10 + $0x90] sm:$0xff] %v10609
    %10660 = vst [vmem:[#allocation10 + $0x98] sm:$0xff] %v10610
    %10661 = vst [vmem:[#allocation10 + $0xa0] sm:$0xff] %v10611
    %10662 = vst [vmem:[#allocation10 + $0xa8] sm:$0xff] %v10612
    %10663 = vst [vmem:[#allocation10 + $0xb0] sm:$0xff] %v10613
    %10664 = vst [vmem:[#allocation10 + $0xb8] sm:$0xff] %v10614
    %10665 = vst [vmem:[#allocation10 + $0xc0] sm:$0xff] %v10615
    %10666 = vst [vmem:[#allocation10 + $0xc8] sm:$0xff] %v10616
    %10667 = vst [vmem:[#allocation10 + $0xd0] sm:$0xff] %v10617
    %10668 = vst [vmem:[#allocation10 + $0xd8] sm:$0xff] %v10618
    %10669 = vst [vmem:[#allocation10 + $0xe0] sm:$0xff] %v10619
    %10670 = vst [vmem:[#allocation10 + $0xe8] sm:$0xff] %v10620
    %10671 = vst [vmem:[#allocation10 + $0xf0] sm:$0xff] %v10621
    %10672 = vst [vmem:[#allocation10 + $0xf8] sm:$0xff] %v10622
    %10673 = vst [vmem:[#allocation10 + $0x100] sm:$0xff] %v10623
    %10674 = vst [vmem:[#allocation10 + $0x108] sm:$0xff] %v10624
    %10675 = vst [vmem:[#allocation10 + $0x110] sm:$0xff] %v10625
    %10676 = vst [vmem:[#allocation10 + $0x118] sm:$0xff] %v10626
    %10677 = vst [vmem:[#allocation10 + $0x120] sm:$0xff] %v10627
    %10678 = vst [vmem:[#allocation10 + $0x128] sm:$0xff] %v10628
    %10679 = vst [vmem:[#allocation10 + $0x130] sm:$0xff] %v10629
    %10680 = vst [vmem:[#allocation10 + $0x138] sm:$0xff] %v10630
    %10681 = vst [vmem:[#allocation10 + $0x140] sm:$0xff] %v10631
    %10682 = vst [vmem:[#allocation10 + $0x148] sm:$0xff] %v10632
    %10683 = vst [vmem:[#allocation10 + $0x150] sm:$0xff] %v10633
    %10684 = vst [vmem:[#allocation10 + $0x158] sm:$0xff] %v10634
    %10685 = vst [vmem:[#allocation10 + $0x160] sm:$0xff] %v10635
    %10686 = vst [vmem:[#allocation10 + $0x168] sm:$0xff] %v10636
    %10687 = vst [vmem:[#allocation10 + $0x170] sm:$0xff] %v10637
    %10688 = vst [vmem:[#allocation10 + $0x178] sm:$0xff] %v10638
    %10689 = vst [vmem:[#allocation10 + $0x180] sm:$0xff] %v10639
    %10690 = vst [vmem:[#allocation10 + $0x188] sm:$0xff] %v10640
    // Predicated region
    $region38: #{tpu_custom_call.1} parent=1 // pred_check
      _
    $region39: #{tpu_custom_call.1} parent=1 // pred_check_branch
      %10692 = sbr.rel (0) target = $region41
    $region40: #{tpu_custom_call.1} parent=1 // pred_region
      %10694 = vsyncadd [#allocation4], 0
      %s10695 = sshll.u32 [#allocation10], 4
      %s10696 = int_to_ptr.vmem [resolvable:$true] %s10695
      %s10697 = sshll.u32 %s5, 4
      %s10698 = int_to_ptr.hbm [resolvable:$true] %s10697
      %10703 = dma.vmem_to_hbm [thread:$0]  %s10696, 6400, %s10698, [#allocation4], 128, 128, 8
    $region41: #{tpu_custom_call.1} parent=1 // pred_fallthru
      _
    // Predicated region
    $region42: #{tpu_custom_call.1} parent=1 // pred_check
      _
    $region43: #{tpu_custom_call.1} parent=1 // pred_check_branch
      %10705 = sbr.rel (0) target = $region45
    $region44: #{tpu_custom_call.1} parent=1 // pred_region
      %10707 = dma.done [#allocation4], 6400
    $region45: #{tpu_custom_call.1} parent=1 // pred_fallthru
      _
    %10708 = vsyncpa [#allocation3], 1
    %10709 = vsyncpa [#allocation6], 1
    %10710 = vsyncpa [#allocation9], 1
    %10711 = vsyncpa [#allocation4], 1

</llo_original>
